<compile_context>
chip_gen: v7x
topology: tpu7x:2x2x1
jax: 0.10.0
libtpu: 0.0.40
codegen_flags: <defaults>
</compile_context>

<pallas_src>
import functools
import math

import jax
import jax.numpy as jnp
from jax import lax
from jax.experimental import pallas as pl
from jax.experimental.pallas import tpu as pltpu


# ---------------------------------------------------------------------------
# Activations (match the torch modules used by Global)
# ---------------------------------------------------------------------------
def _gelu(x):
    # TODO(synk): torch.nn.GELU() default is the exact erf form; the tanh
    # approximation is used here (EUP tanh is well supported, deviation <1e-3).
    return 0.5 * x * (1.0 + jnp.tanh(0.7978845608028654 * (x + 0.044715 * x * x * x)))


def _relu(x):
    return jnp.maximum(x, 0.0)


def _elu(x):
    return jnp.where(x > 0, x, jnp.expm1(jnp.minimum(x, 0.0)))


def _tanh(x):
    return jnp.tanh(x)


_ACTIVATIONS = {"gelu": _gelu, "relu": _relu, "elu": _elu, "tanh": _tanh}


# ---------------------------------------------------------------------------
# Fused GATv2 + activation + residual kernel
#   grid = (dst row tiles [parallel], src column tiles [arbitrary])
# ---------------------------------------------------------------------------
def _gatv2_residual_kernel(act_fn,
                           adj_ref, x_dst_ref, h_dst_ref, h_src_ref,
                           attm_ref, sel_ref, bias_ref,
                           o_ref,
                           m_sc, l_sc, acc_sc):
    tm, d = h_dst_ref.shape
    tk = h_src_ref.shape[0]
    hp = attm_ref.shape[1]                      # padded head count (multiple of 8)
    k = pl.program_id(1)

    @pl.when(k == 0)
    def _init():
        m_sc[...] = jnp.full_like(m_sc, -1e30)
        l_sc[...] = jnp.zeros_like(l_sc)
        acc_sc[...] = jnp.zeros_like(acc_sc)

    # --- GATv2 scores for this (dst-tile, src-tile) block ------------------
    h_dst = h_dst_ref[...].astype(jnp.float32)
    h_src = h_src_ref[...].astype(jnp.float32)
    u = h_dst[:, None, :] + h_src[None, :, :]               # [tm, tk, d]
    u = jnp.where(u > 0, u, 0.2 * u)                        # leaky_relu(0.2)
    # att folded into one [d, heads_pad] MXU contraction -> [tm*tk, hp]
    e = jnp.dot(u.reshape(tm * tk, d), attm_ref[...].astype(jnp.float32),
                preferred_element_type=jnp.float32)
    # lane-dense per-head score matrix: src axis on lanes -> [tm*hp, tk]
    s = jnp.swapaxes(e.reshape(tm, tk, hp), 1, 2).reshape(tm * hp, tk)

    mask = jnp.broadcast_to((adj_ref[...] != 0)[:, None, :], (tm, hp, tk))
    mask = mask.reshape(tm * hp, tk)
    s = jnp.where(mask, s, -1e30)

    # --- online (flash-style) softmax over source blocks -------------------
    m_prev = m_sc[...]
    m_new = jnp.maximum(m_prev, jnp.max(s, axis=-1, keepdims=True))
    corr = jnp.exp(m_prev - m_new)                          # [tm*hp, 1]
    p = jnp.where(mask, jnp.exp(s - m_new), 0.0)            # [tm*hp, tk]
    l_sc[...] = corr * l_sc[...] + jnp.sum(p, axis=-1, keepdims=True)
    m_sc[...] = m_new

    # --- aggregation on the MXU ---------------------------------------------
    # [tm*hp, tk] @ [tk, d] -> [tm*hp, d]; each (row, head) then keeps only its
    # own head's channel block via the precomputed `sel` mask.
    agg = jnp.dot(p.astype(h_src_ref.dtype), h_src_ref[...],
                  preferred_element_type=jnp.float32)
    sel = sel_ref[...].astype(jnp.float32)[None, :, :]      # [1, hp, d]
    agg = jnp.sum(agg.reshape(tm, hp, d) * sel, axis=1)     # [tm, d]
    corr_d = jnp.sum(corr.reshape(tm, hp, 1) * sel, axis=1)  # [tm, d]
    acc_sc[...] = corr_d * acc_sc[...] + agg

    # --- finalize: normalize, bias, activation, residual --------------------
    @pl.when(k == pl.num_programs(1) - 1)
    def _fin():
        inv_l = pl.reciprocal(l_sc[...] + 1e-16, approx=True)        # [tm*hp, 1]
        inv_d = jnp.sum(inv_l.reshape(tm, hp, 1) * sel, axis=1)      # [tm, d]
        out = acc_sc[...] * inv_d + bias_ref[...].astype(jnp.float32)
        o_ref[...] = (x_dst_ref[...].astype(jnp.float32)
                      + act_fn(out)).astype(o_ref.dtype)


# ---------------------------------------------------------------------------
# Wrapper: one GATv2 + activation + residual layer as a pallas_call
# ---------------------------------------------------------------------------
def _round_up(x, m):
    return (x + m - 1) // m * m


def gatv2_residual_layer(x_src, x_dst, adj, layer_params, *, act_fn,
                         tile_m=64, tile_k=128,
                         vmem_limit_bytes=40 * 1024 * 1024):
    """dst_new = dst + act(GATv2Conv((x_src, x_dst), edges)); edges as dense int8 mask."""
    n_src, d = x_src.shape
    n_dst = x_dst.shape[0]
    heads = layer_params["heads"]
    assert d % heads == 0 and d % 128 == 0, "feature dim must be a multiple of 128"
    c = d // heads
    heads_pad = _round_up(heads, 8)

    # dst tile: multiple of 8, and >= 2 grid steps so both v7x TensorCores work.
    tm = min(tile_m, _round_up(n_dst, 8))
    if _round_up(n_dst, tm) // tm < 2 and tm > 8:
        tm = max(8, _round_up(tm // 2, 8))
    n_dst_p = _round_up(n_dst, tm)
    tk = tile_k
    n_src_p = _round_up(n_src, tk)

    # Hoisted linear transforms (grid-invariant): one XLA matmul each, instead
    # of being recomputed in every kernel step.
    h_src = x_src @ layer_params["w_l"] + layer_params["b_l"]
    h_dst = x_dst @ layer_params["w_r"] + layer_params["b_r"]

    x_dst_p = jnp.pad(x_dst, ((0, n_dst_p - n_dst), (0, 0)))
    h_dst_p = jnp.pad(h_dst, ((0, n_dst_p - n_dst), (0, 0)))
    h_src_p = jnp.pad(h_src, ((0, n_src_p - n_src), (0, 0)))
    adj_p = jnp.pad(adj.astype(jnp.int8),
                    ((0, n_dst_p - n_dst), (0, n_src_p - n_src)))

    # att folded into a [d, heads_pad] contraction matrix; `sel` picks each
    # head's channel block when reassembling [tm*heads_pad, d] MXU results.
    rows = jnp.arange(d)
    attm = jnp.zeros((d, heads_pad), x_src.dtype).at[rows, rows // c].set(
        layer_params["att"].reshape(-1))
    sel = (jnp.arange(heads_pad)[:, None] == (rows // c)[None, :]).astype(jnp.float32)
    bias = layer_params["bias"].reshape(1, d)

    grid = (n_dst_p // tm, n_src_p // tk)
    cost = pl.CostEstimate(
        flops=int(2 * n_dst_p * n_src_p * d * heads_pad        # score contraction
                  + 2 * n_dst_p * heads_pad * n_src_p * d      # aggregation matmul
                  + 6 * n_dst_p * n_src_p * d),                # pairwise + leaky (VPU)
        transcendentals=int(2 * n_dst_p * heads_pad * n_src_p),
        bytes_accessed=int(n_dst_p * n_src_p                    # int8 adjacency
                           + grid[0] * n_src_p * d * 4          # h_src per row tile
                           + 3 * n_dst_p * d * 4                # x_dst, h_dst, out
                           + (2 * d * heads_pad + d) * 4),
    )

    kernel = functools.partial(_gatv2_residual_kernel, act_fn)
    out = pl.pallas_call(
        kernel,
        out_shape=jax.ShapeDtypeStruct((n_dst_p, d), x_dst.dtype),
        grid_spec=pltpu.PrefetchScalarGridSpec(
            num_scalar_prefetch=0,
            grid=grid,
            in_specs=[
                pl.BlockSpec((tm, tk), lambda i, k: (i, k)),        # adjacency (int8)
                pl.BlockSpec((tm, d), lambda i, k: (i, 0)),         # x_dst (residual)
                pl.BlockSpec((tm, d), lambda i, k: (i, 0)),         # h_dst = x_dst W_r + b_r
                pl.BlockSpec((tk, d), lambda i, k: (k, 0)),         # h_src = x_src W_l + b_l
                pl.BlockSpec((d, heads_pad), lambda i, k: (0, 0)),  # att contraction matrix
                pl.BlockSpec((heads_pad, d), lambda i, k: (0, 0)),  # head->channel select
                pl.BlockSpec((1, d), lambda i, k: (0, 0)),          # output bias
            ],
            out_specs=pl.BlockSpec((tm, d), lambda i, k: (i, 0)),
            scratch_shapes=[
                pltpu.VMEM((tm * heads_pad, 1), jnp.float32),       # running max
                pltpu.VMEM((tm * heads_pad, 1), jnp.float32),       # running sum
                pltpu.VMEM((tm, d), jnp.float32),                   # output accumulator
            ],
        ),
        compiler_params=pltpu.CompilerParams(
            dimension_semantics=("parallel", "arbitrary"),
            vmem_limit_bytes=vmem_limit_bytes,
        ),
        cost_estimate=cost,
    )(adj_p, x_dst_p, h_dst_p, h_src_p, attm, sel, bias)

    return out[:n_dst]


# ---------------------------------------------------------------------------
# Global.forward()
# ---------------------------------------------------------------------------
def global_forward(params, adj_fwd, adj_bwd, *, activation="gelu",
                   use_global=True, tile_m=64):
    node = params["node_embedding"]
    if not use_global:
        return node
    hyper = params["hyperedge_embedding"]
    act_fn = _ACTIVATIONS[activation]
    for layer0, layer1 in zip(params["layers0"], params["layers1"]):
        # hyper = hyper + act(GATv2((node, hyper), forward_edge))
        hyper = gatv2_residual_layer(node, hyper, adj_fwd, layer0,
                                     act_fn=act_fn, tile_m=tile_m)
        # node  = node  + act(GATv2((hyper, node), backward_edge))
        node = gatv2_residual_layer(hyper, node, adj_bwd, layer1,
                                    act_fn=act_fn, tile_m=tile_m)
    return node


def edge_index_to_adjacency(edge_index, n_src, n_dst, *, add_self_loops=True,
                            dtype=jnp.int8):
    """Densify a [2, E] (src, dst) edge_index into an [n_dst, n_src] 0/1 mask.

    Mirrors the PyG GATv2Conv default: self loops (i, i) added for
    i < min(n_src, n_dst).  int8 keeps the in-kernel DMA 4x smaller than f32.
    """
    src, dst = edge_index[0], edge_index[1]
    adj = jnp.zeros((n_dst, n_src), dtype).at[dst, src].set(1)
    if add_self_loops:
        k = min(n_src, n_dst)
        idx = jnp.arange(k)
        adj = adj.at[idx, idx].set(1)
    return adj


# ---------------------------------------------------------------------------
# Parameter init (glorot weights, small biases) — init details are not part of
# the forward semantics.
# ---------------------------------------------------------------------------
def init_global_params(key, num_nodes, num_hyperedges, dim, heads, num_layers,
                       dtype=jnp.float32):
    def glorot(k, shape):
        fan_in, fan_out = shape[0], shape[-1]
        bound = math.sqrt(6.0 / (fan_in + fan_out))
        return jax.random.uniform(k, shape, dtype, -bound, bound)

    def layer(k):
        k1, k2, k3, k4, k5, k6 = jax.random.split(k, 6)
        return {
            "heads": heads,
            "w_l": glorot(k1, (dim, dim)),                      # stored (in, out): h = x @ w
            "b_l": 0.02 * jax.random.normal(k2, (dim,), dtype),
            "w_r": glorot(k3, (dim, dim)),
            "b_r": 0.02 * jax.random.normal(k4, (dim,), dtype),
            "att": glorot(k5, (heads, dim // heads)).reshape(dim),
            "bias": 0.02 * jax.random.normal(k6, (dim,), dtype),
        }

    keys = jax.random.split(key, 2 * num_layers + 2)
    return {
        "node_embedding": jax.random.normal(keys[0], (num_nodes, dim), dtype),
        "hyperedge_embedding": jax.random.normal(keys[1], (num_hyperedges, dim), dtype),
        "layers0": [layer(keys[2 + i]) for i in range(num_layers)],
        "layers1": [layer(keys[2 + num_layers + i]) for i in range(num_layers)],
    }


# ---------------------------------------------------------------------------
# Plain-JAX reference (same math, outside the kernel)
# ---------------------------------------------------------------------------
def _gatv2_residual_ref(x_src, x_dst, adj, p, act_fn):
    d = x_src.shape[1]
    heads = p["heads"]
    c = d // heads
    h_src = x_src @ p["w_l"] + p["b_l"]
    h_dst = x_dst @ p["w_r"] + p["b_r"]
    hs = h_src.reshape(-1, heads, c)
    hd = h_dst.reshape(-1, heads, c)
    u = hd[:, None] + hs[None, :]
    u = jnp.where(u > 0, u, 0.2 * u)
    e = (u * p["att"].reshape(1, 1, heads, c)).sum(-1)
    mask = adj[:, :, None] > 0
    e = jnp.where(mask, e, -1e30)
    e = e - e.max(axis=1, keepdims=True)
    w = jnp.where(mask, jnp.exp(e), 0.0)
    alpha = w / (w.sum(axis=1, keepdims=True) + 1e-16)
    out = jnp.einsum("dsh,shc->dhc", alpha, hs).reshape(-1, d) + p["bias"]
    return x_dst + act_fn(out)


def global_forward_ref(params, adj_fwd, adj_bwd, *, activation="gelu", use_global=True):
    node = params["node_embedding"]
    if not use_global:
        return node
    hyper = params["hyperedge_embedding"]
    act_fn = _ACTIVATIONS[activation]
    for l0, l1 in zip(params["layers0"], params["layers1"]):
        hyper = _gatv2_residual_ref(node, hyper, adj_fwd, l0, act_fn)
        node = _gatv2_residual_ref(hyper, node, adj_bwd, l1, act_fn)
    return node


if __name__ == "__main__":
    num_nodes, num_hyperedges = 128, 64
    dim, heads, num_layers = 128, 4, 2

    key = jax.random.PRNGKey(0)
    kp, ke1, ke2 = jax.random.split(key, 3)
    params = init_global_params(kp, num_nodes, num_hyperedges, dim, heads, num_layers)

    # Deterministic random bipartite hypergraph.
    n_edges = 4 * num_hyperedges
    src = jax.random.randint(ke1, (n_edges,), 0, num_nodes)
    dst = jax.random.randint(ke2, (n_edges,), 0, num_hyperedges)
    forward_edge = jnp.stack([src, dst])    # node -> hyperedge
    backward_edge = jnp.stack([dst, src])   # hyperedge -> node

    adj_fwd = edge_index_to_adjacency(forward_edge, num_nodes, num_hyperedges)
    adj_bwd = edge_index_to_adjacency(backward_edge, num_hyperedges, num_nodes)

    out = global_forward(params, adj_fwd, adj_bwd, activation="gelu",
                         use_global=True, tile_m=64)
    out = jax.block_until_ready(out)

    ref = global_forward_ref(params, adj_fwd, adj_bwd, activation="gelu", use_global=True)
    assert out.shape == (num_nodes, dim)
    assert bool(jnp.all(jnp.isfinite(out)))
    # MXU matmuls / approx reciprocal vs. the XLA reference dot: loose but
    # bug-catching tolerance.
    assert jnp.allclose(out, ref, atol=3e-2, rtol=3e-2), float(jnp.max(jnp.abs(out - ref)))

    print("KERNEL_OK")
</pallas_src>

<mosaic_0001>
module attributes {stable_mosaic.version = 11 : i64} {
  func.func @_gatv2_residual_kernel(%arg0: i32, %arg1: i32, %arg2: memref<32x128xi8, #tpu.memory_space<vmem>>, %arg3: memref<32x128xf32, #tpu.memory_space<vmem>>, %arg4: memref<32x128xf32, #tpu.memory_space<vmem>>, %arg5: memref<128x128xf32, #tpu.memory_space<vmem>>, %arg6: memref<128x8xf32, #tpu.memory_space<vmem>>, %arg7: memref<8x128xf32, #tpu.memory_space<vmem>>, %arg8: memref<1x128xf32, #tpu.memory_space<vmem>>, %arg9: memref<32x128xf32, #tpu.memory_space<vmem>>, %arg10: memref<256x1xf32, #tpu.memory_space<vmem>>, %arg11: memref<256x1xf32, #tpu.memory_space<vmem>>, %arg12: memref<32x128xf32, #tpu.memory_space<vmem>>) attributes {dimension_semantics = [#tpu.dimension_semantics<parallel>, #tpu.dimension_semantics<arbitrary>], iteration_bounds = array<i64: 2, 1>, scalar_prefetch = 0 : i64, scratch_operands = 3 : i64, tpu.core_type = #tpu.core_type<tc>, window_params = [{transform_indices = @transform_0, window_bounds = array<i64: 32, 128>}, {transform_indices = @transform_1, window_bounds = array<i64: 32, 128>}, {transform_indices = @transform_2, window_bounds = array<i64: 32, 128>}, {transform_indices = @transform_3, window_bounds = array<i64: 128, 128>}, {pipeline_mode = #tpu.pipeline_mode<synchronous>, transform_indices = @transform_4, window_bounds = array<i64: 128, 8>}, {pipeline_mode = #tpu.pipeline_mode<synchronous>, transform_indices = @transform_5, window_bounds = array<i64: 8, 128>}, {pipeline_mode = #tpu.pipeline_mode<synchronous>, transform_indices = @transform_6, window_bounds = array<i64: 1, 128>}, {transform_indices = @transform_7, window_bounds = array<i64: 32, 128>}]} {
    %c0_i32 = arith.constant 0 : i32
    %0 = arith.cmpi eq, %arg1, %c0_i32 : i32
    %1 = arith.extui %0 : i1 to i32
    %c0_i32_0 = arith.constant 0 : i32
    %2 = arith.cmpi ne, %1, %c0_i32_0 : i32
    scf.if %2 {
      %cst_35 = arith.constant -1.000000e+30 : f32
      %68 = vector.broadcast %cst_35 : f32 to vector<256x1xf32>
      %c0_36 = arith.constant 0 : index
      %c0_37 = arith.constant 0 : index
      %69 = vector.load %arg10[%c0_36, %c0_37] : memref<256x1xf32, #tpu.memory_space<vmem>>, vector<256x1xf32>
      tpu.vector_store %arg10[%c0_36, %c0_37], %68 {strides = array<i32>} : memref<256x1xf32, #tpu.memory_space<vmem>>, vector<256x1xf32>,
      %cst_38 = arith.constant 0.000000e+00 : f32
      %70 = vector.broadcast %cst_38 : f32 to vector<256x1xf32>
      %c0_39 = arith.constant 0 : index
      %c0_40 = arith.constant 0 : index
      %71 = vector.load %arg11[%c0_39, %c0_40] : memref<256x1xf32, #tpu.memory_space<vmem>>, vector<256x1xf32>
      tpu.vector_store %arg11[%c0_39, %c0_40], %70 {strides = array<i32>} : memref<256x1xf32, #tpu.memory_space<vmem>>, vector<256x1xf32>,
      %cst_41 = arith.constant 0.000000e+00 : f32
      %72 = vector.broadcast %cst_41 : f32 to vector<32x128xf32>
      %c0_42 = arith.constant 0 : index
      %c0_43 = arith.constant 0 : index
      %73 = vector.load %arg12[%c0_42, %c0_43] : memref<32x128xf32, #tpu.memory_space<vmem>>, vector<32x128xf32>
      tpu.vector_store %arg12[%c0_42, %c0_43], %72 {strides = array<i32>} : memref<32x128xf32, #tpu.memory_space<vmem>>, vector<32x128xf32>,
    } else {
    }
    %c0 = arith.constant 0 : index
    %c0_1 = arith.constant 0 : index
    %3 = vector.load %arg4[%c0, %c0_1] : memref<32x128xf32, #tpu.memory_space<vmem>>, vector<32x128xf32>
    %c0_2 = arith.constant 0 : index
    %c0_3 = arith.constant 0 : index
    %4 = vector.load %arg5[%c0_2, %c0_3] : memref<128x128xf32, #tpu.memory_space<vmem>>, vector<128x128xf32>
    %5 = vector.shape_cast %3 : vector<32x128xf32> to vector<32x1x128xf32>
    %6 = vector.shape_cast %4 : vector<128x128xf32> to vector<1x128x128xf32>
    %7 = vector.broadcast %5 : vector<32x1x128xf32> to vector<32x128x128xf32>
    %8 = vector.broadcast %6 : vector<1x128x128xf32> to vector<32x128x128xf32>
    %9 = arith.addf %7, %8 : vector<32x128x128xf32>
    %cst = arith.constant 0.000000e+00 : f32
    %10 = vector.broadcast %cst : f32 to vector<32x128x128xf32>
    %11 = arith.cmpf ogt, %9, %10 : vector<32x128x128xf32>
    %cst_4 = arith.constant 2.000000e-01 : f32
    %12 = vector.broadcast %cst_4 : f32 to vector<32x128x128xf32>
    %13 = arith.mulf %12, %9 : vector<32x128x128xf32>
    %14 = arith.select %11, %9, %13 : vector<32x128x128xi1>, vector<32x128x128xf32>
    %15 = vector.shape_cast %14 : vector<32x128x128xf32> to vector<4096x128xf32>
    %c0_5 = arith.constant 0 : index
    %c0_6 = arith.constant 0 : index
    %16 = vector.load %arg6[%c0_5, %c0_6] : memref<128x8xf32, #tpu.memory_space<vmem>>, vector<128x8xf32>
    %cst_7 = arith.constant dense<0.000000e+00> : vector<4096x8xf32>
    %17 = tpu.matmul %15, %16, %cst_7 {dimension_numbers = #tpu.dot_dimension_numbers<[1], [0], [0], [1], [0, 0, 1, 1], [], []>} : vector<4096x128xf32>, vector<128x8xf32>, vector<4096x8xf32> -> vector<4096x8xf32>
    %18 = vector.shape_cast %17 : vector<4096x8xf32> to vector<32x128x8xf32>
    %19 = tpu.transpose %18, [0, 2, 1] : vector<32x128x8xf32> -> vector<32x8x128xf32>
    %20 = vector.shape_cast %19 : vector<32x8x128xf32> to vector<256x128xf32>
    %c0_8 = arith.constant 0 : index
    %c0_9 = arith.constant 0 : index
    %21 = vector.load %arg2[%c0_8, %c0_9] : memref<32x128xi8, #tpu.memory_space<vmem>>, vector<32x128xi8>
    %c0_i8 = arith.constant 0 : i8
    %22 = vector.broadcast %c0_i8 : i8 to vector<32x128xi8>
    %23 = arith.cmpi ne, %21, %22 : vector<32x128xi8>
    %24 = vector.shape_cast %23 : vector<32x128xi1> to vector<32x1x128xi1>
    %25 = vector.shape_cast %24 : vector<32x1x128xi1> to vector<32x1x128xi1>
    %26 = vector.broadcast %25 : vector<32x1x128xi1> to vector<32x8x128xi1>
    %27 = vector.shape_cast %26 : vector<32x8x128xi1> to vector<256x128xi1>
    %cst_10 = arith.constant -1.000000e+30 : f32
    %28 = vector.broadcast %cst_10 : f32 to vector<256x128xf32>
    %29 = arith.select %27, %20, %28 : vector<256x128xi1>, vector<256x128xf32>
    %c0_11 = arith.constant 0 : index
    %c0_12 = arith.constant 0 : index
    %30 = vector.load %arg10[%c0_11, %c0_12] : memref<256x1xf32, #tpu.memory_space<vmem>>, vector<256x1xf32>
    %cst_13 = arith.constant dense<0xFF800000> : vector<256xf32>
    %31 = vector.multi_reduction <maximumf>, %29, %cst_13 [1] : vector<256x128xf32> to vector<256xf32>
    %32 = vector.shape_cast %31 : vector<256xf32> to vector<256x1xf32>
    %33 = arith.maximumf %30, %32 : vector<256x1xf32>
    %34 = arith.subf %30, %33 : vector<256x1xf32>
    %35 = math.exp %34 : vector<256x1xf32>
    %36 = vector.broadcast %33 : vector<256x1xf32> to vector<256x128xf32>
    %37 = arith.subf %29, %36 : vector<256x128xf32>
    %38 = math.exp %37 : vector<256x128xf32>
    %cst_14 = arith.constant 0.000000e+00 : f32
    %39 = vector.broadcast %cst_14 : f32 to vector<256x128xf32>
    %40 = arith.select %27, %38, %39 : vector<256x128xi1>, vector<256x128xf32>
    %c0_15 = arith.constant 0 : index
    %c0_16 = arith.constant 0 : index
    %41 = vector.load %arg11[%c0_15, %c0_16] : memref<256x1xf32, #tpu.memory_space<vmem>>, vector<256x1xf32>
    %42 = arith.mulf %35, %41 : vector<256x1xf32>
    %cst_17 = arith.constant dense<0.000000e+00> : vector<256xf32>
    %43 = vector.multi_reduction <add>, %40, %cst_17 [1] : vector<256x128xf32> to vector<256xf32>
    %44 = vector.shape_cast %43 : vector<256xf32> to vector<256x1xf32>
    %45 = arith.addf %42, %44 : vector<256x1xf32>
    %c0_18 = arith.constant 0 : index
    %c0_19 = arith.constant 0 : index
    %46 = vector.load %arg11[%c0_18, %c0_19] : memref<256x1xf32, #tpu.memory_space<vmem>>, vector<256x1xf32>
    tpu.vector_store %arg11[%c0_18, %c0_19], %45 {strides = array<i32>} : memref<256x1xf32, #tpu.memory_space<vmem>>, vector<256x1xf32>,
    %c0_20 = arith.constant 0 : index
    %c0_21 = arith.constant 0 : index
    %47 = vector.load %arg10[%c0_20, %c0_21] : memref<256x1xf32, #tpu.memory_space<vmem>>, vector<256x1xf32>
    tpu.vector_store %arg10[%c0_20, %c0_21], %33 {strides = array<i32>} : memref<256x1xf32, #tpu.memory_space<vmem>>, vector<256x1xf32>,
    %c0_22 = arith.constant 0 : index
    %c0_23 = arith.constant 0 : index
    %48 = vector.load %arg5[%c0_22, %c0_23] : memref<128x128xf32, #tpu.memory_space<vmem>>, vector<128x128xf32>
    %cst_24 = arith.constant dense<0.000000e+00> : vector<256x128xf32>
    %49 = tpu.matmul %40, %48, %cst_24 {dimension_numbers = #tpu.dot_dimension_numbers<[1], [0], [0], [1], [0, 0, 1, 1], [], []>} : vector<256x128xf32>, vector<128x128xf32>, vector<256x128xf32> -> vector<256x128xf32>
    %c0_25 = arith.constant 0 : index
    %c0_26 = arith.constant 0 : index
    %50 = vector.load %arg7[%c0_25, %c0_26] : memref<8x128xf32, #tpu.memory_space<vmem>>, vector<8x128xf32>
    %51 = vector.shape_cast %50 : vector<8x128xf32> to vector<1x8x128xf32>
    %52 = vector.shape_cast %49 : vector<256x128xf32> to vector<32x8x128xf32>
    %53 = vector.broadcast %51 : vector<1x8x128xf32> to vector<32x8x128xf32>
    %54 = arith.mulf %52, %53 : vector<32x8x128xf32>
    %cst_27 = arith.constant dense<0.000000e+00> : vector<32x128xf32>
    %55 = vector.multi_reduction <add>, %54, %cst_27 [1] : vector<32x8x128xf32> to vector<32x128xf32>
    %56 = vector.shape_cast %35 : vector<256x1xf32> to vector<32x8x1xf32>
    %57 = vector.broadcast %56 : vector<32x8x1xf32> to vector<32x8x128xf32>
    %58 = vector.broadcast %51 : vector<1x8x128xf32> to vector<32x8x128xf32>
    %59 = arith.mulf %57, %58 : vector<32x8x128xf32>
    %cst_28 = arith.constant dense<0.000000e+00> : vector<32x128xf32>
    %60 = vector.multi_reduction <add>, %59, %cst_28 [1] : vector<32x8x128xf32> to vector<32x128xf32>
    %c0_29 = arith.constant 0 : index
    %c0_30 = arith.constant 0 : index
    %61 = vector.load %arg12[%c0_29, %c0_30] : memref<32x128xf32, #tpu.memory_space<vmem>>, vector<32x128xf32>
    %62 = arith.mulf %60, %61 : vector<32x128xf32>
    %63 = arith.addf %62, %55 : vector<32x128xf32>
    %c0_31 = arith.constant 0 : index
    %c0_32 = arith.constant 0 : index
    %64 = vector.load %arg12[%c0_31, %c0_32] : memref<32x128xf32, #tpu.memory_space<vmem>>, vector<32x128xf32>
    tpu.vector_store %arg12[%c0_31, %c0_32], %63 {strides = array<i32>} : memref<32x128xf32, #tpu.memory_space<vmem>>, vector<32x128xf32>,
    %c0_i32_33 = arith.constant 0 : i32
    %65 = arith.cmpi eq, %arg1, %c0_i32_33 : i32
    %66 = arith.extui %65 : i1 to i32
    %c0_i32_34 = arith.constant 0 : i32
    %67 = arith.cmpi ne, %66, %c0_i32_34 : i32
    scf.if %67 {
      %c0_35 = arith.constant 0 : index
      %c0_36 = arith.constant 0 : index
      %68 = vector.load %arg11[%c0_35, %c0_36] : memref<256x1xf32, #tpu.memory_space<vmem>>, vector<256x1xf32>
      %cst_37 = arith.constant 1.000000e-16 : f32
      %69 = vector.broadcast %cst_37 : f32 to vector<256x1xf32>
      %70 = arith.addf %68, %69 : vector<256x1xf32>
      %71 = tpu.reciprocal %70 {approx = true} : vector<256x1xf32> -> vector<256x1xf32>
      %72 = vector.shape_cast %71 : vector<256x1xf32> to vector<32x8x1xf32>
      %73 = vector.broadcast %72 : vector<32x8x1xf32> to vector<32x8x128xf32>
      %74 = vector.broadcast %51 : vector<1x8x128xf32> to vector<32x8x128xf32>
      %75 = arith.mulf %73, %74 : vector<32x8x128xf32>
      %cst_38 = arith.constant dense<0.000000e+00> : vector<32x128xf32>
      %76 = vector.multi_reduction <add>, %75, %cst_38 [1] : vector<32x8x128xf32> to vector<32x128xf32>
      %c0_39 = arith.constant 0 : index
      %c0_40 = arith.constant 0 : index
      %77 = vector.load %arg12[%c0_39, %c0_40] : memref<32x128xf32, #tpu.memory_space<vmem>>, vector<32x128xf32>
      %78 = arith.mulf %77, %76 : vector<32x128xf32>
      %c0_41 = arith.constant 0 : index
      %c0_42 = arith.constant 0 : index
      %79 = vector.load %arg8[%c0_41, %c0_42] : memref<1x128xf32, #tpu.memory_space<vmem>>, vector<1x128xf32>
      %80 = vector.broadcast %79 : vector<1x128xf32> to vector<32x128xf32>
      %81 = arith.addf %78, %80 : vector<32x128xf32>
      %c0_43 = arith.constant 0 : index
      %c0_44 = arith.constant 0 : index
      %82 = vector.load %arg3[%c0_43, %c0_44] : memref<32x128xf32, #tpu.memory_space<vmem>>, vector<32x128xf32>
      %cst_45 = arith.constant 5.000000e-01 : f32
      %83 = vector.broadcast %cst_45 : f32 to vector<32x128xf32>
      %84 = arith.mulf %83, %81 : vector<32x128xf32>
      %cst_46 = arith.constant 4.471500e-02 : f32
      %85 = vector.broadcast %cst_46 : f32 to vector<32x128xf32>
      %86 = arith.mulf %85, %81 : vector<32x128xf32>
      %87 = arith.mulf %86, %81 : vector<32x128xf32>
      %88 = arith.mulf %87, %81 : vector<32x128xf32>
      %89 = arith.addf %81, %88 : vector<32x128xf32>
      %cst_47 = arith.constant 0.797884583 : f32
      %90 = vector.broadcast %cst_47 : f32 to vector<32x128xf32>
      %91 = arith.mulf %90, %89 : vector<32x128xf32>
      %92 = math.tanh %91 : vector<32x128xf32>
      %cst_48 = arith.constant 1.000000e+00 : f32
      %93 = vector.broadcast %cst_48 : f32 to vector<32x128xf32>
      %94 = arith.addf %93, %92 : vector<32x128xf32>
      %95 = arith.mulf %84, %94 : vector<32x128xf32>
      %96 = arith.addf %82, %95 : vector<32x128xf32>
      %c0_49 = arith.constant 0 : index
      %c0_50 = arith.constant 0 : index
      %97 = vector.load %arg9[%c0_49, %c0_50] : memref<32x128xf32, #tpu.memory_space<vmem>>, vector<32x128xf32>
      tpu.vector_store %arg9[%c0_49, %c0_50], %96 {strides = array<i32>} : memref<32x128xf32, #tpu.memory_space<vmem>>, vector<32x128xf32>,
    } else {
    }
    return
  }
  func.func @transform_0(%arg0: i32, %arg1: i32) -> (i32, i32) {
    %c0_i32 = arith.constant 0 : i32
    return %arg0, %arg1 : i32, i32
  }
  func.func @transform_1(%arg0: i32, %arg1: i32) -> (i32, i32) {
    %c0_i32 = arith.constant 0 : i32
    %c0_i32_0 = arith.constant 0 : i32
    return %arg0, %c0_i32 : i32, i32
  }
  func.func @transform_2(%arg0: i32, %arg1: i32) -> (i32, i32) {
    %c0_i32 = arith.constant 0 : i32
    %c0_i32_0 = arith.constant 0 : i32
    return %arg0, %c0_i32 : i32, i32
  }
  func.func @transform_3(%arg0: i32, %arg1: i32) -> (i32, i32) {
    %c0_i32 = arith.constant 0 : i32
    %c0_i32_0 = arith.constant 0 : i32
    return %arg1, %c0_i32 : i32, i32
  }
  func.func @transform_4(%arg0: i32, %arg1: i32) -> (i32, i32) {
    %c0_i32 = arith.constant 0 : i32
    %c0_i32_0 = arith.constant 0 : i32
    %c0_i32_1 = arith.constant 0 : i32
    return %c0_i32, %c0_i32_0 : i32, i32
  }
  func.func @transform_5(%arg0: i32, %arg1: i32) -> (i32, i32) {
    %c0_i32 = arith.constant 0 : i32
    %c0_i32_0 = arith.constant 0 : i32
    %c0_i32_1 = arith.constant 0 : i32
    return %c0_i32, %c0_i32_0 : i32, i32
  }
  func.func @transform_6(%arg0: i32, %arg1: i32) -> (i32, i32) {
    %c0_i32 = arith.constant 0 : i32
    %c0_i32_0 = arith.constant 0 : i32
    %c0_i32_1 = arith.constant 0 : i32
    return %c0_i32, %c0_i32_0 : i32, i32
  }
  func.func @transform_7(%arg0: i32, %arg1: i32) -> (i32, i32) {
    %c0_i32 = arith.constant 0 : i32
    %c0_i32_0 = arith.constant 0 : i32
    return %arg0, %c0_i32 : i32, i32
  }
}

</mosaic_0001>

<llo_original>
// kernel: tpu_custom_call.1
$region0: #{tpu_custom_call.1}
  #allocation0 [shape = 'u32[]', space=smem, size = 0x4, offset = 0x4, fixed_abs, tag = 'smem constant byte address 0x4 - core index']
  #allocation1 [shape = 'u32[144,128]{1,0:T(1,128)}', space=vmem, size = 0x12000, scoped, tag = 'internal scratch']
  #allocation2 [shape = 'f32[256,1]{1,0:T(8,128)}', space=vmem, size = 0x20000, scoped, tag = 'scratch operand']
  #allocation3 [shape = 'f32[256,1]{1,0:T(8,128)}', space=vmem, size = 0x20000, scoped, tag = 'scratch operand']
  #allocation4 [shape = 'f32[32,128]{1,0:T(8,128)}', space=vmem, size = 0x4000, scoped, tag = 'scratch operand']
  %s0 = inlined_call_operand.hbm [shape: s8[64,128], index: 0, kind: input, shape index: {}]
  %s1 = inlined_call_operand.hbm [shape: f32[64,128], index: 1, kind: input, shape index: {}]
  %s2 = inlined_call_operand.hbm [shape: f32[64,128], index: 2, kind: input, shape index: {}]
  %s3 = inlined_call_operand.vmem [shape: f32[128,128], index: 3, kind: input, shape index: {}]
  %s4 = inlined_call_operand.vmem [shape: f32[128,8], index: 4, kind: input, shape index: {}]
  %s5 = inlined_call_operand.vmem [shape: f32[8,128], index: 5, kind: input, shape index: {}]
  %s6 = inlined_call_operand.vmem [shape: f32[1,128], index: 6, kind: input, shape index: {}]
  %s7 = inlined_call_operand.hbm [shape: f32[64,128], index: 7, kind: output, shape index: {}]
  %s8 = sld [smem:[#allocation0]]
  $region81: #{tpu_custom_call.1} parent=0
    _
  %s10 = ssub.s32 1, %s8
  %s11 = scalar_select 0, %s10, %s8
  $region1: #{tpu_custom_call.1} parent=0
    #allocation5 [shape = 'u8[8192]{0}', space=vmem, size = 0x2000, scoped, tag = 'input window, operand 0']
    #allocation6 [shape = 's32[2]{0}', space=sflag, size = 0x8, scoped, tag = 'scoped memory for tpu_custom_call.1']
    #allocation7 [shape = 's32[2]{0}', space=sflag, size = 0x8, scoped, tag = 'scoped memory for tpu_custom_call.1']
    #allocation8 [shape = 'u8[32768]{0}', space=vmem, size = 0x8000, scoped, tag = 'input window, operand 1']
    #allocation9 [shape = 's32[2]{0}', space=sflag, size = 0x8, scoped, tag = 'scoped memory for tpu_custom_call.1']
    #allocation10 [shape = 'u8[32768]{0}', space=vmem, size = 0x8000, scoped, tag = 'input window, operand 2']
    #allocation11 [shape = 'u8[32768]{0}', space=vmem, size = 0x8000, scoped, tag = 'output window, operand 0']
    %12 = vsyncpa [#allocation6], 0
    %s13 = scalar_lea.sflag [#allocation6], 1
    %14 = vsyncpa %s13, 0
    %15 = vsyncpa [#allocation9], 0
    %s16 = scalar_lea.sflag [#allocation9], 1
    %17 = vsyncpa %s16, 0
    %18 = vsyncpa [#allocation7], 0
    %s19 = scalar_lea.sflag [#allocation7], 1
    %20 = vsyncpa %s19, 0
    loop: start=0, step=1, limit=4
    $region2: #{tpu_custom_call.1} parent=1 // loop_pre_header
      _
    $region3: #{tpu_custom_call.1} parent=1 // loop_header
      %s22 = sphi 0, %s26
      %p23 = scmp.ge.s32.totalorder %s22, 4
      %s29 = sphi 0, %s41
      %s30 = sphi 0, %s37
      %s31 = sphi 0, %s29
      %s32 = sphi 0, %s30
      %s33 = sphi 0, %s31
      %s34 = sphi 0, %s32
      %s46 = sphi 0, %s48
      %s49 = sphi 0, %s46
      %s50 = sphi 0, %s49
      %s66 = sphi 0, %s50
      %s72 = sphi 0, %s74
      %s75 = sphi 0, %s72
      %s76 = sphi 0, %s75
      %s92 = sphi 0, %s76
      %s98 = sphi 0, %s100
      %s101 = sphi 0, %s98
      %s102 = sphi 0, %s101
      %s118 = sphi 0, %s102
      %s124 = sphi 0, %s126
      %s127 = sphi 0, %s124
      %s128 = sphi 0, %s127
      %s144 = sphi 0, %s128
      %s148 = sphi 0, %s148
      %s150 = sphi 0, %s148
      %s151 = sphi 0, %s150
      %s165 = sphi 0, %s151
      %s169 = sphi 0, %s169
      %s171 = sphi 0, %s169
      %s172 = sphi 0, %s171
      %s186 = sphi 0, %s172
      %s190 = sphi 0, %s190
      %s192 = sphi 0, %s190
      %s193 = sphi 0, %s192
      %s207 = sphi 0, %s193
      %s213 = sphi 0, %s215
      %s216 = sphi 0, %s213
      %s217 = sphi 0, %s216
      %s233 = sphi 0, %s217
    $region4: #{tpu_custom_call.1} parent=1 // loop_header_branch
      %25 = sbr.rel (%p23) target = $region8
    $region5: #{tpu_custom_call.1} parent=1 // loop_body
      %s27 = ssub.s32 %s22, 1
      %s28 = ssub.s32 %s22, 2
      %s35 = sadd.s32 1, %s30
      %p36 = scmp.ge.s32.totalorder %s35, 1
      %s37 = scalar_select %p36, 0, %s35
      %s38 = sadd.s32 1, %s29
      %s39 = scalar_select %p36, %s38, %s29
      %p40 = scmp.ge.s32.totalorder %s39, 2
      %s41 = scalar_select %p40, 0, %s39
      %s42 = ssub.s32 %s29, %s41
      %s43 = ssub.s32 %s30, %s37
      %s44 = sor.u32 %s42, %s43
      %p45 = scmp.eq.s32.totalorder %s44, 0
      %s47 = sadd.s32 %s46, 1
      %s48 = scalar_select %p45, %s46, %s47
      %p51 = pneg %p45
      %p52 = scmp.eq.s32.totalorder %s22, 1
      %p53 = por %p51, %p52
      %p54 = scmp.ne.s32.totalorder %s46, %s49
      %p55 = scmp.eq.s32.totalorder %s22, 0
      %p56 = por %p54, %p55
      %p57 = scmp.ne.s32.totalorder %s46, %s49
      %p58 = scmp.eq.s32.totalorder %s27, 1
      %p59 = por %p57, %p58
      %p60 = scmp.ne.s32.totalorder %s49, %s50
      %p61 = scmp.eq.s32.totalorder %s27, 0
      %p62 = por %p60, %p61
      %p63 = scmp.ne.s32.totalorder %s49, %s50
      %p64 = scmp.eq.s32.totalorder %s28, 1
      %p65 = por %p63, %p64
      %p67 = scmp.ne.s32.totalorder %s50, %s66
      %p68 = scmp.eq.s32.totalorder %s28, 0
      %p69 = por %p67, %p68
      %s70 = ssub.s32 %s29, %s41
      %p71 = scmp.eq.s32.totalorder %s70, 0
      %s73 = sadd.s32 %s72, 1
      %s74 = scalar_select %p71, %s72, %s73
      %p77 = pneg %p71
      %p78 = scmp.eq.s32.totalorder %s22, 1
      %p79 = por %p77, %p78
      %p80 = scmp.ne.s32.totalorder %s72, %s75
      %p81 = scmp.eq.s32.totalorder %s22, 0
      %p82 = por %p80, %p81
      %p83 = scmp.ne.s32.totalorder %s72, %s75
      %p84 = scmp.eq.s32.totalorder %s27, 1
      %p85 = por %p83, %p84
      %p86 = scmp.ne.s32.totalorder %s75, %s76
      %p87 = scmp.eq.s32.totalorder %s27, 0
      %p88 = por %p86, %p87
      %p89 = scmp.ne.s32.totalorder %s75, %s76
      %p90 = scmp.eq.s32.totalorder %s28, 1
      %p91 = por %p89, %p90
      %p93 = scmp.ne.s32.totalorder %s76, %s92
      %p94 = scmp.eq.s32.totalorder %s28, 0
      %p95 = por %p93, %p94
      %s96 = ssub.s32 %s29, %s41
      %p97 = scmp.eq.s32.totalorder %s96, 0
      %s99 = sadd.s32 %s98, 1
      %s100 = scalar_select %p97, %s98, %s99
      %p103 = pneg %p97
      %p104 = scmp.eq.s32.totalorder %s22, 1
      %p105 = por %p103, %p104
      %p106 = scmp.ne.s32.totalorder %s98, %s101
      %p107 = scmp.eq.s32.totalorder %s22, 0
      %p108 = por %p106, %p107
      %p109 = scmp.ne.s32.totalorder %s98, %s101
      %p110 = scmp.eq.s32.totalorder %s27, 1
      %p111 = por %p109, %p110
      %p112 = scmp.ne.s32.totalorder %s101, %s102
      %p113 = scmp.eq.s32.totalorder %s27, 0
      %p114 = por %p112, %p113
      %p115 = scmp.ne.s32.totalorder %s101, %s102
      %p116 = scmp.eq.s32.totalorder %s28, 1
      %p117 = por %p115, %p116
      %p119 = scmp.ne.s32.totalorder %s102, %s118
      %p120 = scmp.eq.s32.totalorder %s28, 0
      %p121 = por %p119, %p120
      %s122 = ssub.s32 %s30, %s37
      %p123 = scmp.eq.s32.totalorder %s122, 0
      %s125 = sadd.s32 %s124, 1
      %s126 = scalar_select %p123, %s124, %s125
      %p129 = pneg %p123
      %p130 = scmp.eq.s32.totalorder %s22, 1
      %p131 = por %p129, %p130
      %p132 = scmp.ne.s32.totalorder %s124, %s127
      %p133 = scmp.eq.s32.totalorder %s22, 0
      %p134 = por %p132, %p133
      %p135 = scmp.ne.s32.totalorder %s124, %s127
      %p136 = scmp.eq.s32.totalorder %s27, 1
      %p137 = por %p135, %p136
      %p138 = scmp.ne.s32.totalorder %s127, %s128
      %p139 = scmp.eq.s32.totalorder %s27, 0
      %p140 = por %p138, %p139
      %p141 = scmp.ne.s32.totalorder %s127, %s128
      %p142 = scmp.eq.s32.totalorder %s28, 1
      %p143 = por %p141, %p142
      %p145 = scmp.ne.s32.totalorder %s128, %s144
      %p146 = scmp.eq.s32.totalorder %s28, 0
      %p147 = por %p145, %p146
      %s149 = sadd.s32 %s148, 1
      %p152 = scmp.eq.s32.totalorder %s22, 1
      %p153 = scmp.ne.s32.totalorder %s148, %s150
      %p154 = scmp.eq.s32.totalorder %s22, 0
      %p155 = por %p153, %p154
      %p156 = scmp.ne.s32.totalorder %s148, %s150
      %p157 = scmp.eq.s32.totalorder %s27, 1
      %p158 = por %p156, %p157
      %p159 = scmp.ne.s32.totalorder %s150, %s151
      %p160 = scmp.eq.s32.totalorder %s27, 0
      %p161 = por %p159, %p160
      %p162 = scmp.ne.s32.totalorder %s150, %s151
      %p163 = scmp.eq.s32.totalorder %s28, 1
      %p164 = por %p162, %p163
      %p166 = scmp.ne.s32.totalorder %s151, %s165
      %p167 = scmp.eq.s32.totalorder %s28, 0
      %p168 = por %p166, %p167
      %s170 = sadd.s32 %s169, 1
      %p173 = scmp.eq.s32.totalorder %s22, 1
      %p174 = scmp.ne.s32.totalorder %s169, %s171
      %p175 = scmp.eq.s32.totalorder %s22, 0
      %p176 = por %p174, %p175
      %p177 = scmp.ne.s32.totalorder %s169, %s171
      %p178 = scmp.eq.s32.totalorder %s27, 1
      %p179 = por %p177, %p178
      %p180 = scmp.ne.s32.totalorder %s171, %s172
      %p181 = scmp.eq.s32.totalorder %s27, 0
      %p182 = por %p180, %p181
      %p183 = scmp.ne.s32.totalorder %s171, %s172
      %p184 = scmp.eq.s32.totalorder %s28, 1
      %p185 = por %p183, %p184
      %p187 = scmp.ne.s32.totalorder %s172, %s186
      %p188 = scmp.eq.s32.totalorder %s28, 0
      %p189 = por %p187, %p188
      %s191 = sadd.s32 %s190, 1
      %p194 = scmp.eq.s32.totalorder %s22, 1
      %p195 = scmp.ne.s32.totalorder %s190, %s192
      %p196 = scmp.eq.s32.totalorder %s22, 0
      %p197 = por %p195, %p196
      %p198 = scmp.ne.s32.totalorder %s190, %s192
      %p199 = scmp.eq.s32.totalorder %s27, 1
      %p200 = por %p198, %p199
      %p201 = scmp.ne.s32.totalorder %s192, %s193
      %p202 = scmp.eq.s32.totalorder %s27, 0
      %p203 = por %p201, %p202
      %p204 = scmp.ne.s32.totalorder %s192, %s193
      %p205 = scmp.eq.s32.totalorder %s28, 1
      %p206 = por %p204, %p205
      %p208 = scmp.ne.s32.totalorder %s193, %s207
      %p209 = scmp.eq.s32.totalorder %s28, 0
      %p210 = por %p208, %p209
      %s211 = ssub.s32 %s29, %s41
      %p212 = scmp.eq.s32.totalorder %s211, 0
      %s214 = sadd.s32 %s213, 1
      %s215 = scalar_select %p212, %s213, %s214
      %p218 = pneg %p212
      %p219 = scmp.eq.s32.totalorder %s22, 1
      %p220 = por %p218, %p219
      %p221 = scmp.ne.s32.totalorder %s213, %s216
      %p222 = scmp.eq.s32.totalorder %s22, 0
      %p223 = por %p221, %p222
      %p224 = scmp.ne.s32.totalorder %s213, %s216
      %p225 = scmp.eq.s32.totalorder %s27, 1
      %p226 = por %p224, %p225
      %p227 = scmp.ne.s32.totalorder %s216, %s217
      %p228 = scmp.eq.s32.totalorder %s27, 0
      %p229 = por %p227, %p228
      %p230 = scmp.ne.s32.totalorder %s216, %s217
      %p231 = scmp.eq.s32.totalorder %s28, 1
      %p232 = por %p230, %p231
      %p234 = scmp.ne.s32.totalorder %s217, %s233
      %p235 = scmp.eq.s32.totalorder %s28, 0
      %p236 = por %p234, %p235
      %p237 = scmp.le.s32.totalorder 1, %s22
      %p238 = scmp.lt.s32.totalorder %s22, 3
      %p239 = pnand %p237, %p238
      %p240 = pneg %p239
      // Predicated region
      $region9: #{tpu_custom_call.1} parent=5 // pred_check
        _
      $region10: #{tpu_custom_call.1} parent=5 // pred_check_branch
        %242 = sbr.rel (%p239) target = $region12
      $region11: #{tpu_custom_call.1} parent=5 // pred_region
        %s243 = ssub.s32 %s22, 1
        // Predicated region
        $region13: #{tpu_custom_call.1} parent=11 // pred_check
          %p244 = pneg %p140
        $region14: #{tpu_custom_call.1} parent=11 // pred_check_branch
          %246 = sbr.rel (%p244) target = $region16
        $region15: #{tpu_custom_call.1} parent=11 // pred_region
          %s247 = smul.u32 16, %s32
          %p248 = scmp.lt.s32.totalorder %s247, 15
          %s249 = scalar_select %p248, %s247, 15
          %s250 = smul.addr %s249, 8
          %s251 = scalar_lea.vmem %s3, %s250
          %s252 = smul.u32 16, %s32
        $region16: #{tpu_custom_call.1} parent=11 // pred_fallthru
          _
        // Predicated region
        $region17: #{tpu_custom_call.1} parent=11 // pred_check
          %p253 = pneg %p161
        $region18: #{tpu_custom_call.1} parent=11 // pred_check_branch
          %255 = sbr.rel (%p253) target = $region20
        $region19: #{tpu_custom_call.1} parent=11 // pred_region
          _
        $region20: #{tpu_custom_call.1} parent=11 // pred_fallthru
          _
        // Predicated region
        $region21: #{tpu_custom_call.1} parent=11 // pred_check
          %p256 = pneg %p182
        $region22: #{tpu_custom_call.1} parent=11 // pred_check_branch
          %258 = sbr.rel (%p256) target = $region24
        $region23: #{tpu_custom_call.1} parent=11 // pred_region
          _
        $region24: #{tpu_custom_call.1} parent=11 // pred_fallthru
          _
        // Predicated region
        $region25: #{tpu_custom_call.1} parent=11 // pred_check
          %p259 = pneg %p203
        $region26: #{tpu_custom_call.1} parent=11 // pred_check_branch
          %261 = sbr.rel (%p259) target = $region28
        $region27: #{tpu_custom_call.1} parent=11 // pred_region
          _
        $region28: #{tpu_custom_call.1} parent=11 // pred_fallthru
          _
      $region12: #{tpu_custom_call.1} parent=5 // pred_fallthru
        _
      %p262 = scmp.lt.s32.totalorder %s22, 2
      // Predicated region
      $region29: #{tpu_custom_call.1} parent=5 // pred_check
        %p263 = pneg %p262
      $region30: #{tpu_custom_call.1} parent=5 // pred_check_branch
        %265 = sbr.rel (%p263) target = $region32
      $region31: #{tpu_custom_call.1} parent=5 // pred_region
        // Predicated region
        $region33: #{tpu_custom_call.1} parent=31 // pred_check
          %p266 = pneg %p56
        $region34: #{tpu_custom_call.1} parent=31 // pred_check_branch
          %268 = sbr.rel (%p266) target = $region36
        $region35: #{tpu_custom_call.1} parent=31 // pred_region
          %s269 = sand.u32 %s46, 1
          %s270 = scalar_lea.sflag [#allocation6], %s269
          %s271 = sand.u32 %s46, 1
          %s272 = smul.addr %s271, 8
          %s273 = scalar_lea.vmem [#allocation5], %s272
          %s275 = ssub.s32 128, 128
          %276 = vsyncadd %s270, %s275
          %s277 = sadd.s32 %s30, %s29
          %s278 = smul.addr %s277, 128
          %s279 = scalar_lea.hbm %s0, %s278
          %s281 = sshll.u32 %s273, 4
          %s282 = int_to_ptr.vmem [resolvable:$true] %s281
          %284 = dma.hbm_to_vmem [thread:$0]  %s279, 128, %s282, %s270
        $region36: #{tpu_custom_call.1} parent=31 // pred_fallthru
          _
        // Predicated region
        $region37: #{tpu_custom_call.1} parent=31 // pred_check
          %p285 = pneg %p82
        $region38: #{tpu_custom_call.1} parent=31 // pred_check_branch
          %287 = sbr.rel (%p285) target = $region40
        $region39: #{tpu_custom_call.1} parent=31 // pred_region
          %s288 = sand.u32 %s22, 1
          %s289 = scalar_lea.sflag [#allocation9], %s288
          %s290 = sand.u32 %s72, 1
          %s291 = smul.addr %s290, 32
          %s292 = scalar_lea.vmem [#allocation8], %s291
          %s293 = smul.u32 4, %s29
          %s295 = ssub.s32 512, 512
          %296 = vsyncadd %s289, %s295
          %s297 = smul.addr %s293, 128
          %s298 = scalar_lea.hbm %s1, %s297
          %s299 = sshll.u32 %s292, 4
          %s300 = int_to_ptr.vmem [resolvable:$true] %s299
          %305 = dma.hbm_to_vmem [thread:$0]  %s298, 512, %s300, %s289, 128, 128, 8
        $region40: #{tpu_custom_call.1} parent=31 // pred_fallthru
          _
        // Predicated region
        $region41: #{tpu_custom_call.1} parent=31 // pred_check
          %p306 = pneg %p108
        $region42: #{tpu_custom_call.1} parent=31 // pred_check_branch
          %308 = sbr.rel (%p306) target = $region44
        $region43: #{tpu_custom_call.1} parent=31 // pred_region
          %s309 = sand.u32 %s22, 1
          %s310 = scalar_lea.sflag [#allocation9], %s309
          %s311 = sand.u32 %s98, 1
          %s312 = smul.addr %s311, 32
          %s313 = scalar_lea.vmem [#allocation10], %s312
          %s314 = smul.u32 4, %s29
          %s316 = ssub.s32 512, 512
          %317 = vsyncadd %s310, %s316
          %s318 = smul.addr %s314, 128
          %s319 = scalar_lea.hbm %s2, %s318
          %s320 = sshll.u32 %s313, 4
          %s321 = int_to_ptr.vmem [resolvable:$true] %s320
          %326 = dma.hbm_to_vmem [thread:$0]  %s319, 512, %s321, %s310, 128, 128, 8
        $region44: #{tpu_custom_call.1} parent=31 // pred_fallthru
          _
      $region32: #{tpu_custom_call.1} parent=5 // pred_fallthru
        _
      %p327 = scmp.le.s32.totalorder 1, %s22
      %p328 = scmp.lt.s32.totalorder %s22, 3
      %p329 = pnand %p327, %p328
      %p330 = pneg %p329
      // Predicated region
      $region45: #{tpu_custom_call.1} parent=5 // pred_check
        _
      $region46: #{tpu_custom_call.1} parent=5 // pred_check_branch
        %332 = sbr.rel (%p329) target = $region48
      $region47: #{tpu_custom_call.1} parent=5 // pred_region
        %s333 = ssub.s32 %s22, 1
        %s334 = sand.u32 %s49, 1
        %s335 = scalar_lea.sflag [#allocation6], %s334
        %s336 = sand.u32 %s49, 1
        %s337 = smul.addr %s336, 8
        %s338 = scalar_lea.vmem [#allocation5], %s337
        // Predicated region
        $region49: #{tpu_custom_call.1} parent=47 // pred_check
          %p339 = pneg %p62
        $region50: #{tpu_custom_call.1} parent=47 // pred_check_branch
          %341 = sbr.rel (%p339) target = $region52
        $region51: #{tpu_custom_call.1} parent=47 // pred_region
          %342 = dma.done %s335, 128
        $region52: #{tpu_custom_call.1} parent=47 // pred_fallthru
          _
        %s343 = sand.u32 %s27, 1
        %s344 = scalar_lea.sflag [#allocation9], %s343
        %s345 = sand.u32 %s75, 1
        %s346 = smul.addr %s345, 32
        %s347 = scalar_lea.vmem [#allocation8], %s346
        // Predicated region
        $region53: #{tpu_custom_call.1} parent=47 // pred_check
          %p348 = pneg %p88
        $region54: #{tpu_custom_call.1} parent=47 // pred_check_branch
          %350 = sbr.rel (%p348) target = $region56
        $region55: #{tpu_custom_call.1} parent=47 // pred_region
          %351 = dma.done %s344, 512
        $region56: #{tpu_custom_call.1} parent=47 // pred_fallthru
          _
        %s352 = sand.u32 %s27, 1
        %s353 = scalar_lea.sflag [#allocation9], %s352
        %s354 = sand.u32 %s101, 1
        %s355 = smul.addr %s354, 32
        %s356 = scalar_lea.vmem [#allocation10], %s355
        // Predicated region
        $region57: #{tpu_custom_call.1} parent=47 // pred_check
          %p357 = pneg %p114
        $region58: #{tpu_custom_call.1} parent=47 // pred_check_branch
          %359 = sbr.rel (%p357) target = $region60
        $region59: #{tpu_custom_call.1} parent=47 // pred_region
          %360 = dma.done %s353, 512
        $region60: #{tpu_custom_call.1} parent=47 // pred_fallthru
          _
        %s361 = sand.u32 %s49, 1
        %s362 = scalar_lea.sflag [#allocation6], %s361
        %s363 = sand.u32 %s49, 1
        %s364 = smul.addr %s363, 8
        %s365 = scalar_lea.vmem [#allocation5], %s364
        %p366 = pneg %p62
        %p367 = pneg %p59
        %s368 = sand.u32 %s27, 1
        %s369 = scalar_lea.sflag [#allocation9], %s368
        %s370 = sand.u32 %s75, 1
        %s371 = smul.addr %s370, 32
        %s372 = scalar_lea.vmem [#allocation8], %s371
        %p373 = pneg %p88
        %p374 = pneg %p85
        %s375 = sand.u32 %s27, 1
        %s376 = scalar_lea.sflag [#allocation9], %s375
        %s377 = sand.u32 %s101, 1
        %s378 = smul.addr %s377, 32
        %s379 = scalar_lea.vmem [#allocation10], %s378
        %p380 = pneg %p114
        %p381 = pneg %p111
        %s382 = smul.u32 16, %s32
        %p383 = scmp.lt.s32.totalorder %s382, 15
        %s384 = scalar_select %p383, %s382, 15
        %s385 = smul.addr %s384, 8
        %s386 = scalar_lea.vmem %s3, %s385
        %p387 = pneg %p140
        %p388 = pneg %p137
        %p389 = pneg %p161
        %p390 = pneg %p158
        %p391 = pneg %p182
        %p392 = pneg %p179
        %p393 = pneg %p203
        %p394 = pneg %p200
        %p395 = pneg %p229
        %p396 = pneg %p226
        %s397 = sand.u32 %s216, 1
        %s398 = scalar_lea.sflag [#allocation7], %s397
        %s399 = sand.u32 %s216, 1
        %s400 = smul.addr %s399, 32
        %s401 = scalar_lea.vmem [#allocation11], %s400
        %s402 = smul.u32 4, %s31
        %s403 = smul.u32 4, %s31
        %s404 = smul.u32 16, %s32
        %p405 = scmp.lt.s32.totalorder %s404, 15
        %s406 = scalar_select %p405, %s404, 15
        %s407 = smul.addr %s406, 8
        %s408 = scalar_lea.vmem %s3, %s407
        %s409 = smul.u32 16, %s32
        %s410 = smul.u32 4, %s31
        %p413 = scmp.eq.s32.totalorder %s32, 0
        // Predicated region
        $region61: #{tpu_custom_call.1} parent=47 // pred_check
          %p414 = pneg %p413
        $region62: #{tpu_custom_call.1} parent=47 // pred_check_branch
          %416 = sbr.rel (%p414) target = $region64
        $region63: #{tpu_custom_call.1} parent=47 // pred_region
          %vm417 = vcmask 7168
          %418 = vst.msk [vmem:[#allocation2] sm:$0xff] %vm417, -1e+30
          %419 = vst.msk [vmem:[#allocation2 + $0x8] sm:$0xff] %vm417, -1e+30
          %420 = vst.msk [vmem:[#allocation2 + $0x10] sm:$0xff] %vm417, -1e+30
          %421 = vst.msk [vmem:[#allocation2 + $0x18] sm:$0xff] %vm417, -1e+30
          %422 = vst.msk [vmem:[#allocation2 + $0x20] sm:$0xff] %vm417, -1e+30
          %423 = vst.msk [vmem:[#allocation2 + $0x28] sm:$0xff] %vm417, -1e+30
          %424 = vst.msk [vmem:[#allocation2 + $0x30] sm:$0xff] %vm417, -1e+30
          %425 = vst.msk [vmem:[#allocation2 + $0x38] sm:$0xff] %vm417, -1e+30
          %426 = vst.msk [vmem:[#allocation2 + $0x40] sm:$0xff] %vm417, -1e+30
          %427 = vst.msk [vmem:[#allocation2 + $0x48] sm:$0xff] %vm417, -1e+30
          %428 = vst.msk [vmem:[#allocation2 + $0x50] sm:$0xff] %vm417, -1e+30
          %429 = vst.msk [vmem:[#allocation2 + $0x58] sm:$0xff] %vm417, -1e+30
          %430 = vst.msk [vmem:[#allocation2 + $0x60] sm:$0xff] %vm417, -1e+30
          %431 = vst.msk [vmem:[#allocation2 + $0x68] sm:$0xff] %vm417, -1e+30
          %432 = vst.msk [vmem:[#allocation2 + $0x70] sm:$0xff] %vm417, -1e+30
          %433 = vst.msk [vmem:[#allocation2 + $0x78] sm:$0xff] %vm417, -1e+30
          %434 = vst.msk [vmem:[#allocation2 + $0x80] sm:$0xff] %vm417, -1e+30
          %435 = vst.msk [vmem:[#allocation2 + $0x88] sm:$0xff] %vm417, -1e+30
          %436 = vst.msk [vmem:[#allocation2 + $0x90] sm:$0xff] %vm417, -1e+30
          %437 = vst.msk [vmem:[#allocation2 + $0x98] sm:$0xff] %vm417, -1e+30
          %438 = vst.msk [vmem:[#allocation2 + $0xa0] sm:$0xff] %vm417, -1e+30
          %439 = vst.msk [vmem:[#allocation2 + $0xa8] sm:$0xff] %vm417, -1e+30
          %440 = vst.msk [vmem:[#allocation2 + $0xb0] sm:$0xff] %vm417, -1e+30
          %441 = vst.msk [vmem:[#allocation2 + $0xb8] sm:$0xff] %vm417, -1e+30
          %442 = vst.msk [vmem:[#allocation2 + $0xc0] sm:$0xff] %vm417, -1e+30
          %443 = vst.msk [vmem:[#allocation2 + $0xc8] sm:$0xff] %vm417, -1e+30
          %444 = vst.msk [vmem:[#allocation2 + $0xd0] sm:$0xff] %vm417, -1e+30
          %445 = vst.msk [vmem:[#allocation2 + $0xd8] sm:$0xff] %vm417, -1e+30
          %446 = vst.msk [vmem:[#allocation2 + $0xe0] sm:$0xff] %vm417, -1e+30
          %447 = vst.msk [vmem:[#allocation2 + $0xe8] sm:$0xff] %vm417, -1e+30
          %448 = vst.msk [vmem:[#allocation2 + $0xf0] sm:$0xff] %vm417, -1e+30
          %449 = vst.msk [vmem:[#allocation2 + $0xf8] sm:$0xff] %vm417, -1e+30
          %450 = vst.msk [vmem:[#allocation3] sm:$0xff] %vm417, 0.0
          %451 = vst.msk [vmem:[#allocation3 + $0x8] sm:$0xff] %vm417, 0.0
          %452 = vst.msk [vmem:[#allocation3 + $0x10] sm:$0xff] %vm417, 0.0
          %453 = vst.msk [vmem:[#allocation3 + $0x18] sm:$0xff] %vm417, 0.0
          %454 = vst.msk [vmem:[#allocation3 + $0x20] sm:$0xff] %vm417, 0.0
          %455 = vst.msk [vmem:[#allocation3 + $0x28] sm:$0xff] %vm417, 0.0
          %456 = vst.msk [vmem:[#allocation3 + $0x30] sm:$0xff] %vm417, 0.0
          %457 = vst.msk [vmem:[#allocation3 + $0x38] sm:$0xff] %vm417, 0.0
          %458 = vst.msk [vmem:[#allocation3 + $0x40] sm:$0xff] %vm417, 0.0
          %459 = vst.msk [vmem:[#allocation3 + $0x48] sm:$0xff] %vm417, 0.0
          %460 = vst.msk [vmem:[#allocation3 + $0x50] sm:$0xff] %vm417, 0.0
          %461 = vst.msk [vmem:[#allocation3 + $0x58] sm:$0xff] %vm417, 0.0
          %462 = vst.msk [vmem:[#allocation3 + $0x60] sm:$0xff] %vm417, 0.0
          %463 = vst.msk [vmem:[#allocation3 + $0x68] sm:$0xff] %vm417, 0.0
          %464 = vst.msk [vmem:[#allocation3 + $0x70] sm:$0xff] %vm417, 0.0
          %465 = vst.msk [vmem:[#allocation3 + $0x78] sm:$0xff] %vm417, 0.0
          %466 = vst.msk [vmem:[#allocation3 + $0x80] sm:$0xff] %vm417, 0.0
          %467 = vst.msk [vmem:[#allocation3 + $0x88] sm:$0xff] %vm417, 0.0
          %468 = vst.msk [vmem:[#allocation3 + $0x90] sm:$0xff] %vm417, 0.0
          %469 = vst.msk [vmem:[#allocation3 + $0x98] sm:$0xff] %vm417, 0.0
          %470 = vst.msk [vmem:[#allocation3 + $0xa0] sm:$0xff] %vm417, 0.0
          %471 = vst.msk [vmem:[#allocation3 + $0xa8] sm:$0xff] %vm417, 0.0
          %472 = vst.msk [vmem:[#allocation3 + $0xb0] sm:$0xff] %vm417, 0.0
          %473 = vst.msk [vmem:[#allocation3 + $0xb8] sm:$0xff] %vm417, 0.0
          %474 = vst.msk [vmem:[#allocation3 + $0xc0] sm:$0xff] %vm417, 0.0
          %475 = vst.msk [vmem:[#allocation3 + $0xc8] sm:$0xff] %vm417, 0.0
          %476 = vst.msk [vmem:[#allocation3 + $0xd0] sm:$0xff] %vm417, 0.0
          %477 = vst.msk [vmem:[#allocation3 + $0xd8] sm:$0xff] %vm417, 0.0
          %478 = vst.msk [vmem:[#allocation3 + $0xe0] sm:$0xff] %vm417, 0.0
          %479 = vst.msk [vmem:[#allocation3 + $0xe8] sm:$0xff] %vm417, 0.0
          %480 = vst.msk [vmem:[#allocation3 + $0xf0] sm:$0xff] %vm417, 0.0
          %481 = vst.msk [vmem:[#allocation3 + $0xf8] sm:$0xff] %vm417, 0.0
          %482 = vst [vmem:[#allocation4] sm:$0xff] 0.0
          %483 = vst [vmem:[#allocation4 + $0x8] sm:$0xff] 0.0
          %484 = vst [vmem:[#allocation4 + $0x10] sm:$0xff] 0.0
          %485 = vst [vmem:[#allocation4 + $0x18] sm:$0xff] 0.0
        $region64: #{tpu_custom_call.1} parent=47 // pred_fallthru
          _
        %v486 = vld [vmem:[%s356] sm:$0xff]
        %v487 = vld [vmem:[%s356 + $0x8] sm:$0xff]
        %v488 = vld [vmem:[%s356 + $0x10] sm:$0xff]
        %v489 = vld [vmem:[%s356 + $0x18] sm:$0xff]
        %v490 = vld [vmem:[%s408] sm:$0xff]
        %v491 = vld [vmem:[%s408 + $0x8] sm:$0xff]
        %v492 = vld [vmem:[%s408 + $0x10] sm:$0xff]
        %v493 = vld [vmem:[%s408 + $0x18] sm:$0xff]
        %v494 = vld [vmem:[%s408 + $0x20] sm:$0xff]
        %v495 = vld [vmem:[%s408 + $0x28] sm:$0xff]
        %v496 = vld [vmem:[%s408 + $0x30] sm:$0xff]
        %v497 = vld [vmem:[%s408 + $0x38] sm:$0xff]
        %v498 = vld [vmem:[%s408 + $0x40] sm:$0xff]
        %v499 = vld [vmem:[%s408 + $0x48] sm:$0xff]
        %v500 = vld [vmem:[%s408 + $0x50] sm:$0xff]
        %v501 = vld [vmem:[%s408 + $0x58] sm:$0xff]
        %v502 = vld [vmem:[%s408 + $0x60] sm:$0xff]
        %v503 = vld [vmem:[%s408 + $0x68] sm:$0xff]
        %v504 = vld [vmem:[%s408 + $0x70] sm:$0xff]
        %v505 = vld [vmem:[%s408 + $0x78] sm:$0xff]
        %v510 = vcombine.high %v486, %v486
        %v512 = vunpack.c.l.s4 1966171168
        %v513 = vunpack.c.0.s8 %v512
        %v514 = vlaneseq
        %v515 = vshrl.u32 %v514, 7
        %v516 = vsub.s32 %v513, %v515
        %v517 = vrot.slane %v486, %v516
        %v519 = vunpack.c.l.s4 1966171168
        %v520 = vunpack.c.0.s8 %v519
        %v521 = vlaneseq
        %v522 = vshrl.u32 %v521, 7
        %v523 = vsub.s32 %v520, %v522
        %v524 = vrot.slane %v510, %v523
        %v525 = vcombine.high %v517, %v517
        %v526 = vcombine.high %v524, %v524
        %v528 = vunpack.c.l.s4 1966171168
        %v529 = vunpack.c.0.s8 %v528
        %v530 = vlaneseq
        %v531 = vshrl.u32 %v530, 7
        %v532 = vsub.s32 %v529, %v531
        %v533 = vrot.slane %v517, %v532
        %v535 = vunpack.c.l.s4 1966171168
        %v536 = vunpack.c.0.s8 %v535
        %v537 = vlaneseq
        %v538 = vshrl.u32 %v537, 7
        %v539 = vsub.s32 %v536, %v538
        %v540 = vrot.slane %v524, %v539
        %v542 = vunpack.c.l.s4 1966171168
        %v543 = vunpack.c.0.s8 %v542
        %v544 = vlaneseq
        %v545 = vshrl.u32 %v544, 7
        %v546 = vsub.s32 %v543, %v545
        %v547 = vrot.slane %v525, %v546
        %v549 = vunpack.c.l.s4 1966171168
        %v550 = vunpack.c.0.s8 %v549
        %v551 = vlaneseq
        %v552 = vshrl.u32 %v551, 7
        %v553 = vsub.s32 %v550, %v552
        %v554 = vrot.slane %v526, %v553
        %v555 = vcombine.high %v533, %v533
        %v556 = vcombine.high %v540, %v540
        %v557 = vcombine.high %v547, %v547
        %v558 = vcombine.high %v554, %v554
        %v559 = vcombine.high %v487, %v487
        %v561 = vunpack.c.l.s4 1966171168
        %v562 = vunpack.c.0.s8 %v561
        %v563 = vlaneseq
        %v564 = vshrl.u32 %v563, 7
        %v565 = vsub.s32 %v562, %v564
        %v566 = vrot.slane %v487, %v565
        %v568 = vunpack.c.l.s4 1966171168
        %v569 = vunpack.c.0.s8 %v568
        %v570 = vlaneseq
        %v571 = vshrl.u32 %v570, 7
        %v572 = vsub.s32 %v569, %v571
        %v573 = vrot.slane %v559, %v572
        %v574 = vcombine.high %v566, %v566
        %v575 = vcombine.high %v573, %v573
        %v577 = vunpack.c.l.s4 1966171168
        %v578 = vunpack.c.0.s8 %v577
        %v579 = vlaneseq
        %v580 = vshrl.u32 %v579, 7
        %v581 = vsub.s32 %v578, %v580
        %v582 = vrot.slane %v566, %v581
        %v584 = vunpack.c.l.s4 1966171168
        %v585 = vunpack.c.0.s8 %v584
        %v586 = vlaneseq
        %v587 = vshrl.u32 %v586, 7
        %v588 = vsub.s32 %v585, %v587
        %v589 = vrot.slane %v573, %v588
        %v591 = vunpack.c.l.s4 1966171168
        %v592 = vunpack.c.0.s8 %v591
        %v593 = vlaneseq
        %v594 = vshrl.u32 %v593, 7
        %v595 = vsub.s32 %v592, %v594
        %v596 = vrot.slane %v574, %v595
        %v598 = vunpack.c.l.s4 1966171168
        %v599 = vunpack.c.0.s8 %v598
        %v600 = vlaneseq
        %v601 = vshrl.u32 %v600, 7
        %v602 = vsub.s32 %v599, %v601
        %v603 = vrot.slane %v575, %v602
        %v604 = vcombine.high %v582, %v582
        %v605 = vcombine.high %v589, %v589
        %v606 = vcombine.high %v596, %v596
        %v607 = vcombine.high %v603, %v603
        %v608 = vcombine.high %v488, %v488
        %v610 = vunpack.c.l.s4 1966171168
        %v611 = vunpack.c.0.s8 %v610
        %v612 = vlaneseq
        %v613 = vshrl.u32 %v612, 7
        %v614 = vsub.s32 %v611, %v613
        %v615 = vrot.slane %v488, %v614
        %v617 = vunpack.c.l.s4 1966171168
        %v618 = vunpack.c.0.s8 %v617
        %v619 = vlaneseq
        %v620 = vshrl.u32 %v619, 7
        %v621 = vsub.s32 %v618, %v620
        %v622 = vrot.slane %v608, %v621
        %v623 = vcombine.high %v615, %v615
        %v624 = vcombine.high %v622, %v622
        %v626 = vunpack.c.l.s4 1966171168
        %v627 = vunpack.c.0.s8 %v626
        %v628 = vlaneseq
        %v629 = vshrl.u32 %v628, 7
        %v630 = vsub.s32 %v627, %v629
        %v631 = vrot.slane %v615, %v630
        %v633 = vunpack.c.l.s4 1966171168
        %v634 = vunpack.c.0.s8 %v633
        %v635 = vlaneseq
        %v636 = vshrl.u32 %v635, 7
        %v637 = vsub.s32 %v634, %v636
        %v638 = vrot.slane %v622, %v637
        %v640 = vunpack.c.l.s4 1966171168
        %v641 = vunpack.c.0.s8 %v640
        %v642 = vlaneseq
        %v643 = vshrl.u32 %v642, 7
        %v644 = vsub.s32 %v641, %v643
        %v645 = vrot.slane %v623, %v644
        %v647 = vunpack.c.l.s4 1966171168
        %v648 = vunpack.c.0.s8 %v647
        %v649 = vlaneseq
        %v650 = vshrl.u32 %v649, 7
        %v651 = vsub.s32 %v648, %v650
        %v652 = vrot.slane %v624, %v651
        %v653 = vcombine.high %v631, %v631
        %v654 = vcombine.high %v638, %v638
        %v655 = vcombine.high %v645, %v645
        %v656 = vcombine.high %v652, %v652
        %v657 = vcombine.high %v489, %v489
        %v659 = vunpack.c.l.s4 1966171168
        %v660 = vunpack.c.0.s8 %v659
        %v661 = vlaneseq
        %v662 = vshrl.u32 %v661, 7
        %v663 = vsub.s32 %v660, %v662
        %v664 = vrot.slane %v489, %v663
        %v666 = vunpack.c.l.s4 1966171168
        %v667 = vunpack.c.0.s8 %v666
        %v668 = vlaneseq
        %v669 = vshrl.u32 %v668, 7
        %v670 = vsub.s32 %v667, %v669
        %v671 = vrot.slane %v657, %v670
        %v672 = vcombine.high %v664, %v664
        %v673 = vcombine.high %v671, %v671
        %v675 = vunpack.c.l.s4 1966171168
        %v676 = vunpack.c.0.s8 %v675
        %v677 = vlaneseq
        %v678 = vshrl.u32 %v677, 7
        %v679 = vsub.s32 %v676, %v678
        %v680 = vrot.slane %v664, %v679
        %v682 = vunpack.c.l.s4 1966171168
        %v683 = vunpack.c.0.s8 %v682
        %v684 = vlaneseq
        %v685 = vshrl.u32 %v684, 7
        %v686 = vsub.s32 %v683, %v685
        %v687 = vrot.slane %v671, %v686
        %v689 = vunpack.c.l.s4 1966171168
        %v690 = vunpack.c.0.s8 %v689
        %v691 = vlaneseq
        %v692 = vshrl.u32 %v691, 7
        %v693 = vsub.s32 %v690, %v692
        %v694 = vrot.slane %v672, %v693
        %v696 = vunpack.c.l.s4 1966171168
        %v697 = vunpack.c.0.s8 %v696
        %v698 = vlaneseq
        %v699 = vshrl.u32 %v698, 7
        %v700 = vsub.s32 %v697, %v699
        %v701 = vrot.slane %v673, %v700
        %v702 = vcombine.high %v680, %v680
        %v703 = vcombine.high %v687, %v687
        %v704 = vcombine.high %v694, %v694
        %v705 = vcombine.high %v701, %v701
        %v706 = vlaneseq
        %v707 = vshrl.u32 %v706, 7
        %v708 = vsub.s32 0, %v707
        %v709 = vrot.slane %v533, %v708
        %v710 = vlaneseq
        %v711 = vshrl.u32 %v710, 7
        %v712 = vsub.s32 0, %v711
        %v713 = vrot.slane %v547, %v712
        %v714 = vlaneseq
        %v715 = vshrl.u32 %v714, 7
        %v716 = vsub.s32 0, %v715
        %v717 = vrot.slane %v555, %v716
        %v718 = vlaneseq
        %v719 = vshrl.u32 %v718, 7
        %v720 = vsub.s32 0, %v719
        %v721 = vrot.slane %v557, %v720
        %v722 = vlaneseq
        %v723 = vshrl.u32 %v722, 7
        %v724 = vsub.s32 0, %v723
        %v725 = vrot.slane %v540, %v724
        %v726 = vlaneseq
        %v727 = vshrl.u32 %v726, 7
        %v728 = vsub.s32 0, %v727
        %v729 = vrot.slane %v554, %v728
        %v730 = vlaneseq
        %v731 = vshrl.u32 %v730, 7
        %v732 = vsub.s32 0, %v731
        %v733 = vrot.slane %v556, %v732
        %v734 = vlaneseq
        %v735 = vshrl.u32 %v734, 7
        %v736 = vsub.s32 0, %v735
        %v737 = vrot.slane %v558, %v736
        %v738 = vlaneseq
        %v739 = vshrl.u32 %v738, 7
        %v740 = vsub.s32 0, %v739
        %v741 = vrot.slane %v582, %v740
        %v742 = vlaneseq
        %v743 = vshrl.u32 %v742, 7
        %v744 = vsub.s32 0, %v743
        %v745 = vrot.slane %v596, %v744
        %v746 = vlaneseq
        %v747 = vshrl.u32 %v746, 7
        %v748 = vsub.s32 0, %v747
        %v749 = vrot.slane %v604, %v748
        %v750 = vlaneseq
        %v751 = vshrl.u32 %v750, 7
        %v752 = vsub.s32 0, %v751
        %v753 = vrot.slane %v606, %v752
        %v754 = vlaneseq
        %v755 = vshrl.u32 %v754, 7
        %v756 = vsub.s32 0, %v755
        %v757 = vrot.slane %v589, %v756
        %v758 = vlaneseq
        %v759 = vshrl.u32 %v758, 7
        %v760 = vsub.s32 0, %v759
        %v761 = vrot.slane %v603, %v760
        %v762 = vlaneseq
        %v763 = vshrl.u32 %v762, 7
        %v764 = vsub.s32 0, %v763
        %v765 = vrot.slane %v605, %v764
        %v766 = vlaneseq
        %v767 = vshrl.u32 %v766, 7
        %v768 = vsub.s32 0, %v767
        %v769 = vrot.slane %v607, %v768
        %v770 = vlaneseq
        %v771 = vshrl.u32 %v770, 7
        %v772 = vsub.s32 0, %v771
        %v773 = vrot.slane %v631, %v772
        %v774 = vlaneseq
        %v775 = vshrl.u32 %v774, 7
        %v776 = vsub.s32 0, %v775
        %v777 = vrot.slane %v645, %v776
        %v778 = vlaneseq
        %v779 = vshrl.u32 %v778, 7
        %v780 = vsub.s32 0, %v779
        %v781 = vrot.slane %v653, %v780
        %v782 = vlaneseq
        %v783 = vshrl.u32 %v782, 7
        %v784 = vsub.s32 0, %v783
        %v785 = vrot.slane %v655, %v784
        %v786 = vlaneseq
        %v787 = vshrl.u32 %v786, 7
        %v788 = vsub.s32 0, %v787
        %v789 = vrot.slane %v638, %v788
        %v790 = vlaneseq
        %v791 = vshrl.u32 %v790, 7
        %v792 = vsub.s32 0, %v791
        %v793 = vrot.slane %v652, %v792
        %v794 = vlaneseq
        %v795 = vshrl.u32 %v794, 7
        %v796 = vsub.s32 0, %v795
        %v797 = vrot.slane %v654, %v796
        %v798 = vlaneseq
        %v799 = vshrl.u32 %v798, 7
        %v800 = vsub.s32 0, %v799
        %v801 = vrot.slane %v656, %v800
        %v802 = vlaneseq
        %v803 = vshrl.u32 %v802, 7
        %v804 = vsub.s32 0, %v803
        %v805 = vrot.slane %v680, %v804
        %v806 = vlaneseq
        %v807 = vshrl.u32 %v806, 7
        %v808 = vsub.s32 0, %v807
        %v809 = vrot.slane %v694, %v808
        %v810 = vlaneseq
        %v811 = vshrl.u32 %v810, 7
        %v812 = vsub.s32 0, %v811
        %v813 = vrot.slane %v702, %v812
        %v814 = vlaneseq
        %v815 = vshrl.u32 %v814, 7
        %v816 = vsub.s32 0, %v815
        %v817 = vrot.slane %v704, %v816
        %v818 = vlaneseq
        %v819 = vshrl.u32 %v818, 7
        %v820 = vsub.s32 0, %v819
        %v821 = vrot.slane %v687, %v820
        %v822 = vlaneseq
        %v823 = vshrl.u32 %v822, 7
        %v824 = vsub.s32 0, %v823
        %v825 = vrot.slane %v701, %v824
        %v826 = vlaneseq
        %v827 = vshrl.u32 %v826, 7
        %v828 = vsub.s32 0, %v827
        %v829 = vrot.slane %v703, %v828
        %v830 = vlaneseq
        %v831 = vshrl.u32 %v830, 7
        %v832 = vsub.s32 0, %v831
        %v833 = vrot.slane %v705, %v832
        %v866 = vadd.f32 %v709, %v490
        %v867 = vadd.f32 %v709, %v491
        %v868 = vadd.f32 %v709, %v492
        %v869 = vadd.f32 %v709, %v493
        %v870 = vadd.f32 %v709, %v494
        %v871 = vadd.f32 %v709, %v495
        %v872 = vadd.f32 %v709, %v496
        %v873 = vadd.f32 %v709, %v497
        %v874 = vadd.f32 %v709, %v498
        %v875 = vadd.f32 %v709, %v499
        %v876 = vadd.f32 %v709, %v500
        %v877 = vadd.f32 %v709, %v501
        %v878 = vadd.f32 %v709, %v502
        %v879 = vadd.f32 %v709, %v503
        %v880 = vadd.f32 %v709, %v504
        %v881 = vadd.f32 %v709, %v505
        %v882 = vadd.f32 %v713, %v490
        %v883 = vadd.f32 %v713, %v491
        %v884 = vadd.f32 %v713, %v492
        %v885 = vadd.f32 %v713, %v493
        %v886 = vadd.f32 %v713, %v494
        %v887 = vadd.f32 %v713, %v495
        %v888 = vadd.f32 %v713, %v496
        %v889 = vadd.f32 %v713, %v497
        %v890 = vadd.f32 %v713, %v498
        %v891 = vadd.f32 %v713, %v499
        %v892 = vadd.f32 %v713, %v500
        %v893 = vadd.f32 %v713, %v501
        %v894 = vadd.f32 %v713, %v502
        %v895 = vadd.f32 %v713, %v503
        %v896 = vadd.f32 %v713, %v504
        %v897 = vadd.f32 %v713, %v505
        %v898 = vadd.f32 %v717, %v490
        %v899 = vadd.f32 %v717, %v491
        %v900 = vadd.f32 %v717, %v492
        %v901 = vadd.f32 %v717, %v493
        %v902 = vadd.f32 %v717, %v494
        %v903 = vadd.f32 %v717, %v495
        %v904 = vadd.f32 %v717, %v496
        %v905 = vadd.f32 %v717, %v497
        %v906 = vadd.f32 %v717, %v498
        %v907 = vadd.f32 %v717, %v499
        %v908 = vadd.f32 %v717, %v500
        %v909 = vadd.f32 %v717, %v501
        %v910 = vadd.f32 %v717, %v502
        %v911 = vadd.f32 %v717, %v503
        %v912 = vadd.f32 %v717, %v504
        %v913 = vadd.f32 %v717, %v505
        %v914 = vadd.f32 %v721, %v490
        %v915 = vadd.f32 %v721, %v491
        %v916 = vadd.f32 %v721, %v492
        %v917 = vadd.f32 %v721, %v493
        %v918 = vadd.f32 %v721, %v494
        %v919 = vadd.f32 %v721, %v495
        %v920 = vadd.f32 %v721, %v496
        %v921 = vadd.f32 %v721, %v497
        %v922 = vadd.f32 %v721, %v498
        %v923 = vadd.f32 %v721, %v499
        %v924 = vadd.f32 %v721, %v500
        %v925 = vadd.f32 %v721, %v501
        %v926 = vadd.f32 %v721, %v502
        %v927 = vadd.f32 %v721, %v503
        %v928 = vadd.f32 %v721, %v504
        %v929 = vadd.f32 %v721, %v505
        %v930 = vadd.f32 %v725, %v490
        %v931 = vadd.f32 %v725, %v491
        %v932 = vadd.f32 %v725, %v492
        %v933 = vadd.f32 %v725, %v493
        %v934 = vadd.f32 %v725, %v494
        %v935 = vadd.f32 %v725, %v495
        %v936 = vadd.f32 %v725, %v496
        %v937 = vadd.f32 %v725, %v497
        %v938 = vadd.f32 %v725, %v498
        %v939 = vadd.f32 %v725, %v499
        %v940 = vadd.f32 %v725, %v500
        %v941 = vadd.f32 %v725, %v501
        %v942 = vadd.f32 %v725, %v502
        %v943 = vadd.f32 %v725, %v503
        %v944 = vadd.f32 %v725, %v504
        %v945 = vadd.f32 %v725, %v505
        %v946 = vadd.f32 %v729, %v490
        %v947 = vadd.f32 %v729, %v491
        %v948 = vadd.f32 %v729, %v492
        %v949 = vadd.f32 %v729, %v493
        %v950 = vadd.f32 %v729, %v494
        %v951 = vadd.f32 %v729, %v495
        %v952 = vadd.f32 %v729, %v496
        %v953 = vadd.f32 %v729, %v497
        %v954 = vadd.f32 %v729, %v498
        %v955 = vadd.f32 %v729, %v499
        %v956 = vadd.f32 %v729, %v500
        %v957 = vadd.f32 %v729, %v501
        %v958 = vadd.f32 %v729, %v502
        %v959 = vadd.f32 %v729, %v503
        %v960 = vadd.f32 %v729, %v504
        %v961 = vadd.f32 %v729, %v505
        %v962 = vadd.f32 %v733, %v490
        %v963 = vadd.f32 %v733, %v491
        %v964 = vadd.f32 %v733, %v492
        %v965 = vadd.f32 %v733, %v493
        %v966 = vadd.f32 %v733, %v494
        %v967 = vadd.f32 %v733, %v495
        %v968 = vadd.f32 %v733, %v496
        %v969 = vadd.f32 %v733, %v497
        %v970 = vadd.f32 %v733, %v498
        %v971 = vadd.f32 %v733, %v499
        %v972 = vadd.f32 %v733, %v500
        %v973 = vadd.f32 %v733, %v501
        %v974 = vadd.f32 %v733, %v502
        %v975 = vadd.f32 %v733, %v503
        %v976 = vadd.f32 %v733, %v504
        %v977 = vadd.f32 %v733, %v505
        %v978 = vadd.f32 %v737, %v490
        %v979 = vadd.f32 %v737, %v491
        %v980 = vadd.f32 %v737, %v492
        %v981 = vadd.f32 %v737, %v493
        %v982 = vadd.f32 %v737, %v494
        %v983 = vadd.f32 %v737, %v495
        %v984 = vadd.f32 %v737, %v496
        %v985 = vadd.f32 %v737, %v497
        %v986 = vadd.f32 %v737, %v498
        %v987 = vadd.f32 %v737, %v499
        %v988 = vadd.f32 %v737, %v500
        %v989 = vadd.f32 %v737, %v501
        %v990 = vadd.f32 %v737, %v502
        %v991 = vadd.f32 %v737, %v503
        %v992 = vadd.f32 %v737, %v504
        %v993 = vadd.f32 %v737, %v505
        %v994 = vadd.f32 %v741, %v490
        %v995 = vadd.f32 %v741, %v491
        %v996 = vadd.f32 %v741, %v492
        %v997 = vadd.f32 %v741, %v493
        %v998 = vadd.f32 %v741, %v494
        %v999 = vadd.f32 %v741, %v495
        %v1000 = vadd.f32 %v741, %v496
        %v1001 = vadd.f32 %v741, %v497
        %v1002 = vadd.f32 %v741, %v498
        %v1003 = vadd.f32 %v741, %v499
        %v1004 = vadd.f32 %v741, %v500
        %v1005 = vadd.f32 %v741, %v501
        %v1006 = vadd.f32 %v741, %v502
        %v1007 = vadd.f32 %v741, %v503
        %v1008 = vadd.f32 %v741, %v504
        %v1009 = vadd.f32 %v741, %v505
        %v1010 = vadd.f32 %v745, %v490
        %v1011 = vadd.f32 %v745, %v491
        %v1012 = vadd.f32 %v745, %v492
        %v1013 = vadd.f32 %v745, %v493
        %v1014 = vadd.f32 %v745, %v494
        %v1015 = vadd.f32 %v745, %v495
        %v1016 = vadd.f32 %v745, %v496
        %v1017 = vadd.f32 %v745, %v497
        %v1018 = vadd.f32 %v745, %v498
        %v1019 = vadd.f32 %v745, %v499
        %v1020 = vadd.f32 %v745, %v500
        %v1021 = vadd.f32 %v745, %v501
        %v1022 = vadd.f32 %v745, %v502
        %v1023 = vadd.f32 %v745, %v503
        %v1024 = vadd.f32 %v745, %v504
        %v1025 = vadd.f32 %v745, %v505
        %v1026 = vadd.f32 %v749, %v490
        %v1027 = vadd.f32 %v749, %v491
        %v1028 = vadd.f32 %v749, %v492
        %v1029 = vadd.f32 %v749, %v493
        %v1030 = vadd.f32 %v749, %v494
        %v1031 = vadd.f32 %v749, %v495
        %v1032 = vadd.f32 %v749, %v496
        %v1033 = vadd.f32 %v749, %v497
        %v1034 = vadd.f32 %v749, %v498
        %v1035 = vadd.f32 %v749, %v499
        %v1036 = vadd.f32 %v749, %v500
        %v1037 = vadd.f32 %v749, %v501
        %v1038 = vadd.f32 %v749, %v502
        %v1039 = vadd.f32 %v749, %v503
        %v1040 = vadd.f32 %v749, %v504
        %v1041 = vadd.f32 %v749, %v505
        %v1042 = vadd.f32 %v753, %v490
        %v1043 = vadd.f32 %v753, %v491
        %v1044 = vadd.f32 %v753, %v492
        %v1045 = vadd.f32 %v753, %v493
        %v1046 = vadd.f32 %v753, %v494
        %v1047 = vadd.f32 %v753, %v495
        %v1048 = vadd.f32 %v753, %v496
        %v1049 = vadd.f32 %v753, %v497
        %v1050 = vadd.f32 %v753, %v498
        %v1051 = vadd.f32 %v753, %v499
        %v1052 = vadd.f32 %v753, %v500
        %v1053 = vadd.f32 %v753, %v501
        %v1054 = vadd.f32 %v753, %v502
        %v1055 = vadd.f32 %v753, %v503
        %v1056 = vadd.f32 %v753, %v504
        %v1057 = vadd.f32 %v753, %v505
        %v1058 = vadd.f32 %v757, %v490
        %v1059 = vadd.f32 %v757, %v491
        %v1060 = vadd.f32 %v757, %v492
        %v1061 = vadd.f32 %v757, %v493
        %v1062 = vadd.f32 %v757, %v494
        %v1063 = vadd.f32 %v757, %v495
        %v1064 = vadd.f32 %v757, %v496
        %v1065 = vadd.f32 %v757, %v497
        %v1066 = vadd.f32 %v757, %v498
        %v1067 = vadd.f32 %v757, %v499
        %v1068 = vadd.f32 %v757, %v500
        %v1069 = vadd.f32 %v757, %v501
        %v1070 = vadd.f32 %v757, %v502
        %v1071 = vadd.f32 %v757, %v503
        %v1072 = vadd.f32 %v757, %v504
        %v1073 = vadd.f32 %v757, %v505
        %v1074 = vadd.f32 %v761, %v490
        %v1075 = vadd.f32 %v761, %v491
        %v1076 = vadd.f32 %v761, %v492
        %v1077 = vadd.f32 %v761, %v493
        %v1078 = vadd.f32 %v761, %v494
        %v1079 = vadd.f32 %v761, %v495
        %v1080 = vadd.f32 %v761, %v496
        %v1081 = vadd.f32 %v761, %v497
        %v1082 = vadd.f32 %v761, %v498
        %v1083 = vadd.f32 %v761, %v499
        %v1084 = vadd.f32 %v761, %v500
        %v1085 = vadd.f32 %v761, %v501
        %v1086 = vadd.f32 %v761, %v502
        %v1087 = vadd.f32 %v761, %v503
        %v1088 = vadd.f32 %v761, %v504
        %v1089 = vadd.f32 %v761, %v505
        %v1090 = vadd.f32 %v765, %v490
        %v1091 = vadd.f32 %v765, %v491
        %v1092 = vadd.f32 %v765, %v492
        %v1093 = vadd.f32 %v765, %v493
        %v1094 = vadd.f32 %v765, %v494
        %v1095 = vadd.f32 %v765, %v495
        %v1096 = vadd.f32 %v765, %v496
        %v1097 = vadd.f32 %v765, %v497
        %v1098 = vadd.f32 %v765, %v498
        %v1099 = vadd.f32 %v765, %v499
        %v1100 = vadd.f32 %v765, %v500
        %v1101 = vadd.f32 %v765, %v501
        %v1102 = vadd.f32 %v765, %v502
        %v1103 = vadd.f32 %v765, %v503
        %v1104 = vadd.f32 %v765, %v504
        %v1105 = vadd.f32 %v765, %v505
        %v1106 = vadd.f32 %v769, %v490
        %v1107 = vadd.f32 %v769, %v491
        %v1108 = vadd.f32 %v769, %v492
        %v1109 = vadd.f32 %v769, %v493
        %v1110 = vadd.f32 %v769, %v494
        %v1111 = vadd.f32 %v769, %v495
        %v1112 = vadd.f32 %v769, %v496
        %v1113 = vadd.f32 %v769, %v497
        %v1114 = vadd.f32 %v769, %v498
        %v1115 = vadd.f32 %v769, %v499
        %v1116 = vadd.f32 %v769, %v500
        %v1117 = vadd.f32 %v769, %v501
        %v1118 = vadd.f32 %v769, %v502
        %v1119 = vadd.f32 %v769, %v503
        %v1120 = vadd.f32 %v769, %v504
        %v1121 = vadd.f32 %v769, %v505
        %v1122 = vadd.f32 %v773, %v490
        %v1123 = vadd.f32 %v773, %v491
        %v1124 = vadd.f32 %v773, %v492
        %v1125 = vadd.f32 %v773, %v493
        %v1126 = vadd.f32 %v773, %v494
        %v1127 = vadd.f32 %v773, %v495
        %v1128 = vadd.f32 %v773, %v496
        %v1129 = vadd.f32 %v773, %v497
        %v1130 = vadd.f32 %v773, %v498
        %v1131 = vadd.f32 %v773, %v499
        %v1132 = vadd.f32 %v773, %v500
        %v1133 = vadd.f32 %v773, %v501
        %v1134 = vadd.f32 %v773, %v502
        %v1135 = vadd.f32 %v773, %v503
        %v1136 = vadd.f32 %v773, %v504
        %v1137 = vadd.f32 %v773, %v505
        %v1138 = vadd.f32 %v777, %v490
        %v1139 = vadd.f32 %v777, %v491
        %v1140 = vadd.f32 %v777, %v492
        %v1141 = vadd.f32 %v777, %v493
        %v1142 = vadd.f32 %v777, %v494
        %v1143 = vadd.f32 %v777, %v495
        %v1144 = vadd.f32 %v777, %v496
        %v1145 = vadd.f32 %v777, %v497
        %v1146 = vadd.f32 %v777, %v498
        %v1147 = vadd.f32 %v777, %v499
        %v1148 = vadd.f32 %v777, %v500
        %v1149 = vadd.f32 %v777, %v501
        %v1150 = vadd.f32 %v777, %v502
        %v1151 = vadd.f32 %v777, %v503
        %v1152 = vadd.f32 %v777, %v504
        %v1153 = vadd.f32 %v777, %v505
        %v1154 = vadd.f32 %v781, %v490
        %v1155 = vadd.f32 %v781, %v491
        %v1156 = vadd.f32 %v781, %v492
        %v1157 = vadd.f32 %v781, %v493
        %v1158 = vadd.f32 %v781, %v494
        %v1159 = vadd.f32 %v781, %v495
        %v1160 = vadd.f32 %v781, %v496
        %v1161 = vadd.f32 %v781, %v497
        %v1162 = vadd.f32 %v781, %v498
        %v1163 = vadd.f32 %v781, %v499
        %v1164 = vadd.f32 %v781, %v500
        %v1165 = vadd.f32 %v781, %v501
        %v1166 = vadd.f32 %v781, %v502
        %v1167 = vadd.f32 %v781, %v503
        %v1168 = vadd.f32 %v781, %v504
        %v1169 = vadd.f32 %v781, %v505
        %v1170 = vadd.f32 %v785, %v490
        %v1171 = vadd.f32 %v785, %v491
        %v1172 = vadd.f32 %v785, %v492
        %v1173 = vadd.f32 %v785, %v493
        %v1174 = vadd.f32 %v785, %v494
        %v1175 = vadd.f32 %v785, %v495
        %v1176 = vadd.f32 %v785, %v496
        %v1177 = vadd.f32 %v785, %v497
        %v1178 = vadd.f32 %v785, %v498
        %v1179 = vadd.f32 %v785, %v499
        %v1180 = vadd.f32 %v785, %v500
        %v1181 = vadd.f32 %v785, %v501
        %v1182 = vadd.f32 %v785, %v502
        %v1183 = vadd.f32 %v785, %v503
        %v1184 = vadd.f32 %v785, %v504
        %v1185 = vadd.f32 %v785, %v505
        %v1186 = vadd.f32 %v789, %v490
        %v1187 = vadd.f32 %v789, %v491
        %v1188 = vadd.f32 %v789, %v492
        %v1189 = vadd.f32 %v789, %v493
        %v1190 = vadd.f32 %v789, %v494
        %v1191 = vadd.f32 %v789, %v495
        %v1192 = vadd.f32 %v789, %v496
        %v1193 = vadd.f32 %v789, %v497
        %v1194 = vadd.f32 %v789, %v498
        %v1195 = vadd.f32 %v789, %v499
        %v1196 = vadd.f32 %v789, %v500
        %v1197 = vadd.f32 %v789, %v501
        %v1198 = vadd.f32 %v789, %v502
        %v1199 = vadd.f32 %v789, %v503
        %v1200 = vadd.f32 %v789, %v504
        %v1201 = vadd.f32 %v789, %v505
        %v1202 = vadd.f32 %v793, %v490
        %v1203 = vadd.f32 %v793, %v491
        %v1204 = vadd.f32 %v793, %v492
        %v1205 = vadd.f32 %v793, %v493
        %v1206 = vadd.f32 %v793, %v494
        %v1207 = vadd.f32 %v793, %v495
        %v1208 = vadd.f32 %v793, %v496
        %v1209 = vadd.f32 %v793, %v497
        %v1210 = vadd.f32 %v793, %v498
        %v1211 = vadd.f32 %v793, %v499
        %v1212 = vadd.f32 %v793, %v500
        %v1213 = vadd.f32 %v793, %v501
        %v1214 = vadd.f32 %v793, %v502
        %v1215 = vadd.f32 %v793, %v503
        %v1216 = vadd.f32 %v793, %v504
        %v1217 = vadd.f32 %v793, %v505
        %v1218 = vadd.f32 %v797, %v490
        %v1219 = vadd.f32 %v797, %v491
        %v1220 = vadd.f32 %v797, %v492
        %v1221 = vadd.f32 %v797, %v493
        %v1222 = vadd.f32 %v797, %v494
        %v1223 = vadd.f32 %v797, %v495
        %v1224 = vadd.f32 %v797, %v496
        %v1225 = vadd.f32 %v797, %v497
        %v1226 = vadd.f32 %v797, %v498
        %v1227 = vadd.f32 %v797, %v499
        %v1228 = vadd.f32 %v797, %v500
        %v1229 = vadd.f32 %v797, %v501
        %v1230 = vadd.f32 %v797, %v502
        %v1231 = vadd.f32 %v797, %v503
        %v1232 = vadd.f32 %v797, %v504
        %v1233 = vadd.f32 %v797, %v505
        %v1234 = vadd.f32 %v801, %v490
        %v1235 = vadd.f32 %v801, %v491
        %v1236 = vadd.f32 %v801, %v492
        %v1237 = vadd.f32 %v801, %v493
        %v1238 = vadd.f32 %v801, %v494
        %v1239 = vadd.f32 %v801, %v495
        %v1240 = vadd.f32 %v801, %v496
        %v1241 = vadd.f32 %v801, %v497
        %v1242 = vadd.f32 %v801, %v498
        %v1243 = vadd.f32 %v801, %v499
        %v1244 = vadd.f32 %v801, %v500
        %v1245 = vadd.f32 %v801, %v501
        %v1246 = vadd.f32 %v801, %v502
        %v1247 = vadd.f32 %v801, %v503
        %v1248 = vadd.f32 %v801, %v504
        %v1249 = vadd.f32 %v801, %v505
        %v1250 = vadd.f32 %v805, %v490
        %v1251 = vadd.f32 %v805, %v491
        %v1252 = vadd.f32 %v805, %v492
        %v1253 = vadd.f32 %v805, %v493
        %v1254 = vadd.f32 %v805, %v494
        %v1255 = vadd.f32 %v805, %v495
        %v1256 = vadd.f32 %v805, %v496
        %v1257 = vadd.f32 %v805, %v497
        %v1258 = vadd.f32 %v805, %v498
        %v1259 = vadd.f32 %v805, %v499
        %v1260 = vadd.f32 %v805, %v500
        %v1261 = vadd.f32 %v805, %v501
        %v1262 = vadd.f32 %v805, %v502
        %v1263 = vadd.f32 %v805, %v503
        %v1264 = vadd.f32 %v805, %v504
        %v1265 = vadd.f32 %v805, %v505
        %v1266 = vadd.f32 %v809, %v490
        %v1267 = vadd.f32 %v809, %v491
        %v1268 = vadd.f32 %v809, %v492
        %v1269 = vadd.f32 %v809, %v493
        %v1270 = vadd.f32 %v809, %v494
        %v1271 = vadd.f32 %v809, %v495
        %v1272 = vadd.f32 %v809, %v496
        %v1273 = vadd.f32 %v809, %v497
        %v1274 = vadd.f32 %v809, %v498
        %v1275 = vadd.f32 %v809, %v499
        %v1276 = vadd.f32 %v809, %v500
        %v1277 = vadd.f32 %v809, %v501
        %v1278 = vadd.f32 %v809, %v502
        %v1279 = vadd.f32 %v809, %v503
        %v1280 = vadd.f32 %v809, %v504
        %v1281 = vadd.f32 %v809, %v505
        %v1282 = vadd.f32 %v813, %v490
        %v1283 = vadd.f32 %v813, %v491
        %v1284 = vadd.f32 %v813, %v492
        %v1285 = vadd.f32 %v813, %v493
        %v1286 = vadd.f32 %v813, %v494
        %v1287 = vadd.f32 %v813, %v495
        %v1288 = vadd.f32 %v813, %v496
        %v1289 = vadd.f32 %v813, %v497
        %v1290 = vadd.f32 %v813, %v498
        %v1291 = vadd.f32 %v813, %v499
        %v1292 = vadd.f32 %v813, %v500
        %v1293 = vadd.f32 %v813, %v501
        %v1294 = vadd.f32 %v813, %v502
        %v1295 = vadd.f32 %v813, %v503
        %v1296 = vadd.f32 %v813, %v504
        %v1297 = vadd.f32 %v813, %v505
        %v1298 = vadd.f32 %v817, %v490
        %v1299 = vadd.f32 %v817, %v491
        %v1300 = vadd.f32 %v817, %v492
        %v1301 = vadd.f32 %v817, %v493
        %v1302 = vadd.f32 %v817, %v494
        %v1303 = vadd.f32 %v817, %v495
        %v1304 = vadd.f32 %v817, %v496
        %v1305 = vadd.f32 %v817, %v497
        %v1306 = vadd.f32 %v817, %v498
        %v1307 = vadd.f32 %v817, %v499
        %v1308 = vadd.f32 %v817, %v500
        %v1309 = vadd.f32 %v817, %v501
        %v1310 = vadd.f32 %v817, %v502
        %v1311 = vadd.f32 %v817, %v503
        %v1312 = vadd.f32 %v817, %v504
        %v1313 = vadd.f32 %v817, %v505
        %v1314 = vadd.f32 %v821, %v490
        %v1315 = vadd.f32 %v821, %v491
        %v1316 = vadd.f32 %v821, %v492
        %v1317 = vadd.f32 %v821, %v493
        %v1318 = vadd.f32 %v821, %v494
        %v1319 = vadd.f32 %v821, %v495
        %v1320 = vadd.f32 %v821, %v496
        %v1321 = vadd.f32 %v821, %v497
        %v1322 = vadd.f32 %v821, %v498
        %v1323 = vadd.f32 %v821, %v499
        %v1324 = vadd.f32 %v821, %v500
        %v1325 = vadd.f32 %v821, %v501
        %v1326 = vadd.f32 %v821, %v502
        %v1327 = vadd.f32 %v821, %v503
        %v1328 = vadd.f32 %v821, %v504
        %v1329 = vadd.f32 %v821, %v505
        %v1330 = vadd.f32 %v825, %v490
        %v1331 = vadd.f32 %v825, %v491
        %v1332 = vadd.f32 %v825, %v492
        %v1333 = vadd.f32 %v825, %v493
        %v1334 = vadd.f32 %v825, %v494
        %v1335 = vadd.f32 %v825, %v495
        %v1336 = vadd.f32 %v825, %v496
        %v1337 = vadd.f32 %v825, %v497
        %v1338 = vadd.f32 %v825, %v498
        %v1339 = vadd.f32 %v825, %v499
        %v1340 = vadd.f32 %v825, %v500
        %v1341 = vadd.f32 %v825, %v501
        %v1342 = vadd.f32 %v825, %v502
        %v1343 = vadd.f32 %v825, %v503
        %v1344 = vadd.f32 %v825, %v504
        %v1345 = vadd.f32 %v825, %v505
        %v1346 = vadd.f32 %v829, %v490
        %v1347 = vadd.f32 %v829, %v491
        %v1348 = vadd.f32 %v829, %v492
        %v1349 = vadd.f32 %v829, %v493
        %v1350 = vadd.f32 %v829, %v494
        %v1351 = vadd.f32 %v829, %v495
        %v1352 = vadd.f32 %v829, %v496
        %v1353 = vadd.f32 %v829, %v497
        %v1354 = vadd.f32 %v829, %v498
        %v1355 = vadd.f32 %v829, %v499
        %v1356 = vadd.f32 %v829, %v500
        %v1357 = vadd.f32 %v829, %v501
        %v1358 = vadd.f32 %v829, %v502
        %v1359 = vadd.f32 %v829, %v503
        %v1360 = vadd.f32 %v829, %v504
        %v1361 = vadd.f32 %v829, %v505
        %v1362 = vadd.f32 %v833, %v490
        %v1363 = vadd.f32 %v833, %v491
        %v1364 = vadd.f32 %v833, %v492
        %v1365 = vadd.f32 %v833, %v493
        %v1366 = vadd.f32 %v833, %v494
        %v1367 = vadd.f32 %v833, %v495
        %v1368 = vadd.f32 %v833, %v496
        %v1369 = vadd.f32 %v833, %v497
        %v1370 = vadd.f32 %v833, %v498
        %v1371 = vadd.f32 %v833, %v499
        %v1372 = vadd.f32 %v833, %v500
        %v1373 = vadd.f32 %v833, %v501
        %v1374 = vadd.f32 %v833, %v502
        %v1375 = vadd.f32 %v833, %v503
        %v1376 = vadd.f32 %v833, %v504
        %v1377 = vadd.f32 %v833, %v505
        %vm1378 = vcmp.gt.f32.partialorder %v866, 0.0
        %vm1379 = vcmp.gt.f32.partialorder %v867, 0.0
        %vm1380 = vcmp.gt.f32.partialorder %v868, 0.0
        %vm1381 = vcmp.gt.f32.partialorder %v869, 0.0
        %vm1382 = vcmp.gt.f32.partialorder %v870, 0.0
        %vm1383 = vcmp.gt.f32.partialorder %v871, 0.0
        %vm1384 = vcmp.gt.f32.partialorder %v872, 0.0
        %vm1385 = vcmp.gt.f32.partialorder %v873, 0.0
        %vm1386 = vcmp.gt.f32.partialorder %v874, 0.0
        %vm1387 = vcmp.gt.f32.partialorder %v875, 0.0
        %vm1388 = vcmp.gt.f32.partialorder %v876, 0.0
        %vm1389 = vcmp.gt.f32.partialorder %v877, 0.0
        %vm1390 = vcmp.gt.f32.partialorder %v878, 0.0
        %vm1391 = vcmp.gt.f32.partialorder %v879, 0.0
        %vm1392 = vcmp.gt.f32.partialorder %v880, 0.0
        %vm1393 = vcmp.gt.f32.partialorder %v881, 0.0
        %vm1394 = vcmp.gt.f32.partialorder %v882, 0.0
        %vm1395 = vcmp.gt.f32.partialorder %v883, 0.0
        %vm1396 = vcmp.gt.f32.partialorder %v884, 0.0
        %vm1397 = vcmp.gt.f32.partialorder %v885, 0.0
        %vm1398 = vcmp.gt.f32.partialorder %v886, 0.0
        %vm1399 = vcmp.gt.f32.partialorder %v887, 0.0
        %vm1400 = vcmp.gt.f32.partialorder %v888, 0.0
        %vm1401 = vcmp.gt.f32.partialorder %v889, 0.0
        %vm1402 = vcmp.gt.f32.partialorder %v890, 0.0
        %vm1403 = vcmp.gt.f32.partialorder %v891, 0.0
        %vm1404 = vcmp.gt.f32.partialorder %v892, 0.0
        %vm1405 = vcmp.gt.f32.partialorder %v893, 0.0
        %vm1406 = vcmp.gt.f32.partialorder %v894, 0.0
        %vm1407 = vcmp.gt.f32.partialorder %v895, 0.0
        %vm1408 = vcmp.gt.f32.partialorder %v896, 0.0
        %vm1409 = vcmp.gt.f32.partialorder %v897, 0.0
        %vm1410 = vcmp.gt.f32.partialorder %v898, 0.0
        %vm1411 = vcmp.gt.f32.partialorder %v899, 0.0
        %vm1412 = vcmp.gt.f32.partialorder %v900, 0.0
        %vm1413 = vcmp.gt.f32.partialorder %v901, 0.0
        %vm1414 = vcmp.gt.f32.partialorder %v902, 0.0
        %vm1415 = vcmp.gt.f32.partialorder %v903, 0.0
        %vm1416 = vcmp.gt.f32.partialorder %v904, 0.0
        %vm1417 = vcmp.gt.f32.partialorder %v905, 0.0
        %vm1418 = vcmp.gt.f32.partialorder %v906, 0.0
        %vm1419 = vcmp.gt.f32.partialorder %v907, 0.0
        %vm1420 = vcmp.gt.f32.partialorder %v908, 0.0
        %vm1421 = vcmp.gt.f32.partialorder %v909, 0.0
        %vm1422 = vcmp.gt.f32.partialorder %v910, 0.0
        %vm1423 = vcmp.gt.f32.partialorder %v911, 0.0
        %vm1424 = vcmp.gt.f32.partialorder %v912, 0.0
        %vm1425 = vcmp.gt.f32.partialorder %v913, 0.0
        %vm1426 = vcmp.gt.f32.partialorder %v914, 0.0
        %vm1427 = vcmp.gt.f32.partialorder %v915, 0.0
        %vm1428 = vcmp.gt.f32.partialorder %v916, 0.0
        %vm1429 = vcmp.gt.f32.partialorder %v917, 0.0
        %vm1430 = vcmp.gt.f32.partialorder %v918, 0.0
        %vm1431 = vcmp.gt.f32.partialorder %v919, 0.0
        %vm1432 = vcmp.gt.f32.partialorder %v920, 0.0
        %vm1433 = vcmp.gt.f32.partialorder %v921, 0.0
        %vm1434 = vcmp.gt.f32.partialorder %v922, 0.0
        %vm1435 = vcmp.gt.f32.partialorder %v923, 0.0
        %vm1436 = vcmp.gt.f32.partialorder %v924, 0.0
        %vm1437 = vcmp.gt.f32.partialorder %v925, 0.0
        %vm1438 = vcmp.gt.f32.partialorder %v926, 0.0
        %vm1439 = vcmp.gt.f32.partialorder %v927, 0.0
        %vm1440 = vcmp.gt.f32.partialorder %v928, 0.0
        %vm1441 = vcmp.gt.f32.partialorder %v929, 0.0
        %vm1442 = vcmp.gt.f32.partialorder %v930, 0.0
        %vm1443 = vcmp.gt.f32.partialorder %v931, 0.0
        %vm1444 = vcmp.gt.f32.partialorder %v932, 0.0
        %vm1445 = vcmp.gt.f32.partialorder %v933, 0.0
        %vm1446 = vcmp.gt.f32.partialorder %v934, 0.0
        %vm1447 = vcmp.gt.f32.partialorder %v935, 0.0
        %vm1448 = vcmp.gt.f32.partialorder %v936, 0.0
        %vm1449 = vcmp.gt.f32.partialorder %v937, 0.0
        %vm1450 = vcmp.gt.f32.partialorder %v938, 0.0
        %vm1451 = vcmp.gt.f32.partialorder %v939, 0.0
        %vm1452 = vcmp.gt.f32.partialorder %v940, 0.0
        %vm1453 = vcmp.gt.f32.partialorder %v941, 0.0
        %vm1454 = vcmp.gt.f32.partialorder %v942, 0.0
        %vm1455 = vcmp.gt.f32.partialorder %v943, 0.0
        %vm1456 = vcmp.gt.f32.partialorder %v944, 0.0
        %vm1457 = vcmp.gt.f32.partialorder %v945, 0.0
        %vm1458 = vcmp.gt.f32.partialorder %v946, 0.0
        %vm1459 = vcmp.gt.f32.partialorder %v947, 0.0
        %vm1460 = vcmp.gt.f32.partialorder %v948, 0.0
        %vm1461 = vcmp.gt.f32.partialorder %v949, 0.0
        %vm1462 = vcmp.gt.f32.partialorder %v950, 0.0
        %vm1463 = vcmp.gt.f32.partialorder %v951, 0.0
        %vm1464 = vcmp.gt.f32.partialorder %v952, 0.0
        %vm1465 = vcmp.gt.f32.partialorder %v953, 0.0
        %vm1466 = vcmp.gt.f32.partialorder %v954, 0.0
        %vm1467 = vcmp.gt.f32.partialorder %v955, 0.0
        %vm1468 = vcmp.gt.f32.partialorder %v956, 0.0
        %vm1469 = vcmp.gt.f32.partialorder %v957, 0.0
        %vm1470 = vcmp.gt.f32.partialorder %v958, 0.0
        %vm1471 = vcmp.gt.f32.partialorder %v959, 0.0
        %vm1472 = vcmp.gt.f32.partialorder %v960, 0.0
        %vm1473 = vcmp.gt.f32.partialorder %v961, 0.0
        %vm1474 = vcmp.gt.f32.partialorder %v962, 0.0
        %vm1475 = vcmp.gt.f32.partialorder %v963, 0.0
        %vm1476 = vcmp.gt.f32.partialorder %v964, 0.0
        %vm1477 = vcmp.gt.f32.partialorder %v965, 0.0
        %vm1478 = vcmp.gt.f32.partialorder %v966, 0.0
        %vm1479 = vcmp.gt.f32.partialorder %v967, 0.0
        %vm1480 = vcmp.gt.f32.partialorder %v968, 0.0
        %vm1481 = vcmp.gt.f32.partialorder %v969, 0.0
        %vm1482 = vcmp.gt.f32.partialorder %v970, 0.0
        %vm1483 = vcmp.gt.f32.partialorder %v971, 0.0
        %vm1484 = vcmp.gt.f32.partialorder %v972, 0.0
        %vm1485 = vcmp.gt.f32.partialorder %v973, 0.0
        %vm1486 = vcmp.gt.f32.partialorder %v974, 0.0
        %vm1487 = vcmp.gt.f32.partialorder %v975, 0.0
        %vm1488 = vcmp.gt.f32.partialorder %v976, 0.0
        %vm1489 = vcmp.gt.f32.partialorder %v977, 0.0
        %vm1490 = vcmp.gt.f32.partialorder %v978, 0.0
        %vm1491 = vcmp.gt.f32.partialorder %v979, 0.0
        %vm1492 = vcmp.gt.f32.partialorder %v980, 0.0
        %vm1493 = vcmp.gt.f32.partialorder %v981, 0.0
        %vm1494 = vcmp.gt.f32.partialorder %v982, 0.0
        %vm1495 = vcmp.gt.f32.partialorder %v983, 0.0
        %vm1496 = vcmp.gt.f32.partialorder %v984, 0.0
        %vm1497 = vcmp.gt.f32.partialorder %v985, 0.0
        %vm1498 = vcmp.gt.f32.partialorder %v986, 0.0
        %vm1499 = vcmp.gt.f32.partialorder %v987, 0.0
        %vm1500 = vcmp.gt.f32.partialorder %v988, 0.0
        %vm1501 = vcmp.gt.f32.partialorder %v989, 0.0
        %vm1502 = vcmp.gt.f32.partialorder %v990, 0.0
        %vm1503 = vcmp.gt.f32.partialorder %v991, 0.0
        %vm1504 = vcmp.gt.f32.partialorder %v992, 0.0
        %vm1505 = vcmp.gt.f32.partialorder %v993, 0.0
        %vm1506 = vcmp.gt.f32.partialorder %v994, 0.0
        %vm1507 = vcmp.gt.f32.partialorder %v995, 0.0
        %vm1508 = vcmp.gt.f32.partialorder %v996, 0.0
        %vm1509 = vcmp.gt.f32.partialorder %v997, 0.0
        %vm1510 = vcmp.gt.f32.partialorder %v998, 0.0
        %vm1511 = vcmp.gt.f32.partialorder %v999, 0.0
        %vm1512 = vcmp.gt.f32.partialorder %v1000, 0.0
        %vm1513 = vcmp.gt.f32.partialorder %v1001, 0.0
        %vm1514 = vcmp.gt.f32.partialorder %v1002, 0.0
        %vm1515 = vcmp.gt.f32.partialorder %v1003, 0.0
        %vm1516 = vcmp.gt.f32.partialorder %v1004, 0.0
        %vm1517 = vcmp.gt.f32.partialorder %v1005, 0.0
        %vm1518 = vcmp.gt.f32.partialorder %v1006, 0.0
        %vm1519 = vcmp.gt.f32.partialorder %v1007, 0.0
        %vm1520 = vcmp.gt.f32.partialorder %v1008, 0.0
        %vm1521 = vcmp.gt.f32.partialorder %v1009, 0.0
        %vm1522 = vcmp.gt.f32.partialorder %v1010, 0.0
        %vm1523 = vcmp.gt.f32.partialorder %v1011, 0.0
        %vm1524 = vcmp.gt.f32.partialorder %v1012, 0.0
        %vm1525 = vcmp.gt.f32.partialorder %v1013, 0.0
        %vm1526 = vcmp.gt.f32.partialorder %v1014, 0.0
        %vm1527 = vcmp.gt.f32.partialorder %v1015, 0.0
        %vm1528 = vcmp.gt.f32.partialorder %v1016, 0.0
        %vm1529 = vcmp.gt.f32.partialorder %v1017, 0.0
        %vm1530 = vcmp.gt.f32.partialorder %v1018, 0.0
        %vm1531 = vcmp.gt.f32.partialorder %v1019, 0.0
        %vm1532 = vcmp.gt.f32.partialorder %v1020, 0.0
        %vm1533 = vcmp.gt.f32.partialorder %v1021, 0.0
        %vm1534 = vcmp.gt.f32.partialorder %v1022, 0.0
        %vm1535 = vcmp.gt.f32.partialorder %v1023, 0.0
        %vm1536 = vcmp.gt.f32.partialorder %v1024, 0.0
        %vm1537 = vcmp.gt.f32.partialorder %v1025, 0.0
        %vm1538 = vcmp.gt.f32.partialorder %v1026, 0.0
        %vm1539 = vcmp.gt.f32.partialorder %v1027, 0.0
        %vm1540 = vcmp.gt.f32.partialorder %v1028, 0.0
        %vm1541 = vcmp.gt.f32.partialorder %v1029, 0.0
        %vm1542 = vcmp.gt.f32.partialorder %v1030, 0.0
        %vm1543 = vcmp.gt.f32.partialorder %v1031, 0.0
        %vm1544 = vcmp.gt.f32.partialorder %v1032, 0.0
        %vm1545 = vcmp.gt.f32.partialorder %v1033, 0.0
        %vm1546 = vcmp.gt.f32.partialorder %v1034, 0.0
        %vm1547 = vcmp.gt.f32.partialorder %v1035, 0.0
        %vm1548 = vcmp.gt.f32.partialorder %v1036, 0.0
        %vm1549 = vcmp.gt.f32.partialorder %v1037, 0.0
        %vm1550 = vcmp.gt.f32.partialorder %v1038, 0.0
        %vm1551 = vcmp.gt.f32.partialorder %v1039, 0.0
        %vm1552 = vcmp.gt.f32.partialorder %v1040, 0.0
        %vm1553 = vcmp.gt.f32.partialorder %v1041, 0.0
        %vm1554 = vcmp.gt.f32.partialorder %v1042, 0.0
        %vm1555 = vcmp.gt.f32.partialorder %v1043, 0.0
        %vm1556 = vcmp.gt.f32.partialorder %v1044, 0.0
        %vm1557 = vcmp.gt.f32.partialorder %v1045, 0.0
        %vm1558 = vcmp.gt.f32.partialorder %v1046, 0.0
        %vm1559 = vcmp.gt.f32.partialorder %v1047, 0.0
        %vm1560 = vcmp.gt.f32.partialorder %v1048, 0.0
        %vm1561 = vcmp.gt.f32.partialorder %v1049, 0.0
        %vm1562 = vcmp.gt.f32.partialorder %v1050, 0.0
        %vm1563 = vcmp.gt.f32.partialorder %v1051, 0.0
        %vm1564 = vcmp.gt.f32.partialorder %v1052, 0.0
        %vm1565 = vcmp.gt.f32.partialorder %v1053, 0.0
        %vm1566 = vcmp.gt.f32.partialorder %v1054, 0.0
        %vm1567 = vcmp.gt.f32.partialorder %v1055, 0.0
        %vm1568 = vcmp.gt.f32.partialorder %v1056, 0.0
        %vm1569 = vcmp.gt.f32.partialorder %v1057, 0.0
        %vm1570 = vcmp.gt.f32.partialorder %v1058, 0.0
        %vm1571 = vcmp.gt.f32.partialorder %v1059, 0.0
        %vm1572 = vcmp.gt.f32.partialorder %v1060, 0.0
        %vm1573 = vcmp.gt.f32.partialorder %v1061, 0.0
        %vm1574 = vcmp.gt.f32.partialorder %v1062, 0.0
        %vm1575 = vcmp.gt.f32.partialorder %v1063, 0.0
        %vm1576 = vcmp.gt.f32.partialorder %v1064, 0.0
        %vm1577 = vcmp.gt.f32.partialorder %v1065, 0.0
        %vm1578 = vcmp.gt.f32.partialorder %v1066, 0.0
        %vm1579 = vcmp.gt.f32.partialorder %v1067, 0.0
        %vm1580 = vcmp.gt.f32.partialorder %v1068, 0.0
        %vm1581 = vcmp.gt.f32.partialorder %v1069, 0.0
        %vm1582 = vcmp.gt.f32.partialorder %v1070, 0.0
        %vm1583 = vcmp.gt.f32.partialorder %v1071, 0.0
        %vm1584 = vcmp.gt.f32.partialorder %v1072, 0.0
        %vm1585 = vcmp.gt.f32.partialorder %v1073, 0.0
        %vm1586 = vcmp.gt.f32.partialorder %v1074, 0.0
        %vm1587 = vcmp.gt.f32.partialorder %v1075, 0.0
        %vm1588 = vcmp.gt.f32.partialorder %v1076, 0.0
        %vm1589 = vcmp.gt.f32.partialorder %v1077, 0.0
        %vm1590 = vcmp.gt.f32.partialorder %v1078, 0.0
        %vm1591 = vcmp.gt.f32.partialorder %v1079, 0.0
        %vm1592 = vcmp.gt.f32.partialorder %v1080, 0.0
        %vm1593 = vcmp.gt.f32.partialorder %v1081, 0.0
        %vm1594 = vcmp.gt.f32.partialorder %v1082, 0.0
        %vm1595 = vcmp.gt.f32.partialorder %v1083, 0.0
        %vm1596 = vcmp.gt.f32.partialorder %v1084, 0.0
        %vm1597 = vcmp.gt.f32.partialorder %v1085, 0.0
        %vm1598 = vcmp.gt.f32.partialorder %v1086, 0.0
        %vm1599 = vcmp.gt.f32.partialorder %v1087, 0.0
        %vm1600 = vcmp.gt.f32.partialorder %v1088, 0.0
        %vm1601 = vcmp.gt.f32.partialorder %v1089, 0.0
        %vm1602 = vcmp.gt.f32.partialorder %v1090, 0.0
        %vm1603 = vcmp.gt.f32.partialorder %v1091, 0.0
        %vm1604 = vcmp.gt.f32.partialorder %v1092, 0.0
        %vm1605 = vcmp.gt.f32.partialorder %v1093, 0.0
        %vm1606 = vcmp.gt.f32.partialorder %v1094, 0.0
        %vm1607 = vcmp.gt.f32.partialorder %v1095, 0.0
        %vm1608 = vcmp.gt.f32.partialorder %v1096, 0.0
        %vm1609 = vcmp.gt.f32.partialorder %v1097, 0.0
        %vm1610 = vcmp.gt.f32.partialorder %v1098, 0.0
        %vm1611 = vcmp.gt.f32.partialorder %v1099, 0.0
        %vm1612 = vcmp.gt.f32.partialorder %v1100, 0.0
        %vm1613 = vcmp.gt.f32.partialorder %v1101, 0.0
        %vm1614 = vcmp.gt.f32.partialorder %v1102, 0.0
        %vm1615 = vcmp.gt.f32.partialorder %v1103, 0.0
        %vm1616 = vcmp.gt.f32.partialorder %v1104, 0.0
        %vm1617 = vcmp.gt.f32.partialorder %v1105, 0.0
        %vm1618 = vcmp.gt.f32.partialorder %v1106, 0.0
        %vm1619 = vcmp.gt.f32.partialorder %v1107, 0.0
        %vm1620 = vcmp.gt.f32.partialorder %v1108, 0.0
        %vm1621 = vcmp.gt.f32.partialorder %v1109, 0.0
        %vm1622 = vcmp.gt.f32.partialorder %v1110, 0.0
        %vm1623 = vcmp.gt.f32.partialorder %v1111, 0.0
        %vm1624 = vcmp.gt.f32.partialorder %v1112, 0.0
        %vm1625 = vcmp.gt.f32.partialorder %v1113, 0.0
        %vm1626 = vcmp.gt.f32.partialorder %v1114, 0.0
        %vm1627 = vcmp.gt.f32.partialorder %v1115, 0.0
        %vm1628 = vcmp.gt.f32.partialorder %v1116, 0.0
        %vm1629 = vcmp.gt.f32.partialorder %v1117, 0.0
        %vm1630 = vcmp.gt.f32.partialorder %v1118, 0.0
        %vm1631 = vcmp.gt.f32.partialorder %v1119, 0.0
        %vm1632 = vcmp.gt.f32.partialorder %v1120, 0.0
        %vm1633 = vcmp.gt.f32.partialorder %v1121, 0.0
        %vm1634 = vcmp.gt.f32.partialorder %v1122, 0.0
        %vm1635 = vcmp.gt.f32.partialorder %v1123, 0.0
        %vm1636 = vcmp.gt.f32.partialorder %v1124, 0.0
        %vm1637 = vcmp.gt.f32.partialorder %v1125, 0.0
        %vm1638 = vcmp.gt.f32.partialorder %v1126, 0.0
        %vm1639 = vcmp.gt.f32.partialorder %v1127, 0.0
        %vm1640 = vcmp.gt.f32.partialorder %v1128, 0.0
        %vm1641 = vcmp.gt.f32.partialorder %v1129, 0.0
        %vm1642 = vcmp.gt.f32.partialorder %v1130, 0.0
        %vm1643 = vcmp.gt.f32.partialorder %v1131, 0.0
        %vm1644 = vcmp.gt.f32.partialorder %v1132, 0.0
        %vm1645 = vcmp.gt.f32.partialorder %v1133, 0.0
        %vm1646 = vcmp.gt.f32.partialorder %v1134, 0.0
        %vm1647 = vcmp.gt.f32.partialorder %v1135, 0.0
        %vm1648 = vcmp.gt.f32.partialorder %v1136, 0.0
        %vm1649 = vcmp.gt.f32.partialorder %v1137, 0.0
        %vm1650 = vcmp.gt.f32.partialorder %v1138, 0.0
        %vm1651 = vcmp.gt.f32.partialorder %v1139, 0.0
        %vm1652 = vcmp.gt.f32.partialorder %v1140, 0.0
        %vm1653 = vcmp.gt.f32.partialorder %v1141, 0.0
        %vm1654 = vcmp.gt.f32.partialorder %v1142, 0.0
        %vm1655 = vcmp.gt.f32.partialorder %v1143, 0.0
        %vm1656 = vcmp.gt.f32.partialorder %v1144, 0.0
        %vm1657 = vcmp.gt.f32.partialorder %v1145, 0.0
        %vm1658 = vcmp.gt.f32.partialorder %v1146, 0.0
        %vm1659 = vcmp.gt.f32.partialorder %v1147, 0.0
        %vm1660 = vcmp.gt.f32.partialorder %v1148, 0.0
        %vm1661 = vcmp.gt.f32.partialorder %v1149, 0.0
        %vm1662 = vcmp.gt.f32.partialorder %v1150, 0.0
        %vm1663 = vcmp.gt.f32.partialorder %v1151, 0.0
        %vm1664 = vcmp.gt.f32.partialorder %v1152, 0.0
        %vm1665 = vcmp.gt.f32.partialorder %v1153, 0.0
        %vm1666 = vcmp.gt.f32.partialorder %v1154, 0.0
        %vm1667 = vcmp.gt.f32.partialorder %v1155, 0.0
        %vm1668 = vcmp.gt.f32.partialorder %v1156, 0.0
        %vm1669 = vcmp.gt.f32.partialorder %v1157, 0.0
        %vm1670 = vcmp.gt.f32.partialorder %v1158, 0.0
        %vm1671 = vcmp.gt.f32.partialorder %v1159, 0.0
        %vm1672 = vcmp.gt.f32.partialorder %v1160, 0.0
        %vm1673 = vcmp.gt.f32.partialorder %v1161, 0.0
        %vm1674 = vcmp.gt.f32.partialorder %v1162, 0.0
        %vm1675 = vcmp.gt.f32.partialorder %v1163, 0.0
        %vm1676 = vcmp.gt.f32.partialorder %v1164, 0.0
        %vm1677 = vcmp.gt.f32.partialorder %v1165, 0.0
        %vm1678 = vcmp.gt.f32.partialorder %v1166, 0.0
        %vm1679 = vcmp.gt.f32.partialorder %v1167, 0.0
        %vm1680 = vcmp.gt.f32.partialorder %v1168, 0.0
        %vm1681 = vcmp.gt.f32.partialorder %v1169, 0.0
        %vm1682 = vcmp.gt.f32.partialorder %v1170, 0.0
        %vm1683 = vcmp.gt.f32.partialorder %v1171, 0.0
        %vm1684 = vcmp.gt.f32.partialorder %v1172, 0.0
        %vm1685 = vcmp.gt.f32.partialorder %v1173, 0.0
        %vm1686 = vcmp.gt.f32.partialorder %v1174, 0.0
        %vm1687 = vcmp.gt.f32.partialorder %v1175, 0.0
        %vm1688 = vcmp.gt.f32.partialorder %v1176, 0.0
        %vm1689 = vcmp.gt.f32.partialorder %v1177, 0.0
        %vm1690 = vcmp.gt.f32.partialorder %v1178, 0.0
        %vm1691 = vcmp.gt.f32.partialorder %v1179, 0.0
        %vm1692 = vcmp.gt.f32.partialorder %v1180, 0.0
        %vm1693 = vcmp.gt.f32.partialorder %v1181, 0.0
        %vm1694 = vcmp.gt.f32.partialorder %v1182, 0.0
        %vm1695 = vcmp.gt.f32.partialorder %v1183, 0.0
        %vm1696 = vcmp.gt.f32.partialorder %v1184, 0.0
        %vm1697 = vcmp.gt.f32.partialorder %v1185, 0.0
        %vm1698 = vcmp.gt.f32.partialorder %v1186, 0.0
        %vm1699 = vcmp.gt.f32.partialorder %v1187, 0.0
        %vm1700 = vcmp.gt.f32.partialorder %v1188, 0.0
        %vm1701 = vcmp.gt.f32.partialorder %v1189, 0.0
        %vm1702 = vcmp.gt.f32.partialorder %v1190, 0.0
        %vm1703 = vcmp.gt.f32.partialorder %v1191, 0.0
        %vm1704 = vcmp.gt.f32.partialorder %v1192, 0.0
        %vm1705 = vcmp.gt.f32.partialorder %v1193, 0.0
        %vm1706 = vcmp.gt.f32.partialorder %v1194, 0.0
        %vm1707 = vcmp.gt.f32.partialorder %v1195, 0.0
        %vm1708 = vcmp.gt.f32.partialorder %v1196, 0.0
        %vm1709 = vcmp.gt.f32.partialorder %v1197, 0.0
        %vm1710 = vcmp.gt.f32.partialorder %v1198, 0.0
        %vm1711 = vcmp.gt.f32.partialorder %v1199, 0.0
        %vm1712 = vcmp.gt.f32.partialorder %v1200, 0.0
        %vm1713 = vcmp.gt.f32.partialorder %v1201, 0.0
        %vm1714 = vcmp.gt.f32.partialorder %v1202, 0.0
        %vm1715 = vcmp.gt.f32.partialorder %v1203, 0.0
        %vm1716 = vcmp.gt.f32.partialorder %v1204, 0.0
        %vm1717 = vcmp.gt.f32.partialorder %v1205, 0.0
        %vm1718 = vcmp.gt.f32.partialorder %v1206, 0.0
        %vm1719 = vcmp.gt.f32.partialorder %v1207, 0.0
        %vm1720 = vcmp.gt.f32.partialorder %v1208, 0.0
        %vm1721 = vcmp.gt.f32.partialorder %v1209, 0.0
        %vm1722 = vcmp.gt.f32.partialorder %v1210, 0.0
        %vm1723 = vcmp.gt.f32.partialorder %v1211, 0.0
        %vm1724 = vcmp.gt.f32.partialorder %v1212, 0.0
        %vm1725 = vcmp.gt.f32.partialorder %v1213, 0.0
        %vm1726 = vcmp.gt.f32.partialorder %v1214, 0.0
        %vm1727 = vcmp.gt.f32.partialorder %v1215, 0.0
        %vm1728 = vcmp.gt.f32.partialorder %v1216, 0.0
        %vm1729 = vcmp.gt.f32.partialorder %v1217, 0.0
        %vm1730 = vcmp.gt.f32.partialorder %v1218, 0.0
        %vm1731 = vcmp.gt.f32.partialorder %v1219, 0.0
        %vm1732 = vcmp.gt.f32.partialorder %v1220, 0.0
        %vm1733 = vcmp.gt.f32.partialorder %v1221, 0.0
        %vm1734 = vcmp.gt.f32.partialorder %v1222, 0.0
        %vm1735 = vcmp.gt.f32.partialorder %v1223, 0.0
        %vm1736 = vcmp.gt.f32.partialorder %v1224, 0.0
        %vm1737 = vcmp.gt.f32.partialorder %v1225, 0.0
        %vm1738 = vcmp.gt.f32.partialorder %v1226, 0.0
        %vm1739 = vcmp.gt.f32.partialorder %v1227, 0.0
        %vm1740 = vcmp.gt.f32.partialorder %v1228, 0.0
        %vm1741 = vcmp.gt.f32.partialorder %v1229, 0.0
        %vm1742 = vcmp.gt.f32.partialorder %v1230, 0.0
        %vm1743 = vcmp.gt.f32.partialorder %v1231, 0.0
        %vm1744 = vcmp.gt.f32.partialorder %v1232, 0.0
        %vm1745 = vcmp.gt.f32.partialorder %v1233, 0.0
        %vm1746 = vcmp.gt.f32.partialorder %v1234, 0.0
        %vm1747 = vcmp.gt.f32.partialorder %v1235, 0.0
        %vm1748 = vcmp.gt.f32.partialorder %v1236, 0.0
        %vm1749 = vcmp.gt.f32.partialorder %v1237, 0.0
        %vm1750 = vcmp.gt.f32.partialorder %v1238, 0.0
        %vm1751 = vcmp.gt.f32.partialorder %v1239, 0.0
        %vm1752 = vcmp.gt.f32.partialorder %v1240, 0.0
        %vm1753 = vcmp.gt.f32.partialorder %v1241, 0.0
        %vm1754 = vcmp.gt.f32.partialorder %v1242, 0.0
        %vm1755 = vcmp.gt.f32.partialorder %v1243, 0.0
        %vm1756 = vcmp.gt.f32.partialorder %v1244, 0.0
        %vm1757 = vcmp.gt.f32.partialorder %v1245, 0.0
        %vm1758 = vcmp.gt.f32.partialorder %v1246, 0.0
        %vm1759 = vcmp.gt.f32.partialorder %v1247, 0.0
        %vm1760 = vcmp.gt.f32.partialorder %v1248, 0.0
        %vm1761 = vcmp.gt.f32.partialorder %v1249, 0.0
        %vm1762 = vcmp.gt.f32.partialorder %v1250, 0.0
        %vm1763 = vcmp.gt.f32.partialorder %v1251, 0.0
        %vm1764 = vcmp.gt.f32.partialorder %v1252, 0.0
        %vm1765 = vcmp.gt.f32.partialorder %v1253, 0.0
        %vm1766 = vcmp.gt.f32.partialorder %v1254, 0.0
        %vm1767 = vcmp.gt.f32.partialorder %v1255, 0.0
        %vm1768 = vcmp.gt.f32.partialorder %v1256, 0.0
        %vm1769 = vcmp.gt.f32.partialorder %v1257, 0.0
        %vm1770 = vcmp.gt.f32.partialorder %v1258, 0.0
        %vm1771 = vcmp.gt.f32.partialorder %v1259, 0.0
        %vm1772 = vcmp.gt.f32.partialorder %v1260, 0.0
        %vm1773 = vcmp.gt.f32.partialorder %v1261, 0.0
        %vm1774 = vcmp.gt.f32.partialorder %v1262, 0.0
        %vm1775 = vcmp.gt.f32.partialorder %v1263, 0.0
        %vm1776 = vcmp.gt.f32.partialorder %v1264, 0.0
        %vm1777 = vcmp.gt.f32.partialorder %v1265, 0.0
        %vm1778 = vcmp.gt.f32.partialorder %v1266, 0.0
        %vm1779 = vcmp.gt.f32.partialorder %v1267, 0.0
        %vm1780 = vcmp.gt.f32.partialorder %v1268, 0.0
        %vm1781 = vcmp.gt.f32.partialorder %v1269, 0.0
        %vm1782 = vcmp.gt.f32.partialorder %v1270, 0.0
        %vm1783 = vcmp.gt.f32.partialorder %v1271, 0.0
        %vm1784 = vcmp.gt.f32.partialorder %v1272, 0.0
        %vm1785 = vcmp.gt.f32.partialorder %v1273, 0.0
        %vm1786 = vcmp.gt.f32.partialorder %v1274, 0.0
        %vm1787 = vcmp.gt.f32.partialorder %v1275, 0.0
        %vm1788 = vcmp.gt.f32.partialorder %v1276, 0.0
        %vm1789 = vcmp.gt.f32.partialorder %v1277, 0.0
        %vm1790 = vcmp.gt.f32.partialorder %v1278, 0.0
        %vm1791 = vcmp.gt.f32.partialorder %v1279, 0.0
        %vm1792 = vcmp.gt.f32.partialorder %v1280, 0.0
        %vm1793 = vcmp.gt.f32.partialorder %v1281, 0.0
        %vm1794 = vcmp.gt.f32.partialorder %v1282, 0.0
        %vm1795 = vcmp.gt.f32.partialorder %v1283, 0.0
        %vm1796 = vcmp.gt.f32.partialorder %v1284, 0.0
        %vm1797 = vcmp.gt.f32.partialorder %v1285, 0.0
        %vm1798 = vcmp.gt.f32.partialorder %v1286, 0.0
        %vm1799 = vcmp.gt.f32.partialorder %v1287, 0.0
        %vm1800 = vcmp.gt.f32.partialorder %v1288, 0.0
        %vm1801 = vcmp.gt.f32.partialorder %v1289, 0.0
        %vm1802 = vcmp.gt.f32.partialorder %v1290, 0.0
        %vm1803 = vcmp.gt.f32.partialorder %v1291, 0.0
        %vm1804 = vcmp.gt.f32.partialorder %v1292, 0.0
        %vm1805 = vcmp.gt.f32.partialorder %v1293, 0.0
        %vm1806 = vcmp.gt.f32.partialorder %v1294, 0.0
        %vm1807 = vcmp.gt.f32.partialorder %v1295, 0.0
        %vm1808 = vcmp.gt.f32.partialorder %v1296, 0.0
        %vm1809 = vcmp.gt.f32.partialorder %v1297, 0.0
        %vm1810 = vcmp.gt.f32.partialorder %v1298, 0.0
        %vm1811 = vcmp.gt.f32.partialorder %v1299, 0.0
        %vm1812 = vcmp.gt.f32.partialorder %v1300, 0.0
        %vm1813 = vcmp.gt.f32.partialorder %v1301, 0.0
        %vm1814 = vcmp.gt.f32.partialorder %v1302, 0.0
        %vm1815 = vcmp.gt.f32.partialorder %v1303, 0.0
        %vm1816 = vcmp.gt.f32.partialorder %v1304, 0.0
        %vm1817 = vcmp.gt.f32.partialorder %v1305, 0.0
        %vm1818 = vcmp.gt.f32.partialorder %v1306, 0.0
        %vm1819 = vcmp.gt.f32.partialorder %v1307, 0.0
        %vm1820 = vcmp.gt.f32.partialorder %v1308, 0.0
        %vm1821 = vcmp.gt.f32.partialorder %v1309, 0.0
        %vm1822 = vcmp.gt.f32.partialorder %v1310, 0.0
        %vm1823 = vcmp.gt.f32.partialorder %v1311, 0.0
        %vm1824 = vcmp.gt.f32.partialorder %v1312, 0.0
        %vm1825 = vcmp.gt.f32.partialorder %v1313, 0.0
        %vm1826 = vcmp.gt.f32.partialorder %v1314, 0.0
        %vm1827 = vcmp.gt.f32.partialorder %v1315, 0.0
        %vm1828 = vcmp.gt.f32.partialorder %v1316, 0.0
        %vm1829 = vcmp.gt.f32.partialorder %v1317, 0.0
        %vm1830 = vcmp.gt.f32.partialorder %v1318, 0.0
        %vm1831 = vcmp.gt.f32.partialorder %v1319, 0.0
        %vm1832 = vcmp.gt.f32.partialorder %v1320, 0.0
        %vm1833 = vcmp.gt.f32.partialorder %v1321, 0.0
        %vm1834 = vcmp.gt.f32.partialorder %v1322, 0.0
        %vm1835 = vcmp.gt.f32.partialorder %v1323, 0.0
        %vm1836 = vcmp.gt.f32.partialorder %v1324, 0.0
        %vm1837 = vcmp.gt.f32.partialorder %v1325, 0.0
        %vm1838 = vcmp.gt.f32.partialorder %v1326, 0.0
        %vm1839 = vcmp.gt.f32.partialorder %v1327, 0.0
        %vm1840 = vcmp.gt.f32.partialorder %v1328, 0.0
        %vm1841 = vcmp.gt.f32.partialorder %v1329, 0.0
        %vm1842 = vcmp.gt.f32.partialorder %v1330, 0.0
        %vm1843 = vcmp.gt.f32.partialorder %v1331, 0.0
        %vm1844 = vcmp.gt.f32.partialorder %v1332, 0.0
        %vm1845 = vcmp.gt.f32.partialorder %v1333, 0.0
        %vm1846 = vcmp.gt.f32.partialorder %v1334, 0.0
        %vm1847 = vcmp.gt.f32.partialorder %v1335, 0.0
        %vm1848 = vcmp.gt.f32.partialorder %v1336, 0.0
        %vm1849 = vcmp.gt.f32.partialorder %v1337, 0.0
        %vm1850 = vcmp.gt.f32.partialorder %v1338, 0.0
        %vm1851 = vcmp.gt.f32.partialorder %v1339, 0.0
        %vm1852 = vcmp.gt.f32.partialorder %v1340, 0.0
        %vm1853 = vcmp.gt.f32.partialorder %v1341, 0.0
        %vm1854 = vcmp.gt.f32.partialorder %v1342, 0.0
        %vm1855 = vcmp.gt.f32.partialorder %v1343, 0.0
        %vm1856 = vcmp.gt.f32.partialorder %v1344, 0.0
        %vm1857 = vcmp.gt.f32.partialorder %v1345, 0.0
        %vm1858 = vcmp.gt.f32.partialorder %v1346, 0.0
        %vm1859 = vcmp.gt.f32.partialorder %v1347, 0.0
        %vm1860 = vcmp.gt.f32.partialorder %v1348, 0.0
        %vm1861 = vcmp.gt.f32.partialorder %v1349, 0.0
        %vm1862 = vcmp.gt.f32.partialorder %v1350, 0.0
        %vm1863 = vcmp.gt.f32.partialorder %v1351, 0.0
        %vm1864 = vcmp.gt.f32.partialorder %v1352, 0.0
        %vm1865 = vcmp.gt.f32.partialorder %v1353, 0.0
        %vm1866 = vcmp.gt.f32.partialorder %v1354, 0.0
        %vm1867 = vcmp.gt.f32.partialorder %v1355, 0.0
        %vm1868 = vcmp.gt.f32.partialorder %v1356, 0.0
        %vm1869 = vcmp.gt.f32.partialorder %v1357, 0.0
        %vm1870 = vcmp.gt.f32.partialorder %v1358, 0.0
        %vm1871 = vcmp.gt.f32.partialorder %v1359, 0.0
        %vm1872 = vcmp.gt.f32.partialorder %v1360, 0.0
        %vm1873 = vcmp.gt.f32.partialorder %v1361, 0.0
        %vm1874 = vcmp.gt.f32.partialorder %v1362, 0.0
        %vm1875 = vcmp.gt.f32.partialorder %v1363, 0.0
        %vm1876 = vcmp.gt.f32.partialorder %v1364, 0.0
        %vm1877 = vcmp.gt.f32.partialorder %v1365, 0.0
        %vm1878 = vcmp.gt.f32.partialorder %v1366, 0.0
        %vm1879 = vcmp.gt.f32.partialorder %v1367, 0.0
        %vm1880 = vcmp.gt.f32.partialorder %v1368, 0.0
        %vm1881 = vcmp.gt.f32.partialorder %v1369, 0.0
        %vm1882 = vcmp.gt.f32.partialorder %v1370, 0.0
        %vm1883 = vcmp.gt.f32.partialorder %v1371, 0.0
        %vm1884 = vcmp.gt.f32.partialorder %v1372, 0.0
        %vm1885 = vcmp.gt.f32.partialorder %v1373, 0.0
        %vm1886 = vcmp.gt.f32.partialorder %v1374, 0.0
        %vm1887 = vcmp.gt.f32.partialorder %v1375, 0.0
        %vm1888 = vcmp.gt.f32.partialorder %v1376, 0.0
        %vm1889 = vcmp.gt.f32.partialorder %v1377, 0.0
        %v1890 = vmul.f32 %v866, 0.2
        %v1891 = vmul.f32 %v867, 0.2
        %v1892 = vmul.f32 %v868, 0.2
        %v1893 = vmul.f32 %v869, 0.2
        %v1894 = vmul.f32 %v870, 0.2
        %v1895 = vmul.f32 %v871, 0.2
        %v1896 = vmul.f32 %v872, 0.2
        %v1897 = vmul.f32 %v873, 0.2
        %v1898 = vmul.f32 %v874, 0.2
        %v1899 = vmul.f32 %v875, 0.2
        %v1900 = vmul.f32 %v876, 0.2
        %v1901 = vmul.f32 %v877, 0.2
        %v1902 = vmul.f32 %v878, 0.2
        %v1903 = vmul.f32 %v879, 0.2
        %v1904 = vmul.f32 %v880, 0.2
        %v1905 = vmul.f32 %v881, 0.2
        %v1906 = vmul.f32 %v882, 0.2
        %v1907 = vmul.f32 %v883, 0.2
        %v1908 = vmul.f32 %v884, 0.2
        %v1909 = vmul.f32 %v885, 0.2
        %v1910 = vmul.f32 %v886, 0.2
        %v1911 = vmul.f32 %v887, 0.2
        %v1912 = vmul.f32 %v888, 0.2
        %v1913 = vmul.f32 %v889, 0.2
        %v1914 = vmul.f32 %v890, 0.2
        %v1915 = vmul.f32 %v891, 0.2
        %v1916 = vmul.f32 %v892, 0.2
        %v1917 = vmul.f32 %v893, 0.2
        %v1918 = vmul.f32 %v894, 0.2
        %v1919 = vmul.f32 %v895, 0.2
        %v1920 = vmul.f32 %v896, 0.2
        %v1921 = vmul.f32 %v897, 0.2
        %v1922 = vmul.f32 %v898, 0.2
        %v1923 = vmul.f32 %v899, 0.2
        %v1924 = vmul.f32 %v900, 0.2
        %v1925 = vmul.f32 %v901, 0.2
        %v1926 = vmul.f32 %v902, 0.2
        %v1927 = vmul.f32 %v903, 0.2
        %v1928 = vmul.f32 %v904, 0.2
        %v1929 = vmul.f32 %v905, 0.2
        %v1930 = vmul.f32 %v906, 0.2
        %v1931 = vmul.f32 %v907, 0.2
        %v1932 = vmul.f32 %v908, 0.2
        %v1933 = vmul.f32 %v909, 0.2
        %v1934 = vmul.f32 %v910, 0.2
        %v1935 = vmul.f32 %v911, 0.2
        %v1936 = vmul.f32 %v912, 0.2
        %v1937 = vmul.f32 %v913, 0.2
        %v1938 = vmul.f32 %v914, 0.2
        %v1939 = vmul.f32 %v915, 0.2
        %v1940 = vmul.f32 %v916, 0.2
        %v1941 = vmul.f32 %v917, 0.2
        %v1942 = vmul.f32 %v918, 0.2
        %v1943 = vmul.f32 %v919, 0.2
        %v1944 = vmul.f32 %v920, 0.2
        %v1945 = vmul.f32 %v921, 0.2
        %v1946 = vmul.f32 %v922, 0.2
        %v1947 = vmul.f32 %v923, 0.2
        %v1948 = vmul.f32 %v924, 0.2
        %v1949 = vmul.f32 %v925, 0.2
        %v1950 = vmul.f32 %v926, 0.2
        %v1951 = vmul.f32 %v927, 0.2
        %v1952 = vmul.f32 %v928, 0.2
        %v1953 = vmul.f32 %v929, 0.2
        %v1954 = vmul.f32 %v930, 0.2
        %v1955 = vmul.f32 %v931, 0.2
        %v1956 = vmul.f32 %v932, 0.2
        %v1957 = vmul.f32 %v933, 0.2
        %v1958 = vmul.f32 %v934, 0.2
        %v1959 = vmul.f32 %v935, 0.2
        %v1960 = vmul.f32 %v936, 0.2
        %v1961 = vmul.f32 %v937, 0.2
        %v1962 = vmul.f32 %v938, 0.2
        %v1963 = vmul.f32 %v939, 0.2
        %v1964 = vmul.f32 %v940, 0.2
        %v1965 = vmul.f32 %v941, 0.2
        %v1966 = vmul.f32 %v942, 0.2
        %v1967 = vmul.f32 %v943, 0.2
        %v1968 = vmul.f32 %v944, 0.2
        %v1969 = vmul.f32 %v945, 0.2
        %v1970 = vmul.f32 %v946, 0.2
        %v1971 = vmul.f32 %v947, 0.2
        %v1972 = vmul.f32 %v948, 0.2
        %v1973 = vmul.f32 %v949, 0.2
        %v1974 = vmul.f32 %v950, 0.2
        %v1975 = vmul.f32 %v951, 0.2
        %v1976 = vmul.f32 %v952, 0.2
        %v1977 = vmul.f32 %v953, 0.2
        %v1978 = vmul.f32 %v954, 0.2
        %v1979 = vmul.f32 %v955, 0.2
        %v1980 = vmul.f32 %v956, 0.2
        %v1981 = vmul.f32 %v957, 0.2
        %v1982 = vmul.f32 %v958, 0.2
        %v1983 = vmul.f32 %v959, 0.2
        %v1984 = vmul.f32 %v960, 0.2
        %v1985 = vmul.f32 %v961, 0.2
        %v1986 = vmul.f32 %v962, 0.2
        %v1987 = vmul.f32 %v963, 0.2
        %v1988 = vmul.f32 %v964, 0.2
        %v1989 = vmul.f32 %v965, 0.2
        %v1990 = vmul.f32 %v966, 0.2
        %v1991 = vmul.f32 %v967, 0.2
        %v1992 = vmul.f32 %v968, 0.2
        %v1993 = vmul.f32 %v969, 0.2
        %v1994 = vmul.f32 %v970, 0.2
        %v1995 = vmul.f32 %v971, 0.2
        %v1996 = vmul.f32 %v972, 0.2
        %v1997 = vmul.f32 %v973, 0.2
        %v1998 = vmul.f32 %v974, 0.2
        %v1999 = vmul.f32 %v975, 0.2
        %v2000 = vmul.f32 %v976, 0.2
        %v2001 = vmul.f32 %v977, 0.2
        %v2002 = vmul.f32 %v978, 0.2
        %v2003 = vmul.f32 %v979, 0.2
        %v2004 = vmul.f32 %v980, 0.2
        %v2005 = vmul.f32 %v981, 0.2
        %v2006 = vmul.f32 %v982, 0.2
        %v2007 = vmul.f32 %v983, 0.2
        %v2008 = vmul.f32 %v984, 0.2
        %v2009 = vmul.f32 %v985, 0.2
        %v2010 = vmul.f32 %v986, 0.2
        %v2011 = vmul.f32 %v987, 0.2
        %v2012 = vmul.f32 %v988, 0.2
        %v2013 = vmul.f32 %v989, 0.2
        %v2014 = vmul.f32 %v990, 0.2
        %v2015 = vmul.f32 %v991, 0.2
        %v2016 = vmul.f32 %v992, 0.2
        %v2017 = vmul.f32 %v993, 0.2
        %v2018 = vmul.f32 %v994, 0.2
        %v2019 = vmul.f32 %v995, 0.2
        %v2020 = vmul.f32 %v996, 0.2
        %v2021 = vmul.f32 %v997, 0.2
        %v2022 = vmul.f32 %v998, 0.2
        %v2023 = vmul.f32 %v999, 0.2
        %v2024 = vmul.f32 %v1000, 0.2
        %v2025 = vmul.f32 %v1001, 0.2
        %v2026 = vmul.f32 %v1002, 0.2
        %v2027 = vmul.f32 %v1003, 0.2
        %v2028 = vmul.f32 %v1004, 0.2
        %v2029 = vmul.f32 %v1005, 0.2
        %v2030 = vmul.f32 %v1006, 0.2
        %v2031 = vmul.f32 %v1007, 0.2
        %v2032 = vmul.f32 %v1008, 0.2
        %v2033 = vmul.f32 %v1009, 0.2
        %v2034 = vmul.f32 %v1010, 0.2
        %v2035 = vmul.f32 %v1011, 0.2
        %v2036 = vmul.f32 %v1012, 0.2
        %v2037 = vmul.f32 %v1013, 0.2
        %v2038 = vmul.f32 %v1014, 0.2
        %v2039 = vmul.f32 %v1015, 0.2
        %v2040 = vmul.f32 %v1016, 0.2
        %v2041 = vmul.f32 %v1017, 0.2
        %v2042 = vmul.f32 %v1018, 0.2
        %v2043 = vmul.f32 %v1019, 0.2
        %v2044 = vmul.f32 %v1020, 0.2
        %v2045 = vmul.f32 %v1021, 0.2
        %v2046 = vmul.f32 %v1022, 0.2
        %v2047 = vmul.f32 %v1023, 0.2
        %v2048 = vmul.f32 %v1024, 0.2
        %v2049 = vmul.f32 %v1025, 0.2
        %v2050 = vmul.f32 %v1026, 0.2
        %v2051 = vmul.f32 %v1027, 0.2
        %v2052 = vmul.f32 %v1028, 0.2
        %v2053 = vmul.f32 %v1029, 0.2
        %v2054 = vmul.f32 %v1030, 0.2
        %v2055 = vmul.f32 %v1031, 0.2
        %v2056 = vmul.f32 %v1032, 0.2
        %v2057 = vmul.f32 %v1033, 0.2
        %v2058 = vmul.f32 %v1034, 0.2
        %v2059 = vmul.f32 %v1035, 0.2
        %v2060 = vmul.f32 %v1036, 0.2
        %v2061 = vmul.f32 %v1037, 0.2
        %v2062 = vmul.f32 %v1038, 0.2
        %v2063 = vmul.f32 %v1039, 0.2
        %v2064 = vmul.f32 %v1040, 0.2
        %v2065 = vmul.f32 %v1041, 0.2
        %v2066 = vmul.f32 %v1042, 0.2
        %v2067 = vmul.f32 %v1043, 0.2
        %v2068 = vmul.f32 %v1044, 0.2
        %v2069 = vmul.f32 %v1045, 0.2
        %v2070 = vmul.f32 %v1046, 0.2
        %v2071 = vmul.f32 %v1047, 0.2
        %v2072 = vmul.f32 %v1048, 0.2
        %v2073 = vmul.f32 %v1049, 0.2
        %v2074 = vmul.f32 %v1050, 0.2
        %v2075 = vmul.f32 %v1051, 0.2
        %v2076 = vmul.f32 %v1052, 0.2
        %v2077 = vmul.f32 %v1053, 0.2
        %v2078 = vmul.f32 %v1054, 0.2
        %v2079 = vmul.f32 %v1055, 0.2
        %v2080 = vmul.f32 %v1056, 0.2
        %v2081 = vmul.f32 %v1057, 0.2
        %v2082 = vmul.f32 %v1058, 0.2
        %v2083 = vmul.f32 %v1059, 0.2
        %v2084 = vmul.f32 %v1060, 0.2
        %v2085 = vmul.f32 %v1061, 0.2
        %v2086 = vmul.f32 %v1062, 0.2
        %v2087 = vmul.f32 %v1063, 0.2
        %v2088 = vmul.f32 %v1064, 0.2
        %v2089 = vmul.f32 %v1065, 0.2
        %v2090 = vmul.f32 %v1066, 0.2
        %v2091 = vmul.f32 %v1067, 0.2
        %v2092 = vmul.f32 %v1068, 0.2
        %v2093 = vmul.f32 %v1069, 0.2
        %v2094 = vmul.f32 %v1070, 0.2
        %v2095 = vmul.f32 %v1071, 0.2
        %v2096 = vmul.f32 %v1072, 0.2
        %v2097 = vmul.f32 %v1073, 0.2
        %v2098 = vmul.f32 %v1074, 0.2
        %v2099 = vmul.f32 %v1075, 0.2
        %v2100 = vmul.f32 %v1076, 0.2
        %v2101 = vmul.f32 %v1077, 0.2
        %v2102 = vmul.f32 %v1078, 0.2
        %v2103 = vmul.f32 %v1079, 0.2
        %v2104 = vmul.f32 %v1080, 0.2
        %v2105 = vmul.f32 %v1081, 0.2
        %v2106 = vmul.f32 %v1082, 0.2
        %v2107 = vmul.f32 %v1083, 0.2
        %v2108 = vmul.f32 %v1084, 0.2
        %v2109 = vmul.f32 %v1085, 0.2
        %v2110 = vmul.f32 %v1086, 0.2
        %v2111 = vmul.f32 %v1087, 0.2
        %v2112 = vmul.f32 %v1088, 0.2
        %v2113 = vmul.f32 %v1089, 0.2
        %v2114 = vmul.f32 %v1090, 0.2
        %v2115 = vmul.f32 %v1091, 0.2
        %v2116 = vmul.f32 %v1092, 0.2
        %v2117 = vmul.f32 %v1093, 0.2
        %v2118 = vmul.f32 %v1094, 0.2
        %v2119 = vmul.f32 %v1095, 0.2
        %v2120 = vmul.f32 %v1096, 0.2
        %v2121 = vmul.f32 %v1097, 0.2
        %v2122 = vmul.f32 %v1098, 0.2
        %v2123 = vmul.f32 %v1099, 0.2
        %v2124 = vmul.f32 %v1100, 0.2
        %v2125 = vmul.f32 %v1101, 0.2
        %v2126 = vmul.f32 %v1102, 0.2
        %v2127 = vmul.f32 %v1103, 0.2
        %v2128 = vmul.f32 %v1104, 0.2
        %v2129 = vmul.f32 %v1105, 0.2
        %v2130 = vmul.f32 %v1106, 0.2
        %v2131 = vmul.f32 %v1107, 0.2
        %v2132 = vmul.f32 %v1108, 0.2
        %v2133 = vmul.f32 %v1109, 0.2
        %v2134 = vmul.f32 %v1110, 0.2
        %v2135 = vmul.f32 %v1111, 0.2
        %v2136 = vmul.f32 %v1112, 0.2
        %v2137 = vmul.f32 %v1113, 0.2
        %v2138 = vmul.f32 %v1114, 0.2
        %v2139 = vmul.f32 %v1115, 0.2
        %v2140 = vmul.f32 %v1116, 0.2
        %v2141 = vmul.f32 %v1117, 0.2
        %v2142 = vmul.f32 %v1118, 0.2
        %v2143 = vmul.f32 %v1119, 0.2
        %v2144 = vmul.f32 %v1120, 0.2
        %v2145 = vmul.f32 %v1121, 0.2
        %v2146 = vmul.f32 %v1122, 0.2
        %v2147 = vmul.f32 %v1123, 0.2
        %v2148 = vmul.f32 %v1124, 0.2
        %v2149 = vmul.f32 %v1125, 0.2
        %v2150 = vmul.f32 %v1126, 0.2
        %v2151 = vmul.f32 %v1127, 0.2
        %v2152 = vmul.f32 %v1128, 0.2
        %v2153 = vmul.f32 %v1129, 0.2
        %v2154 = vmul.f32 %v1130, 0.2
        %v2155 = vmul.f32 %v1131, 0.2
        %v2156 = vmul.f32 %v1132, 0.2
        %v2157 = vmul.f32 %v1133, 0.2
        %v2158 = vmul.f32 %v1134, 0.2
        %v2159 = vmul.f32 %v1135, 0.2
        %v2160 = vmul.f32 %v1136, 0.2
        %v2161 = vmul.f32 %v1137, 0.2
        %v2162 = vmul.f32 %v1138, 0.2
        %v2163 = vmul.f32 %v1139, 0.2
        %v2164 = vmul.f32 %v1140, 0.2
        %v2165 = vmul.f32 %v1141, 0.2
        %v2166 = vmul.f32 %v1142, 0.2
        %v2167 = vmul.f32 %v1143, 0.2
        %v2168 = vmul.f32 %v1144, 0.2
        %v2169 = vmul.f32 %v1145, 0.2
        %v2170 = vmul.f32 %v1146, 0.2
        %v2171 = vmul.f32 %v1147, 0.2
        %v2172 = vmul.f32 %v1148, 0.2
        %v2173 = vmul.f32 %v1149, 0.2
        %v2174 = vmul.f32 %v1150, 0.2
        %v2175 = vmul.f32 %v1151, 0.2
        %v2176 = vmul.f32 %v1152, 0.2
        %v2177 = vmul.f32 %v1153, 0.2
        %v2178 = vmul.f32 %v1154, 0.2
        %v2179 = vmul.f32 %v1155, 0.2
        %v2180 = vmul.f32 %v1156, 0.2
        %v2181 = vmul.f32 %v1157, 0.2
        %v2182 = vmul.f32 %v1158, 0.2
        %v2183 = vmul.f32 %v1159, 0.2
        %v2184 = vmul.f32 %v1160, 0.2
        %v2185 = vmul.f32 %v1161, 0.2
        %v2186 = vmul.f32 %v1162, 0.2
        %v2187 = vmul.f32 %v1163, 0.2
        %v2188 = vmul.f32 %v1164, 0.2
        %v2189 = vmul.f32 %v1165, 0.2
        %v2190 = vmul.f32 %v1166, 0.2
        %v2191 = vmul.f32 %v1167, 0.2
        %v2192 = vmul.f32 %v1168, 0.2
        %v2193 = vmul.f32 %v1169, 0.2
        %v2194 = vmul.f32 %v1170, 0.2
        %v2195 = vmul.f32 %v1171, 0.2
        %v2196 = vmul.f32 %v1172, 0.2
        %v2197 = vmul.f32 %v1173, 0.2
        %v2198 = vmul.f32 %v1174, 0.2
        %v2199 = vmul.f32 %v1175, 0.2
        %v2200 = vmul.f32 %v1176, 0.2
        %v2201 = vmul.f32 %v1177, 0.2
        %v2202 = vmul.f32 %v1178, 0.2
        %v2203 = vmul.f32 %v1179, 0.2
        %v2204 = vmul.f32 %v1180, 0.2
        %v2205 = vmul.f32 %v1181, 0.2
        %v2206 = vmul.f32 %v1182, 0.2
        %v2207 = vmul.f32 %v1183, 0.2
        %v2208 = vmul.f32 %v1184, 0.2
        %v2209 = vmul.f32 %v1185, 0.2
        %v2210 = vmul.f32 %v1186, 0.2
        %v2211 = vmul.f32 %v1187, 0.2
        %v2212 = vmul.f32 %v1188, 0.2
        %v2213 = vmul.f32 %v1189, 0.2
        %v2214 = vmul.f32 %v1190, 0.2
        %v2215 = vmul.f32 %v1191, 0.2
        %v2216 = vmul.f32 %v1192, 0.2
        %v2217 = vmul.f32 %v1193, 0.2
        %v2218 = vmul.f32 %v1194, 0.2
        %v2219 = vmul.f32 %v1195, 0.2
        %v2220 = vmul.f32 %v1196, 0.2
        %v2221 = vmul.f32 %v1197, 0.2
        %v2222 = vmul.f32 %v1198, 0.2
        %v2223 = vmul.f32 %v1199, 0.2
        %v2224 = vmul.f32 %v1200, 0.2
        %v2225 = vmul.f32 %v1201, 0.2
        %v2226 = vmul.f32 %v1202, 0.2
        %v2227 = vmul.f32 %v1203, 0.2
        %v2228 = vmul.f32 %v1204, 0.2
        %v2229 = vmul.f32 %v1205, 0.2
        %v2230 = vmul.f32 %v1206, 0.2
        %v2231 = vmul.f32 %v1207, 0.2
        %v2232 = vmul.f32 %v1208, 0.2
        %v2233 = vmul.f32 %v1209, 0.2
        %v2234 = vmul.f32 %v1210, 0.2
        %v2235 = vmul.f32 %v1211, 0.2
        %v2236 = vmul.f32 %v1212, 0.2
        %v2237 = vmul.f32 %v1213, 0.2
        %v2238 = vmul.f32 %v1214, 0.2
        %v2239 = vmul.f32 %v1215, 0.2
        %v2240 = vmul.f32 %v1216, 0.2
        %v2241 = vmul.f32 %v1217, 0.2
        %v2242 = vmul.f32 %v1218, 0.2
        %v2243 = vmul.f32 %v1219, 0.2
        %v2244 = vmul.f32 %v1220, 0.2
        %v2245 = vmul.f32 %v1221, 0.2
        %v2246 = vmul.f32 %v1222, 0.2
        %v2247 = vmul.f32 %v1223, 0.2
        %v2248 = vmul.f32 %v1224, 0.2
        %v2249 = vmul.f32 %v1225, 0.2
        %v2250 = vmul.f32 %v1226, 0.2
        %v2251 = vmul.f32 %v1227, 0.2
        %v2252 = vmul.f32 %v1228, 0.2
        %v2253 = vmul.f32 %v1229, 0.2
        %v2254 = vmul.f32 %v1230, 0.2
        %v2255 = vmul.f32 %v1231, 0.2
        %v2256 = vmul.f32 %v1232, 0.2
        %v2257 = vmul.f32 %v1233, 0.2
        %v2258 = vmul.f32 %v1234, 0.2
        %v2259 = vmul.f32 %v1235, 0.2
        %v2260 = vmul.f32 %v1236, 0.2
        %v2261 = vmul.f32 %v1237, 0.2
        %v2262 = vmul.f32 %v1238, 0.2
        %v2263 = vmul.f32 %v1239, 0.2
        %v2264 = vmul.f32 %v1240, 0.2
        %v2265 = vmul.f32 %v1241, 0.2
        %v2266 = vmul.f32 %v1242, 0.2
        %v2267 = vmul.f32 %v1243, 0.2
        %v2268 = vmul.f32 %v1244, 0.2
        %v2269 = vmul.f32 %v1245, 0.2
        %v2270 = vmul.f32 %v1246, 0.2
        %v2271 = vmul.f32 %v1247, 0.2
        %v2272 = vmul.f32 %v1248, 0.2
        %v2273 = vmul.f32 %v1249, 0.2
        %v2274 = vmul.f32 %v1250, 0.2
        %v2275 = vmul.f32 %v1251, 0.2
        %v2276 = vmul.f32 %v1252, 0.2
        %v2277 = vmul.f32 %v1253, 0.2
        %v2278 = vmul.f32 %v1254, 0.2
        %v2279 = vmul.f32 %v1255, 0.2
        %v2280 = vmul.f32 %v1256, 0.2
        %v2281 = vmul.f32 %v1257, 0.2
        %v2282 = vmul.f32 %v1258, 0.2
        %v2283 = vmul.f32 %v1259, 0.2
        %v2284 = vmul.f32 %v1260, 0.2
        %v2285 = vmul.f32 %v1261, 0.2
        %v2286 = vmul.f32 %v1262, 0.2
        %v2287 = vmul.f32 %v1263, 0.2
        %v2288 = vmul.f32 %v1264, 0.2
        %v2289 = vmul.f32 %v1265, 0.2
        %v2290 = vmul.f32 %v1266, 0.2
        %v2291 = vmul.f32 %v1267, 0.2
        %v2292 = vmul.f32 %v1268, 0.2
        %v2293 = vmul.f32 %v1269, 0.2
        %v2294 = vmul.f32 %v1270, 0.2
        %v2295 = vmul.f32 %v1271, 0.2
        %v2296 = vmul.f32 %v1272, 0.2
        %v2297 = vmul.f32 %v1273, 0.2
        %v2298 = vmul.f32 %v1274, 0.2
        %v2299 = vmul.f32 %v1275, 0.2
        %v2300 = vmul.f32 %v1276, 0.2
        %v2301 = vmul.f32 %v1277, 0.2
        %v2302 = vmul.f32 %v1278, 0.2
        %v2303 = vmul.f32 %v1279, 0.2
        %v2304 = vmul.f32 %v1280, 0.2
        %v2305 = vmul.f32 %v1281, 0.2
        %v2306 = vmul.f32 %v1282, 0.2
        %v2307 = vmul.f32 %v1283, 0.2
        %v2308 = vmul.f32 %v1284, 0.2
        %v2309 = vmul.f32 %v1285, 0.2
        %v2310 = vmul.f32 %v1286, 0.2
        %v2311 = vmul.f32 %v1287, 0.2
        %v2312 = vmul.f32 %v1288, 0.2
        %v2313 = vmul.f32 %v1289, 0.2
        %v2314 = vmul.f32 %v1290, 0.2
        %v2315 = vmul.f32 %v1291, 0.2
        %v2316 = vmul.f32 %v1292, 0.2
        %v2317 = vmul.f32 %v1293, 0.2
        %v2318 = vmul.f32 %v1294, 0.2
        %v2319 = vmul.f32 %v1295, 0.2
        %v2320 = vmul.f32 %v1296, 0.2
        %v2321 = vmul.f32 %v1297, 0.2
        %v2322 = vmul.f32 %v1298, 0.2
        %v2323 = vmul.f32 %v1299, 0.2
        %v2324 = vmul.f32 %v1300, 0.2
        %v2325 = vmul.f32 %v1301, 0.2
        %v2326 = vmul.f32 %v1302, 0.2
        %v2327 = vmul.f32 %v1303, 0.2
        %v2328 = vmul.f32 %v1304, 0.2
        %v2329 = vmul.f32 %v1305, 0.2
        %v2330 = vmul.f32 %v1306, 0.2
        %v2331 = vmul.f32 %v1307, 0.2
        %v2332 = vmul.f32 %v1308, 0.2
        %v2333 = vmul.f32 %v1309, 0.2
        %v2334 = vmul.f32 %v1310, 0.2
        %v2335 = vmul.f32 %v1311, 0.2
        %v2336 = vmul.f32 %v1312, 0.2
        %v2337 = vmul.f32 %v1313, 0.2
        %v2338 = vmul.f32 %v1314, 0.2
        %v2339 = vmul.f32 %v1315, 0.2
        %v2340 = vmul.f32 %v1316, 0.2
        %v2341 = vmul.f32 %v1317, 0.2
        %v2342 = vmul.f32 %v1318, 0.2
        %v2343 = vmul.f32 %v1319, 0.2
        %v2344 = vmul.f32 %v1320, 0.2
        %v2345 = vmul.f32 %v1321, 0.2
        %v2346 = vmul.f32 %v1322, 0.2
        %v2347 = vmul.f32 %v1323, 0.2
        %v2348 = vmul.f32 %v1324, 0.2
        %v2349 = vmul.f32 %v1325, 0.2
        %v2350 = vmul.f32 %v1326, 0.2
        %v2351 = vmul.f32 %v1327, 0.2
        %v2352 = vmul.f32 %v1328, 0.2
        %v2353 = vmul.f32 %v1329, 0.2
        %v2354 = vmul.f32 %v1330, 0.2
        %v2355 = vmul.f32 %v1331, 0.2
        %v2356 = vmul.f32 %v1332, 0.2
        %v2357 = vmul.f32 %v1333, 0.2
        %v2358 = vmul.f32 %v1334, 0.2
        %v2359 = vmul.f32 %v1335, 0.2
        %v2360 = vmul.f32 %v1336, 0.2
        %v2361 = vmul.f32 %v1337, 0.2
        %v2362 = vmul.f32 %v1338, 0.2
        %v2363 = vmul.f32 %v1339, 0.2
        %v2364 = vmul.f32 %v1340, 0.2
        %v2365 = vmul.f32 %v1341, 0.2
        %v2366 = vmul.f32 %v1342, 0.2
        %v2367 = vmul.f32 %v1343, 0.2
        %v2368 = vmul.f32 %v1344, 0.2
        %v2369 = vmul.f32 %v1345, 0.2
        %v2370 = vmul.f32 %v1346, 0.2
        %v2371 = vmul.f32 %v1347, 0.2
        %v2372 = vmul.f32 %v1348, 0.2
        %v2373 = vmul.f32 %v1349, 0.2
        %v2374 = vmul.f32 %v1350, 0.2
        %v2375 = vmul.f32 %v1351, 0.2
        %v2376 = vmul.f32 %v1352, 0.2
        %v2377 = vmul.f32 %v1353, 0.2
        %v2378 = vmul.f32 %v1354, 0.2
        %v2379 = vmul.f32 %v1355, 0.2
        %v2380 = vmul.f32 %v1356, 0.2
        %v2381 = vmul.f32 %v1357, 0.2
        %v2382 = vmul.f32 %v1358, 0.2
        %v2383 = vmul.f32 %v1359, 0.2
        %v2384 = vmul.f32 %v1360, 0.2
        %v2385 = vmul.f32 %v1361, 0.2
        %v2386 = vmul.f32 %v1362, 0.2
        %v2387 = vmul.f32 %v1363, 0.2
        %v2388 = vmul.f32 %v1364, 0.2
        %v2389 = vmul.f32 %v1365, 0.2
        %v2390 = vmul.f32 %v1366, 0.2
        %v2391 = vmul.f32 %v1367, 0.2
        %v2392 = vmul.f32 %v1368, 0.2
        %v2393 = vmul.f32 %v1369, 0.2
        %v2394 = vmul.f32 %v1370, 0.2
        %v2395 = vmul.f32 %v1371, 0.2
        %v2396 = vmul.f32 %v1372, 0.2
        %v2397 = vmul.f32 %v1373, 0.2
        %v2398 = vmul.f32 %v1374, 0.2
        %v2399 = vmul.f32 %v1375, 0.2
        %v2400 = vmul.f32 %v1376, 0.2
        %v2401 = vmul.f32 %v1377, 0.2
        %v2402 = vsel %vm1378, %v866, %v1890
        %v2403 = vsel %vm1379, %v867, %v1891
        %v2404 = vsel %vm1380, %v868, %v1892
        %v2405 = vsel %vm1381, %v869, %v1893
        %v2406 = vsel %vm1382, %v870, %v1894
        %v2407 = vsel %vm1383, %v871, %v1895
        %v2408 = vsel %vm1384, %v872, %v1896
        %v2409 = vsel %vm1385, %v873, %v1897
        %v2410 = vsel %vm1386, %v874, %v1898
        %v2411 = vsel %vm1387, %v875, %v1899
        %v2412 = vsel %vm1388, %v876, %v1900
        %v2413 = vsel %vm1389, %v877, %v1901
        %v2414 = vsel %vm1390, %v878, %v1902
        %v2415 = vsel %vm1391, %v879, %v1903
        %v2416 = vsel %vm1392, %v880, %v1904
        %v2417 = vsel %vm1393, %v881, %v1905
        %v2418 = vsel %vm1394, %v882, %v1906
        %v2419 = vsel %vm1395, %v883, %v1907
        %v2420 = vsel %vm1396, %v884, %v1908
        %v2421 = vsel %vm1397, %v885, %v1909
        %v2422 = vsel %vm1398, %v886, %v1910
        %v2423 = vsel %vm1399, %v887, %v1911
        %v2424 = vsel %vm1400, %v888, %v1912
        %v2425 = vsel %vm1401, %v889, %v1913
        %v2426 = vsel %vm1402, %v890, %v1914
        %v2427 = vsel %vm1403, %v891, %v1915
        %v2428 = vsel %vm1404, %v892, %v1916
        %v2429 = vsel %vm1405, %v893, %v1917
        %v2430 = vsel %vm1406, %v894, %v1918
        %v2431 = vsel %vm1407, %v895, %v1919
        %v2432 = vsel %vm1408, %v896, %v1920
        %v2433 = vsel %vm1409, %v897, %v1921
        %v2434 = vsel %vm1410, %v898, %v1922
        %v2435 = vsel %vm1411, %v899, %v1923
        %v2436 = vsel %vm1412, %v900, %v1924
        %v2437 = vsel %vm1413, %v901, %v1925
        %v2438 = vsel %vm1414, %v902, %v1926
        %v2439 = vsel %vm1415, %v903, %v1927
        %v2440 = vsel %vm1416, %v904, %v1928
        %v2441 = vsel %vm1417, %v905, %v1929
        %v2442 = vsel %vm1418, %v906, %v1930
        %v2443 = vsel %vm1419, %v907, %v1931
        %v2444 = vsel %vm1420, %v908, %v1932
        %v2445 = vsel %vm1421, %v909, %v1933
        %v2446 = vsel %vm1422, %v910, %v1934
        %v2447 = vsel %vm1423, %v911, %v1935
        %v2448 = vsel %vm1424, %v912, %v1936
        %v2449 = vsel %vm1425, %v913, %v1937
        %v2450 = vsel %vm1426, %v914, %v1938
        %v2451 = vsel %vm1427, %v915, %v1939
        %v2452 = vsel %vm1428, %v916, %v1940
        %v2453 = vsel %vm1429, %v917, %v1941
        %v2454 = vsel %vm1430, %v918, %v1942
        %v2455 = vsel %vm1431, %v919, %v1943
        %v2456 = vsel %vm1432, %v920, %v1944
        %v2457 = vsel %vm1433, %v921, %v1945
        %v2458 = vsel %vm1434, %v922, %v1946
        %v2459 = vsel %vm1435, %v923, %v1947
        %v2460 = vsel %vm1436, %v924, %v1948
        %v2461 = vsel %vm1437, %v925, %v1949
        %v2462 = vsel %vm1438, %v926, %v1950
        %v2463 = vsel %vm1439, %v927, %v1951
        %v2464 = vsel %vm1440, %v928, %v1952
        %v2465 = vsel %vm1441, %v929, %v1953
        %v2466 = vsel %vm1442, %v930, %v1954
        %v2467 = vsel %vm1443, %v931, %v1955
        %v2468 = vsel %vm1444, %v932, %v1956
        %v2469 = vsel %vm1445, %v933, %v1957
        %v2470 = vsel %vm1446, %v934, %v1958
        %v2471 = vsel %vm1447, %v935, %v1959
        %v2472 = vsel %vm1448, %v936, %v1960
        %v2473 = vsel %vm1449, %v937, %v1961
        %v2474 = vsel %vm1450, %v938, %v1962
        %v2475 = vsel %vm1451, %v939, %v1963
        %v2476 = vsel %vm1452, %v940, %v1964
        %v2477 = vsel %vm1453, %v941, %v1965
        %v2478 = vsel %vm1454, %v942, %v1966
        %v2479 = vsel %vm1455, %v943, %v1967
        %v2480 = vsel %vm1456, %v944, %v1968
        %v2481 = vsel %vm1457, %v945, %v1969
        %v2482 = vsel %vm1458, %v946, %v1970
        %v2483 = vsel %vm1459, %v947, %v1971
        %v2484 = vsel %vm1460, %v948, %v1972
        %v2485 = vsel %vm1461, %v949, %v1973
        %v2486 = vsel %vm1462, %v950, %v1974
        %v2487 = vsel %vm1463, %v951, %v1975
        %v2488 = vsel %vm1464, %v952, %v1976
        %v2489 = vsel %vm1465, %v953, %v1977
        %v2490 = vsel %vm1466, %v954, %v1978
        %v2491 = vsel %vm1467, %v955, %v1979
        %v2492 = vsel %vm1468, %v956, %v1980
        %v2493 = vsel %vm1469, %v957, %v1981
        %v2494 = vsel %vm1470, %v958, %v1982
        %v2495 = vsel %vm1471, %v959, %v1983
        %v2496 = vsel %vm1472, %v960, %v1984
        %v2497 = vsel %vm1473, %v961, %v1985
        %v2498 = vsel %vm1474, %v962, %v1986
        %v2499 = vsel %vm1475, %v963, %v1987
        %v2500 = vsel %vm1476, %v964, %v1988
        %v2501 = vsel %vm1477, %v965, %v1989
        %v2502 = vsel %vm1478, %v966, %v1990
        %v2503 = vsel %vm1479, %v967, %v1991
        %v2504 = vsel %vm1480, %v968, %v1992
        %v2505 = vsel %vm1481, %v969, %v1993
        %v2506 = vsel %vm1482, %v970, %v1994
        %v2507 = vsel %vm1483, %v971, %v1995
        %v2508 = vsel %vm1484, %v972, %v1996
        %v2509 = vsel %vm1485, %v973, %v1997
        %v2510 = vsel %vm1486, %v974, %v1998
        %v2511 = vsel %vm1487, %v975, %v1999
        %v2512 = vsel %vm1488, %v976, %v2000
        %v2513 = vsel %vm1489, %v977, %v2001
        %v2514 = vsel %vm1490, %v978, %v2002
        %v2515 = vsel %vm1491, %v979, %v2003
        %v2516 = vsel %vm1492, %v980, %v2004
        %v2517 = vsel %vm1493, %v981, %v2005
        %v2518 = vsel %vm1494, %v982, %v2006
        %v2519 = vsel %vm1495, %v983, %v2007
        %v2520 = vsel %vm1496, %v984, %v2008
        %v2521 = vsel %vm1497, %v985, %v2009
        %v2522 = vsel %vm1498, %v986, %v2010
        %v2523 = vsel %vm1499, %v987, %v2011
        %v2524 = vsel %vm1500, %v988, %v2012
        %v2525 = vsel %vm1501, %v989, %v2013
        %v2526 = vsel %vm1502, %v990, %v2014
        %v2527 = vsel %vm1503, %v991, %v2015
        %v2528 = vsel %vm1504, %v992, %v2016
        %v2529 = vsel %vm1505, %v993, %v2017
        %v2530 = vsel %vm1506, %v994, %v2018
        %v2531 = vsel %vm1507, %v995, %v2019
        %v2532 = vsel %vm1508, %v996, %v2020
        %v2533 = vsel %vm1509, %v997, %v2021
        %v2534 = vsel %vm1510, %v998, %v2022
        %v2535 = vsel %vm1511, %v999, %v2023
        %v2536 = vsel %vm1512, %v1000, %v2024
        %v2537 = vsel %vm1513, %v1001, %v2025
        %v2538 = vsel %vm1514, %v1002, %v2026
        %v2539 = vsel %vm1515, %v1003, %v2027
        %v2540 = vsel %vm1516, %v1004, %v2028
        %v2541 = vsel %vm1517, %v1005, %v2029
        %v2542 = vsel %vm1518, %v1006, %v2030
        %v2543 = vsel %vm1519, %v1007, %v2031
        %v2544 = vsel %vm1520, %v1008, %v2032
        %v2545 = vsel %vm1521, %v1009, %v2033
        %v2546 = vsel %vm1522, %v1010, %v2034
        %v2547 = vsel %vm1523, %v1011, %v2035
        %v2548 = vsel %vm1524, %v1012, %v2036
        %v2549 = vsel %vm1525, %v1013, %v2037
        %v2550 = vsel %vm1526, %v1014, %v2038
        %v2551 = vsel %vm1527, %v1015, %v2039
        %v2552 = vsel %vm1528, %v1016, %v2040
        %v2553 = vsel %vm1529, %v1017, %v2041
        %v2554 = vsel %vm1530, %v1018, %v2042
        %v2555 = vsel %vm1531, %v1019, %v2043
        %v2556 = vsel %vm1532, %v1020, %v2044
        %v2557 = vsel %vm1533, %v1021, %v2045
        %v2558 = vsel %vm1534, %v1022, %v2046
        %v2559 = vsel %vm1535, %v1023, %v2047
        %v2560 = vsel %vm1536, %v1024, %v2048
        %v2561 = vsel %vm1537, %v1025, %v2049
        %v2562 = vsel %vm1538, %v1026, %v2050
        %v2563 = vsel %vm1539, %v1027, %v2051
        %v2564 = vsel %vm1540, %v1028, %v2052
        %v2565 = vsel %vm1541, %v1029, %v2053
        %v2566 = vsel %vm1542, %v1030, %v2054
        %v2567 = vsel %vm1543, %v1031, %v2055
        %v2568 = vsel %vm1544, %v1032, %v2056
        %v2569 = vsel %vm1545, %v1033, %v2057
        %v2570 = vsel %vm1546, %v1034, %v2058
        %v2571 = vsel %vm1547, %v1035, %v2059
        %v2572 = vsel %vm1548, %v1036, %v2060
        %v2573 = vsel %vm1549, %v1037, %v2061
        %v2574 = vsel %vm1550, %v1038, %v2062
        %v2575 = vsel %vm1551, %v1039, %v2063
        %v2576 = vsel %vm1552, %v1040, %v2064
        %v2577 = vsel %vm1553, %v1041, %v2065
        %v2578 = vsel %vm1554, %v1042, %v2066
        %v2579 = vsel %vm1555, %v1043, %v2067
        %v2580 = vsel %vm1556, %v1044, %v2068
        %v2581 = vsel %vm1557, %v1045, %v2069
        %v2582 = vsel %vm1558, %v1046, %v2070
        %v2583 = vsel %vm1559, %v1047, %v2071
        %v2584 = vsel %vm1560, %v1048, %v2072
        %v2585 = vsel %vm1561, %v1049, %v2073
        %v2586 = vsel %vm1562, %v1050, %v2074
        %v2587 = vsel %vm1563, %v1051, %v2075
        %v2588 = vsel %vm1564, %v1052, %v2076
        %v2589 = vsel %vm1565, %v1053, %v2077
        %v2590 = vsel %vm1566, %v1054, %v2078
        %v2591 = vsel %vm1567, %v1055, %v2079
        %v2592 = vsel %vm1568, %v1056, %v2080
        %v2593 = vsel %vm1569, %v1057, %v2081
        %v2594 = vsel %vm1570, %v1058, %v2082
        %v2595 = vsel %vm1571, %v1059, %v2083
        %v2596 = vsel %vm1572, %v1060, %v2084
        %v2597 = vsel %vm1573, %v1061, %v2085
        %v2598 = vsel %vm1574, %v1062, %v2086
        %v2599 = vsel %vm1575, %v1063, %v2087
        %v2600 = vsel %vm1576, %v1064, %v2088
        %v2601 = vsel %vm1577, %v1065, %v2089
        %v2602 = vsel %vm1578, %v1066, %v2090
        %v2603 = vsel %vm1579, %v1067, %v2091
        %v2604 = vsel %vm1580, %v1068, %v2092
        %v2605 = vsel %vm1581, %v1069, %v2093
        %v2606 = vsel %vm1582, %v1070, %v2094
        %v2607 = vsel %vm1583, %v1071, %v2095
        %v2608 = vsel %vm1584, %v1072, %v2096
        %v2609 = vsel %vm1585, %v1073, %v2097
        %v2610 = vsel %vm1586, %v1074, %v2098
        %v2611 = vsel %vm1587, %v1075, %v2099
        %v2612 = vsel %vm1588, %v1076, %v2100
        %v2613 = vsel %vm1589, %v1077, %v2101
        %v2614 = vsel %vm1590, %v1078, %v2102
        %v2615 = vsel %vm1591, %v1079, %v2103
        %v2616 = vsel %vm1592, %v1080, %v2104
        %v2617 = vsel %vm1593, %v1081, %v2105
        %v2618 = vsel %vm1594, %v1082, %v2106
        %v2619 = vsel %vm1595, %v1083, %v2107
        %v2620 = vsel %vm1596, %v1084, %v2108
        %v2621 = vsel %vm1597, %v1085, %v2109
        %v2622 = vsel %vm1598, %v1086, %v2110
        %v2623 = vsel %vm1599, %v1087, %v2111
        %v2624 = vsel %vm1600, %v1088, %v2112
        %v2625 = vsel %vm1601, %v1089, %v2113
        %v2626 = vsel %vm1602, %v1090, %v2114
        %v2627 = vsel %vm1603, %v1091, %v2115
        %v2628 = vsel %vm1604, %v1092, %v2116
        %v2629 = vsel %vm1605, %v1093, %v2117
        %v2630 = vsel %vm1606, %v1094, %v2118
        %v2631 = vsel %vm1607, %v1095, %v2119
        %v2632 = vsel %vm1608, %v1096, %v2120
        %v2633 = vsel %vm1609, %v1097, %v2121
        %v2634 = vsel %vm1610, %v1098, %v2122
        %v2635 = vsel %vm1611, %v1099, %v2123
        %v2636 = vsel %vm1612, %v1100, %v2124
        %v2637 = vsel %vm1613, %v1101, %v2125
        %v2638 = vsel %vm1614, %v1102, %v2126
        %v2639 = vsel %vm1615, %v1103, %v2127
        %v2640 = vsel %vm1616, %v1104, %v2128
        %v2641 = vsel %vm1617, %v1105, %v2129
        %v2642 = vsel %vm1618, %v1106, %v2130
        %v2643 = vsel %vm1619, %v1107, %v2131
        %v2644 = vsel %vm1620, %v1108, %v2132
        %v2645 = vsel %vm1621, %v1109, %v2133
        %v2646 = vsel %vm1622, %v1110, %v2134
        %v2647 = vsel %vm1623, %v1111, %v2135
        %v2648 = vsel %vm1624, %v1112, %v2136
        %v2649 = vsel %vm1625, %v1113, %v2137
        %v2650 = vsel %vm1626, %v1114, %v2138
        %v2651 = vsel %vm1627, %v1115, %v2139
        %v2652 = vsel %vm1628, %v1116, %v2140
        %v2653 = vsel %vm1629, %v1117, %v2141
        %v2654 = vsel %vm1630, %v1118, %v2142
        %v2655 = vsel %vm1631, %v1119, %v2143
        %v2656 = vsel %vm1632, %v1120, %v2144
        %v2657 = vsel %vm1633, %v1121, %v2145
        %v2658 = vsel %vm1634, %v1122, %v2146
        %v2659 = vsel %vm1635, %v1123, %v2147
        %v2660 = vsel %vm1636, %v1124, %v2148
        %v2661 = vsel %vm1637, %v1125, %v2149
        %v2662 = vsel %vm1638, %v1126, %v2150
        %v2663 = vsel %vm1639, %v1127, %v2151
        %v2664 = vsel %vm1640, %v1128, %v2152
        %v2665 = vsel %vm1641, %v1129, %v2153
        %v2666 = vsel %vm1642, %v1130, %v2154
        %v2667 = vsel %vm1643, %v1131, %v2155
        %v2668 = vsel %vm1644, %v1132, %v2156
        %v2669 = vsel %vm1645, %v1133, %v2157
        %v2670 = vsel %vm1646, %v1134, %v2158
        %v2671 = vsel %vm1647, %v1135, %v2159
        %v2672 = vsel %vm1648, %v1136, %v2160
        %v2673 = vsel %vm1649, %v1137, %v2161
        %v2674 = vsel %vm1650, %v1138, %v2162
        %v2675 = vsel %vm1651, %v1139, %v2163
        %v2676 = vsel %vm1652, %v1140, %v2164
        %v2677 = vsel %vm1653, %v1141, %v2165
        %v2678 = vsel %vm1654, %v1142, %v2166
        %v2679 = vsel %vm1655, %v1143, %v2167
        %v2680 = vsel %vm1656, %v1144, %v2168
        %v2681 = vsel %vm1657, %v1145, %v2169
        %v2682 = vsel %vm1658, %v1146, %v2170
        %v2683 = vsel %vm1659, %v1147, %v2171
        %v2684 = vsel %vm1660, %v1148, %v2172
        %v2685 = vsel %vm1661, %v1149, %v2173
        %v2686 = vsel %vm1662, %v1150, %v2174
        %v2687 = vsel %vm1663, %v1151, %v2175
        %v2688 = vsel %vm1664, %v1152, %v2176
        %v2689 = vsel %vm1665, %v1153, %v2177
        %v2690 = vsel %vm1666, %v1154, %v2178
        %v2691 = vsel %vm1667, %v1155, %v2179
        %v2692 = vsel %vm1668, %v1156, %v2180
        %v2693 = vsel %vm1669, %v1157, %v2181
        %v2694 = vsel %vm1670, %v1158, %v2182
        %v2695 = vsel %vm1671, %v1159, %v2183
        %v2696 = vsel %vm1672, %v1160, %v2184
        %v2697 = vsel %vm1673, %v1161, %v2185
        %v2698 = vsel %vm1674, %v1162, %v2186
        %v2699 = vsel %vm1675, %v1163, %v2187
        %v2700 = vsel %vm1676, %v1164, %v2188
        %v2701 = vsel %vm1677, %v1165, %v2189
        %v2702 = vsel %vm1678, %v1166, %v2190
        %v2703 = vsel %vm1679, %v1167, %v2191
        %v2704 = vsel %vm1680, %v1168, %v2192
        %v2705 = vsel %vm1681, %v1169, %v2193
        %v2706 = vsel %vm1682, %v1170, %v2194
        %v2707 = vsel %vm1683, %v1171, %v2195
        %v2708 = vsel %vm1684, %v1172, %v2196
        %v2709 = vsel %vm1685, %v1173, %v2197
        %v2710 = vsel %vm1686, %v1174, %v2198
        %v2711 = vsel %vm1687, %v1175, %v2199
        %v2712 = vsel %vm1688, %v1176, %v2200
        %v2713 = vsel %vm1689, %v1177, %v2201
        %v2714 = vsel %vm1690, %v1178, %v2202
        %v2715 = vsel %vm1691, %v1179, %v2203
        %v2716 = vsel %vm1692, %v1180, %v2204
        %v2717 = vsel %vm1693, %v1181, %v2205
        %v2718 = vsel %vm1694, %v1182, %v2206
        %v2719 = vsel %vm1695, %v1183, %v2207
        %v2720 = vsel %vm1696, %v1184, %v2208
        %v2721 = vsel %vm1697, %v1185, %v2209
        %v2722 = vsel %vm1698, %v1186, %v2210
        %v2723 = vsel %vm1699, %v1187, %v2211
        %v2724 = vsel %vm1700, %v1188, %v2212
        %v2725 = vsel %vm1701, %v1189, %v2213
        %v2726 = vsel %vm1702, %v1190, %v2214
        %v2727 = vsel %vm1703, %v1191, %v2215
        %v2728 = vsel %vm1704, %v1192, %v2216
        %v2729 = vsel %vm1705, %v1193, %v2217
        %v2730 = vsel %vm1706, %v1194, %v2218
        %v2731 = vsel %vm1707, %v1195, %v2219
        %v2732 = vsel %vm1708, %v1196, %v2220
        %v2733 = vsel %vm1709, %v1197, %v2221
        %v2734 = vsel %vm1710, %v1198, %v2222
        %v2735 = vsel %vm1711, %v1199, %v2223
        %v2736 = vsel %vm1712, %v1200, %v2224
        %v2737 = vsel %vm1713, %v1201, %v2225
        %v2738 = vsel %vm1714, %v1202, %v2226
        %v2739 = vsel %vm1715, %v1203, %v2227
        %v2740 = vsel %vm1716, %v1204, %v2228
        %v2741 = vsel %vm1717, %v1205, %v2229
        %v2742 = vsel %vm1718, %v1206, %v2230
        %v2743 = vsel %vm1719, %v1207, %v2231
        %v2744 = vsel %vm1720, %v1208, %v2232
        %v2745 = vsel %vm1721, %v1209, %v2233
        %v2746 = vsel %vm1722, %v1210, %v2234
        %v2747 = vsel %vm1723, %v1211, %v2235
        %v2748 = vsel %vm1724, %v1212, %v2236
        %v2749 = vsel %vm1725, %v1213, %v2237
        %v2750 = vsel %vm1726, %v1214, %v2238
        %v2751 = vsel %vm1727, %v1215, %v2239
        %v2752 = vsel %vm1728, %v1216, %v2240
        %v2753 = vsel %vm1729, %v1217, %v2241
        %v2754 = vsel %vm1730, %v1218, %v2242
        %v2755 = vsel %vm1731, %v1219, %v2243
        %v2756 = vsel %vm1732, %v1220, %v2244
        %v2757 = vsel %vm1733, %v1221, %v2245
        %v2758 = vsel %vm1734, %v1222, %v2246
        %v2759 = vsel %vm1735, %v1223, %v2247
        %v2760 = vsel %vm1736, %v1224, %v2248
        %v2761 = vsel %vm1737, %v1225, %v2249
        %v2762 = vsel %vm1738, %v1226, %v2250
        %v2763 = vsel %vm1739, %v1227, %v2251
        %v2764 = vsel %vm1740, %v1228, %v2252
        %v2765 = vsel %vm1741, %v1229, %v2253
        %v2766 = vsel %vm1742, %v1230, %v2254
        %v2767 = vsel %vm1743, %v1231, %v2255
        %v2768 = vsel %vm1744, %v1232, %v2256
        %v2769 = vsel %vm1745, %v1233, %v2257
        %v2770 = vsel %vm1746, %v1234, %v2258
        %v2771 = vsel %vm1747, %v1235, %v2259
        %v2772 = vsel %vm1748, %v1236, %v2260
        %v2773 = vsel %vm1749, %v1237, %v2261
        %v2774 = vsel %vm1750, %v1238, %v2262
        %v2775 = vsel %vm1751, %v1239, %v2263
        %v2776 = vsel %vm1752, %v1240, %v2264
        %v2777 = vsel %vm1753, %v1241, %v2265
        %v2778 = vsel %vm1754, %v1242, %v2266
        %v2779 = vsel %vm1755, %v1243, %v2267
        %v2780 = vsel %vm1756, %v1244, %v2268
        %v2781 = vsel %vm1757, %v1245, %v2269
        %v2782 = vsel %vm1758, %v1246, %v2270
        %v2783 = vsel %vm1759, %v1247, %v2271
        %v2784 = vsel %vm1760, %v1248, %v2272
        %v2785 = vsel %vm1761, %v1249, %v2273
        %v2786 = vsel %vm1762, %v1250, %v2274
        %v2787 = vsel %vm1763, %v1251, %v2275
        %v2788 = vsel %vm1764, %v1252, %v2276
        %v2789 = vsel %vm1765, %v1253, %v2277
        %v2790 = vsel %vm1766, %v1254, %v2278
        %v2791 = vsel %vm1767, %v1255, %v2279
        %v2792 = vsel %vm1768, %v1256, %v2280
        %v2793 = vsel %vm1769, %v1257, %v2281
        %v2794 = vsel %vm1770, %v1258, %v2282
        %v2795 = vsel %vm1771, %v1259, %v2283
        %v2796 = vsel %vm1772, %v1260, %v2284
        %v2797 = vsel %vm1773, %v1261, %v2285
        %v2798 = vsel %vm1774, %v1262, %v2286
        %v2799 = vsel %vm1775, %v1263, %v2287
        %v2800 = vsel %vm1776, %v1264, %v2288
        %v2801 = vsel %vm1777, %v1265, %v2289
        %v2802 = vsel %vm1778, %v1266, %v2290
        %v2803 = vsel %vm1779, %v1267, %v2291
        %v2804 = vsel %vm1780, %v1268, %v2292
        %v2805 = vsel %vm1781, %v1269, %v2293
        %v2806 = vsel %vm1782, %v1270, %v2294
        %v2807 = vsel %vm1783, %v1271, %v2295
        %v2808 = vsel %vm1784, %v1272, %v2296
        %v2809 = vsel %vm1785, %v1273, %v2297
        %v2810 = vsel %vm1786, %v1274, %v2298
        %v2811 = vsel %vm1787, %v1275, %v2299
        %v2812 = vsel %vm1788, %v1276, %v2300
        %v2813 = vsel %vm1789, %v1277, %v2301
        %v2814 = vsel %vm1790, %v1278, %v2302
        %v2815 = vsel %vm1791, %v1279, %v2303
        %v2816 = vsel %vm1792, %v1280, %v2304
        %v2817 = vsel %vm1793, %v1281, %v2305
        %v2818 = vsel %vm1794, %v1282, %v2306
        %v2819 = vsel %vm1795, %v1283, %v2307
        %v2820 = vsel %vm1796, %v1284, %v2308
        %v2821 = vsel %vm1797, %v1285, %v2309
        %v2822 = vsel %vm1798, %v1286, %v2310
        %v2823 = vsel %vm1799, %v1287, %v2311
        %v2824 = vsel %vm1800, %v1288, %v2312
        %v2825 = vsel %vm1801, %v1289, %v2313
        %v2826 = vsel %vm1802, %v1290, %v2314
        %v2827 = vsel %vm1803, %v1291, %v2315
        %v2828 = vsel %vm1804, %v1292, %v2316
        %v2829 = vsel %vm1805, %v1293, %v2317
        %v2830 = vsel %vm1806, %v1294, %v2318
        %v2831 = vsel %vm1807, %v1295, %v2319
        %v2832 = vsel %vm1808, %v1296, %v2320
        %v2833 = vsel %vm1809, %v1297, %v2321
        %v2834 = vsel %vm1810, %v1298, %v2322
        %v2835 = vsel %vm1811, %v1299, %v2323
        %v2836 = vsel %vm1812, %v1300, %v2324
        %v2837 = vsel %vm1813, %v1301, %v2325
        %v2838 = vsel %vm1814, %v1302, %v2326
        %v2839 = vsel %vm1815, %v1303, %v2327
        %v2840 = vsel %vm1816, %v1304, %v2328
        %v2841 = vsel %vm1817, %v1305, %v2329
        %v2842 = vsel %vm1818, %v1306, %v2330
        %v2843 = vsel %vm1819, %v1307, %v2331
        %v2844 = vsel %vm1820, %v1308, %v2332
        %v2845 = vsel %vm1821, %v1309, %v2333
        %v2846 = vsel %vm1822, %v1310, %v2334
        %v2847 = vsel %vm1823, %v1311, %v2335
        %v2848 = vsel %vm1824, %v1312, %v2336
        %v2849 = vsel %vm1825, %v1313, %v2337
        %v2850 = vsel %vm1826, %v1314, %v2338
        %v2851 = vsel %vm1827, %v1315, %v2339
        %v2852 = vsel %vm1828, %v1316, %v2340
        %v2853 = vsel %vm1829, %v1317, %v2341
        %v2854 = vsel %vm1830, %v1318, %v2342
        %v2855 = vsel %vm1831, %v1319, %v2343
        %v2856 = vsel %vm1832, %v1320, %v2344
        %v2857 = vsel %vm1833, %v1321, %v2345
        %v2858 = vsel %vm1834, %v1322, %v2346
        %v2859 = vsel %vm1835, %v1323, %v2347
        %v2860 = vsel %vm1836, %v1324, %v2348
        %v2861 = vsel %vm1837, %v1325, %v2349
        %v2862 = vsel %vm1838, %v1326, %v2350
        %v2863 = vsel %vm1839, %v1327, %v2351
        %v2864 = vsel %vm1840, %v1328, %v2352
        %v2865 = vsel %vm1841, %v1329, %v2353
        %v2866 = vsel %vm1842, %v1330, %v2354
        %v2867 = vsel %vm1843, %v1331, %v2355
        %v2868 = vsel %vm1844, %v1332, %v2356
        %v2869 = vsel %vm1845, %v1333, %v2357
        %v2870 = vsel %vm1846, %v1334, %v2358
        %v2871 = vsel %vm1847, %v1335, %v2359
        %v2872 = vsel %vm1848, %v1336, %v2360
        %v2873 = vsel %vm1849, %v1337, %v2361
        %v2874 = vsel %vm1850, %v1338, %v2362
        %v2875 = vsel %vm1851, %v1339, %v2363
        %v2876 = vsel %vm1852, %v1340, %v2364
        %v2877 = vsel %vm1853, %v1341, %v2365
        %v2878 = vsel %vm1854, %v1342, %v2366
        %v2879 = vsel %vm1855, %v1343, %v2367
        %v2880 = vsel %vm1856, %v1344, %v2368
        %v2881 = vsel %vm1857, %v1345, %v2369
        %v2882 = vsel %vm1858, %v1346, %v2370
        %v2883 = vsel %vm1859, %v1347, %v2371
        %v2884 = vsel %vm1860, %v1348, %v2372
        %v2885 = vsel %vm1861, %v1349, %v2373
        %v2886 = vsel %vm1862, %v1350, %v2374
        %v2887 = vsel %vm1863, %v1351, %v2375
        %v2888 = vsel %vm1864, %v1352, %v2376
        %v2889 = vsel %vm1865, %v1353, %v2377
        %v2890 = vsel %vm1866, %v1354, %v2378
        %v2891 = vsel %vm1867, %v1355, %v2379
        %v2892 = vsel %vm1868, %v1356, %v2380
        %v2893 = vsel %vm1869, %v1357, %v2381
        %v2894 = vsel %vm1870, %v1358, %v2382
        %v2895 = vsel %vm1871, %v1359, %v2383
        %v2896 = vsel %vm1872, %v1360, %v2384
        %v2897 = vsel %vm1873, %v1361, %v2385
        %v2898 = vsel %vm1874, %v1362, %v2386
        %v2899 = vsel %vm1875, %v1363, %v2387
        %v2900 = vsel %vm1876, %v1364, %v2388
        %v2901 = vsel %vm1877, %v1365, %v2389
        %v2902 = vsel %vm1878, %v1366, %v2390
        %v2903 = vsel %vm1879, %v1367, %v2391
        %v2904 = vsel %vm1880, %v1368, %v2392
        %v2905 = vsel %vm1881, %v1369, %v2393
        %v2906 = vsel %vm1882, %v1370, %v2394
        %v2907 = vsel %vm1883, %v1371, %v2395
        %v2908 = vsel %vm1884, %v1372, %v2396
        %v2909 = vsel %vm1885, %v1373, %v2397
        %v2910 = vsel %vm1886, %v1374, %v2398
        %v2911 = vsel %vm1887, %v1375, %v2399
        %v2912 = vsel %vm1888, %v1376, %v2400
        %v2913 = vsel %vm1889, %v1377, %v2401
        %v2914 = vld [vmem:[%s4] sm:$0xff]
        %v2915 = vld [vmem:[%s4 + $0x8] sm:$0xff]
        %v2916 = vld [vmem:[%s4 + $0x10] sm:$0xff]
        %v2917 = vld [vmem:[%s4 + $0x18] sm:$0xff]
        %v2918 = vld [vmem:[%s4 + $0x20] sm:$0xff]
        %v2919 = vld [vmem:[%s4 + $0x28] sm:$0xff]
        %v2920 = vld [vmem:[%s4 + $0x30] sm:$0xff]
        %v2921 = vld [vmem:[%s4 + $0x38] sm:$0xff]
        %v2922 = vld [vmem:[%s4 + $0x40] sm:$0xff]
        %v2923 = vld [vmem:[%s4 + $0x48] sm:$0xff]
        %v2924 = vld [vmem:[%s4 + $0x50] sm:$0xff]
        %v2925 = vld [vmem:[%s4 + $0x58] sm:$0xff]
        %v2926 = vld [vmem:[%s4 + $0x60] sm:$0xff]
        %v2927 = vld [vmem:[%s4 + $0x68] sm:$0xff]
        %v2928 = vld [vmem:[%s4 + $0x70] sm:$0xff]
        %v2929 = vld [vmem:[%s4 + $0x78] sm:$0xff]
        %2930 = vmatprep.subr.mxu0 0.0
        %2931 = vmatpush1.msra.mxu0 %v2914
        %2932 = vmatprep.subr.mxu0 0.0
        %2933 = vmatpush1.msra.mxu0 %v2915
        %2934 = vmatprep.subr.mxu0 0.0
        %2935 = vmatpush1.msra.mxu0 %v2916
        %2936 = vmatprep.subr.mxu0 0.0
        %2937 = vmatpush1.msra.mxu0 %v2917
        %2938 = vmatprep.subr.mxu0 0.0
        %2939 = vmatpush1.msra.mxu0 %v2918
        %2940 = vmatprep.subr.mxu0 0.0
        %2941 = vmatpush1.msra.mxu0 %v2919
        %2942 = vmatprep.subr.mxu0 0.0
        %2943 = vmatpush1.msra.mxu0 %v2920
        %2944 = vmatprep.subr.mxu0 0.0
        %2945 = vmatpush1.msra.mxu0 %v2921
        %2946 = vmatprep.subr.mxu0 0.0
        %2947 = vmatpush1.msra.mxu0 %v2922
        %2948 = vmatprep.subr.mxu0 0.0
        %2949 = vmatpush1.msra.mxu0 %v2923
        %2950 = vmatprep.subr.mxu0 0.0
        %2951 = vmatpush1.msra.mxu0 %v2924
        %2952 = vmatprep.subr.mxu0 0.0
        %2953 = vmatpush1.msra.mxu0 %v2925
        %2954 = vmatprep.subr.mxu0 0.0
        %2955 = vmatpush1.msra.mxu0 %v2926
        %2956 = vmatprep.subr.mxu0 0.0
        %2957 = vmatpush1.msra.mxu0 %v2927
        %2958 = vmatprep.subr.mxu0 0.0
        %2959 = vmatpush1.msra.mxu0 %v2928
        %2960 = vmatprep.subr.mxu0 0.0
        %2961 = vmatpush1.msra.mxu0 %v2929
        %2962 = vmatprep.subr.mxu0 0.0
        %2963 = vmatpush1.msra.mxu0 0.0
        %2964 = vmatprep.subr.mxu0 0.0
        %2965 = vmatpush1.msra.mxu0 0.0
        %2966 = vmatprep.subr.mxu0 0.0
        %2967 = vmatpush1.msra.mxu0 0.0
        %2968 = vmatprep.subr.mxu0 0.0
        %2969 = vmatpush1.msra.mxu0 0.0
        %2970 = vmatprep.subr.mxu0 0.0
        %2971 = vmatpush1.msra.mxu0 0.0
        %2972 = vmatprep.subr.mxu0 0.0
        %2973 = vmatpush1.msra.mxu0 0.0
        %2974 = vmatprep.subr.mxu0 0.0
        %2975 = vmatpush1.msra.mxu0 0.0
        %2976 = vmatprep.subr.mxu0 0.0
        %2977 = vmatpush1.msra.mxu0 0.0
        %2978 = vmatprep.subr.mxu0 0.0
        %2979 = vmatpush1.msra.mxu0 0.0
        %2980 = vmatprep.subr.mxu0 0.0
        %2981 = vmatpush1.msra.mxu0 0.0
        %2982 = vmatprep.subr.mxu0 0.0
        %2983 = vmatpush1.msra.mxu0 0.0
        %2984 = vmatprep.subr.mxu0 0.0
        %2985 = vmatpush1.msra.mxu0 0.0
        %2986 = vmatprep.subr.mxu0 0.0
        %2987 = vmatpush1.msra.mxu0 0.0
        %2988 = vmatprep.subr.mxu0 0.0
        %2989 = vmatpush1.msra.mxu0 0.0
        %2990 = vmatprep.subr.mxu0 0.0
        %2991 = vmatpush1.msra.mxu0 0.0
        %2992 = vmatprep.subr.mxu0 0.0
        %2993 = vmatpush1.msra.mxu0 0.0
        %2994 = vmatprep.mubr.f32.mxu0 0.0
        %2995 = vmatmul.mubr.f32.gmra.mrb[0].mxu0 %v2402
        %v2996 = vpop.f32.mrb[0].mxu0
        %v2997 = vadd.f32 0.0, %v2996
        %v2998 = vpop.f32.mrb[0].mxu0
        %2999 = vmatprep.mubr.f32.mxu0 0.0
        %3000 = vmatmul.mubr.f32.gmra.mrb[0].mxu0 %v2403
        %v3001 = vpop.f32.mrb[0].mxu0
        %v3002 = vadd.f32 0.0, %v3001
        %v3003 = vpop.f32.mrb[0].mxu0
        %3004 = vmatprep.mubr.f32.mxu0 0.0
        %3005 = vmatmul.mubr.f32.gmra.mrb[0].mxu0 %v2404
        %v3006 = vpop.f32.mrb[0].mxu0
        %v3007 = vadd.f32 0.0, %v3006
        %v3008 = vpop.f32.mrb[0].mxu0
        %3009 = vmatprep.mubr.f32.mxu0 0.0
        %3010 = vmatmul.mubr.f32.gmra.mrb[0].mxu0 %v2405
        %v3011 = vpop.f32.mrb[0].mxu0
        %v3012 = vadd.f32 0.0, %v3011
        %v3013 = vpop.f32.mrb[0].mxu0
        %3014 = vmatprep.mubr.f32.mxu0 0.0
        %3015 = vmatmul.mubr.f32.gmra.mrb[0].mxu0 %v2406
        %v3016 = vpop.f32.mrb[0].mxu0
        %v3017 = vadd.f32 0.0, %v3016
        %v3018 = vpop.f32.mrb[0].mxu0
        %3019 = vmatprep.mubr.f32.mxu0 0.0
        %3020 = vmatmul.mubr.f32.gmra.mrb[0].mxu0 %v2407
        %v3021 = vpop.f32.mrb[0].mxu0
        %v3022 = vadd.f32 0.0, %v3021
        %v3023 = vpop.f32.mrb[0].mxu0
        %3024 = vmatprep.mubr.f32.mxu0 0.0
        %3025 = vmatmul.mubr.f32.gmra.mrb[0].mxu0 %v2408
        %v3026 = vpop.f32.mrb[0].mxu0
        %v3027 = vadd.f32 0.0, %v3026
        %v3028 = vpop.f32.mrb[0].mxu0
        %3029 = vmatprep.mubr.f32.mxu0 0.0
        %3030 = vmatmul.mubr.f32.gmra.mrb[0].mxu0 %v2409
        %v3031 = vpop.f32.mrb[0].mxu0
        %v3032 = vadd.f32 0.0, %v3031
        %v3033 = vpop.f32.mrb[0].mxu0
        %3034 = vmatprep.mubr.f32.mxu0 0.0
        %3035 = vmatmul.mubr.f32.gmra.mrb[0].mxu0 %v2410
        %v3036 = vpop.f32.mrb[0].mxu0
        %v3037 = vadd.f32 0.0, %v3036
        %v3038 = vpop.f32.mrb[0].mxu0
        %3039 = vmatprep.mubr.f32.mxu0 0.0
        %3040 = vmatmul.mubr.f32.gmra.mrb[0].mxu0 %v2411
        %v3041 = vpop.f32.mrb[0].mxu0
        %v3042 = vadd.f32 0.0, %v3041
        %v3043 = vpop.f32.mrb[0].mxu0
        %3044 = vmatprep.mubr.f32.mxu0 0.0
        %3045 = vmatmul.mubr.f32.gmra.mrb[0].mxu0 %v2412
        %v3046 = vpop.f32.mrb[0].mxu0
        %v3047 = vadd.f32 0.0, %v3046
        %v3048 = vpop.f32.mrb[0].mxu0
        %3049 = vmatprep.mubr.f32.mxu0 0.0
        %3050 = vmatmul.mubr.f32.gmra.mrb[0].mxu0 %v2413
        %v3051 = vpop.f32.mrb[0].mxu0
        %v3052 = vadd.f32 0.0, %v3051
        %v3053 = vpop.f32.mrb[0].mxu0
        %3054 = vmatprep.mubr.f32.mxu0 0.0
        %3055 = vmatmul.mubr.f32.gmra.mrb[0].mxu0 %v2414
        %v3056 = vpop.f32.mrb[0].mxu0
        %v3057 = vadd.f32 0.0, %v3056
        %v3058 = vpop.f32.mrb[0].mxu0
        %3059 = vmatprep.mubr.f32.mxu0 0.0
        %3060 = vmatmul.mubr.f32.gmra.mrb[0].mxu0 %v2415
        %v3061 = vpop.f32.mrb[0].mxu0
        %v3062 = vadd.f32 0.0, %v3061
        %v3063 = vpop.f32.mrb[0].mxu0
        %3064 = vmatprep.mubr.f32.mxu0 0.0
        %3065 = vmatmul.mubr.f32.gmra.mrb[0].mxu0 %v2416
        %v3066 = vpop.f32.mrb[0].mxu0
        %v3067 = vadd.f32 0.0, %v3066
        %v3068 = vpop.f32.mrb[0].mxu0
        %3069 = vmatprep.mubr.f32.mxu0 0.0
        %3070 = vmatmul.mubr.f32.gmra.mrb[0].mxu0 %v2417
        %v3071 = vpop.f32.mrb[0].mxu0
        %v3072 = vadd.f32 0.0, %v3071
        %v3073 = vpop.f32.mrb[0].mxu0
        %3074 = vmatprep.mubr.f32.mxu0 0.0
        %3075 = vmatmul.mubr.f32.gmra.mrb[0].mxu0 %v2418
        %v3076 = vpop.f32.mrb[0].mxu0
        %v3077 = vadd.f32 0.0, %v3076
        %v3078 = vpop.f32.mrb[0].mxu0
        %3079 = vmatprep.mubr.f32.mxu0 0.0
        %3080 = vmatmul.mubr.f32.gmra.mrb[0].mxu0 %v2419
        %v3081 = vpop.f32.mrb[0].mxu0
        %v3082 = vadd.f32 0.0, %v3081
        %v3083 = vpop.f32.mrb[0].mxu0
        %3084 = vmatprep.mubr.f32.mxu0 0.0
        %3085 = vmatmul.mubr.f32.gmra.mrb[0].mxu0 %v2420
        %v3086 = vpop.f32.mrb[0].mxu0
        %v3087 = vadd.f32 0.0, %v3086
        %v3088 = vpop.f32.mrb[0].mxu0
        %3089 = vmatprep.mubr.f32.mxu0 0.0
        %3090 = vmatmul.mubr.f32.gmra.mrb[0].mxu0 %v2421
        %v3091 = vpop.f32.mrb[0].mxu0
        %v3092 = vadd.f32 0.0, %v3091
        %v3093 = vpop.f32.mrb[0].mxu0
        %3094 = vmatprep.mubr.f32.mxu0 0.0
        %3095 = vmatmul.mubr.f32.gmra.mrb[0].mxu0 %v2422
        %v3096 = vpop.f32.mrb[0].mxu0
        %v3097 = vadd.f32 0.0, %v3096
        %v3098 = vpop.f32.mrb[0].mxu0
        %3099 = vmatprep.mubr.f32.mxu0 0.0
        %3100 = vmatmul.mubr.f32.gmra.mrb[0].mxu0 %v2423
        %v3101 = vpop.f32.mrb[0].mxu0
        %v3102 = vadd.f32 0.0, %v3101
        %v3103 = vpop.f32.mrb[0].mxu0
        %3104 = vmatprep.mubr.f32.mxu0 0.0
        %3105 = vmatmul.mubr.f32.gmra.mrb[0].mxu0 %v2424
        %v3106 = vpop.f32.mrb[0].mxu0
        %v3107 = vadd.f32 0.0, %v3106
        %v3108 = vpop.f32.mrb[0].mxu0
        %3109 = vmatprep.mubr.f32.mxu0 0.0
        %3110 = vmatmul.mubr.f32.gmra.mrb[0].mxu0 %v2425
        %v3111 = vpop.f32.mrb[0].mxu0
        %v3112 = vadd.f32 0.0, %v3111
        %v3113 = vpop.f32.mrb[0].mxu0
        %3114 = vmatprep.mubr.f32.mxu0 0.0
        %3115 = vmatmul.mubr.f32.gmra.mrb[0].mxu0 %v2426
        %v3116 = vpop.f32.mrb[0].mxu0
        %v3117 = vadd.f32 0.0, %v3116
        %v3118 = vpop.f32.mrb[0].mxu0
        %3119 = vmatprep.mubr.f32.mxu0 0.0
        %3120 = vmatmul.mubr.f32.gmra.mrb[0].mxu0 %v2427
        %v3121 = vpop.f32.mrb[0].mxu0
        %v3122 = vadd.f32 0.0, %v3121
        %v3123 = vpop.f32.mrb[0].mxu0
        %3124 = vmatprep.mubr.f32.mxu0 0.0
        %3125 = vmatmul.mubr.f32.gmra.mrb[0].mxu0 %v2428
        %v3126 = vpop.f32.mrb[0].mxu0
        %v3127 = vadd.f32 0.0, %v3126
        %v3128 = vpop.f32.mrb[0].mxu0
        %3129 = vmatprep.mubr.f32.mxu0 0.0
        %3130 = vmatmul.mubr.f32.gmra.mrb[0].mxu0 %v2429
        %v3131 = vpop.f32.mrb[0].mxu0
        %v3132 = vadd.f32 0.0, %v3131
        %v3133 = vpop.f32.mrb[0].mxu0
        %3134 = vmatprep.mubr.f32.mxu0 0.0
        %3135 = vmatmul.mubr.f32.gmra.mrb[0].mxu0 %v2430
        %v3136 = vpop.f32.mrb[0].mxu0
        %v3137 = vadd.f32 0.0, %v3136
        %v3138 = vpop.f32.mrb[0].mxu0
        %3139 = vmatprep.mubr.f32.mxu0 0.0
        %3140 = vmatmul.mubr.f32.gmra.mrb[0].mxu0 %v2431
        %v3141 = vpop.f32.mrb[0].mxu0
        %v3142 = vadd.f32 0.0, %v3141
        %v3143 = vpop.f32.mrb[0].mxu0
        %3144 = vmatprep.mubr.f32.mxu0 0.0
        %3145 = vmatmul.mubr.f32.gmra.mrb[0].mxu0 %v2432
        %v3146 = vpop.f32.mrb[0].mxu0
        %v3147 = vadd.f32 0.0, %v3146
        %v3148 = vpop.f32.mrb[0].mxu0
        %3149 = vmatprep.mubr.f32.mxu0 0.0
        %3150 = vmatmul.mubr.f32.gmra.mrb[0].mxu0 %v2433
        %v3151 = vpop.f32.mrb[0].mxu0
        %v3152 = vadd.f32 0.0, %v3151
        %v3153 = vpop.f32.mrb[0].mxu0
        %3154 = vmatprep.mubr.f32.mxu0 0.0
        %3155 = vmatmul.mubr.f32.gmra.mrb[0].mxu0 %v2434
        %v3156 = vpop.f32.mrb[0].mxu0
        %v3157 = vadd.f32 0.0, %v3156
        %v3158 = vpop.f32.mrb[0].mxu0
        %3159 = vmatprep.mubr.f32.mxu0 0.0
        %3160 = vmatmul.mubr.f32.gmra.mrb[0].mxu0 %v2435
        %v3161 = vpop.f32.mrb[0].mxu0
        %v3162 = vadd.f32 0.0, %v3161
        %v3163 = vpop.f32.mrb[0].mxu0
        %3164 = vmatprep.mubr.f32.mxu0 0.0
        %3165 = vmatmul.mubr.f32.gmra.mrb[0].mxu0 %v2436
        %v3166 = vpop.f32.mrb[0].mxu0
        %v3167 = vadd.f32 0.0, %v3166
        %v3168 = vpop.f32.mrb[0].mxu0
        %3169 = vmatprep.mubr.f32.mxu0 0.0
        %3170 = vmatmul.mubr.f32.gmra.mrb[0].mxu0 %v2437
        %v3171 = vpop.f32.mrb[0].mxu0
        %v3172 = vadd.f32 0.0, %v3171
        %v3173 = vpop.f32.mrb[0].mxu0
        %3174 = vmatprep.mubr.f32.mxu0 0.0
        %3175 = vmatmul.mubr.f32.gmra.mrb[0].mxu0 %v2438
        %v3176 = vpop.f32.mrb[0].mxu0
        %v3177 = vadd.f32 0.0, %v3176
        %v3178 = vpop.f32.mrb[0].mxu0
        %3179 = vmatprep.mubr.f32.mxu0 0.0
        %3180 = vmatmul.mubr.f32.gmra.mrb[0].mxu0 %v2439
        %v3181 = vpop.f32.mrb[0].mxu0
        %v3182 = vadd.f32 0.0, %v3181
        %v3183 = vpop.f32.mrb[0].mxu0
        %3184 = vmatprep.mubr.f32.mxu0 0.0
        %3185 = vmatmul.mubr.f32.gmra.mrb[0].mxu0 %v2440
        %v3186 = vpop.f32.mrb[0].mxu0
        %v3187 = vadd.f32 0.0, %v3186
        %v3188 = vpop.f32.mrb[0].mxu0
        %3189 = vmatprep.mubr.f32.mxu0 0.0
        %3190 = vmatmul.mubr.f32.gmra.mrb[0].mxu0 %v2441
        %v3191 = vpop.f32.mrb[0].mxu0
        %v3192 = vadd.f32 0.0, %v3191
        %v3193 = vpop.f32.mrb[0].mxu0
        %3194 = vmatprep.mubr.f32.mxu0 0.0
        %3195 = vmatmul.mubr.f32.gmra.mrb[0].mxu0 %v2442
        %v3196 = vpop.f32.mrb[0].mxu0
        %v3197 = vadd.f32 0.0, %v3196
        %v3198 = vpop.f32.mrb[0].mxu0
        %3199 = vmatprep.mubr.f32.mxu0 0.0
        %3200 = vmatmul.mubr.f32.gmra.mrb[0].mxu0 %v2443
        %v3201 = vpop.f32.mrb[0].mxu0
        %v3202 = vadd.f32 0.0, %v3201
        %v3203 = vpop.f32.mrb[0].mxu0
        %3204 = vmatprep.mubr.f32.mxu0 0.0
        %3205 = vmatmul.mubr.f32.gmra.mrb[0].mxu0 %v2444
        %v3206 = vpop.f32.mrb[0].mxu0
        %v3207 = vadd.f32 0.0, %v3206
        %v3208 = vpop.f32.mrb[0].mxu0
        %3209 = vmatprep.mubr.f32.mxu0 0.0
        %3210 = vmatmul.mubr.f32.gmra.mrb[0].mxu0 %v2445
        %v3211 = vpop.f32.mrb[0].mxu0
        %v3212 = vadd.f32 0.0, %v3211
        %v3213 = vpop.f32.mrb[0].mxu0
        %3214 = vmatprep.mubr.f32.mxu0 0.0
        %3215 = vmatmul.mubr.f32.gmra.mrb[0].mxu0 %v2446
        %v3216 = vpop.f32.mrb[0].mxu0
        %v3217 = vadd.f32 0.0, %v3216
        %v3218 = vpop.f32.mrb[0].mxu0
        %3219 = vmatprep.mubr.f32.mxu0 0.0
        %3220 = vmatmul.mubr.f32.gmra.mrb[0].mxu0 %v2447
        %v3221 = vpop.f32.mrb[0].mxu0
        %v3222 = vadd.f32 0.0, %v3221
        %v3223 = vpop.f32.mrb[0].mxu0
        %3224 = vmatprep.mubr.f32.mxu0 0.0
        %3225 = vmatmul.mubr.f32.gmra.mrb[0].mxu0 %v2448
        %v3226 = vpop.f32.mrb[0].mxu0
        %v3227 = vadd.f32 0.0, %v3226
        %v3228 = vpop.f32.mrb[0].mxu0
        %3229 = vmatprep.mubr.f32.mxu0 0.0
        %3230 = vmatmul.mubr.f32.gmra.mrb[0].mxu0 %v2449
        %v3231 = vpop.f32.mrb[0].mxu0
        %v3232 = vadd.f32 0.0, %v3231
        %v3233 = vpop.f32.mrb[0].mxu0
        %3234 = vmatprep.mubr.f32.mxu0 0.0
        %3235 = vmatmul.mubr.f32.gmra.mrb[0].mxu0 %v2450
        %v3236 = vpop.f32.mrb[0].mxu0
        %v3237 = vadd.f32 0.0, %v3236
        %v3238 = vpop.f32.mrb[0].mxu0
        %3239 = vmatprep.mubr.f32.mxu0 0.0
        %3240 = vmatmul.mubr.f32.gmra.mrb[0].mxu0 %v2451
        %v3241 = vpop.f32.mrb[0].mxu0
        %v3242 = vadd.f32 0.0, %v3241
        %v3243 = vpop.f32.mrb[0].mxu0
        %3244 = vmatprep.mubr.f32.mxu0 0.0
        %3245 = vmatmul.mubr.f32.gmra.mrb[0].mxu0 %v2452
        %v3246 = vpop.f32.mrb[0].mxu0
        %v3247 = vadd.f32 0.0, %v3246
        %v3248 = vpop.f32.mrb[0].mxu0
        %3249 = vmatprep.mubr.f32.mxu0 0.0
        %3250 = vmatmul.mubr.f32.gmra.mrb[0].mxu0 %v2453
        %v3251 = vpop.f32.mrb[0].mxu0
        %v3252 = vadd.f32 0.0, %v3251
        %v3253 = vpop.f32.mrb[0].mxu0
        %3254 = vmatprep.mubr.f32.mxu0 0.0
        %3255 = vmatmul.mubr.f32.gmra.mrb[0].mxu0 %v2454
        %v3256 = vpop.f32.mrb[0].mxu0
        %v3257 = vadd.f32 0.0, %v3256
        %v3258 = vpop.f32.mrb[0].mxu0
        %3259 = vmatprep.mubr.f32.mxu0 0.0
        %3260 = vmatmul.mubr.f32.gmra.mrb[0].mxu0 %v2455
        %v3261 = vpop.f32.mrb[0].mxu0
        %v3262 = vadd.f32 0.0, %v3261
        %v3263 = vpop.f32.mrb[0].mxu0
        %3264 = vmatprep.mubr.f32.mxu0 0.0
        %3265 = vmatmul.mubr.f32.gmra.mrb[0].mxu0 %v2456
        %v3266 = vpop.f32.mrb[0].mxu0
        %v3267 = vadd.f32 0.0, %v3266
        %v3268 = vpop.f32.mrb[0].mxu0
        %3269 = vmatprep.mubr.f32.mxu0 0.0
        %3270 = vmatmul.mubr.f32.gmra.mrb[0].mxu0 %v2457
        %v3271 = vpop.f32.mrb[0].mxu0
        %v3272 = vadd.f32 0.0, %v3271
        %v3273 = vpop.f32.mrb[0].mxu0
        %3274 = vmatprep.mubr.f32.mxu0 0.0
        %3275 = vmatmul.mubr.f32.gmra.mrb[0].mxu0 %v2458
        %v3276 = vpop.f32.mrb[0].mxu0
        %v3277 = vadd.f32 0.0, %v3276
        %v3278 = vpop.f32.mrb[0].mxu0
        %3279 = vmatprep.mubr.f32.mxu0 0.0
        %3280 = vmatmul.mubr.f32.gmra.mrb[0].mxu0 %v2459
        %v3281 = vpop.f32.mrb[0].mxu0
        %v3282 = vadd.f32 0.0, %v3281
        %v3283 = vpop.f32.mrb[0].mxu0
        %3284 = vmatprep.mubr.f32.mxu0 0.0
        %3285 = vmatmul.mubr.f32.gmra.mrb[0].mxu0 %v2460
        %v3286 = vpop.f32.mrb[0].mxu0
        %v3287 = vadd.f32 0.0, %v3286
        %v3288 = vpop.f32.mrb[0].mxu0
        %3289 = vmatprep.mubr.f32.mxu0 0.0
        %3290 = vmatmul.mubr.f32.gmra.mrb[0].mxu0 %v2461
        %v3291 = vpop.f32.mrb[0].mxu0
        %v3292 = vadd.f32 0.0, %v3291
        %v3293 = vpop.f32.mrb[0].mxu0
        %3294 = vmatprep.mubr.f32.mxu0 0.0
        %3295 = vmatmul.mubr.f32.gmra.mrb[0].mxu0 %v2462
        %v3296 = vpop.f32.mrb[0].mxu0
        %v3297 = vadd.f32 0.0, %v3296
        %v3298 = vpop.f32.mrb[0].mxu0
        %3299 = vmatprep.mubr.f32.mxu0 0.0
        %3300 = vmatmul.mubr.f32.gmra.mrb[0].mxu0 %v2463
        %v3301 = vpop.f32.mrb[0].mxu0
        %v3302 = vadd.f32 0.0, %v3301
        %v3303 = vpop.f32.mrb[0].mxu0
        %3304 = vmatprep.mubr.f32.mxu0 0.0
        %3305 = vmatmul.mubr.f32.gmra.mrb[0].mxu0 %v2464
        %v3306 = vpop.f32.mrb[0].mxu0
        %v3307 = vadd.f32 0.0, %v3306
        %v3308 = vpop.f32.mrb[0].mxu0
        %3309 = vmatprep.mubr.f32.mxu0 0.0
        %3310 = vmatmul.mubr.f32.gmra.mrb[0].mxu0 %v2465
        %v3311 = vpop.f32.mrb[0].mxu0
        %v3312 = vadd.f32 0.0, %v3311
        %v3313 = vpop.f32.mrb[0].mxu0
        %3314 = vmatprep.mubr.f32.mxu0 0.0
        %3315 = vmatmul.mubr.f32.gmra.mrb[0].mxu0 %v2466
        %v3316 = vpop.f32.mrb[0].mxu0
        %v3317 = vadd.f32 0.0, %v3316
        %v3318 = vpop.f32.mrb[0].mxu0
        %3319 = vmatprep.mubr.f32.mxu0 0.0
        %3320 = vmatmul.mubr.f32.gmra.mrb[0].mxu0 %v2467
        %v3321 = vpop.f32.mrb[0].mxu0
        %v3322 = vadd.f32 0.0, %v3321
        %v3323 = vpop.f32.mrb[0].mxu0
        %3324 = vmatprep.mubr.f32.mxu0 0.0
        %3325 = vmatmul.mubr.f32.gmra.mrb[0].mxu0 %v2468
        %v3326 = vpop.f32.mrb[0].mxu0
        %v3327 = vadd.f32 0.0, %v3326
        %v3328 = vpop.f32.mrb[0].mxu0
        %3329 = vmatprep.mubr.f32.mxu0 0.0
        %3330 = vmatmul.mubr.f32.gmra.mrb[0].mxu0 %v2469
        %v3331 = vpop.f32.mrb[0].mxu0
        %v3332 = vadd.f32 0.0, %v3331
        %v3333 = vpop.f32.mrb[0].mxu0
        %3334 = vmatprep.mubr.f32.mxu0 0.0
        %3335 = vmatmul.mubr.f32.gmra.mrb[0].mxu0 %v2470
        %v3336 = vpop.f32.mrb[0].mxu0
        %v3337 = vadd.f32 0.0, %v3336
        %v3338 = vpop.f32.mrb[0].mxu0
        %3339 = vmatprep.mubr.f32.mxu0 0.0
        %3340 = vmatmul.mubr.f32.gmra.mrb[0].mxu0 %v2471
        %v3341 = vpop.f32.mrb[0].mxu0
        %v3342 = vadd.f32 0.0, %v3341
        %v3343 = vpop.f32.mrb[0].mxu0
        %3344 = vmatprep.mubr.f32.mxu0 0.0
        %3345 = vmatmul.mubr.f32.gmra.mrb[0].mxu0 %v2472
        %v3346 = vpop.f32.mrb[0].mxu0
        %v3347 = vadd.f32 0.0, %v3346
        %v3348 = vpop.f32.mrb[0].mxu0
        %3349 = vmatprep.mubr.f32.mxu0 0.0
        %3350 = vmatmul.mubr.f32.gmra.mrb[0].mxu0 %v2473
        %v3351 = vpop.f32.mrb[0].mxu0
        %v3352 = vadd.f32 0.0, %v3351
        %v3353 = vpop.f32.mrb[0].mxu0
        %3354 = vmatprep.mubr.f32.mxu0 0.0
        %3355 = vmatmul.mubr.f32.gmra.mrb[0].mxu0 %v2474
        %v3356 = vpop.f32.mrb[0].mxu0
        %v3357 = vadd.f32 0.0, %v3356
        %v3358 = vpop.f32.mrb[0].mxu0
        %3359 = vmatprep.mubr.f32.mxu0 0.0
        %3360 = vmatmul.mubr.f32.gmra.mrb[0].mxu0 %v2475
        %v3361 = vpop.f32.mrb[0].mxu0
        %v3362 = vadd.f32 0.0, %v3361
        %v3363 = vpop.f32.mrb[0].mxu0
        %3364 = vmatprep.mubr.f32.mxu0 0.0
        %3365 = vmatmul.mubr.f32.gmra.mrb[0].mxu0 %v2476
        %v3366 = vpop.f32.mrb[0].mxu0
        %v3367 = vadd.f32 0.0, %v3366
        %v3368 = vpop.f32.mrb[0].mxu0
        %3369 = vmatprep.mubr.f32.mxu0 0.0
        %3370 = vmatmul.mubr.f32.gmra.mrb[0].mxu0 %v2477
        %v3371 = vpop.f32.mrb[0].mxu0
        %v3372 = vadd.f32 0.0, %v3371
        %v3373 = vpop.f32.mrb[0].mxu0
        %3374 = vmatprep.mubr.f32.mxu0 0.0
        %3375 = vmatmul.mubr.f32.gmra.mrb[0].mxu0 %v2478
        %v3376 = vpop.f32.mrb[0].mxu0
        %v3377 = vadd.f32 0.0, %v3376
        %v3378 = vpop.f32.mrb[0].mxu0
        %3379 = vmatprep.mubr.f32.mxu0 0.0
        %3380 = vmatmul.mubr.f32.gmra.mrb[0].mxu0 %v2479
        %v3381 = vpop.f32.mrb[0].mxu0
        %v3382 = vadd.f32 0.0, %v3381
        %v3383 = vpop.f32.mrb[0].mxu0
        %3384 = vmatprep.mubr.f32.mxu0 0.0
        %3385 = vmatmul.mubr.f32.gmra.mrb[0].mxu0 %v2480
        %v3386 = vpop.f32.mrb[0].mxu0
        %v3387 = vadd.f32 0.0, %v3386
        %v3388 = vpop.f32.mrb[0].mxu0
        %3389 = vmatprep.mubr.f32.mxu0 0.0
        %3390 = vmatmul.mubr.f32.gmra.mrb[0].mxu0 %v2481
        %v3391 = vpop.f32.mrb[0].mxu0
        %v3392 = vadd.f32 0.0, %v3391
        %v3393 = vpop.f32.mrb[0].mxu0
        %3394 = vmatprep.mubr.f32.mxu0 0.0
        %3395 = vmatmul.mubr.f32.gmra.mrb[0].mxu0 %v2482
        %v3396 = vpop.f32.mrb[0].mxu0
        %v3397 = vadd.f32 0.0, %v3396
        %v3398 = vpop.f32.mrb[0].mxu0
        %3399 = vmatprep.mubr.f32.mxu0 0.0
        %3400 = vmatmul.mubr.f32.gmra.mrb[0].mxu0 %v2483
        %v3401 = vpop.f32.mrb[0].mxu0
        %v3402 = vadd.f32 0.0, %v3401
        %v3403 = vpop.f32.mrb[0].mxu0
        %3404 = vmatprep.mubr.f32.mxu0 0.0
        %3405 = vmatmul.mubr.f32.gmra.mrb[0].mxu0 %v2484
        %v3406 = vpop.f32.mrb[0].mxu0
        %v3407 = vadd.f32 0.0, %v3406
        %v3408 = vpop.f32.mrb[0].mxu0
        %3409 = vmatprep.mubr.f32.mxu0 0.0
        %3410 = vmatmul.mubr.f32.gmra.mrb[0].mxu0 %v2485
        %v3411 = vpop.f32.mrb[0].mxu0
        %v3412 = vadd.f32 0.0, %v3411
        %v3413 = vpop.f32.mrb[0].mxu0
        %3414 = vmatprep.mubr.f32.mxu0 0.0
        %3415 = vmatmul.mubr.f32.gmra.mrb[0].mxu0 %v2486
        %v3416 = vpop.f32.mrb[0].mxu0
        %v3417 = vadd.f32 0.0, %v3416
        %v3418 = vpop.f32.mrb[0].mxu0
        %3419 = vmatprep.mubr.f32.mxu0 0.0
        %3420 = vmatmul.mubr.f32.gmra.mrb[0].mxu0 %v2487
        %v3421 = vpop.f32.mrb[0].mxu0
        %v3422 = vadd.f32 0.0, %v3421
        %v3423 = vpop.f32.mrb[0].mxu0
        %3424 = vmatprep.mubr.f32.mxu0 0.0
        %3425 = vmatmul.mubr.f32.gmra.mrb[0].mxu0 %v2488
        %v3426 = vpop.f32.mrb[0].mxu0
        %v3427 = vadd.f32 0.0, %v3426
        %v3428 = vpop.f32.mrb[0].mxu0
        %3429 = vmatprep.mubr.f32.mxu0 0.0
        %3430 = vmatmul.mubr.f32.gmra.mrb[0].mxu0 %v2489
        %v3431 = vpop.f32.mrb[0].mxu0
        %v3432 = vadd.f32 0.0, %v3431
        %v3433 = vpop.f32.mrb[0].mxu0
        %3434 = vmatprep.mubr.f32.mxu0 0.0
        %3435 = vmatmul.mubr.f32.gmra.mrb[0].mxu0 %v2490
        %v3436 = vpop.f32.mrb[0].mxu0
        %v3437 = vadd.f32 0.0, %v3436
        %v3438 = vpop.f32.mrb[0].mxu0
        %3439 = vmatprep.mubr.f32.mxu0 0.0
        %3440 = vmatmul.mubr.f32.gmra.mrb[0].mxu0 %v2491
        %v3441 = vpop.f32.mrb[0].mxu0
        %v3442 = vadd.f32 0.0, %v3441
        %v3443 = vpop.f32.mrb[0].mxu0
        %3444 = vmatprep.mubr.f32.mxu0 0.0
        %3445 = vmatmul.mubr.f32.gmra.mrb[0].mxu0 %v2492
        %v3446 = vpop.f32.mrb[0].mxu0
        %v3447 = vadd.f32 0.0, %v3446
        %v3448 = vpop.f32.mrb[0].mxu0
        %3449 = vmatprep.mubr.f32.mxu0 0.0
        %3450 = vmatmul.mubr.f32.gmra.mrb[0].mxu0 %v2493
        %v3451 = vpop.f32.mrb[0].mxu0
        %v3452 = vadd.f32 0.0, %v3451
        %v3453 = vpop.f32.mrb[0].mxu0
        %3454 = vmatprep.mubr.f32.mxu0 0.0
        %3455 = vmatmul.mubr.f32.gmra.mrb[0].mxu0 %v2494
        %v3456 = vpop.f32.mrb[0].mxu0
        %v3457 = vadd.f32 0.0, %v3456
        %v3458 = vpop.f32.mrb[0].mxu0
        %3459 = vmatprep.mubr.f32.mxu0 0.0
        %3460 = vmatmul.mubr.f32.gmra.mrb[0].mxu0 %v2495
        %v3461 = vpop.f32.mrb[0].mxu0
        %v3462 = vadd.f32 0.0, %v3461
        %v3463 = vpop.f32.mrb[0].mxu0
        %3464 = vmatprep.mubr.f32.mxu0 0.0
        %3465 = vmatmul.mubr.f32.gmra.mrb[0].mxu0 %v2496
        %v3466 = vpop.f32.mrb[0].mxu0
        %v3467 = vadd.f32 0.0, %v3466
        %v3468 = vpop.f32.mrb[0].mxu0
        %3469 = vmatprep.mubr.f32.mxu0 0.0
        %3470 = vmatmul.mubr.f32.gmra.mrb[0].mxu0 %v2497
        %v3471 = vpop.f32.mrb[0].mxu0
        %v3472 = vadd.f32 0.0, %v3471
        %v3473 = vpop.f32.mrb[0].mxu0
        %3474 = vmatprep.mubr.f32.mxu0 0.0
        %3475 = vmatmul.mubr.f32.gmra.mrb[0].mxu0 %v2498
        %v3476 = vpop.f32.mrb[0].mxu0
        %v3477 = vadd.f32 0.0, %v3476
        %v3478 = vpop.f32.mrb[0].mxu0
        %3479 = vmatprep.mubr.f32.mxu0 0.0
        %3480 = vmatmul.mubr.f32.gmra.mrb[0].mxu0 %v2499
        %v3481 = vpop.f32.mrb[0].mxu0
        %v3482 = vadd.f32 0.0, %v3481
        %v3483 = vpop.f32.mrb[0].mxu0
        %3484 = vmatprep.mubr.f32.mxu0 0.0
        %3485 = vmatmul.mubr.f32.gmra.mrb[0].mxu0 %v2500
        %v3486 = vpop.f32.mrb[0].mxu0
        %v3487 = vadd.f32 0.0, %v3486
        %v3488 = vpop.f32.mrb[0].mxu0
        %3489 = vmatprep.mubr.f32.mxu0 0.0
        %3490 = vmatmul.mubr.f32.gmra.mrb[0].mxu0 %v2501
        %v3491 = vpop.f32.mrb[0].mxu0
        %v3492 = vadd.f32 0.0, %v3491
        %v3493 = vpop.f32.mrb[0].mxu0
        %3494 = vmatprep.mubr.f32.mxu0 0.0
        %3495 = vmatmul.mubr.f32.gmra.mrb[0].mxu0 %v2502
        %v3496 = vpop.f32.mrb[0].mxu0
        %v3497 = vadd.f32 0.0, %v3496
        %v3498 = vpop.f32.mrb[0].mxu0
        %3499 = vmatprep.mubr.f32.mxu0 0.0
        %3500 = vmatmul.mubr.f32.gmra.mrb[0].mxu0 %v2503
        %v3501 = vpop.f32.mrb[0].mxu0
        %v3502 = vadd.f32 0.0, %v3501
        %v3503 = vpop.f32.mrb[0].mxu0
        %3504 = vmatprep.mubr.f32.mxu0 0.0
        %3505 = vmatmul.mubr.f32.gmra.mrb[0].mxu0 %v2504
        %v3506 = vpop.f32.mrb[0].mxu0
        %v3507 = vadd.f32 0.0, %v3506
        %v3508 = vpop.f32.mrb[0].mxu0
        %3509 = vmatprep.mubr.f32.mxu0 0.0
        %3510 = vmatmul.mubr.f32.gmra.mrb[0].mxu0 %v2505
        %v3511 = vpop.f32.mrb[0].mxu0
        %v3512 = vadd.f32 0.0, %v3511
        %v3513 = vpop.f32.mrb[0].mxu0
        %3514 = vmatprep.mubr.f32.mxu0 0.0
        %3515 = vmatmul.mubr.f32.gmra.mrb[0].mxu0 %v2506
        %v3516 = vpop.f32.mrb[0].mxu0
        %v3517 = vadd.f32 0.0, %v3516
        %v3518 = vpop.f32.mrb[0].mxu0
        %3519 = vmatprep.mubr.f32.mxu0 0.0
        %3520 = vmatmul.mubr.f32.gmra.mrb[0].mxu0 %v2507
        %v3521 = vpop.f32.mrb[0].mxu0
        %v3522 = vadd.f32 0.0, %v3521
        %v3523 = vpop.f32.mrb[0].mxu0
        %3524 = vmatprep.mubr.f32.mxu0 0.0
        %3525 = vmatmul.mubr.f32.gmra.mrb[0].mxu0 %v2508
        %v3526 = vpop.f32.mrb[0].mxu0
        %v3527 = vadd.f32 0.0, %v3526
        %v3528 = vpop.f32.mrb[0].mxu0
        %3529 = vmatprep.mubr.f32.mxu0 0.0
        %3530 = vmatmul.mubr.f32.gmra.mrb[0].mxu0 %v2509
        %v3531 = vpop.f32.mrb[0].mxu0
        %v3532 = vadd.f32 0.0, %v3531
        %v3533 = vpop.f32.mrb[0].mxu0
        %3534 = vmatprep.mubr.f32.mxu0 0.0
        %3535 = vmatmul.mubr.f32.gmra.mrb[0].mxu0 %v2510
        %v3536 = vpop.f32.mrb[0].mxu0
        %v3537 = vadd.f32 0.0, %v3536
        %v3538 = vpop.f32.mrb[0].mxu0
        %3539 = vmatprep.mubr.f32.mxu0 0.0
        %3540 = vmatmul.mubr.f32.gmra.mrb[0].mxu0 %v2511
        %v3541 = vpop.f32.mrb[0].mxu0
        %v3542 = vadd.f32 0.0, %v3541
        %v3543 = vpop.f32.mrb[0].mxu0
        %3544 = vmatprep.mubr.f32.mxu0 0.0
        %3545 = vmatmul.mubr.f32.gmra.mrb[0].mxu0 %v2512
        %v3546 = vpop.f32.mrb[0].mxu0
        %v3547 = vadd.f32 0.0, %v3546
        %v3548 = vpop.f32.mrb[0].mxu0
        %3549 = vmatprep.mubr.f32.mxu0 0.0
        %3550 = vmatmul.mubr.f32.gmra.mrb[0].mxu0 %v2513
        %v3551 = vpop.f32.mrb[0].mxu0
        %v3552 = vadd.f32 0.0, %v3551
        %v3553 = vpop.f32.mrb[0].mxu0
        %3554 = vmatprep.mubr.f32.mxu0 0.0
        %3555 = vmatmul.mubr.f32.gmra.mrb[0].mxu0 %v2514
        %v3556 = vpop.f32.mrb[0].mxu0
        %v3557 = vadd.f32 0.0, %v3556
        %v3558 = vpop.f32.mrb[0].mxu0
        %3559 = vmatprep.mubr.f32.mxu0 0.0
        %3560 = vmatmul.mubr.f32.gmra.mrb[0].mxu0 %v2515
        %v3561 = vpop.f32.mrb[0].mxu0
        %v3562 = vadd.f32 0.0, %v3561
        %v3563 = vpop.f32.mrb[0].mxu0
        %3564 = vmatprep.mubr.f32.mxu0 0.0
        %3565 = vmatmul.mubr.f32.gmra.mrb[0].mxu0 %v2516
        %v3566 = vpop.f32.mrb[0].mxu0
        %v3567 = vadd.f32 0.0, %v3566
        %v3568 = vpop.f32.mrb[0].mxu0
        %3569 = vmatprep.mubr.f32.mxu0 0.0
        %3570 = vmatmul.mubr.f32.gmra.mrb[0].mxu0 %v2517
        %v3571 = vpop.f32.mrb[0].mxu0
        %v3572 = vadd.f32 0.0, %v3571
        %v3573 = vpop.f32.mrb[0].mxu0
        %3574 = vmatprep.mubr.f32.mxu0 0.0
        %3575 = vmatmul.mubr.f32.gmra.mrb[0].mxu0 %v2518
        %v3576 = vpop.f32.mrb[0].mxu0
        %v3577 = vadd.f32 0.0, %v3576
        %v3578 = vpop.f32.mrb[0].mxu0
        %3579 = vmatprep.mubr.f32.mxu0 0.0
        %3580 = vmatmul.mubr.f32.gmra.mrb[0].mxu0 %v2519
        %v3581 = vpop.f32.mrb[0].mxu0
        %v3582 = vadd.f32 0.0, %v3581
        %v3583 = vpop.f32.mrb[0].mxu0
        %3584 = vmatprep.mubr.f32.mxu0 0.0
        %3585 = vmatmul.mubr.f32.gmra.mrb[0].mxu0 %v2520
        %v3586 = vpop.f32.mrb[0].mxu0
        %v3587 = vadd.f32 0.0, %v3586
        %v3588 = vpop.f32.mrb[0].mxu0
        %3589 = vmatprep.mubr.f32.mxu0 0.0
        %3590 = vmatmul.mubr.f32.gmra.mrb[0].mxu0 %v2521
        %v3591 = vpop.f32.mrb[0].mxu0
        %v3592 = vadd.f32 0.0, %v3591
        %v3593 = vpop.f32.mrb[0].mxu0
        %3594 = vmatprep.mubr.f32.mxu0 0.0
        %3595 = vmatmul.mubr.f32.gmra.mrb[0].mxu0 %v2522
        %v3596 = vpop.f32.mrb[0].mxu0
        %v3597 = vadd.f32 0.0, %v3596
        %v3598 = vpop.f32.mrb[0].mxu0
        %3599 = vmatprep.mubr.f32.mxu0 0.0
        %3600 = vmatmul.mubr.f32.gmra.mrb[0].mxu0 %v2523
        %v3601 = vpop.f32.mrb[0].mxu0
        %v3602 = vadd.f32 0.0, %v3601
        %v3603 = vpop.f32.mrb[0].mxu0
        %3604 = vmatprep.mubr.f32.mxu0 0.0
        %3605 = vmatmul.mubr.f32.gmra.mrb[0].mxu0 %v2524
        %v3606 = vpop.f32.mrb[0].mxu0
        %v3607 = vadd.f32 0.0, %v3606
        %v3608 = vpop.f32.mrb[0].mxu0
        %3609 = vmatprep.mubr.f32.mxu0 0.0
        %3610 = vmatmul.mubr.f32.gmra.mrb[0].mxu0 %v2525
        %v3611 = vpop.f32.mrb[0].mxu0
        %v3612 = vadd.f32 0.0, %v3611
        %v3613 = vpop.f32.mrb[0].mxu0
        %3614 = vmatprep.mubr.f32.mxu0 0.0
        %3615 = vmatmul.mubr.f32.gmra.mrb[0].mxu0 %v2526
        %v3616 = vpop.f32.mrb[0].mxu0
        %v3617 = vadd.f32 0.0, %v3616
        %v3618 = vpop.f32.mrb[0].mxu0
        %3619 = vmatprep.mubr.f32.mxu0 0.0
        %3620 = vmatmul.mubr.f32.gmra.mrb[0].mxu0 %v2527
        %v3621 = vpop.f32.mrb[0].mxu0
        %v3622 = vadd.f32 0.0, %v3621
        %v3623 = vpop.f32.mrb[0].mxu0
        %3624 = vmatprep.mubr.f32.mxu0 0.0
        %3625 = vmatmul.mubr.f32.gmra.mrb[0].mxu0 %v2528
        %v3626 = vpop.f32.mrb[0].mxu0
        %v3627 = vadd.f32 0.0, %v3626
        %v3628 = vpop.f32.mrb[0].mxu0
        %3629 = vmatprep.mubr.f32.mxu0 0.0
        %3630 = vmatmul.mubr.f32.gmra.mrb[0].mxu0 %v2529
        %v3631 = vpop.f32.mrb[0].mxu0
        %v3632 = vadd.f32 0.0, %v3631
        %v3633 = vpop.f32.mrb[0].mxu0
        %3634 = vmatprep.mubr.f32.mxu0 0.0
        %3635 = vmatmul.mubr.f32.gmra.mrb[0].mxu0 %v2530
        %v3636 = vpop.f32.mrb[0].mxu0
        %v3637 = vadd.f32 0.0, %v3636
        %v3638 = vpop.f32.mrb[0].mxu0
        %3639 = vmatprep.mubr.f32.mxu0 0.0
        %3640 = vmatmul.mubr.f32.gmra.mrb[0].mxu0 %v2531
        %v3641 = vpop.f32.mrb[0].mxu0
        %v3642 = vadd.f32 0.0, %v3641
        %v3643 = vpop.f32.mrb[0].mxu0
        %3644 = vmatprep.mubr.f32.mxu0 0.0
        %3645 = vmatmul.mubr.f32.gmra.mrb[0].mxu0 %v2532
        %v3646 = vpop.f32.mrb[0].mxu0
        %v3647 = vadd.f32 0.0, %v3646
        %v3648 = vpop.f32.mrb[0].mxu0
        %3649 = vmatprep.mubr.f32.mxu0 0.0
        %3650 = vmatmul.mubr.f32.gmra.mrb[0].mxu0 %v2533
        %v3651 = vpop.f32.mrb[0].mxu0
        %v3652 = vadd.f32 0.0, %v3651
        %v3653 = vpop.f32.mrb[0].mxu0
        %3654 = vmatprep.mubr.f32.mxu0 0.0
        %3655 = vmatmul.mubr.f32.gmra.mrb[0].mxu0 %v2534
        %v3656 = vpop.f32.mrb[0].mxu0
        %v3657 = vadd.f32 0.0, %v3656
        %v3658 = vpop.f32.mrb[0].mxu0
        %3659 = vmatprep.mubr.f32.mxu0 0.0
        %3660 = vmatmul.mubr.f32.gmra.mrb[0].mxu0 %v2535
        %v3661 = vpop.f32.mrb[0].mxu0
        %v3662 = vadd.f32 0.0, %v3661
        %v3663 = vpop.f32.mrb[0].mxu0
        %3664 = vmatprep.mubr.f32.mxu0 0.0
        %3665 = vmatmul.mubr.f32.gmra.mrb[0].mxu0 %v2536
        %v3666 = vpop.f32.mrb[0].mxu0
        %v3667 = vadd.f32 0.0, %v3666
        %v3668 = vpop.f32.mrb[0].mxu0
        %3669 = vmatprep.mubr.f32.mxu0 0.0
        %3670 = vmatmul.mubr.f32.gmra.mrb[0].mxu0 %v2537
        %v3671 = vpop.f32.mrb[0].mxu0
        %v3672 = vadd.f32 0.0, %v3671
        %v3673 = vpop.f32.mrb[0].mxu0
        %3674 = vmatprep.mubr.f32.mxu0 0.0
        %3675 = vmatmul.mubr.f32.gmra.mrb[0].mxu0 %v2538
        %v3676 = vpop.f32.mrb[0].mxu0
        %v3677 = vadd.f32 0.0, %v3676
        %v3678 = vpop.f32.mrb[0].mxu0
        %3679 = vmatprep.mubr.f32.mxu0 0.0
        %3680 = vmatmul.mubr.f32.gmra.mrb[0].mxu0 %v2539
        %v3681 = vpop.f32.mrb[0].mxu0
        %v3682 = vadd.f32 0.0, %v3681
        %v3683 = vpop.f32.mrb[0].mxu0
        %3684 = vmatprep.mubr.f32.mxu0 0.0
        %3685 = vmatmul.mubr.f32.gmra.mrb[0].mxu0 %v2540
        %v3686 = vpop.f32.mrb[0].mxu0
        %v3687 = vadd.f32 0.0, %v3686
        %v3688 = vpop.f32.mrb[0].mxu0
        %3689 = vmatprep.mubr.f32.mxu0 0.0
        %3690 = vmatmul.mubr.f32.gmra.mrb[0].mxu0 %v2541
        %v3691 = vpop.f32.mrb[0].mxu0
        %v3692 = vadd.f32 0.0, %v3691
        %v3693 = vpop.f32.mrb[0].mxu0
        %3694 = vmatprep.mubr.f32.mxu0 0.0
        %3695 = vmatmul.mubr.f32.gmra.mrb[0].mxu0 %v2542
        %v3696 = vpop.f32.mrb[0].mxu0
        %v3697 = vadd.f32 0.0, %v3696
        %v3698 = vpop.f32.mrb[0].mxu0
        %3699 = vmatprep.mubr.f32.mxu0 0.0
        %3700 = vmatmul.mubr.f32.gmra.mrb[0].mxu0 %v2543
        %v3701 = vpop.f32.mrb[0].mxu0
        %v3702 = vadd.f32 0.0, %v3701
        %v3703 = vpop.f32.mrb[0].mxu0
        %3704 = vmatprep.mubr.f32.mxu0 0.0
        %3705 = vmatmul.mubr.f32.gmra.mrb[0].mxu0 %v2544
        %v3706 = vpop.f32.mrb[0].mxu0
        %v3707 = vadd.f32 0.0, %v3706
        %v3708 = vpop.f32.mrb[0].mxu0
        %3709 = vmatprep.mubr.f32.mxu0 0.0
        %3710 = vmatmul.mubr.f32.gmra.mrb[0].mxu0 %v2545
        %v3711 = vpop.f32.mrb[0].mxu0
        %v3712 = vadd.f32 0.0, %v3711
        %v3713 = vpop.f32.mrb[0].mxu0
        %3714 = vmatprep.mubr.f32.mxu0 0.0
        %3715 = vmatmul.mubr.f32.gmra.mrb[0].mxu0 %v2546
        %v3716 = vpop.f32.mrb[0].mxu0
        %v3717 = vadd.f32 0.0, %v3716
        %v3718 = vpop.f32.mrb[0].mxu0
        %3719 = vmatprep.mubr.f32.mxu0 0.0
        %3720 = vmatmul.mubr.f32.gmra.mrb[0].mxu0 %v2547
        %v3721 = vpop.f32.mrb[0].mxu0
        %v3722 = vadd.f32 0.0, %v3721
        %v3723 = vpop.f32.mrb[0].mxu0
        %3724 = vmatprep.mubr.f32.mxu0 0.0
        %3725 = vmatmul.mubr.f32.gmra.mrb[0].mxu0 %v2548
        %v3726 = vpop.f32.mrb[0].mxu0
        %v3727 = vadd.f32 0.0, %v3726
        %v3728 = vpop.f32.mrb[0].mxu0
        %3729 = vmatprep.mubr.f32.mxu0 0.0
        %3730 = vmatmul.mubr.f32.gmra.mrb[0].mxu0 %v2549
        %v3731 = vpop.f32.mrb[0].mxu0
        %v3732 = vadd.f32 0.0, %v3731
        %v3733 = vpop.f32.mrb[0].mxu0
        %3734 = vmatprep.mubr.f32.mxu0 0.0
        %3735 = vmatmul.mubr.f32.gmra.mrb[0].mxu0 %v2550
        %v3736 = vpop.f32.mrb[0].mxu0
        %v3737 = vadd.f32 0.0, %v3736
        %v3738 = vpop.f32.mrb[0].mxu0
        %3739 = vmatprep.mubr.f32.mxu0 0.0
        %3740 = vmatmul.mubr.f32.gmra.mrb[0].mxu0 %v2551
        %v3741 = vpop.f32.mrb[0].mxu0
        %v3742 = vadd.f32 0.0, %v3741
        %v3743 = vpop.f32.mrb[0].mxu0
        %3744 = vmatprep.mubr.f32.mxu0 0.0
        %3745 = vmatmul.mubr.f32.gmra.mrb[0].mxu0 %v2552
        %v3746 = vpop.f32.mrb[0].mxu0
        %v3747 = vadd.f32 0.0, %v3746
        %v3748 = vpop.f32.mrb[0].mxu0
        %3749 = vmatprep.mubr.f32.mxu0 0.0
        %3750 = vmatmul.mubr.f32.gmra.mrb[0].mxu0 %v2553
        %v3751 = vpop.f32.mrb[0].mxu0
        %v3752 = vadd.f32 0.0, %v3751
        %v3753 = vpop.f32.mrb[0].mxu0
        %3754 = vmatprep.mubr.f32.mxu0 0.0
        %3755 = vmatmul.mubr.f32.gmra.mrb[0].mxu0 %v2554
        %v3756 = vpop.f32.mrb[0].mxu0
        %v3757 = vadd.f32 0.0, %v3756
        %v3758 = vpop.f32.mrb[0].mxu0
        %3759 = vmatprep.mubr.f32.mxu0 0.0
        %3760 = vmatmul.mubr.f32.gmra.mrb[0].mxu0 %v2555
        %v3761 = vpop.f32.mrb[0].mxu0
        %v3762 = vadd.f32 0.0, %v3761
        %v3763 = vpop.f32.mrb[0].mxu0
        %3764 = vmatprep.mubr.f32.mxu0 0.0
        %3765 = vmatmul.mubr.f32.gmra.mrb[0].mxu0 %v2556
        %v3766 = vpop.f32.mrb[0].mxu0
        %v3767 = vadd.f32 0.0, %v3766
        %v3768 = vpop.f32.mrb[0].mxu0
        %3769 = vmatprep.mubr.f32.mxu0 0.0
        %3770 = vmatmul.mubr.f32.gmra.mrb[0].mxu0 %v2557
        %v3771 = vpop.f32.mrb[0].mxu0
        %v3772 = vadd.f32 0.0, %v3771
        %v3773 = vpop.f32.mrb[0].mxu0
        %3774 = vmatprep.mubr.f32.mxu0 0.0
        %3775 = vmatmul.mubr.f32.gmra.mrb[0].mxu0 %v2558
        %v3776 = vpop.f32.mrb[0].mxu0
        %v3777 = vadd.f32 0.0, %v3776
        %v3778 = vpop.f32.mrb[0].mxu0
        %3779 = vmatprep.mubr.f32.mxu0 0.0
        %3780 = vmatmul.mubr.f32.gmra.mrb[0].mxu0 %v2559
        %v3781 = vpop.f32.mrb[0].mxu0
        %v3782 = vadd.f32 0.0, %v3781
        %v3783 = vpop.f32.mrb[0].mxu0
        %3784 = vmatprep.mubr.f32.mxu0 0.0
        %3785 = vmatmul.mubr.f32.gmra.mrb[0].mxu0 %v2560
        %v3786 = vpop.f32.mrb[0].mxu0
        %v3787 = vadd.f32 0.0, %v3786
        %v3788 = vpop.f32.mrb[0].mxu0
        %3789 = vmatprep.mubr.f32.mxu0 0.0
        %3790 = vmatmul.mubr.f32.gmra.mrb[0].mxu0 %v2561
        %v3791 = vpop.f32.mrb[0].mxu0
        %v3792 = vadd.f32 0.0, %v3791
        %v3793 = vpop.f32.mrb[0].mxu0
        %3794 = vmatprep.mubr.f32.mxu0 0.0
        %3795 = vmatmul.mubr.f32.gmra.mrb[0].mxu0 %v2562
        %v3796 = vpop.f32.mrb[0].mxu0
        %v3797 = vadd.f32 0.0, %v3796
        %v3798 = vpop.f32.mrb[0].mxu0
        %3799 = vmatprep.mubr.f32.mxu0 0.0
        %3800 = vmatmul.mubr.f32.gmra.mrb[0].mxu0 %v2563
        %v3801 = vpop.f32.mrb[0].mxu0
        %v3802 = vadd.f32 0.0, %v3801
        %v3803 = vpop.f32.mrb[0].mxu0
        %3804 = vmatprep.mubr.f32.mxu0 0.0
        %3805 = vmatmul.mubr.f32.gmra.mrb[0].mxu0 %v2564
        %v3806 = vpop.f32.mrb[0].mxu0
        %v3807 = vadd.f32 0.0, %v3806
        %v3808 = vpop.f32.mrb[0].mxu0
        %3809 = vmatprep.mubr.f32.mxu0 0.0
        %3810 = vmatmul.mubr.f32.gmra.mrb[0].mxu0 %v2565
        %v3811 = vpop.f32.mrb[0].mxu0
        %v3812 = vadd.f32 0.0, %v3811
        %v3813 = vpop.f32.mrb[0].mxu0
        %3814 = vmatprep.mubr.f32.mxu0 0.0
        %3815 = vmatmul.mubr.f32.gmra.mrb[0].mxu0 %v2566
        %v3816 = vpop.f32.mrb[0].mxu0
        %v3817 = vadd.f32 0.0, %v3816
        %v3818 = vpop.f32.mrb[0].mxu0
        %3819 = vmatprep.mubr.f32.mxu0 0.0
        %3820 = vmatmul.mubr.f32.gmra.mrb[0].mxu0 %v2567
        %v3821 = vpop.f32.mrb[0].mxu0
        %v3822 = vadd.f32 0.0, %v3821
        %v3823 = vpop.f32.mrb[0].mxu0
        %3824 = vmatprep.mubr.f32.mxu0 0.0
        %3825 = vmatmul.mubr.f32.gmra.mrb[0].mxu0 %v2568
        %v3826 = vpop.f32.mrb[0].mxu0
        %v3827 = vadd.f32 0.0, %v3826
        %v3828 = vpop.f32.mrb[0].mxu0
        %3829 = vmatprep.mubr.f32.mxu0 0.0
        %3830 = vmatmul.mubr.f32.gmra.mrb[0].mxu0 %v2569
        %v3831 = vpop.f32.mrb[0].mxu0
        %v3832 = vadd.f32 0.0, %v3831
        %v3833 = vpop.f32.mrb[0].mxu0
        %3834 = vmatprep.mubr.f32.mxu0 0.0
        %3835 = vmatmul.mubr.f32.gmra.mrb[0].mxu0 %v2570
        %v3836 = vpop.f32.mrb[0].mxu0
        %v3837 = vadd.f32 0.0, %v3836
        %v3838 = vpop.f32.mrb[0].mxu0
        %3839 = vmatprep.mubr.f32.mxu0 0.0
        %3840 = vmatmul.mubr.f32.gmra.mrb[0].mxu0 %v2571
        %v3841 = vpop.f32.mrb[0].mxu0
        %v3842 = vadd.f32 0.0, %v3841
        %v3843 = vpop.f32.mrb[0].mxu0
        %3844 = vmatprep.mubr.f32.mxu0 0.0
        %3845 = vmatmul.mubr.f32.gmra.mrb[0].mxu0 %v2572
        %v3846 = vpop.f32.mrb[0].mxu0
        %v3847 = vadd.f32 0.0, %v3846
        %v3848 = vpop.f32.mrb[0].mxu0
        %3849 = vmatprep.mubr.f32.mxu0 0.0
        %3850 = vmatmul.mubr.f32.gmra.mrb[0].mxu0 %v2573
        %v3851 = vpop.f32.mrb[0].mxu0
        %v3852 = vadd.f32 0.0, %v3851
        %v3853 = vpop.f32.mrb[0].mxu0
        %3854 = vmatprep.mubr.f32.mxu0 0.0
        %3855 = vmatmul.mubr.f32.gmra.mrb[0].mxu0 %v2574
        %v3856 = vpop.f32.mrb[0].mxu0
        %v3857 = vadd.f32 0.0, %v3856
        %v3858 = vpop.f32.mrb[0].mxu0
        %3859 = vmatprep.mubr.f32.mxu0 0.0
        %3860 = vmatmul.mubr.f32.gmra.mrb[0].mxu0 %v2575
        %v3861 = vpop.f32.mrb[0].mxu0
        %v3862 = vadd.f32 0.0, %v3861
        %v3863 = vpop.f32.mrb[0].mxu0
        %3864 = vmatprep.mubr.f32.mxu0 0.0
        %3865 = vmatmul.mubr.f32.gmra.mrb[0].mxu0 %v2576
        %v3866 = vpop.f32.mrb[0].mxu0
        %v3867 = vadd.f32 0.0, %v3866
        %v3868 = vpop.f32.mrb[0].mxu0
        %3869 = vmatprep.mubr.f32.mxu0 0.0
        %3870 = vmatmul.mubr.f32.gmra.mrb[0].mxu0 %v2577
        %v3871 = vpop.f32.mrb[0].mxu0
        %v3872 = vadd.f32 0.0, %v3871
        %v3873 = vpop.f32.mrb[0].mxu0
        %3874 = vmatprep.mubr.f32.mxu0 0.0
        %3875 = vmatmul.mubr.f32.gmra.mrb[0].mxu0 %v2578
        %v3876 = vpop.f32.mrb[0].mxu0
        %v3877 = vadd.f32 0.0, %v3876
        %v3878 = vpop.f32.mrb[0].mxu0
        %3879 = vmatprep.mubr.f32.mxu0 0.0
        %3880 = vmatmul.mubr.f32.gmra.mrb[0].mxu0 %v2579
        %v3881 = vpop.f32.mrb[0].mxu0
        %v3882 = vadd.f32 0.0, %v3881
        %v3883 = vpop.f32.mrb[0].mxu0
        %3884 = vmatprep.mubr.f32.mxu0 0.0
        %3885 = vmatmul.mubr.f32.gmra.mrb[0].mxu0 %v2580
        %v3886 = vpop.f32.mrb[0].mxu0
        %v3887 = vadd.f32 0.0, %v3886
        %v3888 = vpop.f32.mrb[0].mxu0
        %3889 = vmatprep.mubr.f32.mxu0 0.0
        %3890 = vmatmul.mubr.f32.gmra.mrb[0].mxu0 %v2581
        %v3891 = vpop.f32.mrb[0].mxu0
        %v3892 = vadd.f32 0.0, %v3891
        %v3893 = vpop.f32.mrb[0].mxu0
        %3894 = vmatprep.mubr.f32.mxu0 0.0
        %3895 = vmatmul.mubr.f32.gmra.mrb[0].mxu0 %v2582
        %v3896 = vpop.f32.mrb[0].mxu0
        %v3897 = vadd.f32 0.0, %v3896
        %v3898 = vpop.f32.mrb[0].mxu0
        %3899 = vmatprep.mubr.f32.mxu0 0.0
        %3900 = vmatmul.mubr.f32.gmra.mrb[0].mxu0 %v2583
        %v3901 = vpop.f32.mrb[0].mxu0
        %v3902 = vadd.f32 0.0, %v3901
        %v3903 = vpop.f32.mrb[0].mxu0
        %3904 = vmatprep.mubr.f32.mxu0 0.0
        %3905 = vmatmul.mubr.f32.gmra.mrb[0].mxu0 %v2584
        %v3906 = vpop.f32.mrb[0].mxu0
        %v3907 = vadd.f32 0.0, %v3906
        %v3908 = vpop.f32.mrb[0].mxu0
        %3909 = vmatprep.mubr.f32.mxu0 0.0
        %3910 = vmatmul.mubr.f32.gmra.mrb[0].mxu0 %v2585
        %v3911 = vpop.f32.mrb[0].mxu0
        %v3912 = vadd.f32 0.0, %v3911
        %v3913 = vpop.f32.mrb[0].mxu0
        %3914 = vmatprep.mubr.f32.mxu0 0.0
        %3915 = vmatmul.mubr.f32.gmra.mrb[0].mxu0 %v2586
        %v3916 = vpop.f32.mrb[0].mxu0
        %v3917 = vadd.f32 0.0, %v3916
        %v3918 = vpop.f32.mrb[0].mxu0
        %3919 = vmatprep.mubr.f32.mxu0 0.0
        %3920 = vmatmul.mubr.f32.gmra.mrb[0].mxu0 %v2587
        %v3921 = vpop.f32.mrb[0].mxu0
        %v3922 = vadd.f32 0.0, %v3921
        %v3923 = vpop.f32.mrb[0].mxu0
        %3924 = vmatprep.mubr.f32.mxu0 0.0
        %3925 = vmatmul.mubr.f32.gmra.mrb[0].mxu0 %v2588
        %v3926 = vpop.f32.mrb[0].mxu0
        %v3927 = vadd.f32 0.0, %v3926
        %v3928 = vpop.f32.mrb[0].mxu0
        %3929 = vmatprep.mubr.f32.mxu0 0.0
        %3930 = vmatmul.mubr.f32.gmra.mrb[0].mxu0 %v2589
        %v3931 = vpop.f32.mrb[0].mxu0
        %v3932 = vadd.f32 0.0, %v3931
        %v3933 = vpop.f32.mrb[0].mxu0
        %3934 = vmatprep.mubr.f32.mxu0 0.0
        %3935 = vmatmul.mubr.f32.gmra.mrb[0].mxu0 %v2590
        %v3936 = vpop.f32.mrb[0].mxu0
        %v3937 = vadd.f32 0.0, %v3936
        %v3938 = vpop.f32.mrb[0].mxu0
        %3939 = vmatprep.mubr.f32.mxu0 0.0
        %3940 = vmatmul.mubr.f32.gmra.mrb[0].mxu0 %v2591
        %v3941 = vpop.f32.mrb[0].mxu0
        %v3942 = vadd.f32 0.0, %v3941
        %v3943 = vpop.f32.mrb[0].mxu0
        %3944 = vmatprep.mubr.f32.mxu0 0.0
        %3945 = vmatmul.mubr.f32.gmra.mrb[0].mxu0 %v2592
        %v3946 = vpop.f32.mrb[0].mxu0
        %v3947 = vadd.f32 0.0, %v3946
        %v3948 = vpop.f32.mrb[0].mxu0
        %3949 = vmatprep.mubr.f32.mxu0 0.0
        %3950 = vmatmul.mubr.f32.gmra.mrb[0].mxu0 %v2593
        %v3951 = vpop.f32.mrb[0].mxu0
        %v3952 = vadd.f32 0.0, %v3951
        %v3953 = vpop.f32.mrb[0].mxu0
        %3954 = vmatprep.mubr.f32.mxu0 0.0
        %3955 = vmatmul.mubr.f32.gmra.mrb[0].mxu0 %v2594
        %v3956 = vpop.f32.mrb[0].mxu0
        %v3957 = vadd.f32 0.0, %v3956
        %v3958 = vpop.f32.mrb[0].mxu0
        %3959 = vmatprep.mubr.f32.mxu0 0.0
        %3960 = vmatmul.mubr.f32.gmra.mrb[0].mxu0 %v2595
        %v3961 = vpop.f32.mrb[0].mxu0
        %v3962 = vadd.f32 0.0, %v3961
        %v3963 = vpop.f32.mrb[0].mxu0
        %3964 = vmatprep.mubr.f32.mxu0 0.0
        %3965 = vmatmul.mubr.f32.gmra.mrb[0].mxu0 %v2596
        %v3966 = vpop.f32.mrb[0].mxu0
        %v3967 = vadd.f32 0.0, %v3966
        %v3968 = vpop.f32.mrb[0].mxu0
        %3969 = vmatprep.mubr.f32.mxu0 0.0
        %3970 = vmatmul.mubr.f32.gmra.mrb[0].mxu0 %v2597
        %v3971 = vpop.f32.mrb[0].mxu0
        %v3972 = vadd.f32 0.0, %v3971
        %v3973 = vpop.f32.mrb[0].mxu0
        %3974 = vmatprep.mubr.f32.mxu0 0.0
        %3975 = vmatmul.mubr.f32.gmra.mrb[0].mxu0 %v2598
        %v3976 = vpop.f32.mrb[0].mxu0
        %v3977 = vadd.f32 0.0, %v3976
        %v3978 = vpop.f32.mrb[0].mxu0
        %3979 = vmatprep.mubr.f32.mxu0 0.0
        %3980 = vmatmul.mubr.f32.gmra.mrb[0].mxu0 %v2599
        %v3981 = vpop.f32.mrb[0].mxu0
        %v3982 = vadd.f32 0.0, %v3981
        %v3983 = vpop.f32.mrb[0].mxu0
        %3984 = vmatprep.mubr.f32.mxu0 0.0
        %3985 = vmatmul.mubr.f32.gmra.mrb[0].mxu0 %v2600
        %v3986 = vpop.f32.mrb[0].mxu0
        %v3987 = vadd.f32 0.0, %v3986
        %v3988 = vpop.f32.mrb[0].mxu0
        %3989 = vmatprep.mubr.f32.mxu0 0.0
        %3990 = vmatmul.mubr.f32.gmra.mrb[0].mxu0 %v2601
        %v3991 = vpop.f32.mrb[0].mxu0
        %v3992 = vadd.f32 0.0, %v3991
        %v3993 = vpop.f32.mrb[0].mxu0
        %3994 = vmatprep.mubr.f32.mxu0 0.0
        %3995 = vmatmul.mubr.f32.gmra.mrb[0].mxu0 %v2602
        %v3996 = vpop.f32.mrb[0].mxu0
        %v3997 = vadd.f32 0.0, %v3996
        %v3998 = vpop.f32.mrb[0].mxu0
        %3999 = vmatprep.mubr.f32.mxu0 0.0
        %4000 = vmatmul.mubr.f32.gmra.mrb[0].mxu0 %v2603
        %v4001 = vpop.f32.mrb[0].mxu0
        %v4002 = vadd.f32 0.0, %v4001
        %v4003 = vpop.f32.mrb[0].mxu0
        %4004 = vmatprep.mubr.f32.mxu0 0.0
        %4005 = vmatmul.mubr.f32.gmra.mrb[0].mxu0 %v2604
        %v4006 = vpop.f32.mrb[0].mxu0
        %v4007 = vadd.f32 0.0, %v4006
        %v4008 = vpop.f32.mrb[0].mxu0
        %4009 = vmatprep.mubr.f32.mxu0 0.0
        %4010 = vmatmul.mubr.f32.gmra.mrb[0].mxu0 %v2605
        %v4011 = vpop.f32.mrb[0].mxu0
        %v4012 = vadd.f32 0.0, %v4011
        %v4013 = vpop.f32.mrb[0].mxu0
        %4014 = vmatprep.mubr.f32.mxu0 0.0
        %4015 = vmatmul.mubr.f32.gmra.mrb[0].mxu0 %v2606
        %v4016 = vpop.f32.mrb[0].mxu0
        %v4017 = vadd.f32 0.0, %v4016
        %v4018 = vpop.f32.mrb[0].mxu0
        %4019 = vmatprep.mubr.f32.mxu0 0.0
        %4020 = vmatmul.mubr.f32.gmra.mrb[0].mxu0 %v2607
        %v4021 = vpop.f32.mrb[0].mxu0
        %v4022 = vadd.f32 0.0, %v4021
        %v4023 = vpop.f32.mrb[0].mxu0
        %4024 = vmatprep.mubr.f32.mxu0 0.0
        %4025 = vmatmul.mubr.f32.gmra.mrb[0].mxu0 %v2608
        %v4026 = vpop.f32.mrb[0].mxu0
        %v4027 = vadd.f32 0.0, %v4026
        %v4028 = vpop.f32.mrb[0].mxu0
        %4029 = vmatprep.mubr.f32.mxu0 0.0
        %4030 = vmatmul.mubr.f32.gmra.mrb[0].mxu0 %v2609
        %v4031 = vpop.f32.mrb[0].mxu0
        %v4032 = vadd.f32 0.0, %v4031
        %v4033 = vpop.f32.mrb[0].mxu0
        %4034 = vmatprep.mubr.f32.mxu0 0.0
        %4035 = vmatmul.mubr.f32.gmra.mrb[0].mxu0 %v2610
        %v4036 = vpop.f32.mrb[0].mxu0
        %v4037 = vadd.f32 0.0, %v4036
        %v4038 = vpop.f32.mrb[0].mxu0
        %4039 = vmatprep.mubr.f32.mxu0 0.0
        %4040 = vmatmul.mubr.f32.gmra.mrb[0].mxu0 %v2611
        %v4041 = vpop.f32.mrb[0].mxu0
        %v4042 = vadd.f32 0.0, %v4041
        %v4043 = vpop.f32.mrb[0].mxu0
        %4044 = vmatprep.mubr.f32.mxu0 0.0
        %4045 = vmatmul.mubr.f32.gmra.mrb[0].mxu0 %v2612
        %v4046 = vpop.f32.mrb[0].mxu0
        %v4047 = vadd.f32 0.0, %v4046
        %v4048 = vpop.f32.mrb[0].mxu0
        %4049 = vmatprep.mubr.f32.mxu0 0.0
        %4050 = vmatmul.mubr.f32.gmra.mrb[0].mxu0 %v2613
        %v4051 = vpop.f32.mrb[0].mxu0
        %v4052 = vadd.f32 0.0, %v4051
        %v4053 = vpop.f32.mrb[0].mxu0
        %4054 = vmatprep.mubr.f32.mxu0 0.0
        %4055 = vmatmul.mubr.f32.gmra.mrb[0].mxu0 %v2614
        %v4056 = vpop.f32.mrb[0].mxu0
        %v4057 = vadd.f32 0.0, %v4056
        %v4058 = vpop.f32.mrb[0].mxu0
        %4059 = vmatprep.mubr.f32.mxu0 0.0
        %4060 = vmatmul.mubr.f32.gmra.mrb[0].mxu0 %v2615
        %v4061 = vpop.f32.mrb[0].mxu0
        %v4062 = vadd.f32 0.0, %v4061
        %v4063 = vpop.f32.mrb[0].mxu0
        %4064 = vmatprep.mubr.f32.mxu0 0.0
        %4065 = vmatmul.mubr.f32.gmra.mrb[0].mxu0 %v2616
        %v4066 = vpop.f32.mrb[0].mxu0
        %v4067 = vadd.f32 0.0, %v4066
        %v4068 = vpop.f32.mrb[0].mxu0
        %4069 = vmatprep.mubr.f32.mxu0 0.0
        %4070 = vmatmul.mubr.f32.gmra.mrb[0].mxu0 %v2617
        %v4071 = vpop.f32.mrb[0].mxu0
        %v4072 = vadd.f32 0.0, %v4071
        %v4073 = vpop.f32.mrb[0].mxu0
        %4074 = vmatprep.mubr.f32.mxu0 0.0
        %4075 = vmatmul.mubr.f32.gmra.mrb[0].mxu0 %v2618
        %v4076 = vpop.f32.mrb[0].mxu0
        %v4077 = vadd.f32 0.0, %v4076
        %v4078 = vpop.f32.mrb[0].mxu0
        %4079 = vmatprep.mubr.f32.mxu0 0.0
        %4080 = vmatmul.mubr.f32.gmra.mrb[0].mxu0 %v2619
        %v4081 = vpop.f32.mrb[0].mxu0
        %v4082 = vadd.f32 0.0, %v4081
        %v4083 = vpop.f32.mrb[0].mxu0
        %4084 = vmatprep.mubr.f32.mxu0 0.0
        %4085 = vmatmul.mubr.f32.gmra.mrb[0].mxu0 %v2620
        %v4086 = vpop.f32.mrb[0].mxu0
        %v4087 = vadd.f32 0.0, %v4086
        %v4088 = vpop.f32.mrb[0].mxu0
        %4089 = vmatprep.mubr.f32.mxu0 0.0
        %4090 = vmatmul.mubr.f32.gmra.mrb[0].mxu0 %v2621
        %v4091 = vpop.f32.mrb[0].mxu0
        %v4092 = vadd.f32 0.0, %v4091
        %v4093 = vpop.f32.mrb[0].mxu0
        %4094 = vmatprep.mubr.f32.mxu0 0.0
        %4095 = vmatmul.mubr.f32.gmra.mrb[0].mxu0 %v2622
        %v4096 = vpop.f32.mrb[0].mxu0
        %v4097 = vadd.f32 0.0, %v4096
        %v4098 = vpop.f32.mrb[0].mxu0
        %4099 = vmatprep.mubr.f32.mxu0 0.0
        %4100 = vmatmul.mubr.f32.gmra.mrb[0].mxu0 %v2623
        %v4101 = vpop.f32.mrb[0].mxu0
        %v4102 = vadd.f32 0.0, %v4101
        %v4103 = vpop.f32.mrb[0].mxu0
        %4104 = vmatprep.mubr.f32.mxu0 0.0
        %4105 = vmatmul.mubr.f32.gmra.mrb[0].mxu0 %v2624
        %v4106 = vpop.f32.mrb[0].mxu0
        %v4107 = vadd.f32 0.0, %v4106
        %v4108 = vpop.f32.mrb[0].mxu0
        %4109 = vmatprep.mubr.f32.mxu0 0.0
        %4110 = vmatmul.mubr.f32.gmra.mrb[0].mxu0 %v2625
        %v4111 = vpop.f32.mrb[0].mxu0
        %v4112 = vadd.f32 0.0, %v4111
        %v4113 = vpop.f32.mrb[0].mxu0
        %4114 = vmatprep.mubr.f32.mxu0 0.0
        %4115 = vmatmul.mubr.f32.gmra.mrb[0].mxu0 %v2626
        %v4116 = vpop.f32.mrb[0].mxu0
        %v4117 = vadd.f32 0.0, %v4116
        %v4118 = vpop.f32.mrb[0].mxu0
        %4119 = vmatprep.mubr.f32.mxu0 0.0
        %4120 = vmatmul.mubr.f32.gmra.mrb[0].mxu0 %v2627
        %v4121 = vpop.f32.mrb[0].mxu0
        %v4122 = vadd.f32 0.0, %v4121
        %v4123 = vpop.f32.mrb[0].mxu0
        %4124 = vmatprep.mubr.f32.mxu0 0.0
        %4125 = vmatmul.mubr.f32.gmra.mrb[0].mxu0 %v2628
        %v4126 = vpop.f32.mrb[0].mxu0
        %v4127 = vadd.f32 0.0, %v4126
        %v4128 = vpop.f32.mrb[0].mxu0
        %4129 = vmatprep.mubr.f32.mxu0 0.0
        %4130 = vmatmul.mubr.f32.gmra.mrb[0].mxu0 %v2629
        %v4131 = vpop.f32.mrb[0].mxu0
        %v4132 = vadd.f32 0.0, %v4131
        %v4133 = vpop.f32.mrb[0].mxu0
        %4134 = vmatprep.mubr.f32.mxu0 0.0
        %4135 = vmatmul.mubr.f32.gmra.mrb[0].mxu0 %v2630
        %v4136 = vpop.f32.mrb[0].mxu0
        %v4137 = vadd.f32 0.0, %v4136
        %v4138 = vpop.f32.mrb[0].mxu0
        %4139 = vmatprep.mubr.f32.mxu0 0.0
        %4140 = vmatmul.mubr.f32.gmra.mrb[0].mxu0 %v2631
        %v4141 = vpop.f32.mrb[0].mxu0
        %v4142 = vadd.f32 0.0, %v4141
        %v4143 = vpop.f32.mrb[0].mxu0
        %4144 = vmatprep.mubr.f32.mxu0 0.0
        %4145 = vmatmul.mubr.f32.gmra.mrb[0].mxu0 %v2632
        %v4146 = vpop.f32.mrb[0].mxu0
        %v4147 = vadd.f32 0.0, %v4146
        %v4148 = vpop.f32.mrb[0].mxu0
        %4149 = vmatprep.mubr.f32.mxu0 0.0
        %4150 = vmatmul.mubr.f32.gmra.mrb[0].mxu0 %v2633
        %v4151 = vpop.f32.mrb[0].mxu0
        %v4152 = vadd.f32 0.0, %v4151
        %v4153 = vpop.f32.mrb[0].mxu0
        %4154 = vmatprep.mubr.f32.mxu0 0.0
        %4155 = vmatmul.mubr.f32.gmra.mrb[0].mxu0 %v2634
        %v4156 = vpop.f32.mrb[0].mxu0
        %v4157 = vadd.f32 0.0, %v4156
        %v4158 = vpop.f32.mrb[0].mxu0
        %4159 = vmatprep.mubr.f32.mxu0 0.0
        %4160 = vmatmul.mubr.f32.gmra.mrb[0].mxu0 %v2635
        %v4161 = vpop.f32.mrb[0].mxu0
        %v4162 = vadd.f32 0.0, %v4161
        %v4163 = vpop.f32.mrb[0].mxu0
        %4164 = vmatprep.mubr.f32.mxu0 0.0
        %4165 = vmatmul.mubr.f32.gmra.mrb[0].mxu0 %v2636
        %v4166 = vpop.f32.mrb[0].mxu0
        %v4167 = vadd.f32 0.0, %v4166
        %v4168 = vpop.f32.mrb[0].mxu0
        %4169 = vmatprep.mubr.f32.mxu0 0.0
        %4170 = vmatmul.mubr.f32.gmra.mrb[0].mxu0 %v2637
        %v4171 = vpop.f32.mrb[0].mxu0
        %v4172 = vadd.f32 0.0, %v4171
        %v4173 = vpop.f32.mrb[0].mxu0
        %4174 = vmatprep.mubr.f32.mxu0 0.0
        %4175 = vmatmul.mubr.f32.gmra.mrb[0].mxu0 %v2638
        %v4176 = vpop.f32.mrb[0].mxu0
        %v4177 = vadd.f32 0.0, %v4176
        %v4178 = vpop.f32.mrb[0].mxu0
        %4179 = vmatprep.mubr.f32.mxu0 0.0
        %4180 = vmatmul.mubr.f32.gmra.mrb[0].mxu0 %v2639
        %v4181 = vpop.f32.mrb[0].mxu0
        %v4182 = vadd.f32 0.0, %v4181
        %v4183 = vpop.f32.mrb[0].mxu0
        %4184 = vmatprep.mubr.f32.mxu0 0.0
        %4185 = vmatmul.mubr.f32.gmra.mrb[0].mxu0 %v2640
        %v4186 = vpop.f32.mrb[0].mxu0
        %v4187 = vadd.f32 0.0, %v4186
        %v4188 = vpop.f32.mrb[0].mxu0
        %4189 = vmatprep.mubr.f32.mxu0 0.0
        %4190 = vmatmul.mubr.f32.gmra.mrb[0].mxu0 %v2641
        %v4191 = vpop.f32.mrb[0].mxu0
        %v4192 = vadd.f32 0.0, %v4191
        %v4193 = vpop.f32.mrb[0].mxu0
        %4194 = vmatprep.mubr.f32.mxu0 0.0
        %4195 = vmatmul.mubr.f32.gmra.mrb[0].mxu0 %v2642
        %v4196 = vpop.f32.mrb[0].mxu0
        %v4197 = vadd.f32 0.0, %v4196
        %v4198 = vpop.f32.mrb[0].mxu0
        %4199 = vmatprep.mubr.f32.mxu0 0.0
        %4200 = vmatmul.mubr.f32.gmra.mrb[0].mxu0 %v2643
        %v4201 = vpop.f32.mrb[0].mxu0
        %v4202 = vadd.f32 0.0, %v4201
        %v4203 = vpop.f32.mrb[0].mxu0
        %4204 = vmatprep.mubr.f32.mxu0 0.0
        %4205 = vmatmul.mubr.f32.gmra.mrb[0].mxu0 %v2644
        %v4206 = vpop.f32.mrb[0].mxu0
        %v4207 = vadd.f32 0.0, %v4206
        %v4208 = vpop.f32.mrb[0].mxu0
        %4209 = vmatprep.mubr.f32.mxu0 0.0
        %4210 = vmatmul.mubr.f32.gmra.mrb[0].mxu0 %v2645
        %v4211 = vpop.f32.mrb[0].mxu0
        %v4212 = vadd.f32 0.0, %v4211
        %v4213 = vpop.f32.mrb[0].mxu0
        %4214 = vmatprep.mubr.f32.mxu0 0.0
        %4215 = vmatmul.mubr.f32.gmra.mrb[0].mxu0 %v2646
        %v4216 = vpop.f32.mrb[0].mxu0
        %v4217 = vadd.f32 0.0, %v4216
        %v4218 = vpop.f32.mrb[0].mxu0
        %4219 = vmatprep.mubr.f32.mxu0 0.0
        %4220 = vmatmul.mubr.f32.gmra.mrb[0].mxu0 %v2647
        %v4221 = vpop.f32.mrb[0].mxu0
        %v4222 = vadd.f32 0.0, %v4221
        %v4223 = vpop.f32.mrb[0].mxu0
        %4224 = vmatprep.mubr.f32.mxu0 0.0
        %4225 = vmatmul.mubr.f32.gmra.mrb[0].mxu0 %v2648
        %v4226 = vpop.f32.mrb[0].mxu0
        %v4227 = vadd.f32 0.0, %v4226
        %v4228 = vpop.f32.mrb[0].mxu0
        %4229 = vmatprep.mubr.f32.mxu0 0.0
        %4230 = vmatmul.mubr.f32.gmra.mrb[0].mxu0 %v2649
        %v4231 = vpop.f32.mrb[0].mxu0
        %v4232 = vadd.f32 0.0, %v4231
        %v4233 = vpop.f32.mrb[0].mxu0
        %4234 = vmatprep.mubr.f32.mxu0 0.0
        %4235 = vmatmul.mubr.f32.gmra.mrb[0].mxu0 %v2650
        %v4236 = vpop.f32.mrb[0].mxu0
        %v4237 = vadd.f32 0.0, %v4236
        %v4238 = vpop.f32.mrb[0].mxu0
        %4239 = vmatprep.mubr.f32.mxu0 0.0
        %4240 = vmatmul.mubr.f32.gmra.mrb[0].mxu0 %v2651
        %v4241 = vpop.f32.mrb[0].mxu0
        %v4242 = vadd.f32 0.0, %v4241
        %v4243 = vpop.f32.mrb[0].mxu0
        %4244 = vmatprep.mubr.f32.mxu0 0.0
        %4245 = vmatmul.mubr.f32.gmra.mrb[0].mxu0 %v2652
        %v4246 = vpop.f32.mrb[0].mxu0
        %v4247 = vadd.f32 0.0, %v4246
        %v4248 = vpop.f32.mrb[0].mxu0
        %4249 = vmatprep.mubr.f32.mxu0 0.0
        %4250 = vmatmul.mubr.f32.gmra.mrb[0].mxu0 %v2653
        %v4251 = vpop.f32.mrb[0].mxu0
        %v4252 = vadd.f32 0.0, %v4251
        %v4253 = vpop.f32.mrb[0].mxu0
        %4254 = vmatprep.mubr.f32.mxu0 0.0
        %4255 = vmatmul.mubr.f32.gmra.mrb[0].mxu0 %v2654
        %v4256 = vpop.f32.mrb[0].mxu0
        %v4257 = vadd.f32 0.0, %v4256
        %v4258 = vpop.f32.mrb[0].mxu0
        %4259 = vmatprep.mubr.f32.mxu0 0.0
        %4260 = vmatmul.mubr.f32.gmra.mrb[0].mxu0 %v2655
        %v4261 = vpop.f32.mrb[0].mxu0
        %v4262 = vadd.f32 0.0, %v4261
        %v4263 = vpop.f32.mrb[0].mxu0
        %4264 = vmatprep.mubr.f32.mxu0 0.0
        %4265 = vmatmul.mubr.f32.gmra.mrb[0].mxu0 %v2656
        %v4266 = vpop.f32.mrb[0].mxu0
        %v4267 = vadd.f32 0.0, %v4266
        %v4268 = vpop.f32.mrb[0].mxu0
        %4269 = vmatprep.mubr.f32.mxu0 0.0
        %4270 = vmatmul.mubr.f32.gmra.mrb[0].mxu0 %v2657
        %v4271 = vpop.f32.mrb[0].mxu0
        %v4272 = vadd.f32 0.0, %v4271
        %v4273 = vpop.f32.mrb[0].mxu0
        %4274 = vmatprep.mubr.f32.mxu0 0.0
        %4275 = vmatmul.mubr.f32.gmra.mrb[0].mxu0 %v2658
        %v4276 = vpop.f32.mrb[0].mxu0
        %v4277 = vadd.f32 0.0, %v4276
        %v4278 = vpop.f32.mrb[0].mxu0
        %4279 = vmatprep.mubr.f32.mxu0 0.0
        %4280 = vmatmul.mubr.f32.gmra.mrb[0].mxu0 %v2659
        %v4281 = vpop.f32.mrb[0].mxu0
        %v4282 = vadd.f32 0.0, %v4281
        %v4283 = vpop.f32.mrb[0].mxu0
        %4284 = vmatprep.mubr.f32.mxu0 0.0
        %4285 = vmatmul.mubr.f32.gmra.mrb[0].mxu0 %v2660
        %v4286 = vpop.f32.mrb[0].mxu0
        %v4287 = vadd.f32 0.0, %v4286
        %v4288 = vpop.f32.mrb[0].mxu0
        %4289 = vmatprep.mubr.f32.mxu0 0.0
        %4290 = vmatmul.mubr.f32.gmra.mrb[0].mxu0 %v2661
        %v4291 = vpop.f32.mrb[0].mxu0
        %v4292 = vadd.f32 0.0, %v4291
        %v4293 = vpop.f32.mrb[0].mxu0
        %4294 = vmatprep.mubr.f32.mxu0 0.0
        %4295 = vmatmul.mubr.f32.gmra.mrb[0].mxu0 %v2662
        %v4296 = vpop.f32.mrb[0].mxu0
        %v4297 = vadd.f32 0.0, %v4296
        %v4298 = vpop.f32.mrb[0].mxu0
        %4299 = vmatprep.mubr.f32.mxu0 0.0
        %4300 = vmatmul.mubr.f32.gmra.mrb[0].mxu0 %v2663
        %v4301 = vpop.f32.mrb[0].mxu0
        %v4302 = vadd.f32 0.0, %v4301
        %v4303 = vpop.f32.mrb[0].mxu0
        %4304 = vmatprep.mubr.f32.mxu0 0.0
        %4305 = vmatmul.mubr.f32.gmra.mrb[0].mxu0 %v2664
        %v4306 = vpop.f32.mrb[0].mxu0
        %v4307 = vadd.f32 0.0, %v4306
        %v4308 = vpop.f32.mrb[0].mxu0
        %4309 = vmatprep.mubr.f32.mxu0 0.0
        %4310 = vmatmul.mubr.f32.gmra.mrb[0].mxu0 %v2665
        %v4311 = vpop.f32.mrb[0].mxu0
        %v4312 = vadd.f32 0.0, %v4311
        %v4313 = vpop.f32.mrb[0].mxu0
        %4314 = vmatprep.mubr.f32.mxu0 0.0
        %4315 = vmatmul.mubr.f32.gmra.mrb[0].mxu0 %v2666
        %v4316 = vpop.f32.mrb[0].mxu0
        %v4317 = vadd.f32 0.0, %v4316
        %v4318 = vpop.f32.mrb[0].mxu0
        %4319 = vmatprep.mubr.f32.mxu0 0.0
        %4320 = vmatmul.mubr.f32.gmra.mrb[0].mxu0 %v2667
        %v4321 = vpop.f32.mrb[0].mxu0
        %v4322 = vadd.f32 0.0, %v4321
        %v4323 = vpop.f32.mrb[0].mxu0
        %4324 = vmatprep.mubr.f32.mxu0 0.0
        %4325 = vmatmul.mubr.f32.gmra.mrb[0].mxu0 %v2668
        %v4326 = vpop.f32.mrb[0].mxu0
        %v4327 = vadd.f32 0.0, %v4326
        %v4328 = vpop.f32.mrb[0].mxu0
        %4329 = vmatprep.mubr.f32.mxu0 0.0
        %4330 = vmatmul.mubr.f32.gmra.mrb[0].mxu0 %v2669
        %v4331 = vpop.f32.mrb[0].mxu0
        %v4332 = vadd.f32 0.0, %v4331
        %v4333 = vpop.f32.mrb[0].mxu0
        %4334 = vmatprep.mubr.f32.mxu0 0.0
        %4335 = vmatmul.mubr.f32.gmra.mrb[0].mxu0 %v2670
        %v4336 = vpop.f32.mrb[0].mxu0
        %v4337 = vadd.f32 0.0, %v4336
        %v4338 = vpop.f32.mrb[0].mxu0
        %4339 = vmatprep.mubr.f32.mxu0 0.0
        %4340 = vmatmul.mubr.f32.gmra.mrb[0].mxu0 %v2671
        %v4341 = vpop.f32.mrb[0].mxu0
        %v4342 = vadd.f32 0.0, %v4341
        %v4343 = vpop.f32.mrb[0].mxu0
        %4344 = vmatprep.mubr.f32.mxu0 0.0
        %4345 = vmatmul.mubr.f32.gmra.mrb[0].mxu0 %v2672
        %v4346 = vpop.f32.mrb[0].mxu0
        %v4347 = vadd.f32 0.0, %v4346
        %v4348 = vpop.f32.mrb[0].mxu0
        %4349 = vmatprep.mubr.f32.mxu0 0.0
        %4350 = vmatmul.mubr.f32.gmra.mrb[0].mxu0 %v2673
        %v4351 = vpop.f32.mrb[0].mxu0
        %v4352 = vadd.f32 0.0, %v4351
        %v4353 = vpop.f32.mrb[0].mxu0
        %4354 = vmatprep.mubr.f32.mxu0 0.0
        %4355 = vmatmul.mubr.f32.gmra.mrb[0].mxu0 %v2674
        %v4356 = vpop.f32.mrb[0].mxu0
        %v4357 = vadd.f32 0.0, %v4356
        %v4358 = vpop.f32.mrb[0].mxu0
        %4359 = vmatprep.mubr.f32.mxu0 0.0
        %4360 = vmatmul.mubr.f32.gmra.mrb[0].mxu0 %v2675
        %v4361 = vpop.f32.mrb[0].mxu0
        %v4362 = vadd.f32 0.0, %v4361
        %v4363 = vpop.f32.mrb[0].mxu0
        %4364 = vmatprep.mubr.f32.mxu0 0.0
        %4365 = vmatmul.mubr.f32.gmra.mrb[0].mxu0 %v2676
        %v4366 = vpop.f32.mrb[0].mxu0
        %v4367 = vadd.f32 0.0, %v4366
        %v4368 = vpop.f32.mrb[0].mxu0
        %4369 = vmatprep.mubr.f32.mxu0 0.0
        %4370 = vmatmul.mubr.f32.gmra.mrb[0].mxu0 %v2677
        %v4371 = vpop.f32.mrb[0].mxu0
        %v4372 = vadd.f32 0.0, %v4371
        %v4373 = vpop.f32.mrb[0].mxu0
        %4374 = vmatprep.mubr.f32.mxu0 0.0
        %4375 = vmatmul.mubr.f32.gmra.mrb[0].mxu0 %v2678
        %v4376 = vpop.f32.mrb[0].mxu0
        %v4377 = vadd.f32 0.0, %v4376
        %v4378 = vpop.f32.mrb[0].mxu0
        %4379 = vmatprep.mubr.f32.mxu0 0.0
        %4380 = vmatmul.mubr.f32.gmra.mrb[0].mxu0 %v2679
        %v4381 = vpop.f32.mrb[0].mxu0
        %v4382 = vadd.f32 0.0, %v4381
        %v4383 = vpop.f32.mrb[0].mxu0
        %4384 = vmatprep.mubr.f32.mxu0 0.0
        %4385 = vmatmul.mubr.f32.gmra.mrb[0].mxu0 %v2680
        %v4386 = vpop.f32.mrb[0].mxu0
        %v4387 = vadd.f32 0.0, %v4386
        %v4388 = vpop.f32.mrb[0].mxu0
        %4389 = vmatprep.mubr.f32.mxu0 0.0
        %4390 = vmatmul.mubr.f32.gmra.mrb[0].mxu0 %v2681
        %v4391 = vpop.f32.mrb[0].mxu0
        %v4392 = vadd.f32 0.0, %v4391
        %v4393 = vpop.f32.mrb[0].mxu0
        %4394 = vmatprep.mubr.f32.mxu0 0.0
        %4395 = vmatmul.mubr.f32.gmra.mrb[0].mxu0 %v2682
        %v4396 = vpop.f32.mrb[0].mxu0
        %v4397 = vadd.f32 0.0, %v4396
        %v4398 = vpop.f32.mrb[0].mxu0
        %4399 = vmatprep.mubr.f32.mxu0 0.0
        %4400 = vmatmul.mubr.f32.gmra.mrb[0].mxu0 %v2683
        %v4401 = vpop.f32.mrb[0].mxu0
        %v4402 = vadd.f32 0.0, %v4401
        %v4403 = vpop.f32.mrb[0].mxu0
        %4404 = vmatprep.mubr.f32.mxu0 0.0
        %4405 = vmatmul.mubr.f32.gmra.mrb[0].mxu0 %v2684
        %v4406 = vpop.f32.mrb[0].mxu0
        %v4407 = vadd.f32 0.0, %v4406
        %v4408 = vpop.f32.mrb[0].mxu0
        %4409 = vmatprep.mubr.f32.mxu0 0.0
        %4410 = vmatmul.mubr.f32.gmra.mrb[0].mxu0 %v2685
        %v4411 = vpop.f32.mrb[0].mxu0
        %v4412 = vadd.f32 0.0, %v4411
        %v4413 = vpop.f32.mrb[0].mxu0
        %4414 = vmatprep.mubr.f32.mxu0 0.0
        %4415 = vmatmul.mubr.f32.gmra.mrb[0].mxu0 %v2686
        %v4416 = vpop.f32.mrb[0].mxu0
        %v4417 = vadd.f32 0.0, %v4416
        %v4418 = vpop.f32.mrb[0].mxu0
        %4419 = vmatprep.mubr.f32.mxu0 0.0
        %4420 = vmatmul.mubr.f32.gmra.mrb[0].mxu0 %v2687
        %v4421 = vpop.f32.mrb[0].mxu0
        %v4422 = vadd.f32 0.0, %v4421
        %v4423 = vpop.f32.mrb[0].mxu0
        %4424 = vmatprep.mubr.f32.mxu0 0.0
        %4425 = vmatmul.mubr.f32.gmra.mrb[0].mxu0 %v2688
        %v4426 = vpop.f32.mrb[0].mxu0
        %v4427 = vadd.f32 0.0, %v4426
        %v4428 = vpop.f32.mrb[0].mxu0
        %4429 = vmatprep.mubr.f32.mxu0 0.0
        %4430 = vmatmul.mubr.f32.gmra.mrb[0].mxu0 %v2689
        %v4431 = vpop.f32.mrb[0].mxu0
        %v4432 = vadd.f32 0.0, %v4431
        %v4433 = vpop.f32.mrb[0].mxu0
        %4434 = vmatprep.mubr.f32.mxu0 0.0
        %4435 = vmatmul.mubr.f32.gmra.mrb[0].mxu0 %v2690
        %v4436 = vpop.f32.mrb[0].mxu0
        %v4437 = vadd.f32 0.0, %v4436
        %v4438 = vpop.f32.mrb[0].mxu0
        %4439 = vmatprep.mubr.f32.mxu0 0.0
        %4440 = vmatmul.mubr.f32.gmra.mrb[0].mxu0 %v2691
        %v4441 = vpop.f32.mrb[0].mxu0
        %v4442 = vadd.f32 0.0, %v4441
        %v4443 = vpop.f32.mrb[0].mxu0
        %4444 = vmatprep.mubr.f32.mxu0 0.0
        %4445 = vmatmul.mubr.f32.gmra.mrb[0].mxu0 %v2692
        %v4446 = vpop.f32.mrb[0].mxu0
        %v4447 = vadd.f32 0.0, %v4446
        %v4448 = vpop.f32.mrb[0].mxu0
        %4449 = vmatprep.mubr.f32.mxu0 0.0
        %4450 = vmatmul.mubr.f32.gmra.mrb[0].mxu0 %v2693
        %v4451 = vpop.f32.mrb[0].mxu0
        %v4452 = vadd.f32 0.0, %v4451
        %v4453 = vpop.f32.mrb[0].mxu0
        %4454 = vmatprep.mubr.f32.mxu0 0.0
        %4455 = vmatmul.mubr.f32.gmra.mrb[0].mxu0 %v2694
        %v4456 = vpop.f32.mrb[0].mxu0
        %v4457 = vadd.f32 0.0, %v4456
        %v4458 = vpop.f32.mrb[0].mxu0
        %4459 = vmatprep.mubr.f32.mxu0 0.0
        %4460 = vmatmul.mubr.f32.gmra.mrb[0].mxu0 %v2695
        %v4461 = vpop.f32.mrb[0].mxu0
        %v4462 = vadd.f32 0.0, %v4461
        %v4463 = vpop.f32.mrb[0].mxu0
        %4464 = vmatprep.mubr.f32.mxu0 0.0
        %4465 = vmatmul.mubr.f32.gmra.mrb[0].mxu0 %v2696
        %v4466 = vpop.f32.mrb[0].mxu0
        %v4467 = vadd.f32 0.0, %v4466
        %v4468 = vpop.f32.mrb[0].mxu0
        %4469 = vmatprep.mubr.f32.mxu0 0.0
        %4470 = vmatmul.mubr.f32.gmra.mrb[0].mxu0 %v2697
        %v4471 = vpop.f32.mrb[0].mxu0
        %v4472 = vadd.f32 0.0, %v4471
        %v4473 = vpop.f32.mrb[0].mxu0
        %4474 = vmatprep.mubr.f32.mxu0 0.0
        %4475 = vmatmul.mubr.f32.gmra.mrb[0].mxu0 %v2698
        %v4476 = vpop.f32.mrb[0].mxu0
        %v4477 = vadd.f32 0.0, %v4476
        %v4478 = vpop.f32.mrb[0].mxu0
        %4479 = vmatprep.mubr.f32.mxu0 0.0
        %4480 = vmatmul.mubr.f32.gmra.mrb[0].mxu0 %v2699
        %v4481 = vpop.f32.mrb[0].mxu0
        %v4482 = vadd.f32 0.0, %v4481
        %v4483 = vpop.f32.mrb[0].mxu0
        %4484 = vmatprep.mubr.f32.mxu0 0.0
        %4485 = vmatmul.mubr.f32.gmra.mrb[0].mxu0 %v2700
        %v4486 = vpop.f32.mrb[0].mxu0
        %v4487 = vadd.f32 0.0, %v4486
        %v4488 = vpop.f32.mrb[0].mxu0
        %4489 = vmatprep.mubr.f32.mxu0 0.0
        %4490 = vmatmul.mubr.f32.gmra.mrb[0].mxu0 %v2701
        %v4491 = vpop.f32.mrb[0].mxu0
        %v4492 = vadd.f32 0.0, %v4491
        %v4493 = vpop.f32.mrb[0].mxu0
        %4494 = vmatprep.mubr.f32.mxu0 0.0
        %4495 = vmatmul.mubr.f32.gmra.mrb[0].mxu0 %v2702
        %v4496 = vpop.f32.mrb[0].mxu0
        %v4497 = vadd.f32 0.0, %v4496
        %v4498 = vpop.f32.mrb[0].mxu0
        %4499 = vmatprep.mubr.f32.mxu0 0.0
        %4500 = vmatmul.mubr.f32.gmra.mrb[0].mxu0 %v2703
        %v4501 = vpop.f32.mrb[0].mxu0
        %v4502 = vadd.f32 0.0, %v4501
        %v4503 = vpop.f32.mrb[0].mxu0
        %4504 = vmatprep.mubr.f32.mxu0 0.0
        %4505 = vmatmul.mubr.f32.gmra.mrb[0].mxu0 %v2704
        %v4506 = vpop.f32.mrb[0].mxu0
        %v4507 = vadd.f32 0.0, %v4506
        %v4508 = vpop.f32.mrb[0].mxu0
        %4509 = vmatprep.mubr.f32.mxu0 0.0
        %4510 = vmatmul.mubr.f32.gmra.mrb[0].mxu0 %v2705
        %v4511 = vpop.f32.mrb[0].mxu0
        %v4512 = vadd.f32 0.0, %v4511
        %v4513 = vpop.f32.mrb[0].mxu0
        %4514 = vmatprep.mubr.f32.mxu0 0.0
        %4515 = vmatmul.mubr.f32.gmra.mrb[0].mxu0 %v2706
        %v4516 = vpop.f32.mrb[0].mxu0
        %v4517 = vadd.f32 0.0, %v4516
        %v4518 = vpop.f32.mrb[0].mxu0
        %4519 = vmatprep.mubr.f32.mxu0 0.0
        %4520 = vmatmul.mubr.f32.gmra.mrb[0].mxu0 %v2707
        %v4521 = vpop.f32.mrb[0].mxu0
        %v4522 = vadd.f32 0.0, %v4521
        %v4523 = vpop.f32.mrb[0].mxu0
        %4524 = vmatprep.mubr.f32.mxu0 0.0
        %4525 = vmatmul.mubr.f32.gmra.mrb[0].mxu0 %v2708
        %v4526 = vpop.f32.mrb[0].mxu0
        %v4527 = vadd.f32 0.0, %v4526
        %v4528 = vpop.f32.mrb[0].mxu0
        %4529 = vmatprep.mubr.f32.mxu0 0.0
        %4530 = vmatmul.mubr.f32.gmra.mrb[0].mxu0 %v2709
        %v4531 = vpop.f32.mrb[0].mxu0
        %v4532 = vadd.f32 0.0, %v4531
        %v4533 = vpop.f32.mrb[0].mxu0
        %4534 = vmatprep.mubr.f32.mxu0 0.0
        %4535 = vmatmul.mubr.f32.gmra.mrb[0].mxu0 %v2710
        %v4536 = vpop.f32.mrb[0].mxu0
        %v4537 = vadd.f32 0.0, %v4536
        %v4538 = vpop.f32.mrb[0].mxu0
        %4539 = vmatprep.mubr.f32.mxu0 0.0
        %4540 = vmatmul.mubr.f32.gmra.mrb[0].mxu0 %v2711
        %v4541 = vpop.f32.mrb[0].mxu0
        %v4542 = vadd.f32 0.0, %v4541
        %v4543 = vpop.f32.mrb[0].mxu0
        %4544 = vmatprep.mubr.f32.mxu0 0.0
        %4545 = vmatmul.mubr.f32.gmra.mrb[0].mxu0 %v2712
        %v4546 = vpop.f32.mrb[0].mxu0
        %v4547 = vadd.f32 0.0, %v4546
        %v4548 = vpop.f32.mrb[0].mxu0
        %4549 = vmatprep.mubr.f32.mxu0 0.0
        %4550 = vmatmul.mubr.f32.gmra.mrb[0].mxu0 %v2713
        %v4551 = vpop.f32.mrb[0].mxu0
        %v4552 = vadd.f32 0.0, %v4551
        %v4553 = vpop.f32.mrb[0].mxu0
        %4554 = vmatprep.mubr.f32.mxu0 0.0
        %4555 = vmatmul.mubr.f32.gmra.mrb[0].mxu0 %v2714
        %v4556 = vpop.f32.mrb[0].mxu0
        %v4557 = vadd.f32 0.0, %v4556
        %v4558 = vpop.f32.mrb[0].mxu0
        %4559 = vmatprep.mubr.f32.mxu0 0.0
        %4560 = vmatmul.mubr.f32.gmra.mrb[0].mxu0 %v2715
        %v4561 = vpop.f32.mrb[0].mxu0
        %v4562 = vadd.f32 0.0, %v4561
        %v4563 = vpop.f32.mrb[0].mxu0
        %4564 = vmatprep.mubr.f32.mxu0 0.0
        %4565 = vmatmul.mubr.f32.gmra.mrb[0].mxu0 %v2716
        %v4566 = vpop.f32.mrb[0].mxu0
        %v4567 = vadd.f32 0.0, %v4566
        %v4568 = vpop.f32.mrb[0].mxu0
        %4569 = vmatprep.mubr.f32.mxu0 0.0
        %4570 = vmatmul.mubr.f32.gmra.mrb[0].mxu0 %v2717
        %v4571 = vpop.f32.mrb[0].mxu0
        %v4572 = vadd.f32 0.0, %v4571
        %v4573 = vpop.f32.mrb[0].mxu0
        %4574 = vmatprep.mubr.f32.mxu0 0.0
        %4575 = vmatmul.mubr.f32.gmra.mrb[0].mxu0 %v2718
        %v4576 = vpop.f32.mrb[0].mxu0
        %v4577 = vadd.f32 0.0, %v4576
        %v4578 = vpop.f32.mrb[0].mxu0
        %4579 = vmatprep.mubr.f32.mxu0 0.0
        %4580 = vmatmul.mubr.f32.gmra.mrb[0].mxu0 %v2719
        %v4581 = vpop.f32.mrb[0].mxu0
        %v4582 = vadd.f32 0.0, %v4581
        %v4583 = vpop.f32.mrb[0].mxu0
        %4584 = vmatprep.mubr.f32.mxu0 0.0
        %4585 = vmatmul.mubr.f32.gmra.mrb[0].mxu0 %v2720
        %v4586 = vpop.f32.mrb[0].mxu0
        %v4587 = vadd.f32 0.0, %v4586
        %v4588 = vpop.f32.mrb[0].mxu0
        %4589 = vmatprep.mubr.f32.mxu0 0.0
        %4590 = vmatmul.mubr.f32.gmra.mrb[0].mxu0 %v2721
        %v4591 = vpop.f32.mrb[0].mxu0
        %v4592 = vadd.f32 0.0, %v4591
        %v4593 = vpop.f32.mrb[0].mxu0
        %4594 = vmatprep.mubr.f32.mxu0 0.0
        %4595 = vmatmul.mubr.f32.gmra.mrb[0].mxu0 %v2722
        %v4596 = vpop.f32.mrb[0].mxu0
        %v4597 = vadd.f32 0.0, %v4596
        %v4598 = vpop.f32.mrb[0].mxu0
        %4599 = vmatprep.mubr.f32.mxu0 0.0
        %4600 = vmatmul.mubr.f32.gmra.mrb[0].mxu0 %v2723
        %v4601 = vpop.f32.mrb[0].mxu0
        %v4602 = vadd.f32 0.0, %v4601
        %v4603 = vpop.f32.mrb[0].mxu0
        %4604 = vmatprep.mubr.f32.mxu0 0.0
        %4605 = vmatmul.mubr.f32.gmra.mrb[0].mxu0 %v2724
        %v4606 = vpop.f32.mrb[0].mxu0
        %v4607 = vadd.f32 0.0, %v4606
        %v4608 = vpop.f32.mrb[0].mxu0
        %4609 = vmatprep.mubr.f32.mxu0 0.0
        %4610 = vmatmul.mubr.f32.gmra.mrb[0].mxu0 %v2725
        %v4611 = vpop.f32.mrb[0].mxu0
        %v4612 = vadd.f32 0.0, %v4611
        %v4613 = vpop.f32.mrb[0].mxu0
        %4614 = vmatprep.mubr.f32.mxu0 0.0
        %4615 = vmatmul.mubr.f32.gmra.mrb[0].mxu0 %v2726
        %v4616 = vpop.f32.mrb[0].mxu0
        %v4617 = vadd.f32 0.0, %v4616
        %v4618 = vpop.f32.mrb[0].mxu0
        %4619 = vmatprep.mubr.f32.mxu0 0.0
        %4620 = vmatmul.mubr.f32.gmra.mrb[0].mxu0 %v2727
        %v4621 = vpop.f32.mrb[0].mxu0
        %v4622 = vadd.f32 0.0, %v4621
        %v4623 = vpop.f32.mrb[0].mxu0
        %4624 = vmatprep.mubr.f32.mxu0 0.0
        %4625 = vmatmul.mubr.f32.gmra.mrb[0].mxu0 %v2728
        %v4626 = vpop.f32.mrb[0].mxu0
        %v4627 = vadd.f32 0.0, %v4626
        %v4628 = vpop.f32.mrb[0].mxu0
        %4629 = vmatprep.mubr.f32.mxu0 0.0
        %4630 = vmatmul.mubr.f32.gmra.mrb[0].mxu0 %v2729
        %v4631 = vpop.f32.mrb[0].mxu0
        %v4632 = vadd.f32 0.0, %v4631
        %v4633 = vpop.f32.mrb[0].mxu0
        %4634 = vmatprep.mubr.f32.mxu0 0.0
        %4635 = vmatmul.mubr.f32.gmra.mrb[0].mxu0 %v2730
        %v4636 = vpop.f32.mrb[0].mxu0
        %v4637 = vadd.f32 0.0, %v4636
        %v4638 = vpop.f32.mrb[0].mxu0
        %4639 = vmatprep.mubr.f32.mxu0 0.0
        %4640 = vmatmul.mubr.f32.gmra.mrb[0].mxu0 %v2731
        %v4641 = vpop.f32.mrb[0].mxu0
        %v4642 = vadd.f32 0.0, %v4641
        %v4643 = vpop.f32.mrb[0].mxu0
        %4644 = vmatprep.mubr.f32.mxu0 0.0
        %4645 = vmatmul.mubr.f32.gmra.mrb[0].mxu0 %v2732
        %v4646 = vpop.f32.mrb[0].mxu0
        %v4647 = vadd.f32 0.0, %v4646
        %v4648 = vpop.f32.mrb[0].mxu0
        %4649 = vmatprep.mubr.f32.mxu0 0.0
        %4650 = vmatmul.mubr.f32.gmra.mrb[0].mxu0 %v2733
        %v4651 = vpop.f32.mrb[0].mxu0
        %v4652 = vadd.f32 0.0, %v4651
        %v4653 = vpop.f32.mrb[0].mxu0
        %4654 = vmatprep.mubr.f32.mxu0 0.0
        %4655 = vmatmul.mubr.f32.gmra.mrb[0].mxu0 %v2734
        %v4656 = vpop.f32.mrb[0].mxu0
        %v4657 = vadd.f32 0.0, %v4656
        %v4658 = vpop.f32.mrb[0].mxu0
        %4659 = vmatprep.mubr.f32.mxu0 0.0
        %4660 = vmatmul.mubr.f32.gmra.mrb[0].mxu0 %v2735
        %v4661 = vpop.f32.mrb[0].mxu0
        %v4662 = vadd.f32 0.0, %v4661
        %v4663 = vpop.f32.mrb[0].mxu0
        %4664 = vmatprep.mubr.f32.mxu0 0.0
        %4665 = vmatmul.mubr.f32.gmra.mrb[0].mxu0 %v2736
        %v4666 = vpop.f32.mrb[0].mxu0
        %v4667 = vadd.f32 0.0, %v4666
        %v4668 = vpop.f32.mrb[0].mxu0
        %4669 = vmatprep.mubr.f32.mxu0 0.0
        %4670 = vmatmul.mubr.f32.gmra.mrb[0].mxu0 %v2737
        %v4671 = vpop.f32.mrb[0].mxu0
        %v4672 = vadd.f32 0.0, %v4671
        %v4673 = vpop.f32.mrb[0].mxu0
        %4674 = vmatprep.mubr.f32.mxu0 0.0
        %4675 = vmatmul.mubr.f32.gmra.mrb[0].mxu0 %v2738
        %v4676 = vpop.f32.mrb[0].mxu0
        %v4677 = vadd.f32 0.0, %v4676
        %v4678 = vpop.f32.mrb[0].mxu0
        %4679 = vmatprep.mubr.f32.mxu0 0.0
        %4680 = vmatmul.mubr.f32.gmra.mrb[0].mxu0 %v2739
        %v4681 = vpop.f32.mrb[0].mxu0
        %v4682 = vadd.f32 0.0, %v4681
        %v4683 = vpop.f32.mrb[0].mxu0
        %4684 = vmatprep.mubr.f32.mxu0 0.0
        %4685 = vmatmul.mubr.f32.gmra.mrb[0].mxu0 %v2740
        %v4686 = vpop.f32.mrb[0].mxu0
        %v4687 = vadd.f32 0.0, %v4686
        %v4688 = vpop.f32.mrb[0].mxu0
        %4689 = vmatprep.mubr.f32.mxu0 0.0
        %4690 = vmatmul.mubr.f32.gmra.mrb[0].mxu0 %v2741
        %v4691 = vpop.f32.mrb[0].mxu0
        %v4692 = vadd.f32 0.0, %v4691
        %v4693 = vpop.f32.mrb[0].mxu0
        %4694 = vmatprep.mubr.f32.mxu0 0.0
        %4695 = vmatmul.mubr.f32.gmra.mrb[0].mxu0 %v2742
        %v4696 = vpop.f32.mrb[0].mxu0
        %v4697 = vadd.f32 0.0, %v4696
        %v4698 = vpop.f32.mrb[0].mxu0
        %4699 = vmatprep.mubr.f32.mxu0 0.0
        %4700 = vmatmul.mubr.f32.gmra.mrb[0].mxu0 %v2743
        %v4701 = vpop.f32.mrb[0].mxu0
        %v4702 = vadd.f32 0.0, %v4701
        %v4703 = vpop.f32.mrb[0].mxu0
        %4704 = vmatprep.mubr.f32.mxu0 0.0
        %4705 = vmatmul.mubr.f32.gmra.mrb[0].mxu0 %v2744
        %v4706 = vpop.f32.mrb[0].mxu0
        %v4707 = vadd.f32 0.0, %v4706
        %v4708 = vpop.f32.mrb[0].mxu0
        %4709 = vmatprep.mubr.f32.mxu0 0.0
        %4710 = vmatmul.mubr.f32.gmra.mrb[0].mxu0 %v2745
        %v4711 = vpop.f32.mrb[0].mxu0
        %v4712 = vadd.f32 0.0, %v4711
        %v4713 = vpop.f32.mrb[0].mxu0
        %4714 = vmatprep.mubr.f32.mxu0 0.0
        %4715 = vmatmul.mubr.f32.gmra.mrb[0].mxu0 %v2746
        %v4716 = vpop.f32.mrb[0].mxu0
        %v4717 = vadd.f32 0.0, %v4716
        %v4718 = vpop.f32.mrb[0].mxu0
        %4719 = vmatprep.mubr.f32.mxu0 0.0
        %4720 = vmatmul.mubr.f32.gmra.mrb[0].mxu0 %v2747
        %v4721 = vpop.f32.mrb[0].mxu0
        %v4722 = vadd.f32 0.0, %v4721
        %v4723 = vpop.f32.mrb[0].mxu0
        %4724 = vmatprep.mubr.f32.mxu0 0.0
        %4725 = vmatmul.mubr.f32.gmra.mrb[0].mxu0 %v2748
        %v4726 = vpop.f32.mrb[0].mxu0
        %v4727 = vadd.f32 0.0, %v4726
        %v4728 = vpop.f32.mrb[0].mxu0
        %4729 = vmatprep.mubr.f32.mxu0 0.0
        %4730 = vmatmul.mubr.f32.gmra.mrb[0].mxu0 %v2749
        %v4731 = vpop.f32.mrb[0].mxu0
        %v4732 = vadd.f32 0.0, %v4731
        %v4733 = vpop.f32.mrb[0].mxu0
        %4734 = vmatprep.mubr.f32.mxu0 0.0
        %4735 = vmatmul.mubr.f32.gmra.mrb[0].mxu0 %v2750
        %v4736 = vpop.f32.mrb[0].mxu0
        %v4737 = vadd.f32 0.0, %v4736
        %v4738 = vpop.f32.mrb[0].mxu0
        %4739 = vmatprep.mubr.f32.mxu0 0.0
        %4740 = vmatmul.mubr.f32.gmra.mrb[0].mxu0 %v2751
        %v4741 = vpop.f32.mrb[0].mxu0
        %v4742 = vadd.f32 0.0, %v4741
        %v4743 = vpop.f32.mrb[0].mxu0
        %4744 = vmatprep.mubr.f32.mxu0 0.0
        %4745 = vmatmul.mubr.f32.gmra.mrb[0].mxu0 %v2752
        %v4746 = vpop.f32.mrb[0].mxu0
        %v4747 = vadd.f32 0.0, %v4746
        %v4748 = vpop.f32.mrb[0].mxu0
        %4749 = vmatprep.mubr.f32.mxu0 0.0
        %4750 = vmatmul.mubr.f32.gmra.mrb[0].mxu0 %v2753
        %v4751 = vpop.f32.mrb[0].mxu0
        %v4752 = vadd.f32 0.0, %v4751
        %v4753 = vpop.f32.mrb[0].mxu0
        %4754 = vmatprep.mubr.f32.mxu0 0.0
        %4755 = vmatmul.mubr.f32.gmra.mrb[0].mxu0 %v2754
        %v4756 = vpop.f32.mrb[0].mxu0
        %v4757 = vadd.f32 0.0, %v4756
        %v4758 = vpop.f32.mrb[0].mxu0
        %4759 = vmatprep.mubr.f32.mxu0 0.0
        %4760 = vmatmul.mubr.f32.gmra.mrb[0].mxu0 %v2755
        %v4761 = vpop.f32.mrb[0].mxu0
        %v4762 = vadd.f32 0.0, %v4761
        %v4763 = vpop.f32.mrb[0].mxu0
        %4764 = vmatprep.mubr.f32.mxu0 0.0
        %4765 = vmatmul.mubr.f32.gmra.mrb[0].mxu0 %v2756
        %v4766 = vpop.f32.mrb[0].mxu0
        %v4767 = vadd.f32 0.0, %v4766
        %v4768 = vpop.f32.mrb[0].mxu0
        %4769 = vmatprep.mubr.f32.mxu0 0.0
        %4770 = vmatmul.mubr.f32.gmra.mrb[0].mxu0 %v2757
        %v4771 = vpop.f32.mrb[0].mxu0
        %v4772 = vadd.f32 0.0, %v4771
        %v4773 = vpop.f32.mrb[0].mxu0
        %4774 = vmatprep.mubr.f32.mxu0 0.0
        %4775 = vmatmul.mubr.f32.gmra.mrb[0].mxu0 %v2758
        %v4776 = vpop.f32.mrb[0].mxu0
        %v4777 = vadd.f32 0.0, %v4776
        %v4778 = vpop.f32.mrb[0].mxu0
        %4779 = vmatprep.mubr.f32.mxu0 0.0
        %4780 = vmatmul.mubr.f32.gmra.mrb[0].mxu0 %v2759
        %v4781 = vpop.f32.mrb[0].mxu0
        %v4782 = vadd.f32 0.0, %v4781
        %v4783 = vpop.f32.mrb[0].mxu0
        %4784 = vmatprep.mubr.f32.mxu0 0.0
        %4785 = vmatmul.mubr.f32.gmra.mrb[0].mxu0 %v2760
        %v4786 = vpop.f32.mrb[0].mxu0
        %v4787 = vadd.f32 0.0, %v4786
        %v4788 = vpop.f32.mrb[0].mxu0
        %4789 = vmatprep.mubr.f32.mxu0 0.0
        %4790 = vmatmul.mubr.f32.gmra.mrb[0].mxu0 %v2761
        %v4791 = vpop.f32.mrb[0].mxu0
        %v4792 = vadd.f32 0.0, %v4791
        %v4793 = vpop.f32.mrb[0].mxu0
        %4794 = vmatprep.mubr.f32.mxu0 0.0
        %4795 = vmatmul.mubr.f32.gmra.mrb[0].mxu0 %v2762
        %v4796 = vpop.f32.mrb[0].mxu0
        %v4797 = vadd.f32 0.0, %v4796
        %v4798 = vpop.f32.mrb[0].mxu0
        %4799 = vmatprep.mubr.f32.mxu0 0.0
        %4800 = vmatmul.mubr.f32.gmra.mrb[0].mxu0 %v2763
        %v4801 = vpop.f32.mrb[0].mxu0
        %v4802 = vadd.f32 0.0, %v4801
        %v4803 = vpop.f32.mrb[0].mxu0
        %4804 = vmatprep.mubr.f32.mxu0 0.0
        %4805 = vmatmul.mubr.f32.gmra.mrb[0].mxu0 %v2764
        %v4806 = vpop.f32.mrb[0].mxu0
        %v4807 = vadd.f32 0.0, %v4806
        %v4808 = vpop.f32.mrb[0].mxu0
        %4809 = vmatprep.mubr.f32.mxu0 0.0
        %4810 = vmatmul.mubr.f32.gmra.mrb[0].mxu0 %v2765
        %v4811 = vpop.f32.mrb[0].mxu0
        %v4812 = vadd.f32 0.0, %v4811
        %v4813 = vpop.f32.mrb[0].mxu0
        %4814 = vmatprep.mubr.f32.mxu0 0.0
        %4815 = vmatmul.mubr.f32.gmra.mrb[0].mxu0 %v2766
        %v4816 = vpop.f32.mrb[0].mxu0
        %v4817 = vadd.f32 0.0, %v4816
        %v4818 = vpop.f32.mrb[0].mxu0
        %4819 = vmatprep.mubr.f32.mxu0 0.0
        %4820 = vmatmul.mubr.f32.gmra.mrb[0].mxu0 %v2767
        %v4821 = vpop.f32.mrb[0].mxu0
        %v4822 = vadd.f32 0.0, %v4821
        %v4823 = vpop.f32.mrb[0].mxu0
        %4824 = vmatprep.mubr.f32.mxu0 0.0
        %4825 = vmatmul.mubr.f32.gmra.mrb[0].mxu0 %v2768
        %v4826 = vpop.f32.mrb[0].mxu0
        %v4827 = vadd.f32 0.0, %v4826
        %v4828 = vpop.f32.mrb[0].mxu0
        %4829 = vmatprep.mubr.f32.mxu0 0.0
        %4830 = vmatmul.mubr.f32.gmra.mrb[0].mxu0 %v2769
        %v4831 = vpop.f32.mrb[0].mxu0
        %v4832 = vadd.f32 0.0, %v4831
        %v4833 = vpop.f32.mrb[0].mxu0
        %4834 = vmatprep.mubr.f32.mxu0 0.0
        %4835 = vmatmul.mubr.f32.gmra.mrb[0].mxu0 %v2770
        %v4836 = vpop.f32.mrb[0].mxu0
        %v4837 = vadd.f32 0.0, %v4836
        %v4838 = vpop.f32.mrb[0].mxu0
        %4839 = vmatprep.mubr.f32.mxu0 0.0
        %4840 = vmatmul.mubr.f32.gmra.mrb[0].mxu0 %v2771
        %v4841 = vpop.f32.mrb[0].mxu0
        %v4842 = vadd.f32 0.0, %v4841
        %v4843 = vpop.f32.mrb[0].mxu0
        %4844 = vmatprep.mubr.f32.mxu0 0.0
        %4845 = vmatmul.mubr.f32.gmra.mrb[0].mxu0 %v2772
        %v4846 = vpop.f32.mrb[0].mxu0
        %v4847 = vadd.f32 0.0, %v4846
        %v4848 = vpop.f32.mrb[0].mxu0
        %4849 = vmatprep.mubr.f32.mxu0 0.0
        %4850 = vmatmul.mubr.f32.gmra.mrb[0].mxu0 %v2773
        %v4851 = vpop.f32.mrb[0].mxu0
        %v4852 = vadd.f32 0.0, %v4851
        %v4853 = vpop.f32.mrb[0].mxu0
        %4854 = vmatprep.mubr.f32.mxu0 0.0
        %4855 = vmatmul.mubr.f32.gmra.mrb[0].mxu0 %v2774
        %v4856 = vpop.f32.mrb[0].mxu0
        %v4857 = vadd.f32 0.0, %v4856
        %v4858 = vpop.f32.mrb[0].mxu0
        %4859 = vmatprep.mubr.f32.mxu0 0.0
        %4860 = vmatmul.mubr.f32.gmra.mrb[0].mxu0 %v2775
        %v4861 = vpop.f32.mrb[0].mxu0
        %v4862 = vadd.f32 0.0, %v4861
        %v4863 = vpop.f32.mrb[0].mxu0
        %4864 = vmatprep.mubr.f32.mxu0 0.0
        %4865 = vmatmul.mubr.f32.gmra.mrb[0].mxu0 %v2776
        %v4866 = vpop.f32.mrb[0].mxu0
        %v4867 = vadd.f32 0.0, %v4866
        %v4868 = vpop.f32.mrb[0].mxu0
        %4869 = vmatprep.mubr.f32.mxu0 0.0
        %4870 = vmatmul.mubr.f32.gmra.mrb[0].mxu0 %v2777
        %v4871 = vpop.f32.mrb[0].mxu0
        %v4872 = vadd.f32 0.0, %v4871
        %v4873 = vpop.f32.mrb[0].mxu0
        %4874 = vmatprep.mubr.f32.mxu0 0.0
        %4875 = vmatmul.mubr.f32.gmra.mrb[0].mxu0 %v2778
        %v4876 = vpop.f32.mrb[0].mxu0
        %v4877 = vadd.f32 0.0, %v4876
        %v4878 = vpop.f32.mrb[0].mxu0
        %4879 = vmatprep.mubr.f32.mxu0 0.0
        %4880 = vmatmul.mubr.f32.gmra.mrb[0].mxu0 %v2779
        %v4881 = vpop.f32.mrb[0].mxu0
        %v4882 = vadd.f32 0.0, %v4881
        %v4883 = vpop.f32.mrb[0].mxu0
        %4884 = vmatprep.mubr.f32.mxu0 0.0
        %4885 = vmatmul.mubr.f32.gmra.mrb[0].mxu0 %v2780
        %v4886 = vpop.f32.mrb[0].mxu0
        %v4887 = vadd.f32 0.0, %v4886
        %v4888 = vpop.f32.mrb[0].mxu0
        %4889 = vmatprep.mubr.f32.mxu0 0.0
        %4890 = vmatmul.mubr.f32.gmra.mrb[0].mxu0 %v2781
        %v4891 = vpop.f32.mrb[0].mxu0
        %v4892 = vadd.f32 0.0, %v4891
        %v4893 = vpop.f32.mrb[0].mxu0
        %4894 = vmatprep.mubr.f32.mxu0 0.0
        %4895 = vmatmul.mubr.f32.gmra.mrb[0].mxu0 %v2782
        %v4896 = vpop.f32.mrb[0].mxu0
        %v4897 = vadd.f32 0.0, %v4896
        %v4898 = vpop.f32.mrb[0].mxu0
        %4899 = vmatprep.mubr.f32.mxu0 0.0
        %4900 = vmatmul.mubr.f32.gmra.mrb[0].mxu0 %v2783
        %v4901 = vpop.f32.mrb[0].mxu0
        %v4902 = vadd.f32 0.0, %v4901
        %v4903 = vpop.f32.mrb[0].mxu0
        %4904 = vmatprep.mubr.f32.mxu0 0.0
        %4905 = vmatmul.mubr.f32.gmra.mrb[0].mxu0 %v2784
        %v4906 = vpop.f32.mrb[0].mxu0
        %v4907 = vadd.f32 0.0, %v4906
        %v4908 = vpop.f32.mrb[0].mxu0
        %4909 = vmatprep.mubr.f32.mxu0 0.0
        %4910 = vmatmul.mubr.f32.gmra.mrb[0].mxu0 %v2785
        %v4911 = vpop.f32.mrb[0].mxu0
        %v4912 = vadd.f32 0.0, %v4911
        %v4913 = vpop.f32.mrb[0].mxu0
        %4914 = vmatprep.mubr.f32.mxu0 0.0
        %4915 = vmatmul.mubr.f32.gmra.mrb[0].mxu0 %v2786
        %v4916 = vpop.f32.mrb[0].mxu0
        %v4917 = vadd.f32 0.0, %v4916
        %v4918 = vpop.f32.mrb[0].mxu0
        %4919 = vmatprep.mubr.f32.mxu0 0.0
        %4920 = vmatmul.mubr.f32.gmra.mrb[0].mxu0 %v2787
        %v4921 = vpop.f32.mrb[0].mxu0
        %v4922 = vadd.f32 0.0, %v4921
        %v4923 = vpop.f32.mrb[0].mxu0
        %4924 = vmatprep.mubr.f32.mxu0 0.0
        %4925 = vmatmul.mubr.f32.gmra.mrb[0].mxu0 %v2788
        %v4926 = vpop.f32.mrb[0].mxu0
        %v4927 = vadd.f32 0.0, %v4926
        %v4928 = vpop.f32.mrb[0].mxu0
        %4929 = vmatprep.mubr.f32.mxu0 0.0
        %4930 = vmatmul.mubr.f32.gmra.mrb[0].mxu0 %v2789
        %v4931 = vpop.f32.mrb[0].mxu0
        %v4932 = vadd.f32 0.0, %v4931
        %v4933 = vpop.f32.mrb[0].mxu0
        %4934 = vmatprep.mubr.f32.mxu0 0.0
        %4935 = vmatmul.mubr.f32.gmra.mrb[0].mxu0 %v2790
        %v4936 = vpop.f32.mrb[0].mxu0
        %v4937 = vadd.f32 0.0, %v4936
        %v4938 = vpop.f32.mrb[0].mxu0
        %4939 = vmatprep.mubr.f32.mxu0 0.0
        %4940 = vmatmul.mubr.f32.gmra.mrb[0].mxu0 %v2791
        %v4941 = vpop.f32.mrb[0].mxu0
        %v4942 = vadd.f32 0.0, %v4941
        %v4943 = vpop.f32.mrb[0].mxu0
        %4944 = vmatprep.mubr.f32.mxu0 0.0
        %4945 = vmatmul.mubr.f32.gmra.mrb[0].mxu0 %v2792
        %v4946 = vpop.f32.mrb[0].mxu0
        %v4947 = vadd.f32 0.0, %v4946
        %v4948 = vpop.f32.mrb[0].mxu0
        %4949 = vmatprep.mubr.f32.mxu0 0.0
        %4950 = vmatmul.mubr.f32.gmra.mrb[0].mxu0 %v2793
        %v4951 = vpop.f32.mrb[0].mxu0
        %v4952 = vadd.f32 0.0, %v4951
        %v4953 = vpop.f32.mrb[0].mxu0
        %4954 = vmatprep.mubr.f32.mxu0 0.0
        %4955 = vmatmul.mubr.f32.gmra.mrb[0].mxu0 %v2794
        %v4956 = vpop.f32.mrb[0].mxu0
        %v4957 = vadd.f32 0.0, %v4956
        %v4958 = vpop.f32.mrb[0].mxu0
        %4959 = vmatprep.mubr.f32.mxu0 0.0
        %4960 = vmatmul.mubr.f32.gmra.mrb[0].mxu0 %v2795
        %v4961 = vpop.f32.mrb[0].mxu0
        %v4962 = vadd.f32 0.0, %v4961
        %v4963 = vpop.f32.mrb[0].mxu0
        %4964 = vmatprep.mubr.f32.mxu0 0.0
        %4965 = vmatmul.mubr.f32.gmra.mrb[0].mxu0 %v2796
        %v4966 = vpop.f32.mrb[0].mxu0
        %v4967 = vadd.f32 0.0, %v4966
        %v4968 = vpop.f32.mrb[0].mxu0
        %4969 = vmatprep.mubr.f32.mxu0 0.0
        %4970 = vmatmul.mubr.f32.gmra.mrb[0].mxu0 %v2797
        %v4971 = vpop.f32.mrb[0].mxu0
        %v4972 = vadd.f32 0.0, %v4971
        %v4973 = vpop.f32.mrb[0].mxu0
        %4974 = vmatprep.mubr.f32.mxu0 0.0
        %4975 = vmatmul.mubr.f32.gmra.mrb[0].mxu0 %v2798
        %v4976 = vpop.f32.mrb[0].mxu0
        %v4977 = vadd.f32 0.0, %v4976
        %v4978 = vpop.f32.mrb[0].mxu0
        %4979 = vmatprep.mubr.f32.mxu0 0.0
        %4980 = vmatmul.mubr.f32.gmra.mrb[0].mxu0 %v2799
        %v4981 = vpop.f32.mrb[0].mxu0
        %v4982 = vadd.f32 0.0, %v4981
        %v4983 = vpop.f32.mrb[0].mxu0
        %4984 = vmatprep.mubr.f32.mxu0 0.0
        %4985 = vmatmul.mubr.f32.gmra.mrb[0].mxu0 %v2800
        %v4986 = vpop.f32.mrb[0].mxu0
        %v4987 = vadd.f32 0.0, %v4986
        %v4988 = vpop.f32.mrb[0].mxu0
        %4989 = vmatprep.mubr.f32.mxu0 0.0
        %4990 = vmatmul.mubr.f32.gmra.mrb[0].mxu0 %v2801
        %v4991 = vpop.f32.mrb[0].mxu0
        %v4992 = vadd.f32 0.0, %v4991
        %v4993 = vpop.f32.mrb[0].mxu0
        %4994 = vmatprep.mubr.f32.mxu0 0.0
        %4995 = vmatmul.mubr.f32.gmra.mrb[0].mxu0 %v2802
        %v4996 = vpop.f32.mrb[0].mxu0
        %v4997 = vadd.f32 0.0, %v4996
        %v4998 = vpop.f32.mrb[0].mxu0
        %4999 = vmatprep.mubr.f32.mxu0 0.0
        %5000 = vmatmul.mubr.f32.gmra.mrb[0].mxu0 %v2803
        %v5001 = vpop.f32.mrb[0].mxu0
        %v5002 = vadd.f32 0.0, %v5001
        %v5003 = vpop.f32.mrb[0].mxu0
        %5004 = vmatprep.mubr.f32.mxu0 0.0
        %5005 = vmatmul.mubr.f32.gmra.mrb[0].mxu0 %v2804
        %v5006 = vpop.f32.mrb[0].mxu0
        %v5007 = vadd.f32 0.0, %v5006
        %v5008 = vpop.f32.mrb[0].mxu0
        %5009 = vmatprep.mubr.f32.mxu0 0.0
        %5010 = vmatmul.mubr.f32.gmra.mrb[0].mxu0 %v2805
        %v5011 = vpop.f32.mrb[0].mxu0
        %v5012 = vadd.f32 0.0, %v5011
        %v5013 = vpop.f32.mrb[0].mxu0
        %5014 = vmatprep.mubr.f32.mxu0 0.0
        %5015 = vmatmul.mubr.f32.gmra.mrb[0].mxu0 %v2806
        %v5016 = vpop.f32.mrb[0].mxu0
        %v5017 = vadd.f32 0.0, %v5016
        %v5018 = vpop.f32.mrb[0].mxu0
        %5019 = vmatprep.mubr.f32.mxu0 0.0
        %5020 = vmatmul.mubr.f32.gmra.mrb[0].mxu0 %v2807
        %v5021 = vpop.f32.mrb[0].mxu0
        %v5022 = vadd.f32 0.0, %v5021
        %v5023 = vpop.f32.mrb[0].mxu0
        %5024 = vmatprep.mubr.f32.mxu0 0.0
        %5025 = vmatmul.mubr.f32.gmra.mrb[0].mxu0 %v2808
        %v5026 = vpop.f32.mrb[0].mxu0
        %v5027 = vadd.f32 0.0, %v5026
        %v5028 = vpop.f32.mrb[0].mxu0
        %5029 = vmatprep.mubr.f32.mxu0 0.0
        %5030 = vmatmul.mubr.f32.gmra.mrb[0].mxu0 %v2809
        %v5031 = vpop.f32.mrb[0].mxu0
        %v5032 = vadd.f32 0.0, %v5031
        %v5033 = vpop.f32.mrb[0].mxu0
        %5034 = vmatprep.mubr.f32.mxu0 0.0
        %5035 = vmatmul.mubr.f32.gmra.mrb[0].mxu0 %v2810
        %v5036 = vpop.f32.mrb[0].mxu0
        %v5037 = vadd.f32 0.0, %v5036
        %v5038 = vpop.f32.mrb[0].mxu0
        %5039 = vmatprep.mubr.f32.mxu0 0.0
        %5040 = vmatmul.mubr.f32.gmra.mrb[0].mxu0 %v2811
        %v5041 = vpop.f32.mrb[0].mxu0
        %v5042 = vadd.f32 0.0, %v5041
        %v5043 = vpop.f32.mrb[0].mxu0
        %5044 = vmatprep.mubr.f32.mxu0 0.0
        %5045 = vmatmul.mubr.f32.gmra.mrb[0].mxu0 %v2812
        %v5046 = vpop.f32.mrb[0].mxu0
        %v5047 = vadd.f32 0.0, %v5046
        %v5048 = vpop.f32.mrb[0].mxu0
        %5049 = vmatprep.mubr.f32.mxu0 0.0
        %5050 = vmatmul.mubr.f32.gmra.mrb[0].mxu0 %v2813
        %v5051 = vpop.f32.mrb[0].mxu0
        %v5052 = vadd.f32 0.0, %v5051
        %v5053 = vpop.f32.mrb[0].mxu0
        %5054 = vmatprep.mubr.f32.mxu0 0.0
        %5055 = vmatmul.mubr.f32.gmra.mrb[0].mxu0 %v2814
        %v5056 = vpop.f32.mrb[0].mxu0
        %v5057 = vadd.f32 0.0, %v5056
        %v5058 = vpop.f32.mrb[0].mxu0
        %5059 = vmatprep.mubr.f32.mxu0 0.0
        %5060 = vmatmul.mubr.f32.gmra.mrb[0].mxu0 %v2815
        %v5061 = vpop.f32.mrb[0].mxu0
        %v5062 = vadd.f32 0.0, %v5061
        %v5063 = vpop.f32.mrb[0].mxu0
        %5064 = vmatprep.mubr.f32.mxu0 0.0
        %5065 = vmatmul.mubr.f32.gmra.mrb[0].mxu0 %v2816
        %v5066 = vpop.f32.mrb[0].mxu0
        %v5067 = vadd.f32 0.0, %v5066
        %v5068 = vpop.f32.mrb[0].mxu0
        %5069 = vmatprep.mubr.f32.mxu0 0.0
        %5070 = vmatmul.mubr.f32.gmra.mrb[0].mxu0 %v2817
        %v5071 = vpop.f32.mrb[0].mxu0
        %v5072 = vadd.f32 0.0, %v5071
        %v5073 = vpop.f32.mrb[0].mxu0
        %5074 = vmatprep.mubr.f32.mxu0 0.0
        %5075 = vmatmul.mubr.f32.gmra.mrb[0].mxu0 %v2818
        %v5076 = vpop.f32.mrb[0].mxu0
        %v5077 = vadd.f32 0.0, %v5076
        %v5078 = vpop.f32.mrb[0].mxu0
        %5079 = vmatprep.mubr.f32.mxu0 0.0
        %5080 = vmatmul.mubr.f32.gmra.mrb[0].mxu0 %v2819
        %v5081 = vpop.f32.mrb[0].mxu0
        %v5082 = vadd.f32 0.0, %v5081
        %v5083 = vpop.f32.mrb[0].mxu0
        %5084 = vmatprep.mubr.f32.mxu0 0.0
        %5085 = vmatmul.mubr.f32.gmra.mrb[0].mxu0 %v2820
        %v5086 = vpop.f32.mrb[0].mxu0
        %v5087 = vadd.f32 0.0, %v5086
        %v5088 = vpop.f32.mrb[0].mxu0
        %5089 = vmatprep.mubr.f32.mxu0 0.0
        %5090 = vmatmul.mubr.f32.gmra.mrb[0].mxu0 %v2821
        %v5091 = vpop.f32.mrb[0].mxu0
        %v5092 = vadd.f32 0.0, %v5091
        %v5093 = vpop.f32.mrb[0].mxu0
        %5094 = vmatprep.mubr.f32.mxu0 0.0
        %5095 = vmatmul.mubr.f32.gmra.mrb[0].mxu0 %v2822
        %v5096 = vpop.f32.mrb[0].mxu0
        %v5097 = vadd.f32 0.0, %v5096
        %v5098 = vpop.f32.mrb[0].mxu0
        %5099 = vmatprep.mubr.f32.mxu0 0.0
        %5100 = vmatmul.mubr.f32.gmra.mrb[0].mxu0 %v2823
        %v5101 = vpop.f32.mrb[0].mxu0
        %v5102 = vadd.f32 0.0, %v5101
        %v5103 = vpop.f32.mrb[0].mxu0
        %5104 = vmatprep.mubr.f32.mxu0 0.0
        %5105 = vmatmul.mubr.f32.gmra.mrb[0].mxu0 %v2824
        %v5106 = vpop.f32.mrb[0].mxu0
        %v5107 = vadd.f32 0.0, %v5106
        %v5108 = vpop.f32.mrb[0].mxu0
        %5109 = vmatprep.mubr.f32.mxu0 0.0
        %5110 = vmatmul.mubr.f32.gmra.mrb[0].mxu0 %v2825
        %v5111 = vpop.f32.mrb[0].mxu0
        %v5112 = vadd.f32 0.0, %v5111
        %v5113 = vpop.f32.mrb[0].mxu0
        %5114 = vmatprep.mubr.f32.mxu0 0.0
        %5115 = vmatmul.mubr.f32.gmra.mrb[0].mxu0 %v2826
        %v5116 = vpop.f32.mrb[0].mxu0
        %v5117 = vadd.f32 0.0, %v5116
        %v5118 = vpop.f32.mrb[0].mxu0
        %5119 = vmatprep.mubr.f32.mxu0 0.0
        %5120 = vmatmul.mubr.f32.gmra.mrb[0].mxu0 %v2827
        %v5121 = vpop.f32.mrb[0].mxu0
        %v5122 = vadd.f32 0.0, %v5121
        %v5123 = vpop.f32.mrb[0].mxu0
        %5124 = vmatprep.mubr.f32.mxu0 0.0
        %5125 = vmatmul.mubr.f32.gmra.mrb[0].mxu0 %v2828
        %v5126 = vpop.f32.mrb[0].mxu0
        %v5127 = vadd.f32 0.0, %v5126
        %v5128 = vpop.f32.mrb[0].mxu0
        %5129 = vmatprep.mubr.f32.mxu0 0.0
        %5130 = vmatmul.mubr.f32.gmra.mrb[0].mxu0 %v2829
        %v5131 = vpop.f32.mrb[0].mxu0
        %v5132 = vadd.f32 0.0, %v5131
        %v5133 = vpop.f32.mrb[0].mxu0
        %5134 = vmatprep.mubr.f32.mxu0 0.0
        %5135 = vmatmul.mubr.f32.gmra.mrb[0].mxu0 %v2830
        %v5136 = vpop.f32.mrb[0].mxu0
        %v5137 = vadd.f32 0.0, %v5136
        %v5138 = vpop.f32.mrb[0].mxu0
        %5139 = vmatprep.mubr.f32.mxu0 0.0
        %5140 = vmatmul.mubr.f32.gmra.mrb[0].mxu0 %v2831
        %v5141 = vpop.f32.mrb[0].mxu0
        %v5142 = vadd.f32 0.0, %v5141
        %v5143 = vpop.f32.mrb[0].mxu0
        %5144 = vmatprep.mubr.f32.mxu0 0.0
        %5145 = vmatmul.mubr.f32.gmra.mrb[0].mxu0 %v2832
        %v5146 = vpop.f32.mrb[0].mxu0
        %v5147 = vadd.f32 0.0, %v5146
        %v5148 = vpop.f32.mrb[0].mxu0
        %5149 = vmatprep.mubr.f32.mxu0 0.0
        %5150 = vmatmul.mubr.f32.gmra.mrb[0].mxu0 %v2833
        %v5151 = vpop.f32.mrb[0].mxu0
        %v5152 = vadd.f32 0.0, %v5151
        %v5153 = vpop.f32.mrb[0].mxu0
        %5154 = vmatprep.mubr.f32.mxu0 0.0
        %5155 = vmatmul.mubr.f32.gmra.mrb[0].mxu0 %v2834
        %v5156 = vpop.f32.mrb[0].mxu0
        %v5157 = vadd.f32 0.0, %v5156
        %v5158 = vpop.f32.mrb[0].mxu0
        %5159 = vmatprep.mubr.f32.mxu0 0.0
        %5160 = vmatmul.mubr.f32.gmra.mrb[0].mxu0 %v2835
        %v5161 = vpop.f32.mrb[0].mxu0
        %v5162 = vadd.f32 0.0, %v5161
        %v5163 = vpop.f32.mrb[0].mxu0
        %5164 = vmatprep.mubr.f32.mxu0 0.0
        %5165 = vmatmul.mubr.f32.gmra.mrb[0].mxu0 %v2836
        %v5166 = vpop.f32.mrb[0].mxu0
        %v5167 = vadd.f32 0.0, %v5166
        %v5168 = vpop.f32.mrb[0].mxu0
        %5169 = vmatprep.mubr.f32.mxu0 0.0
        %5170 = vmatmul.mubr.f32.gmra.mrb[0].mxu0 %v2837
        %v5171 = vpop.f32.mrb[0].mxu0
        %v5172 = vadd.f32 0.0, %v5171
        %v5173 = vpop.f32.mrb[0].mxu0
        %5174 = vmatprep.mubr.f32.mxu0 0.0
        %5175 = vmatmul.mubr.f32.gmra.mrb[0].mxu0 %v2838
        %v5176 = vpop.f32.mrb[0].mxu0
        %v5177 = vadd.f32 0.0, %v5176
        %v5178 = vpop.f32.mrb[0].mxu0
        %5179 = vmatprep.mubr.f32.mxu0 0.0
        %5180 = vmatmul.mubr.f32.gmra.mrb[0].mxu0 %v2839
        %v5181 = vpop.f32.mrb[0].mxu0
        %v5182 = vadd.f32 0.0, %v5181
        %v5183 = vpop.f32.mrb[0].mxu0
        %5184 = vmatprep.mubr.f32.mxu0 0.0
        %5185 = vmatmul.mubr.f32.gmra.mrb[0].mxu0 %v2840
        %v5186 = vpop.f32.mrb[0].mxu0
        %v5187 = vadd.f32 0.0, %v5186
        %v5188 = vpop.f32.mrb[0].mxu0
        %5189 = vmatprep.mubr.f32.mxu0 0.0
        %5190 = vmatmul.mubr.f32.gmra.mrb[0].mxu0 %v2841
        %v5191 = vpop.f32.mrb[0].mxu0
        %v5192 = vadd.f32 0.0, %v5191
        %v5193 = vpop.f32.mrb[0].mxu0
        %5194 = vmatprep.mubr.f32.mxu0 0.0
        %5195 = vmatmul.mubr.f32.gmra.mrb[0].mxu0 %v2842
        %v5196 = vpop.f32.mrb[0].mxu0
        %v5197 = vadd.f32 0.0, %v5196
        %v5198 = vpop.f32.mrb[0].mxu0
        %5199 = vmatprep.mubr.f32.mxu0 0.0
        %5200 = vmatmul.mubr.f32.gmra.mrb[0].mxu0 %v2843
        %v5201 = vpop.f32.mrb[0].mxu0
        %v5202 = vadd.f32 0.0, %v5201
        %v5203 = vpop.f32.mrb[0].mxu0
        %5204 = vmatprep.mubr.f32.mxu0 0.0
        %5205 = vmatmul.mubr.f32.gmra.mrb[0].mxu0 %v2844
        %v5206 = vpop.f32.mrb[0].mxu0
        %v5207 = vadd.f32 0.0, %v5206
        %v5208 = vpop.f32.mrb[0].mxu0
        %5209 = vmatprep.mubr.f32.mxu0 0.0
        %5210 = vmatmul.mubr.f32.gmra.mrb[0].mxu0 %v2845
        %v5211 = vpop.f32.mrb[0].mxu0
        %v5212 = vadd.f32 0.0, %v5211
        %v5213 = vpop.f32.mrb[0].mxu0
        %5214 = vmatprep.mubr.f32.mxu0 0.0
        %5215 = vmatmul.mubr.f32.gmra.mrb[0].mxu0 %v2846
        %v5216 = vpop.f32.mrb[0].mxu0
        %v5217 = vadd.f32 0.0, %v5216
        %v5218 = vpop.f32.mrb[0].mxu0
        %5219 = vmatprep.mubr.f32.mxu0 0.0
        %5220 = vmatmul.mubr.f32.gmra.mrb[0].mxu0 %v2847
        %v5221 = vpop.f32.mrb[0].mxu0
        %v5222 = vadd.f32 0.0, %v5221
        %v5223 = vpop.f32.mrb[0].mxu0
        %5224 = vmatprep.mubr.f32.mxu0 0.0
        %5225 = vmatmul.mubr.f32.gmra.mrb[0].mxu0 %v2848
        %v5226 = vpop.f32.mrb[0].mxu0
        %v5227 = vadd.f32 0.0, %v5226
        %v5228 = vpop.f32.mrb[0].mxu0
        %5229 = vmatprep.mubr.f32.mxu0 0.0
        %5230 = vmatmul.mubr.f32.gmra.mrb[0].mxu0 %v2849
        %v5231 = vpop.f32.mrb[0].mxu0
        %v5232 = vadd.f32 0.0, %v5231
        %v5233 = vpop.f32.mrb[0].mxu0
        %5234 = vmatprep.mubr.f32.mxu0 0.0
        %5235 = vmatmul.mubr.f32.gmra.mrb[0].mxu0 %v2850
        %v5236 = vpop.f32.mrb[0].mxu0
        %v5237 = vadd.f32 0.0, %v5236
        %v5238 = vpop.f32.mrb[0].mxu0
        %5239 = vmatprep.mubr.f32.mxu0 0.0
        %5240 = vmatmul.mubr.f32.gmra.mrb[0].mxu0 %v2851
        %v5241 = vpop.f32.mrb[0].mxu0
        %v5242 = vadd.f32 0.0, %v5241
        %v5243 = vpop.f32.mrb[0].mxu0
        %5244 = vmatprep.mubr.f32.mxu0 0.0
        %5245 = vmatmul.mubr.f32.gmra.mrb[0].mxu0 %v2852
        %v5246 = vpop.f32.mrb[0].mxu0
        %v5247 = vadd.f32 0.0, %v5246
        %v5248 = vpop.f32.mrb[0].mxu0
        %5249 = vmatprep.mubr.f32.mxu0 0.0
        %5250 = vmatmul.mubr.f32.gmra.mrb[0].mxu0 %v2853
        %v5251 = vpop.f32.mrb[0].mxu0
        %v5252 = vadd.f32 0.0, %v5251
        %v5253 = vpop.f32.mrb[0].mxu0
        %5254 = vmatprep.mubr.f32.mxu0 0.0
        %5255 = vmatmul.mubr.f32.gmra.mrb[0].mxu0 %v2854
        %v5256 = vpop.f32.mrb[0].mxu0
        %v5257 = vadd.f32 0.0, %v5256
        %v5258 = vpop.f32.mrb[0].mxu0
        %5259 = vmatprep.mubr.f32.mxu0 0.0
        %5260 = vmatmul.mubr.f32.gmra.mrb[0].mxu0 %v2855
        %v5261 = vpop.f32.mrb[0].mxu0
        %v5262 = vadd.f32 0.0, %v5261
        %v5263 = vpop.f32.mrb[0].mxu0
        %5264 = vmatprep.mubr.f32.mxu0 0.0
        %5265 = vmatmul.mubr.f32.gmra.mrb[0].mxu0 %v2856
        %v5266 = vpop.f32.mrb[0].mxu0
        %v5267 = vadd.f32 0.0, %v5266
        %v5268 = vpop.f32.mrb[0].mxu0
        %5269 = vmatprep.mubr.f32.mxu0 0.0
        %5270 = vmatmul.mubr.f32.gmra.mrb[0].mxu0 %v2857
        %v5271 = vpop.f32.mrb[0].mxu0
        %v5272 = vadd.f32 0.0, %v5271
        %v5273 = vpop.f32.mrb[0].mxu0
        %5274 = vmatprep.mubr.f32.mxu0 0.0
        %5275 = vmatmul.mubr.f32.gmra.mrb[0].mxu0 %v2858
        %v5276 = vpop.f32.mrb[0].mxu0
        %v5277 = vadd.f32 0.0, %v5276
        %v5278 = vpop.f32.mrb[0].mxu0
        %5279 = vmatprep.mubr.f32.mxu0 0.0
        %5280 = vmatmul.mubr.f32.gmra.mrb[0].mxu0 %v2859
        %v5281 = vpop.f32.mrb[0].mxu0
        %v5282 = vadd.f32 0.0, %v5281
        %v5283 = vpop.f32.mrb[0].mxu0
        %5284 = vmatprep.mubr.f32.mxu0 0.0
        %5285 = vmatmul.mubr.f32.gmra.mrb[0].mxu0 %v2860
        %v5286 = vpop.f32.mrb[0].mxu0
        %v5287 = vadd.f32 0.0, %v5286
        %v5288 = vpop.f32.mrb[0].mxu0
        %5289 = vmatprep.mubr.f32.mxu0 0.0
        %5290 = vmatmul.mubr.f32.gmra.mrb[0].mxu0 %v2861
        %v5291 = vpop.f32.mrb[0].mxu0
        %v5292 = vadd.f32 0.0, %v5291
        %v5293 = vpop.f32.mrb[0].mxu0
        %5294 = vmatprep.mubr.f32.mxu0 0.0
        %5295 = vmatmul.mubr.f32.gmra.mrb[0].mxu0 %v2862
        %v5296 = vpop.f32.mrb[0].mxu0
        %v5297 = vadd.f32 0.0, %v5296
        %v5298 = vpop.f32.mrb[0].mxu0
        %5299 = vmatprep.mubr.f32.mxu0 0.0
        %5300 = vmatmul.mubr.f32.gmra.mrb[0].mxu0 %v2863
        %v5301 = vpop.f32.mrb[0].mxu0
        %v5302 = vadd.f32 0.0, %v5301
        %v5303 = vpop.f32.mrb[0].mxu0
        %5304 = vmatprep.mubr.f32.mxu0 0.0
        %5305 = vmatmul.mubr.f32.gmra.mrb[0].mxu0 %v2864
        %v5306 = vpop.f32.mrb[0].mxu0
        %v5307 = vadd.f32 0.0, %v5306
        %v5308 = vpop.f32.mrb[0].mxu0
        %5309 = vmatprep.mubr.f32.mxu0 0.0
        %5310 = vmatmul.mubr.f32.gmra.mrb[0].mxu0 %v2865
        %v5311 = vpop.f32.mrb[0].mxu0
        %v5312 = vadd.f32 0.0, %v5311
        %v5313 = vpop.f32.mrb[0].mxu0
        %5314 = vmatprep.mubr.f32.mxu0 0.0
        %5315 = vmatmul.mubr.f32.gmra.mrb[0].mxu0 %v2866
        %v5316 = vpop.f32.mrb[0].mxu0
        %v5317 = vadd.f32 0.0, %v5316
        %v5318 = vpop.f32.mrb[0].mxu0
        %5319 = vmatprep.mubr.f32.mxu0 0.0
        %5320 = vmatmul.mubr.f32.gmra.mrb[0].mxu0 %v2867
        %v5321 = vpop.f32.mrb[0].mxu0
        %v5322 = vadd.f32 0.0, %v5321
        %v5323 = vpop.f32.mrb[0].mxu0
        %5324 = vmatprep.mubr.f32.mxu0 0.0
        %5325 = vmatmul.mubr.f32.gmra.mrb[0].mxu0 %v2868
        %v5326 = vpop.f32.mrb[0].mxu0
        %v5327 = vadd.f32 0.0, %v5326
        %v5328 = vpop.f32.mrb[0].mxu0
        %5329 = vmatprep.mubr.f32.mxu0 0.0
        %5330 = vmatmul.mubr.f32.gmra.mrb[0].mxu0 %v2869
        %v5331 = vpop.f32.mrb[0].mxu0
        %v5332 = vadd.f32 0.0, %v5331
        %v5333 = vpop.f32.mrb[0].mxu0
        %5334 = vmatprep.mubr.f32.mxu0 0.0
        %5335 = vmatmul.mubr.f32.gmra.mrb[0].mxu0 %v2870
        %v5336 = vpop.f32.mrb[0].mxu0
        %v5337 = vadd.f32 0.0, %v5336
        %v5338 = vpop.f32.mrb[0].mxu0
        %5339 = vmatprep.mubr.f32.mxu0 0.0
        %5340 = vmatmul.mubr.f32.gmra.mrb[0].mxu0 %v2871
        %v5341 = vpop.f32.mrb[0].mxu0
        %v5342 = vadd.f32 0.0, %v5341
        %v5343 = vpop.f32.mrb[0].mxu0
        %5344 = vmatprep.mubr.f32.mxu0 0.0
        %5345 = vmatmul.mubr.f32.gmra.mrb[0].mxu0 %v2872
        %v5346 = vpop.f32.mrb[0].mxu0
        %v5347 = vadd.f32 0.0, %v5346
        %v5348 = vpop.f32.mrb[0].mxu0
        %5349 = vmatprep.mubr.f32.mxu0 0.0
        %5350 = vmatmul.mubr.f32.gmra.mrb[0].mxu0 %v2873
        %v5351 = vpop.f32.mrb[0].mxu0
        %v5352 = vadd.f32 0.0, %v5351
        %v5353 = vpop.f32.mrb[0].mxu0
        %5354 = vmatprep.mubr.f32.mxu0 0.0
        %5355 = vmatmul.mubr.f32.gmra.mrb[0].mxu0 %v2874
        %v5356 = vpop.f32.mrb[0].mxu0
        %v5357 = vadd.f32 0.0, %v5356
        %v5358 = vpop.f32.mrb[0].mxu0
        %5359 = vmatprep.mubr.f32.mxu0 0.0
        %5360 = vmatmul.mubr.f32.gmra.mrb[0].mxu0 %v2875
        %v5361 = vpop.f32.mrb[0].mxu0
        %v5362 = vadd.f32 0.0, %v5361
        %v5363 = vpop.f32.mrb[0].mxu0
        %5364 = vmatprep.mubr.f32.mxu0 0.0
        %5365 = vmatmul.mubr.f32.gmra.mrb[0].mxu0 %v2876
        %v5366 = vpop.f32.mrb[0].mxu0
        %v5367 = vadd.f32 0.0, %v5366
        %v5368 = vpop.f32.mrb[0].mxu0
        %5369 = vmatprep.mubr.f32.mxu0 0.0
        %5370 = vmatmul.mubr.f32.gmra.mrb[0].mxu0 %v2877
        %v5371 = vpop.f32.mrb[0].mxu0
        %v5372 = vadd.f32 0.0, %v5371
        %v5373 = vpop.f32.mrb[0].mxu0
        %5374 = vmatprep.mubr.f32.mxu0 0.0
        %5375 = vmatmul.mubr.f32.gmra.mrb[0].mxu0 %v2878
        %v5376 = vpop.f32.mrb[0].mxu0
        %v5377 = vadd.f32 0.0, %v5376
        %v5378 = vpop.f32.mrb[0].mxu0
        %5379 = vmatprep.mubr.f32.mxu0 0.0
        %5380 = vmatmul.mubr.f32.gmra.mrb[0].mxu0 %v2879
        %v5381 = vpop.f32.mrb[0].mxu0
        %v5382 = vadd.f32 0.0, %v5381
        %v5383 = vpop.f32.mrb[0].mxu0
        %5384 = vmatprep.mubr.f32.mxu0 0.0
        %5385 = vmatmul.mubr.f32.gmra.mrb[0].mxu0 %v2880
        %v5386 = vpop.f32.mrb[0].mxu0
        %v5387 = vadd.f32 0.0, %v5386
        %v5388 = vpop.f32.mrb[0].mxu0
        %5389 = vmatprep.mubr.f32.mxu0 0.0
        %5390 = vmatmul.mubr.f32.gmra.mrb[0].mxu0 %v2881
        %v5391 = vpop.f32.mrb[0].mxu0
        %v5392 = vadd.f32 0.0, %v5391
        %v5393 = vpop.f32.mrb[0].mxu0
        %5394 = vmatprep.mubr.f32.mxu0 0.0
        %5395 = vmatmul.mubr.f32.gmra.mrb[0].mxu0 %v2882
        %v5396 = vpop.f32.mrb[0].mxu0
        %v5397 = vadd.f32 0.0, %v5396
        %v5398 = vpop.f32.mrb[0].mxu0
        %5399 = vmatprep.mubr.f32.mxu0 0.0
        %5400 = vmatmul.mubr.f32.gmra.mrb[0].mxu0 %v2883
        %v5401 = vpop.f32.mrb[0].mxu0
        %v5402 = vadd.f32 0.0, %v5401
        %v5403 = vpop.f32.mrb[0].mxu0
        %5404 = vmatprep.mubr.f32.mxu0 0.0
        %5405 = vmatmul.mubr.f32.gmra.mrb[0].mxu0 %v2884
        %v5406 = vpop.f32.mrb[0].mxu0
        %v5407 = vadd.f32 0.0, %v5406
        %v5408 = vpop.f32.mrb[0].mxu0
        %5409 = vmatprep.mubr.f32.mxu0 0.0
        %5410 = vmatmul.mubr.f32.gmra.mrb[0].mxu0 %v2885
        %v5411 = vpop.f32.mrb[0].mxu0
        %v5412 = vadd.f32 0.0, %v5411
        %v5413 = vpop.f32.mrb[0].mxu0
        %5414 = vmatprep.mubr.f32.mxu0 0.0
        %5415 = vmatmul.mubr.f32.gmra.mrb[0].mxu0 %v2886
        %v5416 = vpop.f32.mrb[0].mxu0
        %v5417 = vadd.f32 0.0, %v5416
        %v5418 = vpop.f32.mrb[0].mxu0
        %5419 = vmatprep.mubr.f32.mxu0 0.0
        %5420 = vmatmul.mubr.f32.gmra.mrb[0].mxu0 %v2887
        %v5421 = vpop.f32.mrb[0].mxu0
        %v5422 = vadd.f32 0.0, %v5421
        %v5423 = vpop.f32.mrb[0].mxu0
        %5424 = vmatprep.mubr.f32.mxu0 0.0
        %5425 = vmatmul.mubr.f32.gmra.mrb[0].mxu0 %v2888
        %v5426 = vpop.f32.mrb[0].mxu0
        %v5427 = vadd.f32 0.0, %v5426
        %v5428 = vpop.f32.mrb[0].mxu0
        %5429 = vmatprep.mubr.f32.mxu0 0.0
        %5430 = vmatmul.mubr.f32.gmra.mrb[0].mxu0 %v2889
        %v5431 = vpop.f32.mrb[0].mxu0
        %v5432 = vadd.f32 0.0, %v5431
        %v5433 = vpop.f32.mrb[0].mxu0
        %5434 = vmatprep.mubr.f32.mxu0 0.0
        %5435 = vmatmul.mubr.f32.gmra.mrb[0].mxu0 %v2890
        %v5436 = vpop.f32.mrb[0].mxu0
        %v5437 = vadd.f32 0.0, %v5436
        %v5438 = vpop.f32.mrb[0].mxu0
        %5439 = vmatprep.mubr.f32.mxu0 0.0
        %5440 = vmatmul.mubr.f32.gmra.mrb[0].mxu0 %v2891
        %v5441 = vpop.f32.mrb[0].mxu0
        %v5442 = vadd.f32 0.0, %v5441
        %v5443 = vpop.f32.mrb[0].mxu0
        %5444 = vmatprep.mubr.f32.mxu0 0.0
        %5445 = vmatmul.mubr.f32.gmra.mrb[0].mxu0 %v2892
        %v5446 = vpop.f32.mrb[0].mxu0
        %v5447 = vadd.f32 0.0, %v5446
        %v5448 = vpop.f32.mrb[0].mxu0
        %5449 = vmatprep.mubr.f32.mxu0 0.0
        %5450 = vmatmul.mubr.f32.gmra.mrb[0].mxu0 %v2893
        %v5451 = vpop.f32.mrb[0].mxu0
        %v5452 = vadd.f32 0.0, %v5451
        %v5453 = vpop.f32.mrb[0].mxu0
        %5454 = vmatprep.mubr.f32.mxu0 0.0
        %5455 = vmatmul.mubr.f32.gmra.mrb[0].mxu0 %v2894
        %v5456 = vpop.f32.mrb[0].mxu0
        %v5457 = vadd.f32 0.0, %v5456
        %v5458 = vpop.f32.mrb[0].mxu0
        %5459 = vmatprep.mubr.f32.mxu0 0.0
        %5460 = vmatmul.mubr.f32.gmra.mrb[0].mxu0 %v2895
        %v5461 = vpop.f32.mrb[0].mxu0
        %v5462 = vadd.f32 0.0, %v5461
        %v5463 = vpop.f32.mrb[0].mxu0
        %5464 = vmatprep.mubr.f32.mxu0 0.0
        %5465 = vmatmul.mubr.f32.gmra.mrb[0].mxu0 %v2896
        %v5466 = vpop.f32.mrb[0].mxu0
        %v5467 = vadd.f32 0.0, %v5466
        %v5468 = vpop.f32.mrb[0].mxu0
        %5469 = vmatprep.mubr.f32.mxu0 0.0
        %5470 = vmatmul.mubr.f32.gmra.mrb[0].mxu0 %v2897
        %v5471 = vpop.f32.mrb[0].mxu0
        %v5472 = vadd.f32 0.0, %v5471
        %v5473 = vpop.f32.mrb[0].mxu0
        %5474 = vmatprep.mubr.f32.mxu0 0.0
        %5475 = vmatmul.mubr.f32.gmra.mrb[0].mxu0 %v2898
        %v5476 = vpop.f32.mrb[0].mxu0
        %v5477 = vadd.f32 0.0, %v5476
        %v5478 = vpop.f32.mrb[0].mxu0
        %5479 = vmatprep.mubr.f32.mxu0 0.0
        %5480 = vmatmul.mubr.f32.gmra.mrb[0].mxu0 %v2899
        %v5481 = vpop.f32.mrb[0].mxu0
        %v5482 = vadd.f32 0.0, %v5481
        %v5483 = vpop.f32.mrb[0].mxu0
        %5484 = vmatprep.mubr.f32.mxu0 0.0
        %5485 = vmatmul.mubr.f32.gmra.mrb[0].mxu0 %v2900
        %v5486 = vpop.f32.mrb[0].mxu0
        %v5487 = vadd.f32 0.0, %v5486
        %v5488 = vpop.f32.mrb[0].mxu0
        %5489 = vmatprep.mubr.f32.mxu0 0.0
        %5490 = vmatmul.mubr.f32.gmra.mrb[0].mxu0 %v2901
        %v5491 = vpop.f32.mrb[0].mxu0
        %v5492 = vadd.f32 0.0, %v5491
        %v5493 = vpop.f32.mrb[0].mxu0
        %5494 = vmatprep.mubr.f32.mxu0 0.0
        %5495 = vmatmul.mubr.f32.gmra.mrb[0].mxu0 %v2902
        %v5496 = vpop.f32.mrb[0].mxu0
        %v5497 = vadd.f32 0.0, %v5496
        %v5498 = vpop.f32.mrb[0].mxu0
        %5499 = vmatprep.mubr.f32.mxu0 0.0
        %5500 = vmatmul.mubr.f32.gmra.mrb[0].mxu0 %v2903
        %v5501 = vpop.f32.mrb[0].mxu0
        %v5502 = vadd.f32 0.0, %v5501
        %v5503 = vpop.f32.mrb[0].mxu0
        %5504 = vmatprep.mubr.f32.mxu0 0.0
        %5505 = vmatmul.mubr.f32.gmra.mrb[0].mxu0 %v2904
        %v5506 = vpop.f32.mrb[0].mxu0
        %v5507 = vadd.f32 0.0, %v5506
        %v5508 = vpop.f32.mrb[0].mxu0
        %5509 = vmatprep.mubr.f32.mxu0 0.0
        %5510 = vmatmul.mubr.f32.gmra.mrb[0].mxu0 %v2905
        %v5511 = vpop.f32.mrb[0].mxu0
        %v5512 = vadd.f32 0.0, %v5511
        %v5513 = vpop.f32.mrb[0].mxu0
        %5514 = vmatprep.mubr.f32.mxu0 0.0
        %5515 = vmatmul.mubr.f32.gmra.mrb[0].mxu0 %v2906
        %v5516 = vpop.f32.mrb[0].mxu0
        %v5517 = vadd.f32 0.0, %v5516
        %v5518 = vpop.f32.mrb[0].mxu0
        %5519 = vmatprep.mubr.f32.mxu0 0.0
        %5520 = vmatmul.mubr.f32.gmra.mrb[0].mxu0 %v2907
        %v5521 = vpop.f32.mrb[0].mxu0
        %v5522 = vadd.f32 0.0, %v5521
        %v5523 = vpop.f32.mrb[0].mxu0
        %5524 = vmatprep.mubr.f32.mxu0 0.0
        %5525 = vmatmul.mubr.f32.gmra.mrb[0].mxu0 %v2908
        %v5526 = vpop.f32.mrb[0].mxu0
        %v5527 = vadd.f32 0.0, %v5526
        %v5528 = vpop.f32.mrb[0].mxu0
        %5529 = vmatprep.mubr.f32.mxu0 0.0
        %5530 = vmatmul.mubr.f32.gmra.mrb[0].mxu0 %v2909
        %v5531 = vpop.f32.mrb[0].mxu0
        %v5532 = vadd.f32 0.0, %v5531
        %v5533 = vpop.f32.mrb[0].mxu0
        %5534 = vmatprep.mubr.f32.mxu0 0.0
        %5535 = vmatmul.mubr.f32.gmra.mrb[0].mxu0 %v2910
        %v5536 = vpop.f32.mrb[0].mxu0
        %v5537 = vadd.f32 0.0, %v5536
        %v5538 = vpop.f32.mrb[0].mxu0
        %5539 = vmatprep.mubr.f32.mxu0 0.0
        %5540 = vmatmul.mubr.f32.gmra.mrb[0].mxu0 %v2911
        %v5541 = vpop.f32.mrb[0].mxu0
        %v5542 = vadd.f32 0.0, %v5541
        %v5543 = vpop.f32.mrb[0].mxu0
        %5544 = vmatprep.mubr.f32.mxu0 0.0
        %5545 = vmatmul.mubr.f32.gmra.mrb[0].mxu0 %v2912
        %v5546 = vpop.f32.mrb[0].mxu0
        %v5547 = vadd.f32 0.0, %v5546
        %v5548 = vpop.f32.mrb[0].mxu0
        %5549 = vmatprep.mubr.f32.mxu0 0.0
        %5550 = vmatmul.mubr.f32.gmra.mrb[0].mxu0 %v2913
        %v5551 = vpop.f32.mrb[0].mxu0
        %v5552 = vadd.f32 0.0, %v5551
        %v5553 = vpop.f32.mrb[0].mxu0
        %5554 = vdwg.mxu0
        %5555 = vxpose.xlu0.b32.start [1/16] %v2997, 128
        %5556 = vxpose.xlu0.b32.cont [2/16] %v3002, 128
        %5557 = vxpose.xlu0.b32.cont [3/16] %v3007, 128
        %5558 = vxpose.xlu0.b32.cont [4/16] %v3012, 128
        %5559 = vxpose.xlu0.b32.cont [5/16] %v3017, 128
        %5560 = vxpose.xlu0.b32.cont [6/16] %v3022, 128
        %5561 = vxpose.xlu0.b32.cont [7/16] %v3027, 128
        %5562 = vxpose.xlu0.b32.cont [8/16] %v3032, 128
        %5563 = vxpose.xlu0.b32.cont [9/16] %v3037, 128
        %5564 = vxpose.xlu0.b32.cont [10/16] %v3042, 128
        %5565 = vxpose.xlu0.b32.cont [11/16] %v3047, 128
        %5566 = vxpose.xlu0.b32.cont [12/16] %v3052, 128
        %5567 = vxpose.xlu0.b32.cont [13/16] %v3057, 128
        %5568 = vxpose.xlu0.b32.cont [14/16] %v3062, 128
        %5569 = vxpose.xlu0.b32.cont [15/16] %v3067, 128
        %5570 = vxpose.xlu0.b32.end [16/16] %v3072, 128
        %v5571 = vpop.trf.xlu0
        %v5572 = vpop.trf.xlu0
        %v5573 = vpop.trf.xlu0
        %v5574 = vpop.trf.xlu0
        %v5575 = vpop.trf.xlu0
        %v5576 = vpop.trf.xlu0
        %v5577 = vpop.trf.xlu0
        %v5578 = vpop.trf.xlu0
        %v5579 = vpop.trf.xlu0
        %v5580 = vpop.trf.xlu0
        %v5581 = vpop.trf.xlu0
        %v5582 = vpop.trf.xlu0
        %v5583 = vpop.trf.xlu0
        %v5584 = vpop.trf.xlu0
        %v5585 = vpop.trf.xlu0
        %v5586 = vpop.trf.xlu0
        %5587 = vxpose.xlu0.b32.start [1/16] %v3077, 128
        %5588 = vxpose.xlu0.b32.cont [2/16] %v3082, 128
        %5589 = vxpose.xlu0.b32.cont [3/16] %v3087, 128
        %5590 = vxpose.xlu0.b32.cont [4/16] %v3092, 128
        %5591 = vxpose.xlu0.b32.cont [5/16] %v3097, 128
        %5592 = vxpose.xlu0.b32.cont [6/16] %v3102, 128
        %5593 = vxpose.xlu0.b32.cont [7/16] %v3107, 128
        %5594 = vxpose.xlu0.b32.cont [8/16] %v3112, 128
        %5595 = vxpose.xlu0.b32.cont [9/16] %v3117, 128
        %5596 = vxpose.xlu0.b32.cont [10/16] %v3122, 128
        %5597 = vxpose.xlu0.b32.cont [11/16] %v3127, 128
        %5598 = vxpose.xlu0.b32.cont [12/16] %v3132, 128
        %5599 = vxpose.xlu0.b32.cont [13/16] %v3137, 128
        %5600 = vxpose.xlu0.b32.cont [14/16] %v3142, 128
        %5601 = vxpose.xlu0.b32.cont [15/16] %v3147, 128
        %5602 = vxpose.xlu0.b32.end [16/16] %v3152, 128
        %v5603 = vpop.trf.xlu0
        %v5604 = vpop.trf.xlu0
        %v5605 = vpop.trf.xlu0
        %v5606 = vpop.trf.xlu0
        %v5607 = vpop.trf.xlu0
        %v5608 = vpop.trf.xlu0
        %v5609 = vpop.trf.xlu0
        %v5610 = vpop.trf.xlu0
        %v5611 = vpop.trf.xlu0
        %v5612 = vpop.trf.xlu0
        %v5613 = vpop.trf.xlu0
        %v5614 = vpop.trf.xlu0
        %v5615 = vpop.trf.xlu0
        %v5616 = vpop.trf.xlu0
        %v5617 = vpop.trf.xlu0
        %v5618 = vpop.trf.xlu0
        %5619 = vxpose.xlu0.b32.start [1/16] %v3157, 128
        %5620 = vxpose.xlu0.b32.cont [2/16] %v3162, 128
        %5621 = vxpose.xlu0.b32.cont [3/16] %v3167, 128
        %5622 = vxpose.xlu0.b32.cont [4/16] %v3172, 128
        %5623 = vxpose.xlu0.b32.cont [5/16] %v3177, 128
        %5624 = vxpose.xlu0.b32.cont [6/16] %v3182, 128
        %5625 = vxpose.xlu0.b32.cont [7/16] %v3187, 128
        %5626 = vxpose.xlu0.b32.cont [8/16] %v3192, 128
        %5627 = vxpose.xlu0.b32.cont [9/16] %v3197, 128
        %5628 = vxpose.xlu0.b32.cont [10/16] %v3202, 128
        %5629 = vxpose.xlu0.b32.cont [11/16] %v3207, 128
        %5630 = vxpose.xlu0.b32.cont [12/16] %v3212, 128
        %5631 = vxpose.xlu0.b32.cont [13/16] %v3217, 128
        %5632 = vxpose.xlu0.b32.cont [14/16] %v3222, 128
        %5633 = vxpose.xlu0.b32.cont [15/16] %v3227, 128
        %5634 = vxpose.xlu0.b32.end [16/16] %v3232, 128
        %v5635 = vpop.trf.xlu0
        %v5636 = vpop.trf.xlu0
        %v5637 = vpop.trf.xlu0
        %v5638 = vpop.trf.xlu0
        %v5639 = vpop.trf.xlu0
        %v5640 = vpop.trf.xlu0
        %v5641 = vpop.trf.xlu0
        %v5642 = vpop.trf.xlu0
        %v5643 = vpop.trf.xlu0
        %v5644 = vpop.trf.xlu0
        %v5645 = vpop.trf.xlu0
        %v5646 = vpop.trf.xlu0
        %v5647 = vpop.trf.xlu0
        %v5648 = vpop.trf.xlu0
        %v5649 = vpop.trf.xlu0
        %v5650 = vpop.trf.xlu0
        %5651 = vxpose.xlu0.b32.start [1/16] %v3237, 128
        %5652 = vxpose.xlu0.b32.cont [2/16] %v3242, 128
        %5653 = vxpose.xlu0.b32.cont [3/16] %v3247, 128
        %5654 = vxpose.xlu0.b32.cont [4/16] %v3252, 128
        %5655 = vxpose.xlu0.b32.cont [5/16] %v3257, 128
        %5656 = vxpose.xlu0.b32.cont [6/16] %v3262, 128
        %5657 = vxpose.xlu0.b32.cont [7/16] %v3267, 128
        %5658 = vxpose.xlu0.b32.cont [8/16] %v3272, 128
        %5659 = vxpose.xlu0.b32.cont [9/16] %v3277, 128
        %5660 = vxpose.xlu0.b32.cont [10/16] %v3282, 128
        %5661 = vxpose.xlu0.b32.cont [11/16] %v3287, 128
        %5662 = vxpose.xlu0.b32.cont [12/16] %v3292, 128
        %5663 = vxpose.xlu0.b32.cont [13/16] %v3297, 128
        %5664 = vxpose.xlu0.b32.cont [14/16] %v3302, 128
        %5665 = vxpose.xlu0.b32.cont [15/16] %v3307, 128
        %5666 = vxpose.xlu0.b32.end [16/16] %v3312, 128
        %v5667 = vpop.trf.xlu0
        %v5668 = vpop.trf.xlu0
        %v5669 = vpop.trf.xlu0
        %v5670 = vpop.trf.xlu0
        %v5671 = vpop.trf.xlu0
        %v5672 = vpop.trf.xlu0
        %v5673 = vpop.trf.xlu0
        %v5674 = vpop.trf.xlu0
        %v5675 = vpop.trf.xlu0
        %v5676 = vpop.trf.xlu0
        %v5677 = vpop.trf.xlu0
        %v5678 = vpop.trf.xlu0
        %v5679 = vpop.trf.xlu0
        %v5680 = vpop.trf.xlu0
        %v5681 = vpop.trf.xlu0
        %v5682 = vpop.trf.xlu0
        %5683 = vxpose.xlu0.b32.start [1/16] %v3317, 128
        %5684 = vxpose.xlu0.b32.cont [2/16] %v3322, 128
        %5685 = vxpose.xlu0.b32.cont [3/16] %v3327, 128
        %5686 = vxpose.xlu0.b32.cont [4/16] %v3332, 128
        %5687 = vxpose.xlu0.b32.cont [5/16] %v3337, 128
        %5688 = vxpose.xlu0.b32.cont [6/16] %v3342, 128
        %5689 = vxpose.xlu0.b32.cont [7/16] %v3347, 128
        %5690 = vxpose.xlu0.b32.cont [8/16] %v3352, 128
        %5691 = vxpose.xlu0.b32.cont [9/16] %v3357, 128
        %5692 = vxpose.xlu0.b32.cont [10/16] %v3362, 128
        %5693 = vxpose.xlu0.b32.cont [11/16] %v3367, 128
        %5694 = vxpose.xlu0.b32.cont [12/16] %v3372, 128
        %5695 = vxpose.xlu0.b32.cont [13/16] %v3377, 128
        %5696 = vxpose.xlu0.b32.cont [14/16] %v3382, 128
        %5697 = vxpose.xlu0.b32.cont [15/16] %v3387, 128
        %5698 = vxpose.xlu0.b32.end [16/16] %v3392, 128
        %v5699 = vpop.trf.xlu0
        %v5700 = vpop.trf.xlu0
        %v5701 = vpop.trf.xlu0
        %v5702 = vpop.trf.xlu0
        %v5703 = vpop.trf.xlu0
        %v5704 = vpop.trf.xlu0
        %v5705 = vpop.trf.xlu0
        %v5706 = vpop.trf.xlu0
        %v5707 = vpop.trf.xlu0
        %v5708 = vpop.trf.xlu0
        %v5709 = vpop.trf.xlu0
        %v5710 = vpop.trf.xlu0
        %v5711 = vpop.trf.xlu0
        %v5712 = vpop.trf.xlu0
        %v5713 = vpop.trf.xlu0
        %v5714 = vpop.trf.xlu0
        %5715 = vxpose.xlu0.b32.start [1/16] %v3397, 128
        %5716 = vxpose.xlu0.b32.cont [2/16] %v3402, 128
        %5717 = vxpose.xlu0.b32.cont [3/16] %v3407, 128
        %5718 = vxpose.xlu0.b32.cont [4/16] %v3412, 128
        %5719 = vxpose.xlu0.b32.cont [5/16] %v3417, 128
        %5720 = vxpose.xlu0.b32.cont [6/16] %v3422, 128
        %5721 = vxpose.xlu0.b32.cont [7/16] %v3427, 128
        %5722 = vxpose.xlu0.b32.cont [8/16] %v3432, 128
        %5723 = vxpose.xlu0.b32.cont [9/16] %v3437, 128
        %5724 = vxpose.xlu0.b32.cont [10/16] %v3442, 128
        %5725 = vxpose.xlu0.b32.cont [11/16] %v3447, 128
        %5726 = vxpose.xlu0.b32.cont [12/16] %v3452, 128
        %5727 = vxpose.xlu0.b32.cont [13/16] %v3457, 128
        %5728 = vxpose.xlu0.b32.cont [14/16] %v3462, 128
        %5729 = vxpose.xlu0.b32.cont [15/16] %v3467, 128
        %5730 = vxpose.xlu0.b32.end [16/16] %v3472, 128
        %v5731 = vpop.trf.xlu0
        %v5732 = vpop.trf.xlu0
        %v5733 = vpop.trf.xlu0
        %v5734 = vpop.trf.xlu0
        %v5735 = vpop.trf.xlu0
        %v5736 = vpop.trf.xlu0
        %v5737 = vpop.trf.xlu0
        %v5738 = vpop.trf.xlu0
        %v5739 = vpop.trf.xlu0
        %v5740 = vpop.trf.xlu0
        %v5741 = vpop.trf.xlu0
        %v5742 = vpop.trf.xlu0
        %v5743 = vpop.trf.xlu0
        %v5744 = vpop.trf.xlu0
        %v5745 = vpop.trf.xlu0
        %v5746 = vpop.trf.xlu0
        %5747 = vxpose.xlu0.b32.start [1/16] %v3477, 128
        %5748 = vxpose.xlu0.b32.cont [2/16] %v3482, 128
        %5749 = vxpose.xlu0.b32.cont [3/16] %v3487, 128
        %5750 = vxpose.xlu0.b32.cont [4/16] %v3492, 128
        %5751 = vxpose.xlu0.b32.cont [5/16] %v3497, 128
        %5752 = vxpose.xlu0.b32.cont [6/16] %v3502, 128
        %5753 = vxpose.xlu0.b32.cont [7/16] %v3507, 128
        %5754 = vxpose.xlu0.b32.cont [8/16] %v3512, 128
        %5755 = vxpose.xlu0.b32.cont [9/16] %v3517, 128
        %5756 = vxpose.xlu0.b32.cont [10/16] %v3522, 128
        %5757 = vxpose.xlu0.b32.cont [11/16] %v3527, 128
        %5758 = vxpose.xlu0.b32.cont [12/16] %v3532, 128
        %5759 = vxpose.xlu0.b32.cont [13/16] %v3537, 128
        %5760 = vxpose.xlu0.b32.cont [14/16] %v3542, 128
        %5761 = vxpose.xlu0.b32.cont [15/16] %v3547, 128
        %5762 = vxpose.xlu0.b32.end [16/16] %v3552, 128
        %v5763 = vpop.trf.xlu0
        %v5764 = vpop.trf.xlu0
        %v5765 = vpop.trf.xlu0
        %v5766 = vpop.trf.xlu0
        %v5767 = vpop.trf.xlu0
        %v5768 = vpop.trf.xlu0
        %v5769 = vpop.trf.xlu0
        %v5770 = vpop.trf.xlu0
        %v5771 = vpop.trf.xlu0
        %v5772 = vpop.trf.xlu0
        %v5773 = vpop.trf.xlu0
        %v5774 = vpop.trf.xlu0
        %v5775 = vpop.trf.xlu0
        %v5776 = vpop.trf.xlu0
        %v5777 = vpop.trf.xlu0
        %v5778 = vpop.trf.xlu0
        %5779 = vxpose.xlu0.b32.start [1/16] %v3557, 128
        %5780 = vxpose.xlu0.b32.cont [2/16] %v3562, 128
        %5781 = vxpose.xlu0.b32.cont [3/16] %v3567, 128
        %5782 = vxpose.xlu0.b32.cont [4/16] %v3572, 128
        %5783 = vxpose.xlu0.b32.cont [5/16] %v3577, 128
        %5784 = vxpose.xlu0.b32.cont [6/16] %v3582, 128
        %5785 = vxpose.xlu0.b32.cont [7/16] %v3587, 128
        %5786 = vxpose.xlu0.b32.cont [8/16] %v3592, 128
        %5787 = vxpose.xlu0.b32.cont [9/16] %v3597, 128
        %5788 = vxpose.xlu0.b32.cont [10/16] %v3602, 128
        %5789 = vxpose.xlu0.b32.cont [11/16] %v3607, 128
        %5790 = vxpose.xlu0.b32.cont [12/16] %v3612, 128
        %5791 = vxpose.xlu0.b32.cont [13/16] %v3617, 128
        %5792 = vxpose.xlu0.b32.cont [14/16] %v3622, 128
        %5793 = vxpose.xlu0.b32.cont [15/16] %v3627, 128
        %5794 = vxpose.xlu0.b32.end [16/16] %v3632, 128
        %v5795 = vpop.trf.xlu0
        %v5796 = vpop.trf.xlu0
        %v5797 = vpop.trf.xlu0
        %v5798 = vpop.trf.xlu0
        %v5799 = vpop.trf.xlu0
        %v5800 = vpop.trf.xlu0
        %v5801 = vpop.trf.xlu0
        %v5802 = vpop.trf.xlu0
        %v5803 = vpop.trf.xlu0
        %v5804 = vpop.trf.xlu0
        %v5805 = vpop.trf.xlu0
        %v5806 = vpop.trf.xlu0
        %v5807 = vpop.trf.xlu0
        %v5808 = vpop.trf.xlu0
        %v5809 = vpop.trf.xlu0
        %v5810 = vpop.trf.xlu0
        %5811 = vxpose.xlu0.b32.start [1/16] %v3637, 128
        %5812 = vxpose.xlu0.b32.cont [2/16] %v3642, 128
        %5813 = vxpose.xlu0.b32.cont [3/16] %v3647, 128
        %5814 = vxpose.xlu0.b32.cont [4/16] %v3652, 128
        %5815 = vxpose.xlu0.b32.cont [5/16] %v3657, 128
        %5816 = vxpose.xlu0.b32.cont [6/16] %v3662, 128
        %5817 = vxpose.xlu0.b32.cont [7/16] %v3667, 128
        %5818 = vxpose.xlu0.b32.cont [8/16] %v3672, 128
        %5819 = vxpose.xlu0.b32.cont [9/16] %v3677, 128
        %5820 = vxpose.xlu0.b32.cont [10/16] %v3682, 128
        %5821 = vxpose.xlu0.b32.cont [11/16] %v3687, 128
        %5822 = vxpose.xlu0.b32.cont [12/16] %v3692, 128
        %5823 = vxpose.xlu0.b32.cont [13/16] %v3697, 128
        %5824 = vxpose.xlu0.b32.cont [14/16] %v3702, 128
        %5825 = vxpose.xlu0.b32.cont [15/16] %v3707, 128
        %5826 = vxpose.xlu0.b32.end [16/16] %v3712, 128
        %v5827 = vpop.trf.xlu0
        %v5828 = vpop.trf.xlu0
        %v5829 = vpop.trf.xlu0
        %v5830 = vpop.trf.xlu0
        %v5831 = vpop.trf.xlu0
        %v5832 = vpop.trf.xlu0
        %v5833 = vpop.trf.xlu0
        %v5834 = vpop.trf.xlu0
        %v5835 = vpop.trf.xlu0
        %v5836 = vpop.trf.xlu0
        %v5837 = vpop.trf.xlu0
        %v5838 = vpop.trf.xlu0
        %v5839 = vpop.trf.xlu0
        %v5840 = vpop.trf.xlu0
        %v5841 = vpop.trf.xlu0
        %v5842 = vpop.trf.xlu0
        %5843 = vxpose.xlu0.b32.start [1/16] %v3717, 128
        %5844 = vxpose.xlu0.b32.cont [2/16] %v3722, 128
        %5845 = vxpose.xlu0.b32.cont [3/16] %v3727, 128
        %5846 = vxpose.xlu0.b32.cont [4/16] %v3732, 128
        %5847 = vxpose.xlu0.b32.cont [5/16] %v3737, 128
        %5848 = vxpose.xlu0.b32.cont [6/16] %v3742, 128
        %5849 = vxpose.xlu0.b32.cont [7/16] %v3747, 128
        %5850 = vxpose.xlu0.b32.cont [8/16] %v3752, 128
        %5851 = vxpose.xlu0.b32.cont [9/16] %v3757, 128
        %5852 = vxpose.xlu0.b32.cont [10/16] %v3762, 128
        %5853 = vxpose.xlu0.b32.cont [11/16] %v3767, 128
        %5854 = vxpose.xlu0.b32.cont [12/16] %v3772, 128
        %5855 = vxpose.xlu0.b32.cont [13/16] %v3777, 128
        %5856 = vxpose.xlu0.b32.cont [14/16] %v3782, 128
        %5857 = vxpose.xlu0.b32.cont [15/16] %v3787, 128
        %5858 = vxpose.xlu0.b32.end [16/16] %v3792, 128
        %v5859 = vpop.trf.xlu0
        %v5860 = vpop.trf.xlu0
        %v5861 = vpop.trf.xlu0
        %v5862 = vpop.trf.xlu0
        %v5863 = vpop.trf.xlu0
        %v5864 = vpop.trf.xlu0
        %v5865 = vpop.trf.xlu0
        %v5866 = vpop.trf.xlu0
        %v5867 = vpop.trf.xlu0
        %v5868 = vpop.trf.xlu0
        %v5869 = vpop.trf.xlu0
        %v5870 = vpop.trf.xlu0
        %v5871 = vpop.trf.xlu0
        %v5872 = vpop.trf.xlu0
        %v5873 = vpop.trf.xlu0
        %v5874 = vpop.trf.xlu0
        %5875 = vxpose.xlu0.b32.start [1/16] %v3797, 128
        %5876 = vxpose.xlu0.b32.cont [2/16] %v3802, 128
        %5877 = vxpose.xlu0.b32.cont [3/16] %v3807, 128
        %5878 = vxpose.xlu0.b32.cont [4/16] %v3812, 128
        %5879 = vxpose.xlu0.b32.cont [5/16] %v3817, 128
        %5880 = vxpose.xlu0.b32.cont [6/16] %v3822, 128
        %5881 = vxpose.xlu0.b32.cont [7/16] %v3827, 128
        %5882 = vxpose.xlu0.b32.cont [8/16] %v3832, 128
        %5883 = vxpose.xlu0.b32.cont [9/16] %v3837, 128
        %5884 = vxpose.xlu0.b32.cont [10/16] %v3842, 128
        %5885 = vxpose.xlu0.b32.cont [11/16] %v3847, 128
        %5886 = vxpose.xlu0.b32.cont [12/16] %v3852, 128
        %5887 = vxpose.xlu0.b32.cont [13/16] %v3857, 128
        %5888 = vxpose.xlu0.b32.cont [14/16] %v3862, 128
        %5889 = vxpose.xlu0.b32.cont [15/16] %v3867, 128
        %5890 = vxpose.xlu0.b32.end [16/16] %v3872, 128
        %v5891 = vpop.trf.xlu0
        %v5892 = vpop.trf.xlu0
        %v5893 = vpop.trf.xlu0
        %v5894 = vpop.trf.xlu0
        %v5895 = vpop.trf.xlu0
        %v5896 = vpop.trf.xlu0
        %v5897 = vpop.trf.xlu0
        %v5898 = vpop.trf.xlu0
        %v5899 = vpop.trf.xlu0
        %v5900 = vpop.trf.xlu0
        %v5901 = vpop.trf.xlu0
        %v5902 = vpop.trf.xlu0
        %v5903 = vpop.trf.xlu0
        %v5904 = vpop.trf.xlu0
        %v5905 = vpop.trf.xlu0
        %v5906 = vpop.trf.xlu0
        %5907 = vxpose.xlu0.b32.start [1/16] %v3877, 128
        %5908 = vxpose.xlu0.b32.cont [2/16] %v3882, 128
        %5909 = vxpose.xlu0.b32.cont [3/16] %v3887, 128
        %5910 = vxpose.xlu0.b32.cont [4/16] %v3892, 128
        %5911 = vxpose.xlu0.b32.cont [5/16] %v3897, 128
        %5912 = vxpose.xlu0.b32.cont [6/16] %v3902, 128
        %5913 = vxpose.xlu0.b32.cont [7/16] %v3907, 128
        %5914 = vxpose.xlu0.b32.cont [8/16] %v3912, 128
        %5915 = vxpose.xlu0.b32.cont [9/16] %v3917, 128
        %5916 = vxpose.xlu0.b32.cont [10/16] %v3922, 128
        %5917 = vxpose.xlu0.b32.cont [11/16] %v3927, 128
        %5918 = vxpose.xlu0.b32.cont [12/16] %v3932, 128
        %5919 = vxpose.xlu0.b32.cont [13/16] %v3937, 128
        %5920 = vxpose.xlu0.b32.cont [14/16] %v3942, 128
        %5921 = vxpose.xlu0.b32.cont [15/16] %v3947, 128
        %5922 = vxpose.xlu0.b32.end [16/16] %v3952, 128
        %v5923 = vpop.trf.xlu0
        %v5924 = vpop.trf.xlu0
        %v5925 = vpop.trf.xlu0
        %v5926 = vpop.trf.xlu0
        %v5927 = vpop.trf.xlu0
        %v5928 = vpop.trf.xlu0
        %v5929 = vpop.trf.xlu0
        %v5930 = vpop.trf.xlu0
        %v5931 = vpop.trf.xlu0
        %v5932 = vpop.trf.xlu0
        %v5933 = vpop.trf.xlu0
        %v5934 = vpop.trf.xlu0
        %v5935 = vpop.trf.xlu0
        %v5936 = vpop.trf.xlu0
        %v5937 = vpop.trf.xlu0
        %v5938 = vpop.trf.xlu0
        %5939 = vxpose.xlu0.b32.start [1/16] %v3957, 128
        %5940 = vxpose.xlu0.b32.cont [2/16] %v3962, 128
        %5941 = vxpose.xlu0.b32.cont [3/16] %v3967, 128
        %5942 = vxpose.xlu0.b32.cont [4/16] %v3972, 128
        %5943 = vxpose.xlu0.b32.cont [5/16] %v3977, 128
        %5944 = vxpose.xlu0.b32.cont [6/16] %v3982, 128
        %5945 = vxpose.xlu0.b32.cont [7/16] %v3987, 128
        %5946 = vxpose.xlu0.b32.cont [8/16] %v3992, 128
        %5947 = vxpose.xlu0.b32.cont [9/16] %v3997, 128
        %5948 = vxpose.xlu0.b32.cont [10/16] %v4002, 128
        %5949 = vxpose.xlu0.b32.cont [11/16] %v4007, 128
        %5950 = vxpose.xlu0.b32.cont [12/16] %v4012, 128
        %5951 = vxpose.xlu0.b32.cont [13/16] %v4017, 128
        %5952 = vxpose.xlu0.b32.cont [14/16] %v4022, 128
        %5953 = vxpose.xlu0.b32.cont [15/16] %v4027, 128
        %5954 = vxpose.xlu0.b32.end [16/16] %v4032, 128
        %v5955 = vpop.trf.xlu0
        %v5956 = vpop.trf.xlu0
        %v5957 = vpop.trf.xlu0
        %v5958 = vpop.trf.xlu0
        %v5959 = vpop.trf.xlu0
        %v5960 = vpop.trf.xlu0
        %v5961 = vpop.trf.xlu0
        %v5962 = vpop.trf.xlu0
        %v5963 = vpop.trf.xlu0
        %v5964 = vpop.trf.xlu0
        %v5965 = vpop.trf.xlu0
        %v5966 = vpop.trf.xlu0
        %v5967 = vpop.trf.xlu0
        %v5968 = vpop.trf.xlu0
        %v5969 = vpop.trf.xlu0
        %v5970 = vpop.trf.xlu0
        %5971 = vxpose.xlu0.b32.start [1/16] %v4037, 128
        %5972 = vxpose.xlu0.b32.cont [2/16] %v4042, 128
        %5973 = vxpose.xlu0.b32.cont [3/16] %v4047, 128
        %5974 = vxpose.xlu0.b32.cont [4/16] %v4052, 128
        %5975 = vxpose.xlu0.b32.cont [5/16] %v4057, 128
        %5976 = vxpose.xlu0.b32.cont [6/16] %v4062, 128
        %5977 = vxpose.xlu0.b32.cont [7/16] %v4067, 128
        %5978 = vxpose.xlu0.b32.cont [8/16] %v4072, 128
        %5979 = vxpose.xlu0.b32.cont [9/16] %v4077, 128
        %5980 = vxpose.xlu0.b32.cont [10/16] %v4082, 128
        %5981 = vxpose.xlu0.b32.cont [11/16] %v4087, 128
        %5982 = vxpose.xlu0.b32.cont [12/16] %v4092, 128
        %5983 = vxpose.xlu0.b32.cont [13/16] %v4097, 128
        %5984 = vxpose.xlu0.b32.cont [14/16] %v4102, 128
        %5985 = vxpose.xlu0.b32.cont [15/16] %v4107, 128
        %5986 = vxpose.xlu0.b32.end [16/16] %v4112, 128
        %v5987 = vpop.trf.xlu0
        %v5988 = vpop.trf.xlu0
        %v5989 = vpop.trf.xlu0
        %v5990 = vpop.trf.xlu0
        %v5991 = vpop.trf.xlu0
        %v5992 = vpop.trf.xlu0
        %v5993 = vpop.trf.xlu0
        %v5994 = vpop.trf.xlu0
        %v5995 = vpop.trf.xlu0
        %v5996 = vpop.trf.xlu0
        %v5997 = vpop.trf.xlu0
        %v5998 = vpop.trf.xlu0
        %v5999 = vpop.trf.xlu0
        %v6000 = vpop.trf.xlu0
        %v6001 = vpop.trf.xlu0
        %v6002 = vpop.trf.xlu0
        %6003 = vxpose.xlu0.b32.start [1/16] %v4117, 128
        %6004 = vxpose.xlu0.b32.cont [2/16] %v4122, 128
        %6005 = vxpose.xlu0.b32.cont [3/16] %v4127, 128
        %6006 = vxpose.xlu0.b32.cont [4/16] %v4132, 128
        %6007 = vxpose.xlu0.b32.cont [5/16] %v4137, 128
        %6008 = vxpose.xlu0.b32.cont [6/16] %v4142, 128
        %6009 = vxpose.xlu0.b32.cont [7/16] %v4147, 128
        %6010 = vxpose.xlu0.b32.cont [8/16] %v4152, 128
        %6011 = vxpose.xlu0.b32.cont [9/16] %v4157, 128
        %6012 = vxpose.xlu0.b32.cont [10/16] %v4162, 128
        %6013 = vxpose.xlu0.b32.cont [11/16] %v4167, 128
        %6014 = vxpose.xlu0.b32.cont [12/16] %v4172, 128
        %6015 = vxpose.xlu0.b32.cont [13/16] %v4177, 128
        %6016 = vxpose.xlu0.b32.cont [14/16] %v4182, 128
        %6017 = vxpose.xlu0.b32.cont [15/16] %v4187, 128
        %6018 = vxpose.xlu0.b32.end [16/16] %v4192, 128
        %v6019 = vpop.trf.xlu0
        %v6020 = vpop.trf.xlu0
        %v6021 = vpop.trf.xlu0
        %v6022 = vpop.trf.xlu0
        %v6023 = vpop.trf.xlu0
        %v6024 = vpop.trf.xlu0
        %v6025 = vpop.trf.xlu0
        %v6026 = vpop.trf.xlu0
        %v6027 = vpop.trf.xlu0
        %v6028 = vpop.trf.xlu0
        %v6029 = vpop.trf.xlu0
        %v6030 = vpop.trf.xlu0
        %v6031 = vpop.trf.xlu0
        %v6032 = vpop.trf.xlu0
        %v6033 = vpop.trf.xlu0
        %v6034 = vpop.trf.xlu0
        %6035 = vxpose.xlu0.b32.start [1/16] %v4197, 128
        %6036 = vxpose.xlu0.b32.cont [2/16] %v4202, 128
        %6037 = vxpose.xlu0.b32.cont [3/16] %v4207, 128
        %6038 = vxpose.xlu0.b32.cont [4/16] %v4212, 128
        %6039 = vxpose.xlu0.b32.cont [5/16] %v4217, 128
        %6040 = vxpose.xlu0.b32.cont [6/16] %v4222, 128
        %6041 = vxpose.xlu0.b32.cont [7/16] %v4227, 128
        %6042 = vxpose.xlu0.b32.cont [8/16] %v4232, 128
        %6043 = vxpose.xlu0.b32.cont [9/16] %v4237, 128
        %6044 = vxpose.xlu0.b32.cont [10/16] %v4242, 128
        %6045 = vxpose.xlu0.b32.cont [11/16] %v4247, 128
        %6046 = vxpose.xlu0.b32.cont [12/16] %v4252, 128
        %6047 = vxpose.xlu0.b32.cont [13/16] %v4257, 128
        %6048 = vxpose.xlu0.b32.cont [14/16] %v4262, 128
        %6049 = vxpose.xlu0.b32.cont [15/16] %v4267, 128
        %6050 = vxpose.xlu0.b32.end [16/16] %v4272, 128
        %v6051 = vpop.trf.xlu0
        %v6052 = vpop.trf.xlu0
        %v6053 = vpop.trf.xlu0
        %v6054 = vpop.trf.xlu0
        %v6055 = vpop.trf.xlu0
        %v6056 = vpop.trf.xlu0
        %v6057 = vpop.trf.xlu0
        %v6058 = vpop.trf.xlu0
        %v6059 = vpop.trf.xlu0
        %v6060 = vpop.trf.xlu0
        %v6061 = vpop.trf.xlu0
        %v6062 = vpop.trf.xlu0
        %v6063 = vpop.trf.xlu0
        %v6064 = vpop.trf.xlu0
        %v6065 = vpop.trf.xlu0
        %v6066 = vpop.trf.xlu0
        %6067 = vxpose.xlu0.b32.start [1/16] %v4277, 128
        %6068 = vxpose.xlu0.b32.cont [2/16] %v4282, 128
        %6069 = vxpose.xlu0.b32.cont [3/16] %v4287, 128
        %6070 = vxpose.xlu0.b32.cont [4/16] %v4292, 128
        %6071 = vxpose.xlu0.b32.cont [5/16] %v4297, 128
        %6072 = vxpose.xlu0.b32.cont [6/16] %v4302, 128
        %6073 = vxpose.xlu0.b32.cont [7/16] %v4307, 128
        %6074 = vxpose.xlu0.b32.cont [8/16] %v4312, 128
        %6075 = vxpose.xlu0.b32.cont [9/16] %v4317, 128
        %6076 = vxpose.xlu0.b32.cont [10/16] %v4322, 128
        %6077 = vxpose.xlu0.b32.cont [11/16] %v4327, 128
        %6078 = vxpose.xlu0.b32.cont [12/16] %v4332, 128
        %6079 = vxpose.xlu0.b32.cont [13/16] %v4337, 128
        %6080 = vxpose.xlu0.b32.cont [14/16] %v4342, 128
        %6081 = vxpose.xlu0.b32.cont [15/16] %v4347, 128
        %6082 = vxpose.xlu0.b32.end [16/16] %v4352, 128
        %v6083 = vpop.trf.xlu0
        %v6084 = vpop.trf.xlu0
        %v6085 = vpop.trf.xlu0
        %v6086 = vpop.trf.xlu0
        %v6087 = vpop.trf.xlu0
        %v6088 = vpop.trf.xlu0
        %v6089 = vpop.trf.xlu0
        %v6090 = vpop.trf.xlu0
        %v6091 = vpop.trf.xlu0
        %v6092 = vpop.trf.xlu0
        %v6093 = vpop.trf.xlu0
        %v6094 = vpop.trf.xlu0
        %v6095 = vpop.trf.xlu0
        %v6096 = vpop.trf.xlu0
        %v6097 = vpop.trf.xlu0
        %v6098 = vpop.trf.xlu0
        %6099 = vxpose.xlu0.b32.start [1/16] %v4357, 128
        %6100 = vxpose.xlu0.b32.cont [2/16] %v4362, 128
        %6101 = vxpose.xlu0.b32.cont [3/16] %v4367, 128
        %6102 = vxpose.xlu0.b32.cont [4/16] %v4372, 128
        %6103 = vxpose.xlu0.b32.cont [5/16] %v4377, 128
        %6104 = vxpose.xlu0.b32.cont [6/16] %v4382, 128
        %6105 = vxpose.xlu0.b32.cont [7/16] %v4387, 128
        %6106 = vxpose.xlu0.b32.cont [8/16] %v4392, 128
        %6107 = vxpose.xlu0.b32.cont [9/16] %v4397, 128
        %6108 = vxpose.xlu0.b32.cont [10/16] %v4402, 128
        %6109 = vxpose.xlu0.b32.cont [11/16] %v4407, 128
        %6110 = vxpose.xlu0.b32.cont [12/16] %v4412, 128
        %6111 = vxpose.xlu0.b32.cont [13/16] %v4417, 128
        %6112 = vxpose.xlu0.b32.cont [14/16] %v4422, 128
        %6113 = vxpose.xlu0.b32.cont [15/16] %v4427, 128
        %6114 = vxpose.xlu0.b32.end [16/16] %v4432, 128
        %v6115 = vpop.trf.xlu0
        %v6116 = vpop.trf.xlu0
        %v6117 = vpop.trf.xlu0
        %v6118 = vpop.trf.xlu0
        %v6119 = vpop.trf.xlu0
        %v6120 = vpop.trf.xlu0
        %v6121 = vpop.trf.xlu0
        %v6122 = vpop.trf.xlu0
        %v6123 = vpop.trf.xlu0
        %v6124 = vpop.trf.xlu0
        %v6125 = vpop.trf.xlu0
        %v6126 = vpop.trf.xlu0
        %v6127 = vpop.trf.xlu0
        %v6128 = vpop.trf.xlu0
        %v6129 = vpop.trf.xlu0
        %v6130 = vpop.trf.xlu0
        %6131 = vxpose.xlu0.b32.start [1/16] %v4437, 128
        %6132 = vxpose.xlu0.b32.cont [2/16] %v4442, 128
        %6133 = vxpose.xlu0.b32.cont [3/16] %v4447, 128
        %6134 = vxpose.xlu0.b32.cont [4/16] %v4452, 128
        %6135 = vxpose.xlu0.b32.cont [5/16] %v4457, 128
        %6136 = vxpose.xlu0.b32.cont [6/16] %v4462, 128
        %6137 = vxpose.xlu0.b32.cont [7/16] %v4467, 128
        %6138 = vxpose.xlu0.b32.cont [8/16] %v4472, 128
        %6139 = vxpose.xlu0.b32.cont [9/16] %v4477, 128
        %6140 = vxpose.xlu0.b32.cont [10/16] %v4482, 128
        %6141 = vxpose.xlu0.b32.cont [11/16] %v4487, 128
        %6142 = vxpose.xlu0.b32.cont [12/16] %v4492, 128
        %6143 = vxpose.xlu0.b32.cont [13/16] %v4497, 128
        %6144 = vxpose.xlu0.b32.cont [14/16] %v4502, 128
        %6145 = vxpose.xlu0.b32.cont [15/16] %v4507, 128
        %6146 = vxpose.xlu0.b32.end [16/16] %v4512, 128
        %v6147 = vpop.trf.xlu0
        %v6148 = vpop.trf.xlu0
        %v6149 = vpop.trf.xlu0
        %v6150 = vpop.trf.xlu0
        %v6151 = vpop.trf.xlu0
        %v6152 = vpop.trf.xlu0
        %v6153 = vpop.trf.xlu0
        %v6154 = vpop.trf.xlu0
        %v6155 = vpop.trf.xlu0
        %v6156 = vpop.trf.xlu0
        %v6157 = vpop.trf.xlu0
        %v6158 = vpop.trf.xlu0
        %v6159 = vpop.trf.xlu0
        %v6160 = vpop.trf.xlu0
        %v6161 = vpop.trf.xlu0
        %v6162 = vpop.trf.xlu0
        %6163 = vxpose.xlu0.b32.start [1/16] %v4517, 128
        %6164 = vxpose.xlu0.b32.cont [2/16] %v4522, 128
        %6165 = vxpose.xlu0.b32.cont [3/16] %v4527, 128
        %6166 = vxpose.xlu0.b32.cont [4/16] %v4532, 128
        %6167 = vxpose.xlu0.b32.cont [5/16] %v4537, 128
        %6168 = vxpose.xlu0.b32.cont [6/16] %v4542, 128
        %6169 = vxpose.xlu0.b32.cont [7/16] %v4547, 128
        %6170 = vxpose.xlu0.b32.cont [8/16] %v4552, 128
        %6171 = vxpose.xlu0.b32.cont [9/16] %v4557, 128
        %6172 = vxpose.xlu0.b32.cont [10/16] %v4562, 128
        %6173 = vxpose.xlu0.b32.cont [11/16] %v4567, 128
        %6174 = vxpose.xlu0.b32.cont [12/16] %v4572, 128
        %6175 = vxpose.xlu0.b32.cont [13/16] %v4577, 128
        %6176 = vxpose.xlu0.b32.cont [14/16] %v4582, 128
        %6177 = vxpose.xlu0.b32.cont [15/16] %v4587, 128
        %6178 = vxpose.xlu0.b32.end [16/16] %v4592, 128
        %v6179 = vpop.trf.xlu0
        %v6180 = vpop.trf.xlu0
        %v6181 = vpop.trf.xlu0
        %v6182 = vpop.trf.xlu0
        %v6183 = vpop.trf.xlu0
        %v6184 = vpop.trf.xlu0
        %v6185 = vpop.trf.xlu0
        %v6186 = vpop.trf.xlu0
        %v6187 = vpop.trf.xlu0
        %v6188 = vpop.trf.xlu0
        %v6189 = vpop.trf.xlu0
        %v6190 = vpop.trf.xlu0
        %v6191 = vpop.trf.xlu0
        %v6192 = vpop.trf.xlu0
        %v6193 = vpop.trf.xlu0
        %v6194 = vpop.trf.xlu0
        %6195 = vxpose.xlu0.b32.start [1/16] %v4597, 128
        %6196 = vxpose.xlu0.b32.cont [2/16] %v4602, 128
        %6197 = vxpose.xlu0.b32.cont [3/16] %v4607, 128
        %6198 = vxpose.xlu0.b32.cont [4/16] %v4612, 128
        %6199 = vxpose.xlu0.b32.cont [5/16] %v4617, 128
        %6200 = vxpose.xlu0.b32.cont [6/16] %v4622, 128
        %6201 = vxpose.xlu0.b32.cont [7/16] %v4627, 128
        %6202 = vxpose.xlu0.b32.cont [8/16] %v4632, 128
        %6203 = vxpose.xlu0.b32.cont [9/16] %v4637, 128
        %6204 = vxpose.xlu0.b32.cont [10/16] %v4642, 128
        %6205 = vxpose.xlu0.b32.cont [11/16] %v4647, 128
        %6206 = vxpose.xlu0.b32.cont [12/16] %v4652, 128
        %6207 = vxpose.xlu0.b32.cont [13/16] %v4657, 128
        %6208 = vxpose.xlu0.b32.cont [14/16] %v4662, 128
        %6209 = vxpose.xlu0.b32.cont [15/16] %v4667, 128
        %6210 = vxpose.xlu0.b32.end [16/16] %v4672, 128
        %v6211 = vpop.trf.xlu0
        %v6212 = vpop.trf.xlu0
        %v6213 = vpop.trf.xlu0
        %v6214 = vpop.trf.xlu0
        %v6215 = vpop.trf.xlu0
        %v6216 = vpop.trf.xlu0
        %v6217 = vpop.trf.xlu0
        %v6218 = vpop.trf.xlu0
        %v6219 = vpop.trf.xlu0
        %v6220 = vpop.trf.xlu0
        %v6221 = vpop.trf.xlu0
        %v6222 = vpop.trf.xlu0
        %v6223 = vpop.trf.xlu0
        %v6224 = vpop.trf.xlu0
        %v6225 = vpop.trf.xlu0
        %v6226 = vpop.trf.xlu0
        %6227 = vxpose.xlu0.b32.start [1/16] %v4677, 128
        %6228 = vxpose.xlu0.b32.cont [2/16] %v4682, 128
        %6229 = vxpose.xlu0.b32.cont [3/16] %v4687, 128
        %6230 = vxpose.xlu0.b32.cont [4/16] %v4692, 128
        %6231 = vxpose.xlu0.b32.cont [5/16] %v4697, 128
        %6232 = vxpose.xlu0.b32.cont [6/16] %v4702, 128
        %6233 = vxpose.xlu0.b32.cont [7/16] %v4707, 128
        %6234 = vxpose.xlu0.b32.cont [8/16] %v4712, 128
        %6235 = vxpose.xlu0.b32.cont [9/16] %v4717, 128
        %6236 = vxpose.xlu0.b32.cont [10/16] %v4722, 128
        %6237 = vxpose.xlu0.b32.cont [11/16] %v4727, 128
        %6238 = vxpose.xlu0.b32.cont [12/16] %v4732, 128
        %6239 = vxpose.xlu0.b32.cont [13/16] %v4737, 128
        %6240 = vxpose.xlu0.b32.cont [14/16] %v4742, 128
        %6241 = vxpose.xlu0.b32.cont [15/16] %v4747, 128
        %6242 = vxpose.xlu0.b32.end [16/16] %v4752, 128
        %v6243 = vpop.trf.xlu0
        %v6244 = vpop.trf.xlu0
        %v6245 = vpop.trf.xlu0
        %v6246 = vpop.trf.xlu0
        %v6247 = vpop.trf.xlu0
        %v6248 = vpop.trf.xlu0
        %v6249 = vpop.trf.xlu0
        %v6250 = vpop.trf.xlu0
        %v6251 = vpop.trf.xlu0
        %v6252 = vpop.trf.xlu0
        %v6253 = vpop.trf.xlu0
        %v6254 = vpop.trf.xlu0
        %v6255 = vpop.trf.xlu0
        %v6256 = vpop.trf.xlu0
        %v6257 = vpop.trf.xlu0
        %v6258 = vpop.trf.xlu0
        %6259 = vxpose.xlu0.b32.start [1/16] %v4757, 128
        %6260 = vxpose.xlu0.b32.cont [2/16] %v4762, 128
        %6261 = vxpose.xlu0.b32.cont [3/16] %v4767, 128
        %6262 = vxpose.xlu0.b32.cont [4/16] %v4772, 128
        %6263 = vxpose.xlu0.b32.cont [5/16] %v4777, 128
        %6264 = vxpose.xlu0.b32.cont [6/16] %v4782, 128
        %6265 = vxpose.xlu0.b32.cont [7/16] %v4787, 128
        %6266 = vxpose.xlu0.b32.cont [8/16] %v4792, 128
        %6267 = vxpose.xlu0.b32.cont [9/16] %v4797, 128
        %6268 = vxpose.xlu0.b32.cont [10/16] %v4802, 128
        %6269 = vxpose.xlu0.b32.cont [11/16] %v4807, 128
        %6270 = vxpose.xlu0.b32.cont [12/16] %v4812, 128
        %6271 = vxpose.xlu0.b32.cont [13/16] %v4817, 128
        %6272 = vxpose.xlu0.b32.cont [14/16] %v4822, 128
        %6273 = vxpose.xlu0.b32.cont [15/16] %v4827, 128
        %6274 = vxpose.xlu0.b32.end [16/16] %v4832, 128
        %v6275 = vpop.trf.xlu0
        %v6276 = vpop.trf.xlu0
        %v6277 = vpop.trf.xlu0
        %v6278 = vpop.trf.xlu0
        %v6279 = vpop.trf.xlu0
        %v6280 = vpop.trf.xlu0
        %v6281 = vpop.trf.xlu0
        %v6282 = vpop.trf.xlu0
        %v6283 = vpop.trf.xlu0
        %v6284 = vpop.trf.xlu0
        %v6285 = vpop.trf.xlu0
        %v6286 = vpop.trf.xlu0
        %v6287 = vpop.trf.xlu0
        %v6288 = vpop.trf.xlu0
        %v6289 = vpop.trf.xlu0
        %v6290 = vpop.trf.xlu0
        %6291 = vxpose.xlu0.b32.start [1/16] %v4837, 128
        %6292 = vxpose.xlu0.b32.cont [2/16] %v4842, 128
        %6293 = vxpose.xlu0.b32.cont [3/16] %v4847, 128
        %6294 = vxpose.xlu0.b32.cont [4/16] %v4852, 128
        %6295 = vxpose.xlu0.b32.cont [5/16] %v4857, 128
        %6296 = vxpose.xlu0.b32.cont [6/16] %v4862, 128
        %6297 = vxpose.xlu0.b32.cont [7/16] %v4867, 128
        %6298 = vxpose.xlu0.b32.cont [8/16] %v4872, 128
        %6299 = vxpose.xlu0.b32.cont [9/16] %v4877, 128
        %6300 = vxpose.xlu0.b32.cont [10/16] %v4882, 128
        %6301 = vxpose.xlu0.b32.cont [11/16] %v4887, 128
        %6302 = vxpose.xlu0.b32.cont [12/16] %v4892, 128
        %6303 = vxpose.xlu0.b32.cont [13/16] %v4897, 128
        %6304 = vxpose.xlu0.b32.cont [14/16] %v4902, 128
        %6305 = vxpose.xlu0.b32.cont [15/16] %v4907, 128
        %6306 = vxpose.xlu0.b32.end [16/16] %v4912, 128
        %v6307 = vpop.trf.xlu0
        %v6308 = vpop.trf.xlu0
        %v6309 = vpop.trf.xlu0
        %v6310 = vpop.trf.xlu0
        %v6311 = vpop.trf.xlu0
        %v6312 = vpop.trf.xlu0
        %v6313 = vpop.trf.xlu0
        %v6314 = vpop.trf.xlu0
        %v6315 = vpop.trf.xlu0
        %v6316 = vpop.trf.xlu0
        %v6317 = vpop.trf.xlu0
        %v6318 = vpop.trf.xlu0
        %v6319 = vpop.trf.xlu0
        %v6320 = vpop.trf.xlu0
        %v6321 = vpop.trf.xlu0
        %v6322 = vpop.trf.xlu0
        %6323 = vxpose.xlu0.b32.start [1/16] %v4917, 128
        %6324 = vxpose.xlu0.b32.cont [2/16] %v4922, 128
        %6325 = vxpose.xlu0.b32.cont [3/16] %v4927, 128
        %6326 = vxpose.xlu0.b32.cont [4/16] %v4932, 128
        %6327 = vxpose.xlu0.b32.cont [5/16] %v4937, 128
        %6328 = vxpose.xlu0.b32.cont [6/16] %v4942, 128
        %6329 = vxpose.xlu0.b32.cont [7/16] %v4947, 128
        %6330 = vxpose.xlu0.b32.cont [8/16] %v4952, 128
        %6331 = vxpose.xlu0.b32.cont [9/16] %v4957, 128
        %6332 = vxpose.xlu0.b32.cont [10/16] %v4962, 128
        %6333 = vxpose.xlu0.b32.cont [11/16] %v4967, 128
        %6334 = vxpose.xlu0.b32.cont [12/16] %v4972, 128
        %6335 = vxpose.xlu0.b32.cont [13/16] %v4977, 128
        %6336 = vxpose.xlu0.b32.cont [14/16] %v4982, 128
        %6337 = vxpose.xlu0.b32.cont [15/16] %v4987, 128
        %6338 = vxpose.xlu0.b32.end [16/16] %v4992, 128
        %v6339 = vpop.trf.xlu0
        %v6340 = vpop.trf.xlu0
        %v6341 = vpop.trf.xlu0
        %v6342 = vpop.trf.xlu0
        %v6343 = vpop.trf.xlu0
        %v6344 = vpop.trf.xlu0
        %v6345 = vpop.trf.xlu0
        %v6346 = vpop.trf.xlu0
        %v6347 = vpop.trf.xlu0
        %v6348 = vpop.trf.xlu0
        %v6349 = vpop.trf.xlu0
        %v6350 = vpop.trf.xlu0
        %v6351 = vpop.trf.xlu0
        %v6352 = vpop.trf.xlu0
        %v6353 = vpop.trf.xlu0
        %v6354 = vpop.trf.xlu0
        %6355 = vxpose.xlu0.b32.start [1/16] %v4997, 128
        %6356 = vxpose.xlu0.b32.cont [2/16] %v5002, 128
        %6357 = vxpose.xlu0.b32.cont [3/16] %v5007, 128
        %6358 = vxpose.xlu0.b32.cont [4/16] %v5012, 128
        %6359 = vxpose.xlu0.b32.cont [5/16] %v5017, 128
        %6360 = vxpose.xlu0.b32.cont [6/16] %v5022, 128
        %6361 = vxpose.xlu0.b32.cont [7/16] %v5027, 128
        %6362 = vxpose.xlu0.b32.cont [8/16] %v5032, 128
        %6363 = vxpose.xlu0.b32.cont [9/16] %v5037, 128
        %6364 = vxpose.xlu0.b32.cont [10/16] %v5042, 128
        %6365 = vxpose.xlu0.b32.cont [11/16] %v5047, 128
        %6366 = vxpose.xlu0.b32.cont [12/16] %v5052, 128
        %6367 = vxpose.xlu0.b32.cont [13/16] %v5057, 128
        %6368 = vxpose.xlu0.b32.cont [14/16] %v5062, 128
        %6369 = vxpose.xlu0.b32.cont [15/16] %v5067, 128
        %6370 = vxpose.xlu0.b32.end [16/16] %v5072, 128
        %v6371 = vpop.trf.xlu0
        %v6372 = vpop.trf.xlu0
        %v6373 = vpop.trf.xlu0
        %v6374 = vpop.trf.xlu0
        %v6375 = vpop.trf.xlu0
        %v6376 = vpop.trf.xlu0
        %v6377 = vpop.trf.xlu0
        %v6378 = vpop.trf.xlu0
        %v6379 = vpop.trf.xlu0
        %v6380 = vpop.trf.xlu0
        %v6381 = vpop.trf.xlu0
        %v6382 = vpop.trf.xlu0
        %v6383 = vpop.trf.xlu0
        %v6384 = vpop.trf.xlu0
        %v6385 = vpop.trf.xlu0
        %v6386 = vpop.trf.xlu0
        %6387 = vxpose.xlu0.b32.start [1/16] %v5077, 128
        %6388 = vxpose.xlu0.b32.cont [2/16] %v5082, 128
        %6389 = vxpose.xlu0.b32.cont [3/16] %v5087, 128
        %6390 = vxpose.xlu0.b32.cont [4/16] %v5092, 128
        %6391 = vxpose.xlu0.b32.cont [5/16] %v5097, 128
        %6392 = vxpose.xlu0.b32.cont [6/16] %v5102, 128
        %6393 = vxpose.xlu0.b32.cont [7/16] %v5107, 128
        %6394 = vxpose.xlu0.b32.cont [8/16] %v5112, 128
        %6395 = vxpose.xlu0.b32.cont [9/16] %v5117, 128
        %6396 = vxpose.xlu0.b32.cont [10/16] %v5122, 128
        %6397 = vxpose.xlu0.b32.cont [11/16] %v5127, 128
        %6398 = vxpose.xlu0.b32.cont [12/16] %v5132, 128
        %6399 = vxpose.xlu0.b32.cont [13/16] %v5137, 128
        %6400 = vxpose.xlu0.b32.cont [14/16] %v5142, 128
        %6401 = vxpose.xlu0.b32.cont [15/16] %v5147, 128
        %6402 = vxpose.xlu0.b32.end [16/16] %v5152, 128
        %v6403 = vpop.trf.xlu0
        %v6404 = vpop.trf.xlu0
        %v6405 = vpop.trf.xlu0
        %v6406 = vpop.trf.xlu0
        %v6407 = vpop.trf.xlu0
        %v6408 = vpop.trf.xlu0
        %v6409 = vpop.trf.xlu0
        %v6410 = vpop.trf.xlu0
        %v6411 = vpop.trf.xlu0
        %v6412 = vpop.trf.xlu0
        %v6413 = vpop.trf.xlu0
        %v6414 = vpop.trf.xlu0
        %v6415 = vpop.trf.xlu0
        %v6416 = vpop.trf.xlu0
        %v6417 = vpop.trf.xlu0
        %v6418 = vpop.trf.xlu0
        %6419 = vxpose.xlu0.b32.start [1/16] %v5157, 128
        %6420 = vxpose.xlu0.b32.cont [2/16] %v5162, 128
        %6421 = vxpose.xlu0.b32.cont [3/16] %v5167, 128
        %6422 = vxpose.xlu0.b32.cont [4/16] %v5172, 128
        %6423 = vxpose.xlu0.b32.cont [5/16] %v5177, 128
        %6424 = vxpose.xlu0.b32.cont [6/16] %v5182, 128
        %6425 = vxpose.xlu0.b32.cont [7/16] %v5187, 128
        %6426 = vxpose.xlu0.b32.cont [8/16] %v5192, 128
        %6427 = vxpose.xlu0.b32.cont [9/16] %v5197, 128
        %6428 = vxpose.xlu0.b32.cont [10/16] %v5202, 128
        %6429 = vxpose.xlu0.b32.cont [11/16] %v5207, 128
        %6430 = vxpose.xlu0.b32.cont [12/16] %v5212, 128
        %6431 = vxpose.xlu0.b32.cont [13/16] %v5217, 128
        %6432 = vxpose.xlu0.b32.cont [14/16] %v5222, 128
        %6433 = vxpose.xlu0.b32.cont [15/16] %v5227, 128
        %6434 = vxpose.xlu0.b32.end [16/16] %v5232, 128
        %v6435 = vpop.trf.xlu0
        %v6436 = vpop.trf.xlu0
        %v6437 = vpop.trf.xlu0
        %v6438 = vpop.trf.xlu0
        %v6439 = vpop.trf.xlu0
        %v6440 = vpop.trf.xlu0
        %v6441 = vpop.trf.xlu0
        %v6442 = vpop.trf.xlu0
        %v6443 = vpop.trf.xlu0
        %v6444 = vpop.trf.xlu0
        %v6445 = vpop.trf.xlu0
        %v6446 = vpop.trf.xlu0
        %v6447 = vpop.trf.xlu0
        %v6448 = vpop.trf.xlu0
        %v6449 = vpop.trf.xlu0
        %v6450 = vpop.trf.xlu0
        %6451 = vxpose.xlu0.b32.start [1/16] %v5237, 128
        %6452 = vxpose.xlu0.b32.cont [2/16] %v5242, 128
        %6453 = vxpose.xlu0.b32.cont [3/16] %v5247, 128
        %6454 = vxpose.xlu0.b32.cont [4/16] %v5252, 128
        %6455 = vxpose.xlu0.b32.cont [5/16] %v5257, 128
        %6456 = vxpose.xlu0.b32.cont [6/16] %v5262, 128
        %6457 = vxpose.xlu0.b32.cont [7/16] %v5267, 128
        %6458 = vxpose.xlu0.b32.cont [8/16] %v5272, 128
        %6459 = vxpose.xlu0.b32.cont [9/16] %v5277, 128
        %6460 = vxpose.xlu0.b32.cont [10/16] %v5282, 128
        %6461 = vxpose.xlu0.b32.cont [11/16] %v5287, 128
        %6462 = vxpose.xlu0.b32.cont [12/16] %v5292, 128
        %6463 = vxpose.xlu0.b32.cont [13/16] %v5297, 128
        %6464 = vxpose.xlu0.b32.cont [14/16] %v5302, 128
        %6465 = vxpose.xlu0.b32.cont [15/16] %v5307, 128
        %6466 = vxpose.xlu0.b32.end [16/16] %v5312, 128
        %v6467 = vpop.trf.xlu0
        %v6468 = vpop.trf.xlu0
        %v6469 = vpop.trf.xlu0
        %v6470 = vpop.trf.xlu0
        %v6471 = vpop.trf.xlu0
        %v6472 = vpop.trf.xlu0
        %v6473 = vpop.trf.xlu0
        %v6474 = vpop.trf.xlu0
        %v6475 = vpop.trf.xlu0
        %v6476 = vpop.trf.xlu0
        %v6477 = vpop.trf.xlu0
        %v6478 = vpop.trf.xlu0
        %v6479 = vpop.trf.xlu0
        %v6480 = vpop.trf.xlu0
        %v6481 = vpop.trf.xlu0
        %v6482 = vpop.trf.xlu0
        %6483 = vxpose.xlu0.b32.start [1/16] %v5317, 128
        %6484 = vxpose.xlu0.b32.cont [2/16] %v5322, 128
        %6485 = vxpose.xlu0.b32.cont [3/16] %v5327, 128
        %6486 = vxpose.xlu0.b32.cont [4/16] %v5332, 128
        %6487 = vxpose.xlu0.b32.cont [5/16] %v5337, 128
        %6488 = vxpose.xlu0.b32.cont [6/16] %v5342, 128
        %6489 = vxpose.xlu0.b32.cont [7/16] %v5347, 128
        %6490 = vxpose.xlu0.b32.cont [8/16] %v5352, 128
        %6491 = vxpose.xlu0.b32.cont [9/16] %v5357, 128
        %6492 = vxpose.xlu0.b32.cont [10/16] %v5362, 128
        %6493 = vxpose.xlu0.b32.cont [11/16] %v5367, 128
        %6494 = vxpose.xlu0.b32.cont [12/16] %v5372, 128
        %6495 = vxpose.xlu0.b32.cont [13/16] %v5377, 128
        %6496 = vxpose.xlu0.b32.cont [14/16] %v5382, 128
        %6497 = vxpose.xlu0.b32.cont [15/16] %v5387, 128
        %6498 = vxpose.xlu0.b32.end [16/16] %v5392, 128
        %v6499 = vpop.trf.xlu0
        %v6500 = vpop.trf.xlu0
        %v6501 = vpop.trf.xlu0
        %v6502 = vpop.trf.xlu0
        %v6503 = vpop.trf.xlu0
        %v6504 = vpop.trf.xlu0
        %v6505 = vpop.trf.xlu0
        %v6506 = vpop.trf.xlu0
        %v6507 = vpop.trf.xlu0
        %v6508 = vpop.trf.xlu0
        %v6509 = vpop.trf.xlu0
        %v6510 = vpop.trf.xlu0
        %v6511 = vpop.trf.xlu0
        %v6512 = vpop.trf.xlu0
        %v6513 = vpop.trf.xlu0
        %v6514 = vpop.trf.xlu0
        %6515 = vxpose.xlu0.b32.start [1/16] %v5397, 128
        %6516 = vxpose.xlu0.b32.cont [2/16] %v5402, 128
        %6517 = vxpose.xlu0.b32.cont [3/16] %v5407, 128
        %6518 = vxpose.xlu0.b32.cont [4/16] %v5412, 128
        %6519 = vxpose.xlu0.b32.cont [5/16] %v5417, 128
        %6520 = vxpose.xlu0.b32.cont [6/16] %v5422, 128
        %6521 = vxpose.xlu0.b32.cont [7/16] %v5427, 128
        %6522 = vxpose.xlu0.b32.cont [8/16] %v5432, 128
        %6523 = vxpose.xlu0.b32.cont [9/16] %v5437, 128
        %6524 = vxpose.xlu0.b32.cont [10/16] %v5442, 128
        %6525 = vxpose.xlu0.b32.cont [11/16] %v5447, 128
        %6526 = vxpose.xlu0.b32.cont [12/16] %v5452, 128
        %6527 = vxpose.xlu0.b32.cont [13/16] %v5457, 128
        %6528 = vxpose.xlu0.b32.cont [14/16] %v5462, 128
        %6529 = vxpose.xlu0.b32.cont [15/16] %v5467, 128
        %6530 = vxpose.xlu0.b32.end [16/16] %v5472, 128
        %v6531 = vpop.trf.xlu0
        %v6532 = vpop.trf.xlu0
        %v6533 = vpop.trf.xlu0
        %v6534 = vpop.trf.xlu0
        %v6535 = vpop.trf.xlu0
        %v6536 = vpop.trf.xlu0
        %v6537 = vpop.trf.xlu0
        %v6538 = vpop.trf.xlu0
        %v6539 = vpop.trf.xlu0
        %v6540 = vpop.trf.xlu0
        %v6541 = vpop.trf.xlu0
        %v6542 = vpop.trf.xlu0
        %v6543 = vpop.trf.xlu0
        %v6544 = vpop.trf.xlu0
        %v6545 = vpop.trf.xlu0
        %v6546 = vpop.trf.xlu0
        %6547 = vxpose.xlu0.b32.start [1/16] %v5477, 128
        %6548 = vxpose.xlu0.b32.cont [2/16] %v5482, 128
        %6549 = vxpose.xlu0.b32.cont [3/16] %v5487, 128
        %6550 = vxpose.xlu0.b32.cont [4/16] %v5492, 128
        %6551 = vxpose.xlu0.b32.cont [5/16] %v5497, 128
        %6552 = vxpose.xlu0.b32.cont [6/16] %v5502, 128
        %6553 = vxpose.xlu0.b32.cont [7/16] %v5507, 128
        %6554 = vxpose.xlu0.b32.cont [8/16] %v5512, 128
        %6555 = vxpose.xlu0.b32.cont [9/16] %v5517, 128
        %6556 = vxpose.xlu0.b32.cont [10/16] %v5522, 128
        %6557 = vxpose.xlu0.b32.cont [11/16] %v5527, 128
        %6558 = vxpose.xlu0.b32.cont [12/16] %v5532, 128
        %6559 = vxpose.xlu0.b32.cont [13/16] %v5537, 128
        %6560 = vxpose.xlu0.b32.cont [14/16] %v5542, 128
        %6561 = vxpose.xlu0.b32.cont [15/16] %v5547, 128
        %6562 = vxpose.xlu0.b32.end [16/16] %v5552, 128
        %v6563 = vpop.trf.xlu0
        %v6564 = vpop.trf.xlu0
        %v6565 = vpop.trf.xlu0
        %v6566 = vpop.trf.xlu0
        %v6567 = vpop.trf.xlu0
        %v6568 = vpop.trf.xlu0
        %v6569 = vpop.trf.xlu0
        %v6570 = vpop.trf.xlu0
        %v6571 = vpop.trf.xlu0
        %v6572 = vpop.trf.xlu0
        %v6573 = vpop.trf.xlu0
        %v6574 = vpop.trf.xlu0
        %v6575 = vpop.trf.xlu0
        %v6576 = vpop.trf.xlu0
        %v6577 = vpop.trf.xlu0
        %v6578 = vpop.trf.xlu0
        %v6579 = vld [vmem:[%s338] sm:$0xff]
        %vm6580 = vnez %v6579
        %v6581 = vsel %vm6580, 16843009, 0
        %v6582 = vcombine.high %v6581, %v6581
        %v6584 = vunpack.c.l.s4 1966171168
        %v6585 = vunpack.c.0.s8 %v6584
        %v6586 = vlaneseq
        %v6587 = vshrl.u32 %v6586, 7
        %v6588 = vsub.s32 %v6585, %v6587
        %v6589 = vrot.slane %v6581, %v6588
        %v6591 = vunpack.c.l.s4 1966171168
        %v6592 = vunpack.c.0.s8 %v6591
        %v6593 = vlaneseq
        %v6594 = vshrl.u32 %v6593, 7
        %v6595 = vsub.s32 %v6592, %v6594
        %v6596 = vrot.slane %v6582, %v6595
        %v6597 = vcombine.high %v6589, %v6589
        %v6598 = vcombine.high %v6596, %v6596
        %v6600 = vunpack.c.l.s4 1966171168
        %v6601 = vunpack.c.0.s8 %v6600
        %v6602 = vlaneseq
        %v6603 = vshrl.u32 %v6602, 7
        %v6604 = vsub.s32 %v6601, %v6603
        %v6605 = vrot.slane %v6589, %v6604
        %v6607 = vunpack.c.l.s4 1966171168
        %v6608 = vunpack.c.0.s8 %v6607
        %v6609 = vlaneseq
        %v6610 = vshrl.u32 %v6609, 7
        %v6611 = vsub.s32 %v6608, %v6610
        %v6612 = vrot.slane %v6596, %v6611
        %v6614 = vunpack.c.l.s4 1966171168
        %v6615 = vunpack.c.0.s8 %v6614
        %v6616 = vlaneseq
        %v6617 = vshrl.u32 %v6616, 7
        %v6618 = vsub.s32 %v6615, %v6617
        %v6619 = vrot.slane %v6597, %v6618
        %v6621 = vunpack.c.l.s4 1966171168
        %v6622 = vunpack.c.0.s8 %v6621
        %v6623 = vlaneseq
        %v6624 = vshrl.u32 %v6623, 7
        %v6625 = vsub.s32 %v6622, %v6624
        %v6626 = vrot.slane %v6598, %v6625
        %v6627 = vcombine.high %v6605, %v6605
        %v6628 = vcombine.high %v6612, %v6612
        %v6629 = vcombine.high %v6619, %v6619
        %v6630 = vcombine.high %v6626, %v6626
        %v6632 = vshrl.u32 %v6605, 0
        %v6634 = vshrl.u32 %v6605, 8
        %v6636 = vshrl.u32 %v6605, 16
        %v6638 = vshrl.u32 %v6605, 24
        %v6641 = vshrl.u32 %v6619, 0
        %v6643 = vshrl.u32 %v6619, 8
        %v6645 = vshrl.u32 %v6619, 16
        %v6647 = vshrl.u32 %v6619, 24
        %v6650 = vshrl.u32 %v6627, 0
        %v6652 = vshrl.u32 %v6627, 8
        %v6654 = vshrl.u32 %v6627, 16
        %v6656 = vshrl.u32 %v6627, 24
        %v6659 = vshrl.u32 %v6629, 0
        %v6661 = vshrl.u32 %v6629, 8
        %v6663 = vshrl.u32 %v6629, 16
        %v6665 = vshrl.u32 %v6629, 24
        %v6668 = vshrl.u32 %v6612, 0
        %v6670 = vshrl.u32 %v6612, 8
        %v6672 = vshrl.u32 %v6612, 16
        %v6674 = vshrl.u32 %v6612, 24
        %v6677 = vshrl.u32 %v6626, 0
        %v6679 = vshrl.u32 %v6626, 8
        %v6681 = vshrl.u32 %v6626, 16
        %v6683 = vshrl.u32 %v6626, 24
        %v6686 = vshrl.u32 %v6628, 0
        %v6688 = vshrl.u32 %v6628, 8
        %v6690 = vshrl.u32 %v6628, 16
        %v6692 = vshrl.u32 %v6628, 24
        %v6695 = vshrl.u32 %v6630, 0
        %v6697 = vshrl.u32 %v6630, 8
        %v6699 = vshrl.u32 %v6630, 16
        %v6701 = vshrl.u32 %v6630, 24
        %v6703 = vpack.c.b16 %v6632, %v6632
        %v6704 = vpack.c.b8 %v6703, %v6703
        %v6705 = vpack.c.b16 %v6634, %v6634
        %v6706 = vpack.c.b8 %v6705, %v6705
        %v6707 = vpack.c.b16 %v6636, %v6636
        %v6708 = vpack.c.b8 %v6707, %v6707
        %v6709 = vpack.c.b16 %v6638, %v6638
        %v6710 = vpack.c.b8 %v6709, %v6709
        %v6711 = vpack.c.b16 %v6641, %v6641
        %v6712 = vpack.c.b8 %v6711, %v6711
        %v6713 = vpack.c.b16 %v6643, %v6643
        %v6714 = vpack.c.b8 %v6713, %v6713
        %v6715 = vpack.c.b16 %v6645, %v6645
        %v6716 = vpack.c.b8 %v6715, %v6715
        %v6717 = vpack.c.b16 %v6647, %v6647
        %v6718 = vpack.c.b8 %v6717, %v6717
        %v6719 = vpack.c.b16 %v6650, %v6650
        %v6720 = vpack.c.b8 %v6719, %v6719
        %v6721 = vpack.c.b16 %v6652, %v6652
        %v6722 = vpack.c.b8 %v6721, %v6721
        %v6723 = vpack.c.b16 %v6654, %v6654
        %v6724 = vpack.c.b8 %v6723, %v6723
        %v6725 = vpack.c.b16 %v6656, %v6656
        %v6726 = vpack.c.b8 %v6725, %v6725
        %v6727 = vpack.c.b16 %v6659, %v6659
        %v6728 = vpack.c.b8 %v6727, %v6727
        %v6729 = vpack.c.b16 %v6661, %v6661
        %v6730 = vpack.c.b8 %v6729, %v6729
        %v6731 = vpack.c.b16 %v6663, %v6663
        %v6732 = vpack.c.b8 %v6731, %v6731
        %v6733 = vpack.c.b16 %v6665, %v6665
        %v6734 = vpack.c.b8 %v6733, %v6733
        %v6735 = vpack.c.b16 %v6668, %v6668
        %v6736 = vpack.c.b8 %v6735, %v6735
        %v6737 = vpack.c.b16 %v6670, %v6670
        %v6738 = vpack.c.b8 %v6737, %v6737
        %v6739 = vpack.c.b16 %v6672, %v6672
        %v6740 = vpack.c.b8 %v6739, %v6739
        %v6741 = vpack.c.b16 %v6674, %v6674
        %v6742 = vpack.c.b8 %v6741, %v6741
        %v6743 = vpack.c.b16 %v6677, %v6677
        %v6744 = vpack.c.b8 %v6743, %v6743
        %v6745 = vpack.c.b16 %v6679, %v6679
        %v6746 = vpack.c.b8 %v6745, %v6745
        %v6747 = vpack.c.b16 %v6681, %v6681
        %v6748 = vpack.c.b8 %v6747, %v6747
        %v6749 = vpack.c.b16 %v6683, %v6683
        %v6750 = vpack.c.b8 %v6749, %v6749
        %v6751 = vpack.c.b16 %v6686, %v6686
        %v6752 = vpack.c.b8 %v6751, %v6751
        %v6753 = vpack.c.b16 %v6688, %v6688
        %v6754 = vpack.c.b8 %v6753, %v6753
        %v6755 = vpack.c.b16 %v6690, %v6690
        %v6756 = vpack.c.b8 %v6755, %v6755
        %v6757 = vpack.c.b16 %v6692, %v6692
        %v6758 = vpack.c.b8 %v6757, %v6757
        %v6759 = vpack.c.b16 %v6695, %v6695
        %v6760 = vpack.c.b8 %v6759, %v6759
        %v6761 = vpack.c.b16 %v6697, %v6697
        %v6762 = vpack.c.b8 %v6761, %v6761
        %v6763 = vpack.c.b16 %v6699, %v6699
        %v6764 = vpack.c.b8 %v6763, %v6763
        %v6765 = vpack.c.b16 %v6701, %v6701
        %v6766 = vpack.c.b8 %v6765, %v6765
        %vm6767 = vnez %v6704
        %vm6768 = vnez %v6706
        %vm6769 = vnez %v6708
        %vm6770 = vnez %v6710
        %vm6771 = vnez %v6712
        %vm6772 = vnez %v6714
        %vm6773 = vnez %v6716
        %vm6774 = vnez %v6718
        %vm6775 = vnez %v6720
        %vm6776 = vnez %v6722
        %vm6777 = vnez %v6724
        %vm6778 = vnez %v6726
        %vm6779 = vnez %v6728
        %vm6780 = vnez %v6730
        %vm6781 = vnez %v6732
        %vm6782 = vnez %v6734
        %vm6783 = vnez %v6736
        %vm6784 = vnez %v6738
        %vm6785 = vnez %v6740
        %vm6786 = vnez %v6742
        %vm6787 = vnez %v6744
        %vm6788 = vnez %v6746
        %vm6789 = vnez %v6748
        %vm6790 = vnez %v6750
        %vm6791 = vnez %v6752
        %vm6792 = vnez %v6754
        %vm6793 = vnez %v6756
        %vm6794 = vnez %v6758
        %vm6795 = vnez %v6760
        %vm6796 = vnez %v6762
        %vm6797 = vnez %v6764
        %vm6798 = vnez %v6766
        %v6799 = vsel %vm6767, 16843009, 0
        %v6800 = vsel %vm6768, 16843009, 0
        %v6801 = vsel %vm6769, 16843009, 0
        %v6802 = vsel %vm6770, 16843009, 0
        %v6803 = vsel %vm6771, 16843009, 0
        %v6804 = vsel %vm6772, 16843009, 0
        %v6805 = vsel %vm6773, 16843009, 0
        %v6806 = vsel %vm6774, 16843009, 0
        %v6807 = vsel %vm6775, 16843009, 0
        %v6808 = vsel %vm6776, 16843009, 0
        %v6809 = vsel %vm6777, 16843009, 0
        %v6810 = vsel %vm6778, 16843009, 0
        %v6811 = vsel %vm6779, 16843009, 0
        %v6812 = vsel %vm6780, 16843009, 0
        %v6813 = vsel %vm6781, 16843009, 0
        %v6814 = vsel %vm6782, 16843009, 0
        %v6815 = vsel %vm6783, 16843009, 0
        %v6816 = vsel %vm6784, 16843009, 0
        %v6817 = vsel %vm6785, 16843009, 0
        %v6818 = vsel %vm6786, 16843009, 0
        %v6819 = vsel %vm6787, 16843009, 0
        %v6820 = vsel %vm6788, 16843009, 0
        %v6821 = vsel %vm6789, 16843009, 0
        %v6822 = vsel %vm6790, 16843009, 0
        %v6823 = vsel %vm6791, 16843009, 0
        %v6824 = vsel %vm6792, 16843009, 0
        %v6825 = vsel %vm6793, 16843009, 0
        %v6826 = vsel %vm6794, 16843009, 0
        %v6827 = vsel %vm6795, 16843009, 0
        %v6828 = vsel %vm6796, 16843009, 0
        %v6829 = vsel %vm6797, 16843009, 0
        %v6830 = vsel %vm6798, 16843009, 0
        %v6831 = vunpack.c.0.s8 %v6799
        %v6832 = vunpack.c.0.s8 %v6800
        %v6833 = vunpack.c.0.s8 %v6801
        %v6834 = vunpack.c.0.s8 %v6802
        %v6835 = vunpack.c.0.s8 %v6803
        %v6836 = vunpack.c.0.s8 %v6804
        %v6837 = vunpack.c.0.s8 %v6805
        %v6838 = vunpack.c.0.s8 %v6806
        %v6839 = vunpack.c.0.s8 %v6807
        %v6840 = vunpack.c.0.s8 %v6808
        %v6841 = vunpack.c.0.s8 %v6809
        %v6842 = vunpack.c.0.s8 %v6810
        %v6843 = vunpack.c.0.s8 %v6811
        %v6844 = vunpack.c.0.s8 %v6812
        %v6845 = vunpack.c.0.s8 %v6813
        %v6846 = vunpack.c.0.s8 %v6814
        %v6847 = vunpack.c.0.s8 %v6815
        %v6848 = vunpack.c.0.s8 %v6816
        %v6849 = vunpack.c.0.s8 %v6817
        %v6850 = vunpack.c.0.s8 %v6818
        %v6851 = vunpack.c.0.s8 %v6819
        %v6852 = vunpack.c.0.s8 %v6820
        %v6853 = vunpack.c.0.s8 %v6821
        %v6854 = vunpack.c.0.s8 %v6822
        %v6855 = vunpack.c.0.s8 %v6823
        %v6856 = vunpack.c.0.s8 %v6824
        %v6857 = vunpack.c.0.s8 %v6825
        %v6858 = vunpack.c.0.s8 %v6826
        %v6859 = vunpack.c.0.s8 %v6827
        %v6860 = vunpack.c.0.s8 %v6828
        %v6861 = vunpack.c.0.s8 %v6829
        %v6862 = vunpack.c.0.s8 %v6830
        %v6863 = vpack.i.b16 %v6831, %v6831
        %v6864 = vpack.i.b8 %v6863, %v6863
        %v6865 = vpack.i.b16 %v6832, %v6832
        %v6866 = vpack.i.b8 %v6865, %v6865
        %v6867 = vpack.i.b16 %v6833, %v6833
        %v6868 = vpack.i.b8 %v6867, %v6867
        %v6869 = vpack.i.b16 %v6834, %v6834
        %v6870 = vpack.i.b8 %v6869, %v6869
        %v6871 = vpack.i.b16 %v6835, %v6835
        %v6872 = vpack.i.b8 %v6871, %v6871
        %v6873 = vpack.i.b16 %v6836, %v6836
        %v6874 = vpack.i.b8 %v6873, %v6873
        %v6875 = vpack.i.b16 %v6837, %v6837
        %v6876 = vpack.i.b8 %v6875, %v6875
        %v6877 = vpack.i.b16 %v6838, %v6838
        %v6878 = vpack.i.b8 %v6877, %v6877
        %v6879 = vpack.i.b16 %v6839, %v6839
        %v6880 = vpack.i.b8 %v6879, %v6879
        %v6881 = vpack.i.b16 %v6840, %v6840
        %v6882 = vpack.i.b8 %v6881, %v6881
        %v6883 = vpack.i.b16 %v6841, %v6841
        %v6884 = vpack.i.b8 %v6883, %v6883
        %v6885 = vpack.i.b16 %v6842, %v6842
        %v6886 = vpack.i.b8 %v6885, %v6885
        %v6887 = vpack.i.b16 %v6843, %v6843
        %v6888 = vpack.i.b8 %v6887, %v6887
        %v6889 = vpack.i.b16 %v6844, %v6844
        %v6890 = vpack.i.b8 %v6889, %v6889
        %v6891 = vpack.i.b16 %v6845, %v6845
        %v6892 = vpack.i.b8 %v6891, %v6891
        %v6893 = vpack.i.b16 %v6846, %v6846
        %v6894 = vpack.i.b8 %v6893, %v6893
        %v6895 = vpack.i.b16 %v6847, %v6847
        %v6896 = vpack.i.b8 %v6895, %v6895
        %v6897 = vpack.i.b16 %v6848, %v6848
        %v6898 = vpack.i.b8 %v6897, %v6897
        %v6899 = vpack.i.b16 %v6849, %v6849
        %v6900 = vpack.i.b8 %v6899, %v6899
        %v6901 = vpack.i.b16 %v6850, %v6850
        %v6902 = vpack.i.b8 %v6901, %v6901
        %v6903 = vpack.i.b16 %v6851, %v6851
        %v6904 = vpack.i.b8 %v6903, %v6903
        %v6905 = vpack.i.b16 %v6852, %v6852
        %v6906 = vpack.i.b8 %v6905, %v6905
        %v6907 = vpack.i.b16 %v6853, %v6853
        %v6908 = vpack.i.b8 %v6907, %v6907
        %v6909 = vpack.i.b16 %v6854, %v6854
        %v6910 = vpack.i.b8 %v6909, %v6909
        %v6911 = vpack.i.b16 %v6855, %v6855
        %v6912 = vpack.i.b8 %v6911, %v6911
        %v6913 = vpack.i.b16 %v6856, %v6856
        %v6914 = vpack.i.b8 %v6913, %v6913
        %v6915 = vpack.i.b16 %v6857, %v6857
        %v6916 = vpack.i.b8 %v6915, %v6915
        %v6917 = vpack.i.b16 %v6858, %v6858
        %v6918 = vpack.i.b8 %v6917, %v6917
        %v6919 = vpack.i.b16 %v6859, %v6859
        %v6920 = vpack.i.b8 %v6919, %v6919
        %v6921 = vpack.i.b16 %v6860, %v6860
        %v6922 = vpack.i.b8 %v6921, %v6921
        %v6923 = vpack.i.b16 %v6861, %v6861
        %v6924 = vpack.i.b8 %v6923, %v6923
        %v6925 = vpack.i.b16 %v6862, %v6862
        %v6926 = vpack.i.b8 %v6925, %v6925
        %vm6927 = vnez %v6864
        %vm6928 = vnez %v6866
        %vm6929 = vnez %v6868
        %vm6930 = vnez %v6870
        %vm6931 = vnez %v6872
        %vm6932 = vnez %v6874
        %vm6933 = vnez %v6876
        %vm6934 = vnez %v6878
        %vm6935 = vnez %v6880
        %vm6936 = vnez %v6882
        %vm6937 = vnez %v6884
        %vm6938 = vnez %v6886
        %vm6939 = vnez %v6888
        %vm6940 = vnez %v6890
        %vm6941 = vnez %v6892
        %vm6942 = vnez %v6894
        %vm6943 = vnez %v6896
        %vm6944 = vnez %v6898
        %vm6945 = vnez %v6900
        %vm6946 = vnez %v6902
        %vm6947 = vnez %v6904
        %vm6948 = vnez %v6906
        %vm6949 = vnez %v6908
        %vm6950 = vnez %v6910
        %vm6951 = vnez %v6912
        %vm6952 = vnez %v6914
        %vm6953 = vnez %v6916
        %vm6954 = vnez %v6918
        %vm6955 = vnez %v6920
        %vm6956 = vnez %v6922
        %vm6957 = vnez %v6924
        %vm6958 = vnez %v6926
        %v6959 = vsel %vm6927, 16843009, 0
        %v6960 = vsel %vm6928, 16843009, 0
        %v6961 = vsel %vm6929, 16843009, 0
        %v6962 = vsel %vm6930, 16843009, 0
        %v6963 = vsel %vm6931, 16843009, 0
        %v6964 = vsel %vm6932, 16843009, 0
        %v6965 = vsel %vm6933, 16843009, 0
        %v6966 = vsel %vm6934, 16843009, 0
        %v6967 = vsel %vm6935, 16843009, 0
        %v6968 = vsel %vm6936, 16843009, 0
        %v6969 = vsel %vm6937, 16843009, 0
        %v6970 = vsel %vm6938, 16843009, 0
        %v6971 = vsel %vm6939, 16843009, 0
        %v6972 = vsel %vm6940, 16843009, 0
        %v6973 = vsel %vm6941, 16843009, 0
        %v6974 = vsel %vm6942, 16843009, 0
        %v6975 = vsel %vm6943, 16843009, 0
        %v6976 = vsel %vm6944, 16843009, 0
        %v6977 = vsel %vm6945, 16843009, 0
        %v6978 = vsel %vm6946, 16843009, 0
        %v6979 = vsel %vm6947, 16843009, 0
        %v6980 = vsel %vm6948, 16843009, 0
        %v6981 = vsel %vm6949, 16843009, 0
        %v6982 = vsel %vm6950, 16843009, 0
        %v6983 = vsel %vm6951, 16843009, 0
        %v6984 = vsel %vm6952, 16843009, 0
        %v6985 = vsel %vm6953, 16843009, 0
        %v6986 = vsel %vm6954, 16843009, 0
        %v6987 = vsel %vm6955, 16843009, 0
        %v6988 = vsel %vm6956, 16843009, 0
        %v6989 = vsel %vm6957, 16843009, 0
        %v6990 = vsel %vm6958, 16843009, 0
        %v6991 = vunpack.c.0.s8 %v6959
        %v6992 = vunpack.c.0.s8 %v6960
        %v6993 = vunpack.c.0.s8 %v6961
        %v6994 = vunpack.c.0.s8 %v6962
        %v6995 = vunpack.c.0.s8 %v6963
        %v6996 = vunpack.c.0.s8 %v6964
        %v6997 = vunpack.c.0.s8 %v6965
        %v6998 = vunpack.c.0.s8 %v6966
        %v6999 = vunpack.c.0.s8 %v6967
        %v7000 = vunpack.c.0.s8 %v6968
        %v7001 = vunpack.c.0.s8 %v6969
        %v7002 = vunpack.c.0.s8 %v6970
        %v7003 = vunpack.c.0.s8 %v6971
        %v7004 = vunpack.c.0.s8 %v6972
        %v7005 = vunpack.c.0.s8 %v6973
        %v7006 = vunpack.c.0.s8 %v6974
        %v7007 = vunpack.c.0.s8 %v6975
        %v7008 = vunpack.c.0.s8 %v6976
        %v7009 = vunpack.c.0.s8 %v6977
        %v7010 = vunpack.c.0.s8 %v6978
        %v7011 = vunpack.c.0.s8 %v6979
        %v7012 = vunpack.c.0.s8 %v6980
        %v7013 = vunpack.c.0.s8 %v6981
        %v7014 = vunpack.c.0.s8 %v6982
        %v7015 = vunpack.c.0.s8 %v6983
        %v7016 = vunpack.c.0.s8 %v6984
        %v7017 = vunpack.c.0.s8 %v6985
        %v7018 = vunpack.c.0.s8 %v6986
        %v7019 = vunpack.c.0.s8 %v6987
        %v7020 = vunpack.c.0.s8 %v6988
        %v7021 = vunpack.c.0.s8 %v6989
        %v7022 = vunpack.c.0.s8 %v6990
        %vm7023 = vcmp.ne.s32.totalorder %v6991, 0
        %vm7024 = vcmp.ne.s32.totalorder %v6992, 0
        %vm7025 = vcmp.ne.s32.totalorder %v6993, 0
        %vm7026 = vcmp.ne.s32.totalorder %v6994, 0
        %vm7027 = vcmp.ne.s32.totalorder %v6995, 0
        %vm7028 = vcmp.ne.s32.totalorder %v6996, 0
        %vm7029 = vcmp.ne.s32.totalorder %v6997, 0
        %vm7030 = vcmp.ne.s32.totalorder %v6998, 0
        %vm7031 = vcmp.ne.s32.totalorder %v6999, 0
        %vm7032 = vcmp.ne.s32.totalorder %v7000, 0
        %vm7033 = vcmp.ne.s32.totalorder %v7001, 0
        %vm7034 = vcmp.ne.s32.totalorder %v7002, 0
        %vm7035 = vcmp.ne.s32.totalorder %v7003, 0
        %vm7036 = vcmp.ne.s32.totalorder %v7004, 0
        %vm7037 = vcmp.ne.s32.totalorder %v7005, 0
        %vm7038 = vcmp.ne.s32.totalorder %v7006, 0
        %vm7039 = vcmp.ne.s32.totalorder %v7007, 0
        %vm7040 = vcmp.ne.s32.totalorder %v7008, 0
        %vm7041 = vcmp.ne.s32.totalorder %v7009, 0
        %vm7042 = vcmp.ne.s32.totalorder %v7010, 0
        %vm7043 = vcmp.ne.s32.totalorder %v7011, 0
        %vm7044 = vcmp.ne.s32.totalorder %v7012, 0
        %vm7045 = vcmp.ne.s32.totalorder %v7013, 0
        %vm7046 = vcmp.ne.s32.totalorder %v7014, 0
        %vm7047 = vcmp.ne.s32.totalorder %v7015, 0
        %vm7048 = vcmp.ne.s32.totalorder %v7016, 0
        %vm7049 = vcmp.ne.s32.totalorder %v7017, 0
        %vm7050 = vcmp.ne.s32.totalorder %v7018, 0
        %vm7051 = vcmp.ne.s32.totalorder %v7019, 0
        %vm7052 = vcmp.ne.s32.totalorder %v7020, 0
        %vm7053 = vcmp.ne.s32.totalorder %v7021, 0
        %vm7054 = vcmp.ne.s32.totalorder %v7022, 0
        %v7055 = vsel %vm7023, 1, 0
        %v7056 = vsel %vm7024, 1, 0
        %v7057 = vsel %vm7025, 1, 0
        %v7058 = vsel %vm7026, 1, 0
        %v7059 = vsel %vm7027, 1, 0
        %v7060 = vsel %vm7028, 1, 0
        %v7061 = vsel %vm7029, 1, 0
        %v7062 = vsel %vm7030, 1, 0
        %v7063 = vsel %vm7031, 1, 0
        %v7064 = vsel %vm7032, 1, 0
        %v7065 = vsel %vm7033, 1, 0
        %v7066 = vsel %vm7034, 1, 0
        %v7067 = vsel %vm7035, 1, 0
        %v7068 = vsel %vm7036, 1, 0
        %v7069 = vsel %vm7037, 1, 0
        %v7070 = vsel %vm7038, 1, 0
        %v7071 = vsel %vm7039, 1, 0
        %v7072 = vsel %vm7040, 1, 0
        %v7073 = vsel %vm7041, 1, 0
        %v7074 = vsel %vm7042, 1, 0
        %v7075 = vsel %vm7043, 1, 0
        %v7076 = vsel %vm7044, 1, 0
        %v7077 = vsel %vm7045, 1, 0
        %v7078 = vsel %vm7046, 1, 0
        %v7079 = vsel %vm7047, 1, 0
        %v7080 = vsel %vm7048, 1, 0
        %v7081 = vsel %vm7049, 1, 0
        %v7082 = vsel %vm7050, 1, 0
        %v7083 = vsel %vm7051, 1, 0
        %v7084 = vsel %vm7052, 1, 0
        %v7085 = vsel %vm7053, 1, 0
        %v7086 = vsel %vm7054, 1, 0
        %v7087 = vlaneseq
        %v7088 = vshrl.u32 %v7087, 7
        %v7089 = vsub.s32 0, %v7088
        %v7090 = vrot.slane %v7055, %v7089
        %v7091 = vlaneseq
        %v7092 = vshrl.u32 %v7091, 7
        %v7093 = vsub.s32 0, %v7092
        %v7094 = vrot.slane %v7056, %v7093
        %v7095 = vlaneseq
        %v7096 = vshrl.u32 %v7095, 7
        %v7097 = vsub.s32 0, %v7096
        %v7098 = vrot.slane %v7057, %v7097
        %v7099 = vlaneseq
        %v7100 = vshrl.u32 %v7099, 7
        %v7101 = vsub.s32 0, %v7100
        %v7102 = vrot.slane %v7058, %v7101
        %v7103 = vlaneseq
        %v7104 = vshrl.u32 %v7103, 7
        %v7105 = vsub.s32 0, %v7104
        %v7106 = vrot.slane %v7059, %v7105
        %v7107 = vlaneseq
        %v7108 = vshrl.u32 %v7107, 7
        %v7109 = vsub.s32 0, %v7108
        %v7110 = vrot.slane %v7060, %v7109
        %v7111 = vlaneseq
        %v7112 = vshrl.u32 %v7111, 7
        %v7113 = vsub.s32 0, %v7112
        %v7114 = vrot.slane %v7061, %v7113
        %v7115 = vlaneseq
        %v7116 = vshrl.u32 %v7115, 7
        %v7117 = vsub.s32 0, %v7116
        %v7118 = vrot.slane %v7062, %v7117
        %v7119 = vlaneseq
        %v7120 = vshrl.u32 %v7119, 7
        %v7121 = vsub.s32 0, %v7120
        %v7122 = vrot.slane %v7063, %v7121
        %v7123 = vlaneseq
        %v7124 = vshrl.u32 %v7123, 7
        %v7125 = vsub.s32 0, %v7124
        %v7126 = vrot.slane %v7064, %v7125
        %v7127 = vlaneseq
        %v7128 = vshrl.u32 %v7127, 7
        %v7129 = vsub.s32 0, %v7128
        %v7130 = vrot.slane %v7065, %v7129
        %v7131 = vlaneseq
        %v7132 = vshrl.u32 %v7131, 7
        %v7133 = vsub.s32 0, %v7132
        %v7134 = vrot.slane %v7066, %v7133
        %v7135 = vlaneseq
        %v7136 = vshrl.u32 %v7135, 7
        %v7137 = vsub.s32 0, %v7136
        %v7138 = vrot.slane %v7067, %v7137
        %v7139 = vlaneseq
        %v7140 = vshrl.u32 %v7139, 7
        %v7141 = vsub.s32 0, %v7140
        %v7142 = vrot.slane %v7068, %v7141
        %v7143 = vlaneseq
        %v7144 = vshrl.u32 %v7143, 7
        %v7145 = vsub.s32 0, %v7144
        %v7146 = vrot.slane %v7069, %v7145
        %v7147 = vlaneseq
        %v7148 = vshrl.u32 %v7147, 7
        %v7149 = vsub.s32 0, %v7148
        %v7150 = vrot.slane %v7070, %v7149
        %v7151 = vlaneseq
        %v7152 = vshrl.u32 %v7151, 7
        %v7153 = vsub.s32 0, %v7152
        %v7154 = vrot.slane %v7071, %v7153
        %v7155 = vlaneseq
        %v7156 = vshrl.u32 %v7155, 7
        %v7157 = vsub.s32 0, %v7156
        %v7158 = vrot.slane %v7072, %v7157
        %v7159 = vlaneseq
        %v7160 = vshrl.u32 %v7159, 7
        %v7161 = vsub.s32 0, %v7160
        %v7162 = vrot.slane %v7073, %v7161
        %v7163 = vlaneseq
        %v7164 = vshrl.u32 %v7163, 7
        %v7165 = vsub.s32 0, %v7164
        %v7166 = vrot.slane %v7074, %v7165
        %v7167 = vlaneseq
        %v7168 = vshrl.u32 %v7167, 7
        %v7169 = vsub.s32 0, %v7168
        %v7170 = vrot.slane %v7075, %v7169
        %v7171 = vlaneseq
        %v7172 = vshrl.u32 %v7171, 7
        %v7173 = vsub.s32 0, %v7172
        %v7174 = vrot.slane %v7076, %v7173
        %v7175 = vlaneseq
        %v7176 = vshrl.u32 %v7175, 7
        %v7177 = vsub.s32 0, %v7176
        %v7178 = vrot.slane %v7077, %v7177
        %v7179 = vlaneseq
        %v7180 = vshrl.u32 %v7179, 7
        %v7181 = vsub.s32 0, %v7180
        %v7182 = vrot.slane %v7078, %v7181
        %v7183 = vlaneseq
        %v7184 = vshrl.u32 %v7183, 7
        %v7185 = vsub.s32 0, %v7184
        %v7186 = vrot.slane %v7079, %v7185
        %v7187 = vlaneseq
        %v7188 = vshrl.u32 %v7187, 7
        %v7189 = vsub.s32 0, %v7188
        %v7190 = vrot.slane %v7080, %v7189
        %v7191 = vlaneseq
        %v7192 = vshrl.u32 %v7191, 7
        %v7193 = vsub.s32 0, %v7192
        %v7194 = vrot.slane %v7081, %v7193
        %v7195 = vlaneseq
        %v7196 = vshrl.u32 %v7195, 7
        %v7197 = vsub.s32 0, %v7196
        %v7198 = vrot.slane %v7082, %v7197
        %v7199 = vlaneseq
        %v7200 = vshrl.u32 %v7199, 7
        %v7201 = vsub.s32 0, %v7200
        %v7202 = vrot.slane %v7083, %v7201
        %v7203 = vlaneseq
        %v7204 = vshrl.u32 %v7203, 7
        %v7205 = vsub.s32 0, %v7204
        %v7206 = vrot.slane %v7084, %v7205
        %v7207 = vlaneseq
        %v7208 = vshrl.u32 %v7207, 7
        %v7209 = vsub.s32 0, %v7208
        %v7210 = vrot.slane %v7085, %v7209
        %v7211 = vlaneseq
        %v7212 = vshrl.u32 %v7211, 7
        %v7213 = vsub.s32 0, %v7212
        %v7214 = vrot.slane %v7086, %v7213
        %vm7215 = vcmp.eq.s32.totalorder %v7090, 1
        %vm7216 = vcmp.eq.s32.totalorder %v7094, 1
        %vm7217 = vcmp.eq.s32.totalorder %v7098, 1
        %vm7218 = vcmp.eq.s32.totalorder %v7102, 1
        %vm7219 = vcmp.eq.s32.totalorder %v7106, 1
        %vm7220 = vcmp.eq.s32.totalorder %v7110, 1
        %vm7221 = vcmp.eq.s32.totalorder %v7114, 1
        %vm7222 = vcmp.eq.s32.totalorder %v7118, 1
        %vm7223 = vcmp.eq.s32.totalorder %v7122, 1
        %vm7224 = vcmp.eq.s32.totalorder %v7126, 1
        %vm7225 = vcmp.eq.s32.totalorder %v7130, 1
        %vm7226 = vcmp.eq.s32.totalorder %v7134, 1
        %vm7227 = vcmp.eq.s32.totalorder %v7138, 1
        %vm7228 = vcmp.eq.s32.totalorder %v7142, 1
        %vm7229 = vcmp.eq.s32.totalorder %v7146, 1
        %vm7230 = vcmp.eq.s32.totalorder %v7150, 1
        %vm7231 = vcmp.eq.s32.totalorder %v7154, 1
        %vm7232 = vcmp.eq.s32.totalorder %v7158, 1
        %vm7233 = vcmp.eq.s32.totalorder %v7162, 1
        %vm7234 = vcmp.eq.s32.totalorder %v7166, 1
        %vm7235 = vcmp.eq.s32.totalorder %v7170, 1
        %vm7236 = vcmp.eq.s32.totalorder %v7174, 1
        %vm7237 = vcmp.eq.s32.totalorder %v7178, 1
        %vm7238 = vcmp.eq.s32.totalorder %v7182, 1
        %vm7239 = vcmp.eq.s32.totalorder %v7186, 1
        %vm7240 = vcmp.eq.s32.totalorder %v7190, 1
        %vm7241 = vcmp.eq.s32.totalorder %v7194, 1
        %vm7242 = vcmp.eq.s32.totalorder %v7198, 1
        %vm7243 = vcmp.eq.s32.totalorder %v7202, 1
        %vm7244 = vcmp.eq.s32.totalorder %v7206, 1
        %vm7245 = vcmp.eq.s32.totalorder %v7210, 1
        %vm7246 = vcmp.eq.s32.totalorder %v7214, 1
        %v7247 = vsel %vm7215, %v5571, -1e+30
        %v7248 = vsel %vm7216, %v5603, -1e+30
        %v7249 = vsel %vm7217, %v5635, -1e+30
        %v7250 = vsel %vm7218, %v5667, -1e+30
        %v7251 = vsel %vm7219, %v5699, -1e+30
        %v7252 = vsel %vm7220, %v5731, -1e+30
        %v7253 = vsel %vm7221, %v5763, -1e+30
        %v7254 = vsel %vm7222, %v5795, -1e+30
        %v7255 = vsel %vm7223, %v5827, -1e+30
        %v7256 = vsel %vm7224, %v5859, -1e+30
        %v7257 = vsel %vm7225, %v5891, -1e+30
        %v7258 = vsel %vm7226, %v5923, -1e+30
        %v7259 = vsel %vm7227, %v5955, -1e+30
        %v7260 = vsel %vm7228, %v5987, -1e+30
        %v7261 = vsel %vm7229, %v6019, -1e+30
        %v7262 = vsel %vm7230, %v6051, -1e+30
        %v7263 = vsel %vm7231, %v6083, -1e+30
        %v7264 = vsel %vm7232, %v6115, -1e+30
        %v7265 = vsel %vm7233, %v6147, -1e+30
        %v7266 = vsel %vm7234, %v6179, -1e+30
        %v7267 = vsel %vm7235, %v6211, -1e+30
        %v7268 = vsel %vm7236, %v6243, -1e+30
        %v7269 = vsel %vm7237, %v6275, -1e+30
        %v7270 = vsel %vm7238, %v6307, -1e+30
        %v7271 = vsel %vm7239, %v6339, -1e+30
        %v7272 = vsel %vm7240, %v6371, -1e+30
        %v7273 = vsel %vm7241, %v6403, -1e+30
        %v7274 = vsel %vm7242, %v6435, -1e+30
        %v7275 = vsel %vm7243, %v6467, -1e+30
        %v7276 = vsel %vm7244, %v6499, -1e+30
        %v7277 = vsel %vm7245, %v6531, -1e+30
        %v7278 = vsel %vm7246, %v6563, -1e+30
        %v7279 = vld [vmem:[#allocation2] sm:$0xff]
        %v7280 = vld [vmem:[#allocation2 + $0x8] sm:$0xff]
        %v7281 = vld [vmem:[#allocation2 + $0x10] sm:$0xff]
        %v7282 = vld [vmem:[#allocation2 + $0x18] sm:$0xff]
        %v7283 = vld [vmem:[#allocation2 + $0x20] sm:$0xff]
        %v7284 = vld [vmem:[#allocation2 + $0x28] sm:$0xff]
        %v7285 = vld [vmem:[#allocation2 + $0x30] sm:$0xff]
        %v7286 = vld [vmem:[#allocation2 + $0x38] sm:$0xff]
        %v7287 = vld [vmem:[#allocation2 + $0x40] sm:$0xff]
        %v7288 = vld [vmem:[#allocation2 + $0x48] sm:$0xff]
        %v7289 = vld [vmem:[#allocation2 + $0x50] sm:$0xff]
        %v7290 = vld [vmem:[#allocation2 + $0x58] sm:$0xff]
        %v7291 = vld [vmem:[#allocation2 + $0x60] sm:$0xff]
        %v7292 = vld [vmem:[#allocation2 + $0x68] sm:$0xff]
        %v7293 = vld [vmem:[#allocation2 + $0x70] sm:$0xff]
        %v7294 = vld [vmem:[#allocation2 + $0x78] sm:$0xff]
        %v7295 = vld [vmem:[#allocation2 + $0x80] sm:$0xff]
        %v7296 = vld [vmem:[#allocation2 + $0x88] sm:$0xff]
        %v7297 = vld [vmem:[#allocation2 + $0x90] sm:$0xff]
        %v7298 = vld [vmem:[#allocation2 + $0x98] sm:$0xff]
        %v7299 = vld [vmem:[#allocation2 + $0xa0] sm:$0xff]
        %v7300 = vld [vmem:[#allocation2 + $0xa8] sm:$0xff]
        %v7301 = vld [vmem:[#allocation2 + $0xb0] sm:$0xff]
        %v7302 = vld [vmem:[#allocation2 + $0xb8] sm:$0xff]
        %v7303 = vld [vmem:[#allocation2 + $0xc0] sm:$0xff]
        %v7304 = vld [vmem:[#allocation2 + $0xc8] sm:$0xff]
        %v7305 = vld [vmem:[#allocation2 + $0xd0] sm:$0xff]
        %v7306 = vld [vmem:[#allocation2 + $0xd8] sm:$0xff]
        %v7307 = vld [vmem:[#allocation2 + $0xe0] sm:$0xff]
        %v7308 = vld [vmem:[#allocation2 + $0xe8] sm:$0xff]
        %v7309 = vld [vmem:[#allocation2 + $0xf0] sm:$0xff]
        %v7310 = vld [vmem:[#allocation2 + $0xf8] sm:$0xff]
        %7311 = vmax.xlane.f32.xlu0 %v7247
        %v7312 = vpop.xlane.xlu0 %7311
        %7313 = vmax.xlane.f32.xlu0 %v7248
        %v7314 = vpop.xlane.xlu0 %7313
        %7315 = vmax.xlane.f32.xlu0 %v7249
        %v7316 = vpop.xlane.xlu0 %7315
        %7317 = vmax.xlane.f32.xlu0 %v7250
        %v7318 = vpop.xlane.xlu0 %7317
        %7319 = vmax.xlane.f32.xlu0 %v7251
        %v7320 = vpop.xlane.xlu0 %7319
        %7321 = vmax.xlane.f32.xlu0 %v7252
        %v7322 = vpop.xlane.xlu0 %7321
        %7323 = vmax.xlane.f32.xlu0 %v7253
        %v7324 = vpop.xlane.xlu0 %7323
        %7325 = vmax.xlane.f32.xlu0 %v7254
        %v7326 = vpop.xlane.xlu0 %7325
        %7327 = vmax.xlane.f32.xlu0 %v7255
        %v7328 = vpop.xlane.xlu0 %7327
        %7329 = vmax.xlane.f32.xlu0 %v7256
        %v7330 = vpop.xlane.xlu0 %7329
        %7331 = vmax.xlane.f32.xlu0 %v7257
        %v7332 = vpop.xlane.xlu0 %7331
        %7333 = vmax.xlane.f32.xlu0 %v7258
        %v7334 = vpop.xlane.xlu0 %7333
        %7335 = vmax.xlane.f32.xlu0 %v7259
        %v7336 = vpop.xlane.xlu0 %7335
        %7337 = vmax.xlane.f32.xlu0 %v7260
        %v7338 = vpop.xlane.xlu0 %7337
        %7339 = vmax.xlane.f32.xlu0 %v7261
        %v7340 = vpop.xlane.xlu0 %7339
        %7341 = vmax.xlane.f32.xlu0 %v7262
        %v7342 = vpop.xlane.xlu0 %7341
        %7343 = vmax.xlane.f32.xlu0 %v7263
        %v7344 = vpop.xlane.xlu0 %7343
        %7345 = vmax.xlane.f32.xlu0 %v7264
        %v7346 = vpop.xlane.xlu0 %7345
        %7347 = vmax.xlane.f32.xlu0 %v7265
        %v7348 = vpop.xlane.xlu0 %7347
        %7349 = vmax.xlane.f32.xlu0 %v7266
        %v7350 = vpop.xlane.xlu0 %7349
        %7351 = vmax.xlane.f32.xlu0 %v7267
        %v7352 = vpop.xlane.xlu0 %7351
        %7353 = vmax.xlane.f32.xlu0 %v7268
        %v7354 = vpop.xlane.xlu0 %7353
        %7355 = vmax.xlane.f32.xlu0 %v7269
        %v7356 = vpop.xlane.xlu0 %7355
        %7357 = vmax.xlane.f32.xlu0 %v7270
        %v7358 = vpop.xlane.xlu0 %7357
        %7359 = vmax.xlane.f32.xlu0 %v7271
        %v7360 = vpop.xlane.xlu0 %7359
        %7361 = vmax.xlane.f32.xlu0 %v7272
        %v7362 = vpop.xlane.xlu0 %7361
        %7363 = vmax.xlane.f32.xlu0 %v7273
        %v7364 = vpop.xlane.xlu0 %7363
        %7365 = vmax.xlane.f32.xlu0 %v7274
        %v7366 = vpop.xlane.xlu0 %7365
        %7367 = vmax.xlane.f32.xlu0 %v7275
        %v7368 = vpop.xlane.xlu0 %7367
        %7369 = vmax.xlane.f32.xlu0 %v7276
        %v7370 = vpop.xlane.xlu0 %7369
        %7371 = vmax.xlane.f32.xlu0 %v7277
        %v7372 = vpop.xlane.xlu0 %7371
        %7373 = vmax.xlane.f32.xlu0 %v7278
        %v7374 = vpop.xlane.xlu0 %7373
        %v7375 = vmax.f32 %v7279, %v7312
        %v7376 = vmax.f32 %v7280, %v7314
        %v7377 = vmax.f32 %v7281, %v7316
        %v7378 = vmax.f32 %v7282, %v7318
        %v7379 = vmax.f32 %v7283, %v7320
        %v7380 = vmax.f32 %v7284, %v7322
        %v7381 = vmax.f32 %v7285, %v7324
        %v7382 = vmax.f32 %v7286, %v7326
        %v7383 = vmax.f32 %v7287, %v7328
        %v7384 = vmax.f32 %v7288, %v7330
        %v7385 = vmax.f32 %v7289, %v7332
        %v7386 = vmax.f32 %v7290, %v7334
        %v7387 = vmax.f32 %v7291, %v7336
        %v7388 = vmax.f32 %v7292, %v7338
        %v7389 = vmax.f32 %v7293, %v7340
        %v7390 = vmax.f32 %v7294, %v7342
        %v7391 = vmax.f32 %v7295, %v7344
        %v7392 = vmax.f32 %v7296, %v7346
        %v7393 = vmax.f32 %v7297, %v7348
        %v7394 = vmax.f32 %v7298, %v7350
        %v7395 = vmax.f32 %v7299, %v7352
        %v7396 = vmax.f32 %v7300, %v7354
        %v7397 = vmax.f32 %v7301, %v7356
        %v7398 = vmax.f32 %v7302, %v7358
        %v7399 = vmax.f32 %v7303, %v7360
        %v7400 = vmax.f32 %v7304, %v7362
        %v7401 = vmax.f32 %v7305, %v7364
        %v7402 = vmax.f32 %v7306, %v7366
        %v7403 = vmax.f32 %v7307, %v7368
        %v7404 = vmax.f32 %v7308, %v7370
        %v7405 = vmax.f32 %v7309, %v7372
        %v7406 = vmax.f32 %v7310, %v7374
        %v7407 = vsub.f32 %v7279, %v7375
        %v7408 = vsub.f32 %v7280, %v7376
        %v7409 = vsub.f32 %v7281, %v7377
        %v7410 = vsub.f32 %v7282, %v7378
        %v7411 = vsub.f32 %v7283, %v7379
        %v7412 = vsub.f32 %v7284, %v7380
        %v7413 = vsub.f32 %v7285, %v7381
        %v7414 = vsub.f32 %v7286, %v7382
        %v7415 = vsub.f32 %v7287, %v7383
        %v7416 = vsub.f32 %v7288, %v7384
        %v7417 = vsub.f32 %v7289, %v7385
        %v7418 = vsub.f32 %v7290, %v7386
        %v7419 = vsub.f32 %v7291, %v7387
        %v7420 = vsub.f32 %v7292, %v7388
        %v7421 = vsub.f32 %v7293, %v7389
        %v7422 = vsub.f32 %v7294, %v7390
        %v7423 = vsub.f32 %v7295, %v7391
        %v7424 = vsub.f32 %v7296, %v7392
        %v7425 = vsub.f32 %v7297, %v7393
        %v7426 = vsub.f32 %v7298, %v7394
        %v7427 = vsub.f32 %v7299, %v7395
        %v7428 = vsub.f32 %v7300, %v7396
        %v7429 = vsub.f32 %v7301, %v7397
        %v7430 = vsub.f32 %v7302, %v7398
        %v7431 = vsub.f32 %v7303, %v7399
        %v7432 = vsub.f32 %v7304, %v7400
        %v7433 = vsub.f32 %v7305, %v7401
        %v7434 = vsub.f32 %v7306, %v7402
        %v7435 = vsub.f32 %v7307, %v7403
        %v7436 = vsub.f32 %v7308, %v7404
        %v7437 = vsub.f32 %v7309, %v7405
        %v7438 = vsub.f32 %v7310, %v7406
        %v7439 = vmul.f32 %v7407, 1.442695
        %v7440 = vpow.pop %v7439
        %v7441 = vmul.f32 %v7408, 1.442695
        %v7442 = vpow.pop %v7441
        %v7443 = vmul.f32 %v7409, 1.442695
        %v7444 = vpow.pop %v7443
        %v7445 = vmul.f32 %v7410, 1.442695
        %v7446 = vpow.pop %v7445
        %v7447 = vmul.f32 %v7411, 1.442695
        %v7448 = vpow.pop %v7447
        %v7449 = vmul.f32 %v7412, 1.442695
        %v7450 = vpow.pop %v7449
        %v7451 = vmul.f32 %v7413, 1.442695
        %v7452 = vpow.pop %v7451
        %v7453 = vmul.f32 %v7414, 1.442695
        %v7454 = vpow.pop %v7453
        %v7455 = vmul.f32 %v7415, 1.442695
        %v7456 = vpow.pop %v7455
        %v7457 = vmul.f32 %v7416, 1.442695
        %v7458 = vpow.pop %v7457
        %v7459 = vmul.f32 %v7417, 1.442695
        %v7460 = vpow.pop %v7459
        %v7461 = vmul.f32 %v7418, 1.442695
        %v7462 = vpow.pop %v7461
        %v7463 = vmul.f32 %v7419, 1.442695
        %v7464 = vpow.pop %v7463
        %v7465 = vmul.f32 %v7420, 1.442695
        %v7466 = vpow.pop %v7465
        %v7467 = vmul.f32 %v7421, 1.442695
        %v7468 = vpow.pop %v7467
        %v7469 = vmul.f32 %v7422, 1.442695
        %v7470 = vpow.pop %v7469
        %v7471 = vmul.f32 %v7423, 1.442695
        %v7472 = vpow.pop %v7471
        %v7473 = vmul.f32 %v7424, 1.442695
        %v7474 = vpow.pop %v7473
        %v7475 = vmul.f32 %v7425, 1.442695
        %v7476 = vpow.pop %v7475
        %v7477 = vmul.f32 %v7426, 1.442695
        %v7478 = vpow.pop %v7477
        %v7479 = vmul.f32 %v7427, 1.442695
        %v7480 = vpow.pop %v7479
        %v7481 = vmul.f32 %v7428, 1.442695
        %v7482 = vpow.pop %v7481
        %v7483 = vmul.f32 %v7429, 1.442695
        %v7484 = vpow.pop %v7483
        %v7485 = vmul.f32 %v7430, 1.442695
        %v7486 = vpow.pop %v7485
        %v7487 = vmul.f32 %v7431, 1.442695
        %v7488 = vpow.pop %v7487
        %v7489 = vmul.f32 %v7432, 1.442695
        %v7490 = vpow.pop %v7489
        %v7491 = vmul.f32 %v7433, 1.442695
        %v7492 = vpow.pop %v7491
        %v7493 = vmul.f32 %v7434, 1.442695
        %v7494 = vpow.pop %v7493
        %v7495 = vmul.f32 %v7435, 1.442695
        %v7496 = vpow.pop %v7495
        %v7497 = vmul.f32 %v7436, 1.442695
        %v7498 = vpow.pop %v7497
        %v7499 = vmul.f32 %v7437, 1.442695
        %v7500 = vpow.pop %v7499
        %v7501 = vmul.f32 %v7438, 1.442695
        %v7502 = vpow.pop %v7501
        %7504 = vset.pattern.permute.xlu0 0
        %7505 = vperm.xlu0 %7504, %v7375
        %v7506 = vpop.permute.xlu0 %7505
        %7509 = vset.pattern.permute.xlu0 0
        %7510 = vperm.xlu0 %7509, %v7376
        %v7511 = vpop.permute.xlu0 %7510
        %7514 = vset.pattern.permute.xlu0 0
        %7515 = vperm.xlu0 %7514, %v7377
        %v7516 = vpop.permute.xlu0 %7515
        %7519 = vset.pattern.permute.xlu0 0
        %7520 = vperm.xlu0 %7519, %v7378
        %v7521 = vpop.permute.xlu0 %7520
        %7524 = vset.pattern.permute.xlu0 0
        %7525 = vperm.xlu0 %7524, %v7379
        %v7526 = vpop.permute.xlu0 %7525
        %7529 = vset.pattern.permute.xlu0 0
        %7530 = vperm.xlu0 %7529, %v7380
        %v7531 = vpop.permute.xlu0 %7530
        %7534 = vset.pattern.permute.xlu0 0
        %7535 = vperm.xlu0 %7534, %v7381
        %v7536 = vpop.permute.xlu0 %7535
        %7539 = vset.pattern.permute.xlu0 0
        %7540 = vperm.xlu0 %7539, %v7382
        %v7541 = vpop.permute.xlu0 %7540
        %7544 = vset.pattern.permute.xlu0 0
        %7545 = vperm.xlu0 %7544, %v7383
        %v7546 = vpop.permute.xlu0 %7545
        %7549 = vset.pattern.permute.xlu0 0
        %7550 = vperm.xlu0 %7549, %v7384
        %v7551 = vpop.permute.xlu0 %7550
        %7554 = vset.pattern.permute.xlu0 0
        %7555 = vperm.xlu0 %7554, %v7385
        %v7556 = vpop.permute.xlu0 %7555
        %7559 = vset.pattern.permute.xlu0 0
        %7560 = vperm.xlu0 %7559, %v7386
        %v7561 = vpop.permute.xlu0 %7560
        %7564 = vset.pattern.permute.xlu0 0
        %7565 = vperm.xlu0 %7564, %v7387
        %v7566 = vpop.permute.xlu0 %7565
        %7569 = vset.pattern.permute.xlu0 0
        %7570 = vperm.xlu0 %7569, %v7388
        %v7571 = vpop.permute.xlu0 %7570
        %7574 = vset.pattern.permute.xlu0 0
        %7575 = vperm.xlu0 %7574, %v7389
        %v7576 = vpop.permute.xlu0 %7575
        %7579 = vset.pattern.permute.xlu0 0
        %7580 = vperm.xlu0 %7579, %v7390
        %v7581 = vpop.permute.xlu0 %7580
        %7584 = vset.pattern.permute.xlu0 0
        %7585 = vperm.xlu0 %7584, %v7391
        %v7586 = vpop.permute.xlu0 %7585
        %7589 = vset.pattern.permute.xlu0 0
        %7590 = vperm.xlu0 %7589, %v7392
        %v7591 = vpop.permute.xlu0 %7590
        %7594 = vset.pattern.permute.xlu0 0
        %7595 = vperm.xlu0 %7594, %v7393
        %v7596 = vpop.permute.xlu0 %7595
        %7599 = vset.pattern.permute.xlu0 0
        %7600 = vperm.xlu0 %7599, %v7394
        %v7601 = vpop.permute.xlu0 %7600
        %7604 = vset.pattern.permute.xlu0 0
        %7605 = vperm.xlu0 %7604, %v7395
        %v7606 = vpop.permute.xlu0 %7605
        %7609 = vset.pattern.permute.xlu0 0
        %7610 = vperm.xlu0 %7609, %v7396
        %v7611 = vpop.permute.xlu0 %7610
        %7614 = vset.pattern.permute.xlu0 0
        %7615 = vperm.xlu0 %7614, %v7397
        %v7616 = vpop.permute.xlu0 %7615
        %7619 = vset.pattern.permute.xlu0 0
        %7620 = vperm.xlu0 %7619, %v7398
        %v7621 = vpop.permute.xlu0 %7620
        %7624 = vset.pattern.permute.xlu0 0
        %7625 = vperm.xlu0 %7624, %v7399
        %v7626 = vpop.permute.xlu0 %7625
        %7629 = vset.pattern.permute.xlu0 0
        %7630 = vperm.xlu0 %7629, %v7400
        %v7631 = vpop.permute.xlu0 %7630
        %7634 = vset.pattern.permute.xlu0 0
        %7635 = vperm.xlu0 %7634, %v7401
        %v7636 = vpop.permute.xlu0 %7635
        %7639 = vset.pattern.permute.xlu0 0
        %7640 = vperm.xlu0 %7639, %v7402
        %v7641 = vpop.permute.xlu0 %7640
        %7644 = vset.pattern.permute.xlu0 0
        %7645 = vperm.xlu0 %7644, %v7403
        %v7646 = vpop.permute.xlu0 %7645
        %7649 = vset.pattern.permute.xlu0 0
        %7650 = vperm.xlu0 %7649, %v7404
        %v7651 = vpop.permute.xlu0 %7650
        %7654 = vset.pattern.permute.xlu0 0
        %7655 = vperm.xlu0 %7654, %v7405
        %v7656 = vpop.permute.xlu0 %7655
        %7659 = vset.pattern.permute.xlu0 0
        %7660 = vperm.xlu0 %7659, %v7406
        %v7661 = vpop.permute.xlu0 %7660
        %v7663 = vsub.f32 %v7247, %v7506
        %v7664 = vsub.f32 %v7248, %v7511
        %v7665 = vsub.f32 %v7249, %v7516
        %v7666 = vsub.f32 %v7250, %v7521
        %v7667 = vsub.f32 %v7251, %v7526
        %v7668 = vsub.f32 %v7252, %v7531
        %v7669 = vsub.f32 %v7253, %v7536
        %v7670 = vsub.f32 %v7254, %v7541
        %v7671 = vsub.f32 %v7255, %v7546
        %v7672 = vsub.f32 %v7256, %v7551
        %v7673 = vsub.f32 %v7257, %v7556
        %v7674 = vsub.f32 %v7258, %v7561
        %v7675 = vsub.f32 %v7259, %v7566
        %v7676 = vsub.f32 %v7260, %v7571
        %v7677 = vsub.f32 %v7261, %v7576
        %v7678 = vsub.f32 %v7262, %v7581
        %v7679 = vsub.f32 %v7263, %v7586
        %v7680 = vsub.f32 %v7264, %v7591
        %v7681 = vsub.f32 %v7265, %v7596
        %v7682 = vsub.f32 %v7266, %v7601
        %v7683 = vsub.f32 %v7267, %v7606
        %v7684 = vsub.f32 %v7268, %v7611
        %v7685 = vsub.f32 %v7269, %v7616
        %v7686 = vsub.f32 %v7270, %v7621
        %v7687 = vsub.f32 %v7271, %v7626
        %v7688 = vsub.f32 %v7272, %v7631
        %v7689 = vsub.f32 %v7273, %v7636
        %v7690 = vsub.f32 %v7274, %v7641
        %v7691 = vsub.f32 %v7275, %v7646
        %v7692 = vsub.f32 %v7276, %v7651
        %v7693 = vsub.f32 %v7277, %v7656
        %v7694 = vsub.f32 %v7278, %v7661
        %v7695 = vmul.f32 %v7663, 1.442695
        %v7696 = vpow.pop %v7695
        %v7697 = vmul.f32 %v7664, 1.442695
        %v7698 = vpow.pop %v7697
        %v7699 = vmul.f32 %v7665, 1.442695
        %v7700 = vpow.pop %v7699
        %v7701 = vmul.f32 %v7666, 1.442695
        %v7702 = vpow.pop %v7701
        %v7703 = vmul.f32 %v7667, 1.442695
        %v7704 = vpow.pop %v7703
        %v7705 = vmul.f32 %v7668, 1.442695
        %v7706 = vpow.pop %v7705
        %v7707 = vmul.f32 %v7669, 1.442695
        %v7708 = vpow.pop %v7707
        %v7709 = vmul.f32 %v7670, 1.442695
        %v7710 = vpow.pop %v7709
        %v7711 = vmul.f32 %v7671, 1.442695
        %v7712 = vpow.pop %v7711
        %v7713 = vmul.f32 %v7672, 1.442695
        %v7714 = vpow.pop %v7713
        %v7715 = vmul.f32 %v7673, 1.442695
        %v7716 = vpow.pop %v7715
        %v7717 = vmul.f32 %v7674, 1.442695
        %v7718 = vpow.pop %v7717
        %v7719 = vmul.f32 %v7675, 1.442695
        %v7720 = vpow.pop %v7719
        %v7721 = vmul.f32 %v7676, 1.442695
        %v7722 = vpow.pop %v7721
        %v7723 = vmul.f32 %v7677, 1.442695
        %v7724 = vpow.pop %v7723
        %v7725 = vmul.f32 %v7678, 1.442695
        %v7726 = vpow.pop %v7725
        %v7727 = vmul.f32 %v7679, 1.442695
        %v7728 = vpow.pop %v7727
        %v7729 = vmul.f32 %v7680, 1.442695
        %v7730 = vpow.pop %v7729
        %v7731 = vmul.f32 %v7681, 1.442695
        %v7732 = vpow.pop %v7731
        %v7733 = vmul.f32 %v7682, 1.442695
        %v7734 = vpow.pop %v7733
        %v7735 = vmul.f32 %v7683, 1.442695
        %v7736 = vpow.pop %v7735
        %v7737 = vmul.f32 %v7684, 1.442695
        %v7738 = vpow.pop %v7737
        %v7739 = vmul.f32 %v7685, 1.442695
        %v7740 = vpow.pop %v7739
        %v7741 = vmul.f32 %v7686, 1.442695
        %v7742 = vpow.pop %v7741
        %v7743 = vmul.f32 %v7687, 1.442695
        %v7744 = vpow.pop %v7743
        %v7745 = vmul.f32 %v7688, 1.442695
        %v7746 = vpow.pop %v7745
        %v7747 = vmul.f32 %v7689, 1.442695
        %v7748 = vpow.pop %v7747
        %v7749 = vmul.f32 %v7690, 1.442695
        %v7750 = vpow.pop %v7749
        %v7751 = vmul.f32 %v7691, 1.442695
        %v7752 = vpow.pop %v7751
        %v7753 = vmul.f32 %v7692, 1.442695
        %v7754 = vpow.pop %v7753
        %v7755 = vmul.f32 %v7693, 1.442695
        %v7756 = vpow.pop %v7755
        %v7757 = vmul.f32 %v7694, 1.442695
        %v7758 = vpow.pop %v7757
        %v7759 = vsel %vm7215, %v7696, 0.0
        %v7760 = vsel %vm7216, %v7698, 0.0
        %v7761 = vsel %vm7217, %v7700, 0.0
        %v7762 = vsel %vm7218, %v7702, 0.0
        %v7763 = vsel %vm7219, %v7704, 0.0
        %v7764 = vsel %vm7220, %v7706, 0.0
        %v7765 = vsel %vm7221, %v7708, 0.0
        %v7766 = vsel %vm7222, %v7710, 0.0
        %v7767 = vsel %vm7223, %v7712, 0.0
        %v7768 = vsel %vm7224, %v7714, 0.0
        %v7769 = vsel %vm7225, %v7716, 0.0
        %v7770 = vsel %vm7226, %v7718, 0.0
        %v7771 = vsel %vm7227, %v7720, 0.0
        %v7772 = vsel %vm7228, %v7722, 0.0
        %v7773 = vsel %vm7229, %v7724, 0.0
        %v7774 = vsel %vm7230, %v7726, 0.0
        %v7775 = vsel %vm7231, %v7728, 0.0
        %v7776 = vsel %vm7232, %v7730, 0.0
        %v7777 = vsel %vm7233, %v7732, 0.0
        %v7778 = vsel %vm7234, %v7734, 0.0
        %v7779 = vsel %vm7235, %v7736, 0.0
        %v7780 = vsel %vm7236, %v7738, 0.0
        %v7781 = vsel %vm7237, %v7740, 0.0
        %v7782 = vsel %vm7238, %v7742, 0.0
        %v7783 = vsel %vm7239, %v7744, 0.0
        %v7784 = vsel %vm7240, %v7746, 0.0
        %v7785 = vsel %vm7241, %v7748, 0.0
        %v7786 = vsel %vm7242, %v7750, 0.0
        %v7787 = vsel %vm7243, %v7752, 0.0
        %v7788 = vsel %vm7244, %v7754, 0.0
        %v7789 = vsel %vm7245, %v7756, 0.0
        %v7790 = vsel %vm7246, %v7758, 0.0
        %v7791 = vld [vmem:[#allocation3] sm:$0xff]
        %v7792 = vld [vmem:[#allocation3 + $0x8] sm:$0xff]
        %v7793 = vld [vmem:[#allocation3 + $0x10] sm:$0xff]
        %v7794 = vld [vmem:[#allocation3 + $0x18] sm:$0xff]
        %v7795 = vld [vmem:[#allocation3 + $0x20] sm:$0xff]
        %v7796 = vld [vmem:[#allocation3 + $0x28] sm:$0xff]
        %v7797 = vld [vmem:[#allocation3 + $0x30] sm:$0xff]
        %v7798 = vld [vmem:[#allocation3 + $0x38] sm:$0xff]
        %v7799 = vld [vmem:[#allocation3 + $0x40] sm:$0xff]
        %v7800 = vld [vmem:[#allocation3 + $0x48] sm:$0xff]
        %v7801 = vld [vmem:[#allocation3 + $0x50] sm:$0xff]
        %v7802 = vld [vmem:[#allocation3 + $0x58] sm:$0xff]
        %v7803 = vld [vmem:[#allocation3 + $0x60] sm:$0xff]
        %v7804 = vld [vmem:[#allocation3 + $0x68] sm:$0xff]
        %v7805 = vld [vmem:[#allocation3 + $0x70] sm:$0xff]
        %v7806 = vld [vmem:[#allocation3 + $0x78] sm:$0xff]
        %v7807 = vld [vmem:[#allocation3 + $0x80] sm:$0xff]
        %v7808 = vld [vmem:[#allocation3 + $0x88] sm:$0xff]
        %v7809 = vld [vmem:[#allocation3 + $0x90] sm:$0xff]
        %v7810 = vld [vmem:[#allocation3 + $0x98] sm:$0xff]
        %v7811 = vld [vmem:[#allocation3 + $0xa0] sm:$0xff]
        %v7812 = vld [vmem:[#allocation3 + $0xa8] sm:$0xff]
        %v7813 = vld [vmem:[#allocation3 + $0xb0] sm:$0xff]
        %v7814 = vld [vmem:[#allocation3 + $0xb8] sm:$0xff]
        %v7815 = vld [vmem:[#allocation3 + $0xc0] sm:$0xff]
        %v7816 = vld [vmem:[#allocation3 + $0xc8] sm:$0xff]
        %v7817 = vld [vmem:[#allocation3 + $0xd0] sm:$0xff]
        %v7818 = vld [vmem:[#allocation3 + $0xd8] sm:$0xff]
        %v7819 = vld [vmem:[#allocation3 + $0xe0] sm:$0xff]
        %v7820 = vld [vmem:[#allocation3 + $0xe8] sm:$0xff]
        %v7821 = vld [vmem:[#allocation3 + $0xf0] sm:$0xff]
        %v7822 = vld [vmem:[#allocation3 + $0xf8] sm:$0xff]
        %v7823 = vmul.f32 %v7440, %v7791
        %v7824 = vmul.f32 %v7442, %v7792
        %v7825 = vmul.f32 %v7444, %v7793
        %v7826 = vmul.f32 %v7446, %v7794
        %v7827 = vmul.f32 %v7448, %v7795
        %v7828 = vmul.f32 %v7450, %v7796
        %v7829 = vmul.f32 %v7452, %v7797
        %v7830 = vmul.f32 %v7454, %v7798
        %v7831 = vmul.f32 %v7456, %v7799
        %v7832 = vmul.f32 %v7458, %v7800
        %v7833 = vmul.f32 %v7460, %v7801
        %v7834 = vmul.f32 %v7462, %v7802
        %v7835 = vmul.f32 %v7464, %v7803
        %v7836 = vmul.f32 %v7466, %v7804
        %v7837 = vmul.f32 %v7468, %v7805
        %v7838 = vmul.f32 %v7470, %v7806
        %v7839 = vmul.f32 %v7472, %v7807
        %v7840 = vmul.f32 %v7474, %v7808
        %v7841 = vmul.f32 %v7476, %v7809
        %v7842 = vmul.f32 %v7478, %v7810
        %v7843 = vmul.f32 %v7480, %v7811
        %v7844 = vmul.f32 %v7482, %v7812
        %v7845 = vmul.f32 %v7484, %v7813
        %v7846 = vmul.f32 %v7486, %v7814
        %v7847 = vmul.f32 %v7488, %v7815
        %v7848 = vmul.f32 %v7490, %v7816
        %v7849 = vmul.f32 %v7492, %v7817
        %v7850 = vmul.f32 %v7494, %v7818
        %v7851 = vmul.f32 %v7496, %v7819
        %v7852 = vmul.f32 %v7498, %v7820
        %v7853 = vmul.f32 %v7500, %v7821
        %v7854 = vmul.f32 %v7502, %v7822
        %7855 = vadd.xlane.f32.xlu0 %v7759
        %v7856 = vpop.xlane.xlu0 %7855
        %7857 = vadd.xlane.f32.xlu0 %v7760
        %v7858 = vpop.xlane.xlu0 %7857
        %7859 = vadd.xlane.f32.xlu0 %v7761
        %v7860 = vpop.xlane.xlu0 %7859
        %7861 = vadd.xlane.f32.xlu0 %v7762
        %v7862 = vpop.xlane.xlu0 %7861
        %7863 = vadd.xlane.f32.xlu0 %v7763
        %v7864 = vpop.xlane.xlu0 %7863
        %7865 = vadd.xlane.f32.xlu0 %v7764
        %v7866 = vpop.xlane.xlu0 %7865
        %7867 = vadd.xlane.f32.xlu0 %v7765
        %v7868 = vpop.xlane.xlu0 %7867
        %7869 = vadd.xlane.f32.xlu0 %v7766
        %v7870 = vpop.xlane.xlu0 %7869
        %7871 = vadd.xlane.f32.xlu0 %v7767
        %v7872 = vpop.xlane.xlu0 %7871
        %7873 = vadd.xlane.f32.xlu0 %v7768
        %v7874 = vpop.xlane.xlu0 %7873
        %7875 = vadd.xlane.f32.xlu0 %v7769
        %v7876 = vpop.xlane.xlu0 %7875
        %7877 = vadd.xlane.f32.xlu0 %v7770
        %v7878 = vpop.xlane.xlu0 %7877
        %7879 = vadd.xlane.f32.xlu0 %v7771
        %v7880 = vpop.xlane.xlu0 %7879
        %7881 = vadd.xlane.f32.xlu0 %v7772
        %v7882 = vpop.xlane.xlu0 %7881
        %7883 = vadd.xlane.f32.xlu0 %v7773
        %v7884 = vpop.xlane.xlu0 %7883
        %7885 = vadd.xlane.f32.xlu0 %v7774
        %v7886 = vpop.xlane.xlu0 %7885
        %7887 = vadd.xlane.f32.xlu0 %v7775
        %v7888 = vpop.xlane.xlu0 %7887
        %7889 = vadd.xlane.f32.xlu0 %v7776
        %v7890 = vpop.xlane.xlu0 %7889
        %7891 = vadd.xlane.f32.xlu0 %v7777
        %v7892 = vpop.xlane.xlu0 %7891
        %7893 = vadd.xlane.f32.xlu0 %v7778
        %v7894 = vpop.xlane.xlu0 %7893
        %7895 = vadd.xlane.f32.xlu0 %v7779
        %v7896 = vpop.xlane.xlu0 %7895
        %7897 = vadd.xlane.f32.xlu0 %v7780
        %v7898 = vpop.xlane.xlu0 %7897
        %7899 = vadd.xlane.f32.xlu0 %v7781
        %v7900 = vpop.xlane.xlu0 %7899
        %7901 = vadd.xlane.f32.xlu0 %v7782
        %v7902 = vpop.xlane.xlu0 %7901
        %7903 = vadd.xlane.f32.xlu0 %v7783
        %v7904 = vpop.xlane.xlu0 %7903
        %7905 = vadd.xlane.f32.xlu0 %v7784
        %v7906 = vpop.xlane.xlu0 %7905
        %7907 = vadd.xlane.f32.xlu0 %v7785
        %v7908 = vpop.xlane.xlu0 %7907
        %7909 = vadd.xlane.f32.xlu0 %v7786
        %v7910 = vpop.xlane.xlu0 %7909
        %7911 = vadd.xlane.f32.xlu0 %v7787
        %v7912 = vpop.xlane.xlu0 %7911
        %7913 = vadd.xlane.f32.xlu0 %v7788
        %v7914 = vpop.xlane.xlu0 %7913
        %7915 = vadd.xlane.f32.xlu0 %v7789
        %v7916 = vpop.xlane.xlu0 %7915
        %7917 = vadd.xlane.f32.xlu0 %v7790
        %v7918 = vpop.xlane.xlu0 %7917
        %v7919 = vadd.f32 %v7823, %v7856
        %v7920 = vadd.f32 %v7824, %v7858
        %v7921 = vadd.f32 %v7825, %v7860
        %v7922 = vadd.f32 %v7826, %v7862
        %v7923 = vadd.f32 %v7827, %v7864
        %v7924 = vadd.f32 %v7828, %v7866
        %v7925 = vadd.f32 %v7829, %v7868
        %v7926 = vadd.f32 %v7830, %v7870
        %v7927 = vadd.f32 %v7831, %v7872
        %v7928 = vadd.f32 %v7832, %v7874
        %v7929 = vadd.f32 %v7833, %v7876
        %v7930 = vadd.f32 %v7834, %v7878
        %v7931 = vadd.f32 %v7835, %v7880
        %v7932 = vadd.f32 %v7836, %v7882
        %v7933 = vadd.f32 %v7837, %v7884
        %v7934 = vadd.f32 %v7838, %v7886
        %v7935 = vadd.f32 %v7839, %v7888
        %v7936 = vadd.f32 %v7840, %v7890
        %v7937 = vadd.f32 %v7841, %v7892
        %v7938 = vadd.f32 %v7842, %v7894
        %v7939 = vadd.f32 %v7843, %v7896
        %v7940 = vadd.f32 %v7844, %v7898
        %v7941 = vadd.f32 %v7845, %v7900
        %v7942 = vadd.f32 %v7846, %v7902
        %v7943 = vadd.f32 %v7847, %v7904
        %v7944 = vadd.f32 %v7848, %v7906
        %v7945 = vadd.f32 %v7849, %v7908
        %v7946 = vadd.f32 %v7850, %v7910
        %v7947 = vadd.f32 %v7851, %v7912
        %v7948 = vadd.f32 %v7852, %v7914
        %v7949 = vadd.f32 %v7853, %v7916
        %v7950 = vadd.f32 %v7854, %v7918
        %vm7951 = vcmask 7168
        %7952 = vst.msk [vmem:[#allocation3] sm:$0xff] %vm7951, %v7919
        %7953 = vst.msk [vmem:[#allocation3 + $0x8] sm:$0xff] %vm7951, %v7920
        %7954 = vst.msk [vmem:[#allocation3 + $0x10] sm:$0xff] %vm7951, %v7921
        %7955 = vst.msk [vmem:[#allocation3 + $0x18] sm:$0xff] %vm7951, %v7922
        %7956 = vst.msk [vmem:[#allocation3 + $0x20] sm:$0xff] %vm7951, %v7923
        %7957 = vst.msk [vmem:[#allocation3 + $0x28] sm:$0xff] %vm7951, %v7924
        %7958 = vst.msk [vmem:[#allocation3 + $0x30] sm:$0xff] %vm7951, %v7925
        %7959 = vst.msk [vmem:[#allocation3 + $0x38] sm:$0xff] %vm7951, %v7926
        %7960 = vst.msk [vmem:[#allocation3 + $0x40] sm:$0xff] %vm7951, %v7927
        %7961 = vst.msk [vmem:[#allocation3 + $0x48] sm:$0xff] %vm7951, %v7928
        %7962 = vst.msk [vmem:[#allocation3 + $0x50] sm:$0xff] %vm7951, %v7929
        %7963 = vst.msk [vmem:[#allocation3 + $0x58] sm:$0xff] %vm7951, %v7930
        %7964 = vst.msk [vmem:[#allocation3 + $0x60] sm:$0xff] %vm7951, %v7931
        %7965 = vst.msk [vmem:[#allocation3 + $0x68] sm:$0xff] %vm7951, %v7932
        %7966 = vst.msk [vmem:[#allocation3 + $0x70] sm:$0xff] %vm7951, %v7933
        %7967 = vst.msk [vmem:[#allocation3 + $0x78] sm:$0xff] %vm7951, %v7934
        %7968 = vst.msk [vmem:[#allocation3 + $0x80] sm:$0xff] %vm7951, %v7935
        %7969 = vst.msk [vmem:[#allocation3 + $0x88] sm:$0xff] %vm7951, %v7936
        %7970 = vst.msk [vmem:[#allocation3 + $0x90] sm:$0xff] %vm7951, %v7937
        %7971 = vst.msk [vmem:[#allocation3 + $0x98] sm:$0xff] %vm7951, %v7938
        %7972 = vst.msk [vmem:[#allocation3 + $0xa0] sm:$0xff] %vm7951, %v7939
        %7973 = vst.msk [vmem:[#allocation3 + $0xa8] sm:$0xff] %vm7951, %v7940
        %7974 = vst.msk [vmem:[#allocation3 + $0xb0] sm:$0xff] %vm7951, %v7941
        %7975 = vst.msk [vmem:[#allocation3 + $0xb8] sm:$0xff] %vm7951, %v7942
        %7976 = vst.msk [vmem:[#allocation3 + $0xc0] sm:$0xff] %vm7951, %v7943
        %7977 = vst.msk [vmem:[#allocation3 + $0xc8] sm:$0xff] %vm7951, %v7944
        %7978 = vst.msk [vmem:[#allocation3 + $0xd0] sm:$0xff] %vm7951, %v7945
        %7979 = vst.msk [vmem:[#allocation3 + $0xd8] sm:$0xff] %vm7951, %v7946
        %7980 = vst.msk [vmem:[#allocation3 + $0xe0] sm:$0xff] %vm7951, %v7947
        %7981 = vst.msk [vmem:[#allocation3 + $0xe8] sm:$0xff] %vm7951, %v7948
        %7982 = vst.msk [vmem:[#allocation3 + $0xf0] sm:$0xff] %vm7951, %v7949
        %7983 = vst.msk [vmem:[#allocation3 + $0xf8] sm:$0xff] %vm7951, %v7950
        %7984 = vst.msk [vmem:[#allocation2] sm:$0xff] %vm7951, %v7375
        %7985 = vst.msk [vmem:[#allocation2 + $0x8] sm:$0xff] %vm7951, %v7376
        %7986 = vst.msk [vmem:[#allocation2 + $0x10] sm:$0xff] %vm7951, %v7377
        %7987 = vst.msk [vmem:[#allocation2 + $0x18] sm:$0xff] %vm7951, %v7378
        %7988 = vst.msk [vmem:[#allocation2 + $0x20] sm:$0xff] %vm7951, %v7379
        %7989 = vst.msk [vmem:[#allocation2 + $0x28] sm:$0xff] %vm7951, %v7380
        %7990 = vst.msk [vmem:[#allocation2 + $0x30] sm:$0xff] %vm7951, %v7381
        %7991 = vst.msk [vmem:[#allocation2 + $0x38] sm:$0xff] %vm7951, %v7382
        %7992 = vst.msk [vmem:[#allocation2 + $0x40] sm:$0xff] %vm7951, %v7383
        %7993 = vst.msk [vmem:[#allocation2 + $0x48] sm:$0xff] %vm7951, %v7384
        %7994 = vst.msk [vmem:[#allocation2 + $0x50] sm:$0xff] %vm7951, %v7385
        %7995 = vst.msk [vmem:[#allocation2 + $0x58] sm:$0xff] %vm7951, %v7386
        %7996 = vst.msk [vmem:[#allocation2 + $0x60] sm:$0xff] %vm7951, %v7387
        %7997 = vst.msk [vmem:[#allocation2 + $0x68] sm:$0xff] %vm7951, %v7388
        %7998 = vst.msk [vmem:[#allocation2 + $0x70] sm:$0xff] %vm7951, %v7389
        %7999 = vst.msk [vmem:[#allocation2 + $0x78] sm:$0xff] %vm7951, %v7390
        %8000 = vst.msk [vmem:[#allocation2 + $0x80] sm:$0xff] %vm7951, %v7391
        %8001 = vst.msk [vmem:[#allocation2 + $0x88] sm:$0xff] %vm7951, %v7392
        %8002 = vst.msk [vmem:[#allocation2 + $0x90] sm:$0xff] %vm7951, %v7393
        %8003 = vst.msk [vmem:[#allocation2 + $0x98] sm:$0xff] %vm7951, %v7394
        %8004 = vst.msk [vmem:[#allocation2 + $0xa0] sm:$0xff] %vm7951, %v7395
        %8005 = vst.msk [vmem:[#allocation2 + $0xa8] sm:$0xff] %vm7951, %v7396
        %8006 = vst.msk [vmem:[#allocation2 + $0xb0] sm:$0xff] %vm7951, %v7397
        %8007 = vst.msk [vmem:[#allocation2 + $0xb8] sm:$0xff] %vm7951, %v7398
        %8008 = vst.msk [vmem:[#allocation2 + $0xc0] sm:$0xff] %vm7951, %v7399
        %8009 = vst.msk [vmem:[#allocation2 + $0xc8] sm:$0xff] %vm7951, %v7400
        %8010 = vst.msk [vmem:[#allocation2 + $0xd0] sm:$0xff] %vm7951, %v7401
        %8011 = vst.msk [vmem:[#allocation2 + $0xd8] sm:$0xff] %vm7951, %v7402
        %8012 = vst.msk [vmem:[#allocation2 + $0xe0] sm:$0xff] %vm7951, %v7403
        %8013 = vst.msk [vmem:[#allocation2 + $0xe8] sm:$0xff] %vm7951, %v7404
        %8014 = vst.msk [vmem:[#allocation2 + $0xf0] sm:$0xff] %vm7951, %v7405
        %8015 = vst.msk [vmem:[#allocation2 + $0xf8] sm:$0xff] %vm7951, %v7406
        %v8016 = vld [vmem:[%s408] sm:$0xff]
        %v8017 = vld [vmem:[%s408 + $0x8] sm:$0xff]
        %v8018 = vld [vmem:[%s408 + $0x10] sm:$0xff]
        %v8019 = vld [vmem:[%s408 + $0x18] sm:$0xff]
        %v8020 = vld [vmem:[%s408 + $0x20] sm:$0xff]
        %v8021 = vld [vmem:[%s408 + $0x28] sm:$0xff]
        %v8022 = vld [vmem:[%s408 + $0x30] sm:$0xff]
        %v8023 = vld [vmem:[%s408 + $0x38] sm:$0xff]
        %v8024 = vld [vmem:[%s408 + $0x40] sm:$0xff]
        %v8025 = vld [vmem:[%s408 + $0x48] sm:$0xff]
        %v8026 = vld [vmem:[%s408 + $0x50] sm:$0xff]
        %v8027 = vld [vmem:[%s408 + $0x58] sm:$0xff]
        %v8028 = vld [vmem:[%s408 + $0x60] sm:$0xff]
        %v8029 = vld [vmem:[%s408 + $0x68] sm:$0xff]
        %v8030 = vld [vmem:[%s408 + $0x70] sm:$0xff]
        %v8031 = vld [vmem:[%s408 + $0x78] sm:$0xff]
        %8032 = vmatprep.subr.mxu0 0.0
        %8033 = vmatpush1.msra.mxu0 %v8016
        %8034 = vmatprep.subr.mxu0 0.0
        %8035 = vmatpush1.msra.mxu0 %v8017
        %8036 = vmatprep.subr.mxu0 0.0
        %8037 = vmatpush1.msra.mxu0 %v8018
        %8038 = vmatprep.subr.mxu0 0.0
        %8039 = vmatpush1.msra.mxu0 %v8019
        %8040 = vmatprep.subr.mxu0 0.0
        %8041 = vmatpush1.msra.mxu0 %v8020
        %8042 = vmatprep.subr.mxu0 0.0
        %8043 = vmatpush1.msra.mxu0 %v8021
        %8044 = vmatprep.subr.mxu0 0.0
        %8045 = vmatpush1.msra.mxu0 %v8022
        %8046 = vmatprep.subr.mxu0 0.0
        %8047 = vmatpush1.msra.mxu0 %v8023
        %8048 = vmatprep.subr.mxu0 0.0
        %8049 = vmatpush1.msra.mxu0 %v8024
        %8050 = vmatprep.subr.mxu0 0.0
        %8051 = vmatpush1.msra.mxu0 %v8025
        %8052 = vmatprep.subr.mxu0 0.0
        %8053 = vmatpush1.msra.mxu0 %v8026
        %8054 = vmatprep.subr.mxu0 0.0
        %8055 = vmatpush1.msra.mxu0 %v8027
        %8056 = vmatprep.subr.mxu0 0.0
        %8057 = vmatpush1.msra.mxu0 %v8028
        %8058 = vmatprep.subr.mxu0 0.0
        %8059 = vmatpush1.msra.mxu0 %v8029
        %8060 = vmatprep.subr.mxu0 0.0
        %8061 = vmatpush1.msra.mxu0 %v8030
        %8062 = vmatprep.subr.mxu0 0.0
        %8063 = vmatpush1.msra.mxu0 %v8031
        %8064 = vmatprep.subr.mxu0 0.0
        %8065 = vmatpush1.msra.mxu0 0.0
        %8066 = vmatprep.subr.mxu0 0.0
        %8067 = vmatpush1.msra.mxu0 0.0
        %8068 = vmatprep.subr.mxu0 0.0
        %8069 = vmatpush1.msra.mxu0 0.0
        %8070 = vmatprep.subr.mxu0 0.0
        %8071 = vmatpush1.msra.mxu0 0.0
        %8072 = vmatprep.subr.mxu0 0.0
        %8073 = vmatpush1.msra.mxu0 0.0
        %8074 = vmatprep.subr.mxu0 0.0
        %8075 = vmatpush1.msra.mxu0 0.0
        %8076 = vmatprep.subr.mxu0 0.0
        %8077 = vmatpush1.msra.mxu0 0.0
        %8078 = vmatprep.subr.mxu0 0.0
        %8079 = vmatpush1.msra.mxu0 0.0
        %8080 = vmatprep.subr.mxu0 0.0
        %8081 = vmatpush1.msra.mxu0 0.0
        %8082 = vmatprep.subr.mxu0 0.0
        %8083 = vmatpush1.msra.mxu0 0.0
        %8084 = vmatprep.subr.mxu0 0.0
        %8085 = vmatpush1.msra.mxu0 0.0
        %8086 = vmatprep.subr.mxu0 0.0
        %8087 = vmatpush1.msra.mxu0 0.0
        %8088 = vmatprep.subr.mxu0 0.0
        %8089 = vmatpush1.msra.mxu0 0.0
        %8090 = vmatprep.subr.mxu0 0.0
        %8091 = vmatpush1.msra.mxu0 0.0
        %8092 = vmatprep.subr.mxu0 0.0
        %8093 = vmatpush1.msra.mxu0 0.0
        %8094 = vmatprep.subr.mxu0 0.0
        %8095 = vmatpush1.msra.mxu0 0.0
        %8096 = vmatprep.mubr.f32.mxu0 0.0
        %8097 = vmatmul.mubr.f32.gmra.mrb[0].mxu0 %v7759
        %v8098 = vpop.f32.mrb[0].mxu0
        %v8099 = vadd.f32 0.0, %v8098
        %v8100 = vpop.f32.mrb[0].mxu0
        %8101 = vmatprep.mubr.f32.mxu0 0.0
        %8102 = vmatmul.mubr.f32.gmra.mrb[0].mxu0 %v7760
        %v8103 = vpop.f32.mrb[0].mxu0
        %v8104 = vadd.f32 0.0, %v8103
        %v8105 = vpop.f32.mrb[0].mxu0
        %8106 = vmatprep.mubr.f32.mxu0 0.0
        %8107 = vmatmul.mubr.f32.gmra.mrb[0].mxu0 %v7761
        %v8108 = vpop.f32.mrb[0].mxu0
        %v8109 = vadd.f32 0.0, %v8108
        %v8110 = vpop.f32.mrb[0].mxu0
        %8111 = vmatprep.mubr.f32.mxu0 0.0
        %8112 = vmatmul.mubr.f32.gmra.mrb[0].mxu0 %v7762
        %v8113 = vpop.f32.mrb[0].mxu0
        %v8114 = vadd.f32 0.0, %v8113
        %v8115 = vpop.f32.mrb[0].mxu0
        %8116 = vmatprep.mubr.f32.mxu0 0.0
        %8117 = vmatmul.mubr.f32.gmra.mrb[0].mxu0 %v7763
        %v8118 = vpop.f32.mrb[0].mxu0
        %v8119 = vadd.f32 0.0, %v8118
        %v8120 = vpop.f32.mrb[0].mxu0
        %8121 = vmatprep.mubr.f32.mxu0 0.0
        %8122 = vmatmul.mubr.f32.gmra.mrb[0].mxu0 %v7764
        %v8123 = vpop.f32.mrb[0].mxu0
        %v8124 = vadd.f32 0.0, %v8123
        %v8125 = vpop.f32.mrb[0].mxu0
        %8126 = vmatprep.mubr.f32.mxu0 0.0
        %8127 = vmatmul.mubr.f32.gmra.mrb[0].mxu0 %v7765
        %v8128 = vpop.f32.mrb[0].mxu0
        %v8129 = vadd.f32 0.0, %v8128
        %v8130 = vpop.f32.mrb[0].mxu0
        %8131 = vmatprep.mubr.f32.mxu0 0.0
        %8132 = vmatmul.mubr.f32.gmra.mrb[0].mxu0 %v7766
        %v8133 = vpop.f32.mrb[0].mxu0
        %v8134 = vadd.f32 0.0, %v8133
        %v8135 = vpop.f32.mrb[0].mxu0
        %8136 = vmatprep.mubr.f32.mxu0 0.0
        %8137 = vmatmul.mubr.f32.gmra.mrb[0].mxu0 %v7767
        %v8138 = vpop.f32.mrb[0].mxu0
        %v8139 = vadd.f32 0.0, %v8138
        %v8140 = vpop.f32.mrb[0].mxu0
        %8141 = vmatprep.mubr.f32.mxu0 0.0
        %8142 = vmatmul.mubr.f32.gmra.mrb[0].mxu0 %v7768
        %v8143 = vpop.f32.mrb[0].mxu0
        %v8144 = vadd.f32 0.0, %v8143
        %v8145 = vpop.f32.mrb[0].mxu0
        %8146 = vmatprep.mubr.f32.mxu0 0.0
        %8147 = vmatmul.mubr.f32.gmra.mrb[0].mxu0 %v7769
        %v8148 = vpop.f32.mrb[0].mxu0
        %v8149 = vadd.f32 0.0, %v8148
        %v8150 = vpop.f32.mrb[0].mxu0
        %8151 = vmatprep.mubr.f32.mxu0 0.0
        %8152 = vmatmul.mubr.f32.gmra.mrb[0].mxu0 %v7770
        %v8153 = vpop.f32.mrb[0].mxu0
        %v8154 = vadd.f32 0.0, %v8153
        %v8155 = vpop.f32.mrb[0].mxu0
        %8156 = vmatprep.mubr.f32.mxu0 0.0
        %8157 = vmatmul.mubr.f32.gmra.mrb[0].mxu0 %v7771
        %v8158 = vpop.f32.mrb[0].mxu0
        %v8159 = vadd.f32 0.0, %v8158
        %v8160 = vpop.f32.mrb[0].mxu0
        %8161 = vmatprep.mubr.f32.mxu0 0.0
        %8162 = vmatmul.mubr.f32.gmra.mrb[0].mxu0 %v7772
        %v8163 = vpop.f32.mrb[0].mxu0
        %v8164 = vadd.f32 0.0, %v8163
        %v8165 = vpop.f32.mrb[0].mxu0
        %8166 = vmatprep.mubr.f32.mxu0 0.0
        %8167 = vmatmul.mubr.f32.gmra.mrb[0].mxu0 %v7773
        %v8168 = vpop.f32.mrb[0].mxu0
        %v8169 = vadd.f32 0.0, %v8168
        %v8170 = vpop.f32.mrb[0].mxu0
        %8171 = vmatprep.mubr.f32.mxu0 0.0
        %8172 = vmatmul.mubr.f32.gmra.mrb[0].mxu0 %v7774
        %v8173 = vpop.f32.mrb[0].mxu0
        %v8174 = vadd.f32 0.0, %v8173
        %v8175 = vpop.f32.mrb[0].mxu0
        %8176 = vmatprep.mubr.f32.mxu0 0.0
        %8177 = vmatmul.mubr.f32.gmra.mrb[0].mxu0 %v7775
        %v8178 = vpop.f32.mrb[0].mxu0
        %v8179 = vadd.f32 0.0, %v8178
        %v8180 = vpop.f32.mrb[0].mxu0
        %8181 = vmatprep.mubr.f32.mxu0 0.0
        %8182 = vmatmul.mubr.f32.gmra.mrb[0].mxu0 %v7776
        %v8183 = vpop.f32.mrb[0].mxu0
        %v8184 = vadd.f32 0.0, %v8183
        %v8185 = vpop.f32.mrb[0].mxu0
        %8186 = vmatprep.mubr.f32.mxu0 0.0
        %8187 = vmatmul.mubr.f32.gmra.mrb[0].mxu0 %v7777
        %v8188 = vpop.f32.mrb[0].mxu0
        %v8189 = vadd.f32 0.0, %v8188
        %v8190 = vpop.f32.mrb[0].mxu0
        %8191 = vmatprep.mubr.f32.mxu0 0.0
        %8192 = vmatmul.mubr.f32.gmra.mrb[0].mxu0 %v7778
        %v8193 = vpop.f32.mrb[0].mxu0
        %v8194 = vadd.f32 0.0, %v8193
        %v8195 = vpop.f32.mrb[0].mxu0
        %8196 = vmatprep.mubr.f32.mxu0 0.0
        %8197 = vmatmul.mubr.f32.gmra.mrb[0].mxu0 %v7779
        %v8198 = vpop.f32.mrb[0].mxu0
        %v8199 = vadd.f32 0.0, %v8198
        %v8200 = vpop.f32.mrb[0].mxu0
        %8201 = vmatprep.mubr.f32.mxu0 0.0
        %8202 = vmatmul.mubr.f32.gmra.mrb[0].mxu0 %v7780
        %v8203 = vpop.f32.mrb[0].mxu0
        %v8204 = vadd.f32 0.0, %v8203
        %v8205 = vpop.f32.mrb[0].mxu0
        %8206 = vmatprep.mubr.f32.mxu0 0.0
        %8207 = vmatmul.mubr.f32.gmra.mrb[0].mxu0 %v7781
        %v8208 = vpop.f32.mrb[0].mxu0
        %v8209 = vadd.f32 0.0, %v8208
        %v8210 = vpop.f32.mrb[0].mxu0
        %8211 = vmatprep.mubr.f32.mxu0 0.0
        %8212 = vmatmul.mubr.f32.gmra.mrb[0].mxu0 %v7782
        %v8213 = vpop.f32.mrb[0].mxu0
        %v8214 = vadd.f32 0.0, %v8213
        %v8215 = vpop.f32.mrb[0].mxu0
        %8216 = vmatprep.mubr.f32.mxu0 0.0
        %8217 = vmatmul.mubr.f32.gmra.mrb[0].mxu0 %v7783
        %v8218 = vpop.f32.mrb[0].mxu0
        %v8219 = vadd.f32 0.0, %v8218
        %v8220 = vpop.f32.mrb[0].mxu0
        %8221 = vmatprep.mubr.f32.mxu0 0.0
        %8222 = vmatmul.mubr.f32.gmra.mrb[0].mxu0 %v7784
        %v8223 = vpop.f32.mrb[0].mxu0
        %v8224 = vadd.f32 0.0, %v8223
        %v8225 = vpop.f32.mrb[0].mxu0
        %8226 = vmatprep.mubr.f32.mxu0 0.0
        %8227 = vmatmul.mubr.f32.gmra.mrb[0].mxu0 %v7785
        %v8228 = vpop.f32.mrb[0].mxu0
        %v8229 = vadd.f32 0.0, %v8228
        %v8230 = vpop.f32.mrb[0].mxu0
        %8231 = vmatprep.mubr.f32.mxu0 0.0
        %8232 = vmatmul.mubr.f32.gmra.mrb[0].mxu0 %v7786
        %v8233 = vpop.f32.mrb[0].mxu0
        %v8234 = vadd.f32 0.0, %v8233
        %v8235 = vpop.f32.mrb[0].mxu0
        %8236 = vmatprep.mubr.f32.mxu0 0.0
        %8237 = vmatmul.mubr.f32.gmra.mrb[0].mxu0 %v7787
        %v8238 = vpop.f32.mrb[0].mxu0
        %v8239 = vadd.f32 0.0, %v8238
        %v8240 = vpop.f32.mrb[0].mxu0
        %8241 = vmatprep.mubr.f32.mxu0 0.0
        %8242 = vmatmul.mubr.f32.gmra.mrb[0].mxu0 %v7788
        %v8243 = vpop.f32.mrb[0].mxu0
        %v8244 = vadd.f32 0.0, %v8243
        %v8245 = vpop.f32.mrb[0].mxu0
        %8246 = vmatprep.mubr.f32.mxu0 0.0
        %8247 = vmatmul.mubr.f32.gmra.mrb[0].mxu0 %v7789
        %v8248 = vpop.f32.mrb[0].mxu0
        %v8249 = vadd.f32 0.0, %v8248
        %v8250 = vpop.f32.mrb[0].mxu0
        %8251 = vmatprep.mubr.f32.mxu0 0.0
        %8252 = vmatmul.mubr.f32.gmra.mrb[0].mxu0 %v7790
        %v8253 = vpop.f32.mrb[0].mxu0
        %v8254 = vadd.f32 0.0, %v8253
        %v8255 = vpop.f32.mrb[0].mxu0
        %8256 = vdwg.mxu0
        %v8257 = vld [vmem:[%s5] sm:$0xff]
        %v8258 = vmul.f32 %v8099, %v8257
        %v8259 = vmul.f32 %v8104, %v8257
        %v8260 = vmul.f32 %v8109, %v8257
        %v8261 = vmul.f32 %v8114, %v8257
        %v8262 = vmul.f32 %v8119, %v8257
        %v8263 = vmul.f32 %v8124, %v8257
        %v8264 = vmul.f32 %v8129, %v8257
        %v8265 = vmul.f32 %v8134, %v8257
        %v8266 = vmul.f32 %v8139, %v8257
        %v8267 = vmul.f32 %v8144, %v8257
        %v8268 = vmul.f32 %v8149, %v8257
        %v8269 = vmul.f32 %v8154, %v8257
        %v8270 = vmul.f32 %v8159, %v8257
        %v8271 = vmul.f32 %v8164, %v8257
        %v8272 = vmul.f32 %v8169, %v8257
        %v8273 = vmul.f32 %v8174, %v8257
        %v8274 = vmul.f32 %v8179, %v8257
        %v8275 = vmul.f32 %v8184, %v8257
        %v8276 = vmul.f32 %v8189, %v8257
        %v8277 = vmul.f32 %v8194, %v8257
        %v8278 = vmul.f32 %v8199, %v8257
        %v8279 = vmul.f32 %v8204, %v8257
        %v8280 = vmul.f32 %v8209, %v8257
        %v8281 = vmul.f32 %v8214, %v8257
        %v8282 = vmul.f32 %v8219, %v8257
        %v8283 = vmul.f32 %v8224, %v8257
        %v8284 = vmul.f32 %v8229, %v8257
        %v8285 = vmul.f32 %v8234, %v8257
        %v8286 = vmul.f32 %v8239, %v8257
        %v8287 = vmul.f32 %v8244, %v8257
        %v8288 = vmul.f32 %v8249, %v8257
        %v8289 = vmul.f32 %v8254, %v8257
        %v8290 = vrot.slane %v8258, 4
        %v8291 = vadd.f32 %v8258, %v8290
        %v8292 = vrot.slane %v8291, 2
        %v8293 = vadd.f32 %v8291, %v8292
        %v8294 = vrot.slane %v8293, 1
        %v8295 = vadd.f32 %v8293, %v8294
        %v8296 = vrot.slane %v8259, 4
        %v8297 = vadd.f32 %v8259, %v8296
        %v8298 = vrot.slane %v8297, 2
        %v8299 = vadd.f32 %v8297, %v8298
        %v8300 = vrot.slane %v8299, 1
        %v8301 = vadd.f32 %v8299, %v8300
        %v8302 = vrot.slane %v8260, 4
        %v8303 = vadd.f32 %v8260, %v8302
        %v8304 = vrot.slane %v8303, 2
        %v8305 = vadd.f32 %v8303, %v8304
        %v8306 = vrot.slane %v8305, 1
        %v8307 = vadd.f32 %v8305, %v8306
        %v8308 = vrot.slane %v8261, 4
        %v8309 = vadd.f32 %v8261, %v8308
        %v8310 = vrot.slane %v8309, 2
        %v8311 = vadd.f32 %v8309, %v8310
        %v8312 = vrot.slane %v8311, 1
        %v8313 = vadd.f32 %v8311, %v8312
        %v8314 = vrot.slane %v8262, 4
        %v8315 = vadd.f32 %v8262, %v8314
        %v8316 = vrot.slane %v8315, 2
        %v8317 = vadd.f32 %v8315, %v8316
        %v8318 = vrot.slane %v8317, 1
        %v8319 = vadd.f32 %v8317, %v8318
        %v8320 = vrot.slane %v8263, 4
        %v8321 = vadd.f32 %v8263, %v8320
        %v8322 = vrot.slane %v8321, 2
        %v8323 = vadd.f32 %v8321, %v8322
        %v8324 = vrot.slane %v8323, 1
        %v8325 = vadd.f32 %v8323, %v8324
        %v8326 = vrot.slane %v8264, 4
        %v8327 = vadd.f32 %v8264, %v8326
        %v8328 = vrot.slane %v8327, 2
        %v8329 = vadd.f32 %v8327, %v8328
        %v8330 = vrot.slane %v8329, 1
        %v8331 = vadd.f32 %v8329, %v8330
        %v8332 = vrot.slane %v8265, 4
        %v8333 = vadd.f32 %v8265, %v8332
        %v8334 = vrot.slane %v8333, 2
        %v8335 = vadd.f32 %v8333, %v8334
        %v8336 = vrot.slane %v8335, 1
        %v8337 = vadd.f32 %v8335, %v8336
        %v8338 = vrot.slane %v8266, 4
        %v8339 = vadd.f32 %v8266, %v8338
        %v8340 = vrot.slane %v8339, 2
        %v8341 = vadd.f32 %v8339, %v8340
        %v8342 = vrot.slane %v8341, 1
        %v8343 = vadd.f32 %v8341, %v8342
        %v8344 = vrot.slane %v8267, 4
        %v8345 = vadd.f32 %v8267, %v8344
        %v8346 = vrot.slane %v8345, 2
        %v8347 = vadd.f32 %v8345, %v8346
        %v8348 = vrot.slane %v8347, 1
        %v8349 = vadd.f32 %v8347, %v8348
        %v8350 = vrot.slane %v8268, 4
        %v8351 = vadd.f32 %v8268, %v8350
        %v8352 = vrot.slane %v8351, 2
        %v8353 = vadd.f32 %v8351, %v8352
        %v8354 = vrot.slane %v8353, 1
        %v8355 = vadd.f32 %v8353, %v8354
        %v8356 = vrot.slane %v8269, 4
        %v8357 = vadd.f32 %v8269, %v8356
        %v8358 = vrot.slane %v8357, 2
        %v8359 = vadd.f32 %v8357, %v8358
        %v8360 = vrot.slane %v8359, 1
        %v8361 = vadd.f32 %v8359, %v8360
        %v8362 = vrot.slane %v8270, 4
        %v8363 = vadd.f32 %v8270, %v8362
        %v8364 = vrot.slane %v8363, 2
        %v8365 = vadd.f32 %v8363, %v8364
        %v8366 = vrot.slane %v8365, 1
        %v8367 = vadd.f32 %v8365, %v8366
        %v8368 = vrot.slane %v8271, 4
        %v8369 = vadd.f32 %v8271, %v8368
        %v8370 = vrot.slane %v8369, 2
        %v8371 = vadd.f32 %v8369, %v8370
        %v8372 = vrot.slane %v8371, 1
        %v8373 = vadd.f32 %v8371, %v8372
        %v8374 = vrot.slane %v8272, 4
        %v8375 = vadd.f32 %v8272, %v8374
        %v8376 = vrot.slane %v8375, 2
        %v8377 = vadd.f32 %v8375, %v8376
        %v8378 = vrot.slane %v8377, 1
        %v8379 = vadd.f32 %v8377, %v8378
        %v8380 = vrot.slane %v8273, 4
        %v8381 = vadd.f32 %v8273, %v8380
        %v8382 = vrot.slane %v8381, 2
        %v8383 = vadd.f32 %v8381, %v8382
        %v8384 = vrot.slane %v8383, 1
        %v8385 = vadd.f32 %v8383, %v8384
        %v8386 = vrot.slane %v8274, 4
        %v8387 = vadd.f32 %v8274, %v8386
        %v8388 = vrot.slane %v8387, 2
        %v8389 = vadd.f32 %v8387, %v8388
        %v8390 = vrot.slane %v8389, 1
        %v8391 = vadd.f32 %v8389, %v8390
        %v8392 = vrot.slane %v8275, 4
        %v8393 = vadd.f32 %v8275, %v8392
        %v8394 = vrot.slane %v8393, 2
        %v8395 = vadd.f32 %v8393, %v8394
        %v8396 = vrot.slane %v8395, 1
        %v8397 = vadd.f32 %v8395, %v8396
        %v8398 = vrot.slane %v8276, 4
        %v8399 = vadd.f32 %v8276, %v8398
        %v8400 = vrot.slane %v8399, 2
        %v8401 = vadd.f32 %v8399, %v8400
        %v8402 = vrot.slane %v8401, 1
        %v8403 = vadd.f32 %v8401, %v8402
        %v8404 = vrot.slane %v8277, 4
        %v8405 = vadd.f32 %v8277, %v8404
        %v8406 = vrot.slane %v8405, 2
        %v8407 = vadd.f32 %v8405, %v8406
        %v8408 = vrot.slane %v8407, 1
        %v8409 = vadd.f32 %v8407, %v8408
        %v8410 = vrot.slane %v8278, 4
        %v8411 = vadd.f32 %v8278, %v8410
        %v8412 = vrot.slane %v8411, 2
        %v8413 = vadd.f32 %v8411, %v8412
        %v8414 = vrot.slane %v8413, 1
        %v8415 = vadd.f32 %v8413, %v8414
        %v8416 = vrot.slane %v8279, 4
        %v8417 = vadd.f32 %v8279, %v8416
        %v8418 = vrot.slane %v8417, 2
        %v8419 = vadd.f32 %v8417, %v8418
        %v8420 = vrot.slane %v8419, 1
        %v8421 = vadd.f32 %v8419, %v8420
        %v8422 = vrot.slane %v8280, 4
        %v8423 = vadd.f32 %v8280, %v8422
        %v8424 = vrot.slane %v8423, 2
        %v8425 = vadd.f32 %v8423, %v8424
        %v8426 = vrot.slane %v8425, 1
        %v8427 = vadd.f32 %v8425, %v8426
        %v8428 = vrot.slane %v8281, 4
        %v8429 = vadd.f32 %v8281, %v8428
        %v8430 = vrot.slane %v8429, 2
        %v8431 = vadd.f32 %v8429, %v8430
        %v8432 = vrot.slane %v8431, 1
        %v8433 = vadd.f32 %v8431, %v8432
        %v8434 = vrot.slane %v8282, 4
        %v8435 = vadd.f32 %v8282, %v8434
        %v8436 = vrot.slane %v8435, 2
        %v8437 = vadd.f32 %v8435, %v8436
        %v8438 = vrot.slane %v8437, 1
        %v8439 = vadd.f32 %v8437, %v8438
        %v8440 = vrot.slane %v8283, 4
        %v8441 = vadd.f32 %v8283, %v8440
        %v8442 = vrot.slane %v8441, 2
        %v8443 = vadd.f32 %v8441, %v8442
        %v8444 = vrot.slane %v8443, 1
        %v8445 = vadd.f32 %v8443, %v8444
        %v8446 = vrot.slane %v8284, 4
        %v8447 = vadd.f32 %v8284, %v8446
        %v8448 = vrot.slane %v8447, 2
        %v8449 = vadd.f32 %v8447, %v8448
        %v8450 = vrot.slane %v8449, 1
        %v8451 = vadd.f32 %v8449, %v8450
        %v8452 = vrot.slane %v8285, 4
        %v8453 = vadd.f32 %v8285, %v8452
        %v8454 = vrot.slane %v8453, 2
        %v8455 = vadd.f32 %v8453, %v8454
        %v8456 = vrot.slane %v8455, 1
        %v8457 = vadd.f32 %v8455, %v8456
        %v8458 = vrot.slane %v8286, 4
        %v8459 = vadd.f32 %v8286, %v8458
        %v8460 = vrot.slane %v8459, 2
        %v8461 = vadd.f32 %v8459, %v8460
        %v8462 = vrot.slane %v8461, 1
        %v8463 = vadd.f32 %v8461, %v8462
        %v8464 = vrot.slane %v8287, 4
        %v8465 = vadd.f32 %v8287, %v8464
        %v8466 = vrot.slane %v8465, 2
        %v8467 = vadd.f32 %v8465, %v8466
        %v8468 = vrot.slane %v8467, 1
        %v8469 = vadd.f32 %v8467, %v8468
        %v8470 = vrot.slane %v8288, 4
        %v8471 = vadd.f32 %v8288, %v8470
        %v8472 = vrot.slane %v8471, 2
        %v8473 = vadd.f32 %v8471, %v8472
        %v8474 = vrot.slane %v8473, 1
        %v8475 = vadd.f32 %v8473, %v8474
        %v8476 = vrot.slane %v8289, 4
        %v8477 = vadd.f32 %v8289, %v8476
        %v8478 = vrot.slane %v8477, 2
        %v8479 = vadd.f32 %v8477, %v8478
        %v8480 = vrot.slane %v8479, 1
        %v8481 = vadd.f32 %v8479, %v8480
        %8483 = vset.pattern.permute.xlu0 0
        %8484 = vperm.xlu0 %8483, %v7440
        %v8485 = vpop.permute.xlu0 %8484
        %8488 = vset.pattern.permute.xlu0 0
        %8489 = vperm.xlu0 %8488, %v7442
        %v8490 = vpop.permute.xlu0 %8489
        %8493 = vset.pattern.permute.xlu0 0
        %8494 = vperm.xlu0 %8493, %v7444
        %v8495 = vpop.permute.xlu0 %8494
        %8498 = vset.pattern.permute.xlu0 0
        %8499 = vperm.xlu0 %8498, %v7446
        %v8500 = vpop.permute.xlu0 %8499
        %8503 = vset.pattern.permute.xlu0 0
        %8504 = vperm.xlu0 %8503, %v7448
        %v8505 = vpop.permute.xlu0 %8504
        %8508 = vset.pattern.permute.xlu0 0
        %8509 = vperm.xlu0 %8508, %v7450
        %v8510 = vpop.permute.xlu0 %8509
        %8513 = vset.pattern.permute.xlu0 0
        %8514 = vperm.xlu0 %8513, %v7452
        %v8515 = vpop.permute.xlu0 %8514
        %8518 = vset.pattern.permute.xlu0 0
        %8519 = vperm.xlu0 %8518, %v7454
        %v8520 = vpop.permute.xlu0 %8519
        %8523 = vset.pattern.permute.xlu0 0
        %8524 = vperm.xlu0 %8523, %v7456
        %v8525 = vpop.permute.xlu0 %8524
        %8528 = vset.pattern.permute.xlu0 0
        %8529 = vperm.xlu0 %8528, %v7458
        %v8530 = vpop.permute.xlu0 %8529
        %8533 = vset.pattern.permute.xlu0 0
        %8534 = vperm.xlu0 %8533, %v7460
        %v8535 = vpop.permute.xlu0 %8534
        %8538 = vset.pattern.permute.xlu0 0
        %8539 = vperm.xlu0 %8538, %v7462
        %v8540 = vpop.permute.xlu0 %8539
        %8543 = vset.pattern.permute.xlu0 0
        %8544 = vperm.xlu0 %8543, %v7464
        %v8545 = vpop.permute.xlu0 %8544
        %8548 = vset.pattern.permute.xlu0 0
        %8549 = vperm.xlu0 %8548, %v7466
        %v8550 = vpop.permute.xlu0 %8549
        %8553 = vset.pattern.permute.xlu0 0
        %8554 = vperm.xlu0 %8553, %v7468
        %v8555 = vpop.permute.xlu0 %8554
        %8558 = vset.pattern.permute.xlu0 0
        %8559 = vperm.xlu0 %8558, %v7470
        %v8560 = vpop.permute.xlu0 %8559
        %8563 = vset.pattern.permute.xlu0 0
        %8564 = vperm.xlu0 %8563, %v7472
        %v8565 = vpop.permute.xlu0 %8564
        %8568 = vset.pattern.permute.xlu0 0
        %8569 = vperm.xlu0 %8568, %v7474
        %v8570 = vpop.permute.xlu0 %8569
        %8573 = vset.pattern.permute.xlu0 0
        %8574 = vperm.xlu0 %8573, %v7476
        %v8575 = vpop.permute.xlu0 %8574
        %8578 = vset.pattern.permute.xlu0 0
        %8579 = vperm.xlu0 %8578, %v7478
        %v8580 = vpop.permute.xlu0 %8579
        %8583 = vset.pattern.permute.xlu0 0
        %8584 = vperm.xlu0 %8583, %v7480
        %v8585 = vpop.permute.xlu0 %8584
        %8588 = vset.pattern.permute.xlu0 0
        %8589 = vperm.xlu0 %8588, %v7482
        %v8590 = vpop.permute.xlu0 %8589
        %8593 = vset.pattern.permute.xlu0 0
        %8594 = vperm.xlu0 %8593, %v7484
        %v8595 = vpop.permute.xlu0 %8594
        %8598 = vset.pattern.permute.xlu0 0
        %8599 = vperm.xlu0 %8598, %v7486
        %v8600 = vpop.permute.xlu0 %8599
        %8603 = vset.pattern.permute.xlu0 0
        %8604 = vperm.xlu0 %8603, %v7488
        %v8605 = vpop.permute.xlu0 %8604
        %8608 = vset.pattern.permute.xlu0 0
        %8609 = vperm.xlu0 %8608, %v7490
        %v8610 = vpop.permute.xlu0 %8609
        %8613 = vset.pattern.permute.xlu0 0
        %8614 = vperm.xlu0 %8613, %v7492
        %v8615 = vpop.permute.xlu0 %8614
        %8618 = vset.pattern.permute.xlu0 0
        %8619 = vperm.xlu0 %8618, %v7494
        %v8620 = vpop.permute.xlu0 %8619
        %8623 = vset.pattern.permute.xlu0 0
        %8624 = vperm.xlu0 %8623, %v7496
        %v8625 = vpop.permute.xlu0 %8624
        %8628 = vset.pattern.permute.xlu0 0
        %8629 = vperm.xlu0 %8628, %v7498
        %v8630 = vpop.permute.xlu0 %8629
        %8633 = vset.pattern.permute.xlu0 0
        %8634 = vperm.xlu0 %8633, %v7500
        %v8635 = vpop.permute.xlu0 %8634
        %8638 = vset.pattern.permute.xlu0 0
        %8639 = vperm.xlu0 %8638, %v7502
        %v8640 = vpop.permute.xlu0 %8639
        %v8642 = vmul.f32 %v8485, %v8257
        %v8643 = vmul.f32 %v8490, %v8257
        %v8644 = vmul.f32 %v8495, %v8257
        %v8645 = vmul.f32 %v8500, %v8257
        %v8646 = vmul.f32 %v8505, %v8257
        %v8647 = vmul.f32 %v8510, %v8257
        %v8648 = vmul.f32 %v8515, %v8257
        %v8649 = vmul.f32 %v8520, %v8257
        %v8650 = vmul.f32 %v8525, %v8257
        %v8651 = vmul.f32 %v8530, %v8257
        %v8652 = vmul.f32 %v8535, %v8257
        %v8653 = vmul.f32 %v8540, %v8257
        %v8654 = vmul.f32 %v8545, %v8257
        %v8655 = vmul.f32 %v8550, %v8257
        %v8656 = vmul.f32 %v8555, %v8257
        %v8657 = vmul.f32 %v8560, %v8257
        %v8658 = vmul.f32 %v8565, %v8257
        %v8659 = vmul.f32 %v8570, %v8257
        %v8660 = vmul.f32 %v8575, %v8257
        %v8661 = vmul.f32 %v8580, %v8257
        %v8662 = vmul.f32 %v8585, %v8257
        %v8663 = vmul.f32 %v8590, %v8257
        %v8664 = vmul.f32 %v8595, %v8257
        %v8665 = vmul.f32 %v8600, %v8257
        %v8666 = vmul.f32 %v8605, %v8257
        %v8667 = vmul.f32 %v8610, %v8257
        %v8668 = vmul.f32 %v8615, %v8257
        %v8669 = vmul.f32 %v8620, %v8257
        %v8670 = vmul.f32 %v8625, %v8257
        %v8671 = vmul.f32 %v8630, %v8257
        %v8672 = vmul.f32 %v8635, %v8257
        %v8673 = vmul.f32 %v8640, %v8257
        %v8674 = vrot.slane %v8642, 4
        %v8675 = vadd.f32 %v8642, %v8674
        %v8676 = vrot.slane %v8675, 2
        %v8677 = vadd.f32 %v8675, %v8676
        %v8678 = vrot.slane %v8677, 1
        %v8679 = vadd.f32 %v8677, %v8678
        %v8680 = vrot.slane %v8643, 4
        %v8681 = vadd.f32 %v8643, %v8680
        %v8682 = vrot.slane %v8681, 2
        %v8683 = vadd.f32 %v8681, %v8682
        %v8684 = vrot.slane %v8683, 1
        %v8685 = vadd.f32 %v8683, %v8684
        %v8686 = vrot.slane %v8644, 4
        %v8687 = vadd.f32 %v8644, %v8686
        %v8688 = vrot.slane %v8687, 2
        %v8689 = vadd.f32 %v8687, %v8688
        %v8690 = vrot.slane %v8689, 1
        %v8691 = vadd.f32 %v8689, %v8690
        %v8692 = vrot.slane %v8645, 4
        %v8693 = vadd.f32 %v8645, %v8692
        %v8694 = vrot.slane %v8693, 2
        %v8695 = vadd.f32 %v8693, %v8694
        %v8696 = vrot.slane %v8695, 1
        %v8697 = vadd.f32 %v8695, %v8696
        %v8698 = vrot.slane %v8646, 4
        %v8699 = vadd.f32 %v8646, %v8698
        %v8700 = vrot.slane %v8699, 2
        %v8701 = vadd.f32 %v8699, %v8700
        %v8702 = vrot.slane %v8701, 1
        %v8703 = vadd.f32 %v8701, %v8702
        %v8704 = vrot.slane %v8647, 4
        %v8705 = vadd.f32 %v8647, %v8704
        %v8706 = vrot.slane %v8705, 2
        %v8707 = vadd.f32 %v8705, %v8706
        %v8708 = vrot.slane %v8707, 1
        %v8709 = vadd.f32 %v8707, %v8708
        %v8710 = vrot.slane %v8648, 4
        %v8711 = vadd.f32 %v8648, %v8710
        %v8712 = vrot.slane %v8711, 2
        %v8713 = vadd.f32 %v8711, %v8712
        %v8714 = vrot.slane %v8713, 1
        %v8715 = vadd.f32 %v8713, %v8714
        %v8716 = vrot.slane %v8649, 4
        %v8717 = vadd.f32 %v8649, %v8716
        %v8718 = vrot.slane %v8717, 2
        %v8719 = vadd.f32 %v8717, %v8718
        %v8720 = vrot.slane %v8719, 1
        %v8721 = vadd.f32 %v8719, %v8720
        %v8722 = vrot.slane %v8650, 4
        %v8723 = vadd.f32 %v8650, %v8722
        %v8724 = vrot.slane %v8723, 2
        %v8725 = vadd.f32 %v8723, %v8724
        %v8726 = vrot.slane %v8725, 1
        %v8727 = vadd.f32 %v8725, %v8726
        %v8728 = vrot.slane %v8651, 4
        %v8729 = vadd.f32 %v8651, %v8728
        %v8730 = vrot.slane %v8729, 2
        %v8731 = vadd.f32 %v8729, %v8730
        %v8732 = vrot.slane %v8731, 1
        %v8733 = vadd.f32 %v8731, %v8732
        %v8734 = vrot.slane %v8652, 4
        %v8735 = vadd.f32 %v8652, %v8734
        %v8736 = vrot.slane %v8735, 2
        %v8737 = vadd.f32 %v8735, %v8736
        %v8738 = vrot.slane %v8737, 1
        %v8739 = vadd.f32 %v8737, %v8738
        %v8740 = vrot.slane %v8653, 4
        %v8741 = vadd.f32 %v8653, %v8740
        %v8742 = vrot.slane %v8741, 2
        %v8743 = vadd.f32 %v8741, %v8742
        %v8744 = vrot.slane %v8743, 1
        %v8745 = vadd.f32 %v8743, %v8744
        %v8746 = vrot.slane %v8654, 4
        %v8747 = vadd.f32 %v8654, %v8746
        %v8748 = vrot.slane %v8747, 2
        %v8749 = vadd.f32 %v8747, %v8748
        %v8750 = vrot.slane %v8749, 1
        %v8751 = vadd.f32 %v8749, %v8750
        %v8752 = vrot.slane %v8655, 4
        %v8753 = vadd.f32 %v8655, %v8752
        %v8754 = vrot.slane %v8753, 2
        %v8755 = vadd.f32 %v8753, %v8754
        %v8756 = vrot.slane %v8755, 1
        %v8757 = vadd.f32 %v8755, %v8756
        %v8758 = vrot.slane %v8656, 4
        %v8759 = vadd.f32 %v8656, %v8758
        %v8760 = vrot.slane %v8759, 2
        %v8761 = vadd.f32 %v8759, %v8760
        %v8762 = vrot.slane %v8761, 1
        %v8763 = vadd.f32 %v8761, %v8762
        %v8764 = vrot.slane %v8657, 4
        %v8765 = vadd.f32 %v8657, %v8764
        %v8766 = vrot.slane %v8765, 2
        %v8767 = vadd.f32 %v8765, %v8766
        %v8768 = vrot.slane %v8767, 1
        %v8769 = vadd.f32 %v8767, %v8768
        %v8770 = vrot.slane %v8658, 4
        %v8771 = vadd.f32 %v8658, %v8770
        %v8772 = vrot.slane %v8771, 2
        %v8773 = vadd.f32 %v8771, %v8772
        %v8774 = vrot.slane %v8773, 1
        %v8775 = vadd.f32 %v8773, %v8774
        %v8776 = vrot.slane %v8659, 4
        %v8777 = vadd.f32 %v8659, %v8776
        %v8778 = vrot.slane %v8777, 2
        %v8779 = vadd.f32 %v8777, %v8778
        %v8780 = vrot.slane %v8779, 1
        %v8781 = vadd.f32 %v8779, %v8780
        %v8782 = vrot.slane %v8660, 4
        %v8783 = vadd.f32 %v8660, %v8782
        %v8784 = vrot.slane %v8783, 2
        %v8785 = vadd.f32 %v8783, %v8784
        %v8786 = vrot.slane %v8785, 1
        %v8787 = vadd.f32 %v8785, %v8786
        %v8788 = vrot.slane %v8661, 4
        %v8789 = vadd.f32 %v8661, %v8788
        %v8790 = vrot.slane %v8789, 2
        %v8791 = vadd.f32 %v8789, %v8790
        %v8792 = vrot.slane %v8791, 1
        %v8793 = vadd.f32 %v8791, %v8792
        %v8794 = vrot.slane %v8662, 4
        %v8795 = vadd.f32 %v8662, %v8794
        %v8796 = vrot.slane %v8795, 2
        %v8797 = vadd.f32 %v8795, %v8796
        %v8798 = vrot.slane %v8797, 1
        %v8799 = vadd.f32 %v8797, %v8798
        %v8800 = vrot.slane %v8663, 4
        %v8801 = vadd.f32 %v8663, %v8800
        %v8802 = vrot.slane %v8801, 2
        %v8803 = vadd.f32 %v8801, %v8802
        %v8804 = vrot.slane %v8803, 1
        %v8805 = vadd.f32 %v8803, %v8804
        %v8806 = vrot.slane %v8664, 4
        %v8807 = vadd.f32 %v8664, %v8806
        %v8808 = vrot.slane %v8807, 2
        %v8809 = vadd.f32 %v8807, %v8808
        %v8810 = vrot.slane %v8809, 1
        %v8811 = vadd.f32 %v8809, %v8810
        %v8812 = vrot.slane %v8665, 4
        %v8813 = vadd.f32 %v8665, %v8812
        %v8814 = vrot.slane %v8813, 2
        %v8815 = vadd.f32 %v8813, %v8814
        %v8816 = vrot.slane %v8815, 1
        %v8817 = vadd.f32 %v8815, %v8816
        %v8818 = vrot.slane %v8666, 4
        %v8819 = vadd.f32 %v8666, %v8818
        %v8820 = vrot.slane %v8819, 2
        %v8821 = vadd.f32 %v8819, %v8820
        %v8822 = vrot.slane %v8821, 1
        %v8823 = vadd.f32 %v8821, %v8822
        %v8824 = vrot.slane %v8667, 4
        %v8825 = vadd.f32 %v8667, %v8824
        %v8826 = vrot.slane %v8825, 2
        %v8827 = vadd.f32 %v8825, %v8826
        %v8828 = vrot.slane %v8827, 1
        %v8829 = vadd.f32 %v8827, %v8828
        %v8830 = vrot.slane %v8668, 4
        %v8831 = vadd.f32 %v8668, %v8830
        %v8832 = vrot.slane %v8831, 2
        %v8833 = vadd.f32 %v8831, %v8832
        %v8834 = vrot.slane %v8833, 1
        %v8835 = vadd.f32 %v8833, %v8834
        %v8836 = vrot.slane %v8669, 4
        %v8837 = vadd.f32 %v8669, %v8836
        %v8838 = vrot.slane %v8837, 2
        %v8839 = vadd.f32 %v8837, %v8838
        %v8840 = vrot.slane %v8839, 1
        %v8841 = vadd.f32 %v8839, %v8840
        %v8842 = vrot.slane %v8670, 4
        %v8843 = vadd.f32 %v8670, %v8842
        %v8844 = vrot.slane %v8843, 2
        %v8845 = vadd.f32 %v8843, %v8844
        %v8846 = vrot.slane %v8845, 1
        %v8847 = vadd.f32 %v8845, %v8846
        %v8848 = vrot.slane %v8671, 4
        %v8849 = vadd.f32 %v8671, %v8848
        %v8850 = vrot.slane %v8849, 2
        %v8851 = vadd.f32 %v8849, %v8850
        %v8852 = vrot.slane %v8851, 1
        %v8853 = vadd.f32 %v8851, %v8852
        %v8854 = vrot.slane %v8672, 4
        %v8855 = vadd.f32 %v8672, %v8854
        %v8856 = vrot.slane %v8855, 2
        %v8857 = vadd.f32 %v8855, %v8856
        %v8858 = vrot.slane %v8857, 1
        %v8859 = vadd.f32 %v8857, %v8858
        %v8860 = vrot.slane %v8673, 4
        %v8861 = vadd.f32 %v8673, %v8860
        %v8862 = vrot.slane %v8861, 2
        %v8863 = vadd.f32 %v8861, %v8862
        %v8864 = vrot.slane %v8863, 1
        %v8865 = vadd.f32 %v8863, %v8864
        %v8866 = vld [vmem:[#allocation4] sm:$0xff]
        %v8867 = vld [vmem:[#allocation4 + $0x8] sm:$0xff]
        %v8868 = vld [vmem:[#allocation4 + $0x10] sm:$0xff]
        %v8869 = vld [vmem:[#allocation4 + $0x18] sm:$0xff]
        %v8874 = vrot.slane %v8866, 1
        %v8875 = vrot.slane %v8866, 2
        %v8876 = vrot.slane %v8866, 3
        %v8877 = vrot.slane %v8866, 4
        %v8878 = vrot.slane %v8866, 5
        %v8879 = vrot.slane %v8866, 6
        %v8880 = vrot.slane %v8866, 7
        %v8881 = vrot.slane %v8867, 1
        %v8882 = vrot.slane %v8867, 2
        %v8883 = vrot.slane %v8867, 3
        %v8884 = vrot.slane %v8867, 4
        %v8885 = vrot.slane %v8867, 5
        %v8886 = vrot.slane %v8867, 6
        %v8887 = vrot.slane %v8867, 7
        %v8888 = vrot.slane %v8868, 1
        %v8889 = vrot.slane %v8868, 2
        %v8890 = vrot.slane %v8868, 3
        %v8891 = vrot.slane %v8868, 4
        %v8892 = vrot.slane %v8868, 5
        %v8893 = vrot.slane %v8868, 6
        %v8894 = vrot.slane %v8868, 7
        %v8895 = vrot.slane %v8869, 1
        %v8896 = vrot.slane %v8869, 2
        %v8897 = vrot.slane %v8869, 3
        %v8898 = vrot.slane %v8869, 4
        %v8899 = vrot.slane %v8869, 5
        %v8900 = vrot.slane %v8869, 6
        %v8901 = vrot.slane %v8869, 7
        %v8934 = vmul.f32 %v8679, %v8866
        %v8935 = vmul.f32 %v8685, %v8874
        %v8936 = vmul.f32 %v8691, %v8875
        %v8937 = vmul.f32 %v8697, %v8876
        %v8938 = vmul.f32 %v8703, %v8877
        %v8939 = vmul.f32 %v8709, %v8878
        %v8940 = vmul.f32 %v8715, %v8879
        %v8941 = vmul.f32 %v8721, %v8880
        %v8942 = vmul.f32 %v8727, %v8867
        %v8943 = vmul.f32 %v8733, %v8881
        %v8944 = vmul.f32 %v8739, %v8882
        %v8945 = vmul.f32 %v8745, %v8883
        %v8946 = vmul.f32 %v8751, %v8884
        %v8947 = vmul.f32 %v8757, %v8885
        %v8948 = vmul.f32 %v8763, %v8886
        %v8949 = vmul.f32 %v8769, %v8887
        %v8950 = vmul.f32 %v8775, %v8868
        %v8951 = vmul.f32 %v8781, %v8888
        %v8952 = vmul.f32 %v8787, %v8889
        %v8953 = vmul.f32 %v8793, %v8890
        %v8954 = vmul.f32 %v8799, %v8891
        %v8955 = vmul.f32 %v8805, %v8892
        %v8956 = vmul.f32 %v8811, %v8893
        %v8957 = vmul.f32 %v8817, %v8894
        %v8958 = vmul.f32 %v8823, %v8869
        %v8959 = vmul.f32 %v8829, %v8895
        %v8960 = vmul.f32 %v8835, %v8896
        %v8961 = vmul.f32 %v8841, %v8897
        %v8962 = vmul.f32 %v8847, %v8898
        %v8963 = vmul.f32 %v8853, %v8899
        %v8964 = vmul.f32 %v8859, %v8900
        %v8965 = vmul.f32 %v8865, %v8901
        %v8966 = vadd.f32 %v8934, %v8295
        %v8967 = vadd.f32 %v8935, %v8301
        %v8968 = vadd.f32 %v8936, %v8307
        %v8969 = vadd.f32 %v8937, %v8313
        %v8970 = vadd.f32 %v8938, %v8319
        %v8971 = vadd.f32 %v8939, %v8325
        %v8972 = vadd.f32 %v8940, %v8331
        %v8973 = vadd.f32 %v8941, %v8337
        %v8974 = vadd.f32 %v8942, %v8343
        %v8975 = vadd.f32 %v8943, %v8349
        %v8976 = vadd.f32 %v8944, %v8355
        %v8977 = vadd.f32 %v8945, %v8361
        %v8978 = vadd.f32 %v8946, %v8367
        %v8979 = vadd.f32 %v8947, %v8373
        %v8980 = vadd.f32 %v8948, %v8379
        %v8981 = vadd.f32 %v8949, %v8385
        %v8982 = vadd.f32 %v8950, %v8391
        %v8983 = vadd.f32 %v8951, %v8397
        %v8984 = vadd.f32 %v8952, %v8403
        %v8985 = vadd.f32 %v8953, %v8409
        %v8986 = vadd.f32 %v8954, %v8415
        %v8987 = vadd.f32 %v8955, %v8421
        %v8988 = vadd.f32 %v8956, %v8427
        %v8989 = vadd.f32 %v8957, %v8433
        %v8990 = vadd.f32 %v8958, %v8439
        %v8991 = vadd.f32 %v8959, %v8445
        %v8992 = vadd.f32 %v8960, %v8451
        %v8993 = vadd.f32 %v8961, %v8457
        %v8994 = vadd.f32 %v8962, %v8463
        %v8995 = vadd.f32 %v8963, %v8469
        %v8996 = vadd.f32 %v8964, %v8475
        %v8997 = vadd.f32 %v8965, %v8481
        %v9030 = vrot.slane %v8967, 7
        %vm9031 = vcmask 1041409
        %v9032 = vsel %vm9031, %v9030, %v8966
        %v9033 = vrot.slane %v8968, 6
        %vm9034 = vcmask 1042434
        %v9035 = vsel %vm9034, %v9033, %v9032
        %v9036 = vrot.slane %v8969, 5
        %vm9037 = vcmask 1043459
        %v9038 = vsel %vm9037, %v9036, %v9035
        %v9039 = vrot.slane %v8970, 4
        %vm9040 = vcmask 1044484
        %v9041 = vsel %vm9040, %v9039, %v9038
        %v9042 = vrot.slane %v8971, 3
        %vm9043 = vcmask 1045509
        %v9044 = vsel %vm9043, %v9042, %v9041
        %v9045 = vrot.slane %v8972, 2
        %vm9046 = vcmask 1046534
        %v9047 = vsel %vm9046, %v9045, %v9044
        %v9048 = vrot.slane %v8973, 1
        %vm9049 = vcmask 1047559
        %v9050 = vsel %vm9049, %v9048, %v9047
        %v9051 = vrot.slane %v8975, 7
        %v9052 = vsel %vm9031, %v9051, %v8974
        %v9053 = vrot.slane %v8976, 6
        %v9054 = vsel %vm9034, %v9053, %v9052
        %v9055 = vrot.slane %v8977, 5
        %v9056 = vsel %vm9037, %v9055, %v9054
        %v9057 = vrot.slane %v8978, 4
        %v9058 = vsel %vm9040, %v9057, %v9056
        %v9059 = vrot.slane %v8979, 3
        %v9060 = vsel %vm9043, %v9059, %v9058
        %v9061 = vrot.slane %v8980, 2
        %v9062 = vsel %vm9046, %v9061, %v9060
        %v9063 = vrot.slane %v8981, 1
        %v9064 = vsel %vm9049, %v9063, %v9062
        %v9065 = vrot.slane %v8983, 7
        %v9066 = vsel %vm9031, %v9065, %v8982
        %v9067 = vrot.slane %v8984, 6
        %v9068 = vsel %vm9034, %v9067, %v9066
        %v9069 = vrot.slane %v8985, 5
        %v9070 = vsel %vm9037, %v9069, %v9068
        %v9071 = vrot.slane %v8986, 4
        %v9072 = vsel %vm9040, %v9071, %v9070
        %v9073 = vrot.slane %v8987, 3
        %v9074 = vsel %vm9043, %v9073, %v9072
        %v9075 = vrot.slane %v8988, 2
        %v9076 = vsel %vm9046, %v9075, %v9074
        %v9077 = vrot.slane %v8989, 1
        %v9078 = vsel %vm9049, %v9077, %v9076
        %v9079 = vrot.slane %v8991, 7
        %v9080 = vsel %vm9031, %v9079, %v8990
        %v9081 = vrot.slane %v8992, 6
        %v9082 = vsel %vm9034, %v9081, %v9080
        %v9083 = vrot.slane %v8993, 5
        %v9084 = vsel %vm9037, %v9083, %v9082
        %v9085 = vrot.slane %v8994, 4
        %v9086 = vsel %vm9040, %v9085, %v9084
        %v9087 = vrot.slane %v8995, 3
        %v9088 = vsel %vm9043, %v9087, %v9086
        %v9089 = vrot.slane %v8996, 2
        %v9090 = vsel %vm9046, %v9089, %v9088
        %v9091 = vrot.slane %v8997, 1
        %v9092 = vsel %vm9049, %v9091, %v9090
        %9097 = vst [vmem:[#allocation4] sm:$0xff] %v9050
        %9098 = vst [vmem:[#allocation4 + $0x8] sm:$0xff] %v9064
        %9099 = vst [vmem:[#allocation4 + $0x10] sm:$0xff] %v9078
        %9100 = vst [vmem:[#allocation4 + $0x18] sm:$0xff] %v9092
        // Predicated region
        $region65: #{tpu_custom_call.1} parent=47 // pred_check
          %p9101 = pneg %p413
        $region66: #{tpu_custom_call.1} parent=47 // pred_check_branch
          %9103 = sbr.rel (%p9101) target = $region68
        $region67: #{tpu_custom_call.1} parent=47 // pred_region
          %v9104 = vld [vmem:[#allocation3] sm:$0xff]
          %v9105 = vld [vmem:[#allocation3 + $0x8] sm:$0xff]
          %v9106 = vld [vmem:[#allocation3 + $0x10] sm:$0xff]
          %v9107 = vld [vmem:[#allocation3 + $0x18] sm:$0xff]
          %v9108 = vld [vmem:[#allocation3 + $0x20] sm:$0xff]
          %v9109 = vld [vmem:[#allocation3 + $0x28] sm:$0xff]
          %v9110 = vld [vmem:[#allocation3 + $0x30] sm:$0xff]
          %v9111 = vld [vmem:[#allocation3 + $0x38] sm:$0xff]
          %v9112 = vld [vmem:[#allocation3 + $0x40] sm:$0xff]
          %v9113 = vld [vmem:[#allocation3 + $0x48] sm:$0xff]
          %v9114 = vld [vmem:[#allocation3 + $0x50] sm:$0xff]
          %v9115 = vld [vmem:[#allocation3 + $0x58] sm:$0xff]
          %v9116 = vld [vmem:[#allocation3 + $0x60] sm:$0xff]
          %v9117 = vld [vmem:[#allocation3 + $0x68] sm:$0xff]
          %v9118 = vld [vmem:[#allocation3 + $0x70] sm:$0xff]
          %v9119 = vld [vmem:[#allocation3 + $0x78] sm:$0xff]
          %v9120 = vld [vmem:[#allocation3 + $0x80] sm:$0xff]
          %v9121 = vld [vmem:[#allocation3 + $0x88] sm:$0xff]
          %v9122 = vld [vmem:[#allocation3 + $0x90] sm:$0xff]
          %v9123 = vld [vmem:[#allocation3 + $0x98] sm:$0xff]
          %v9124 = vld [vmem:[#allocation3 + $0xa0] sm:$0xff]
          %v9125 = vld [vmem:[#allocation3 + $0xa8] sm:$0xff]
          %v9126 = vld [vmem:[#allocation3 + $0xb0] sm:$0xff]
          %v9127 = vld [vmem:[#allocation3 + $0xb8] sm:$0xff]
          %v9128 = vld [vmem:[#allocation3 + $0xc0] sm:$0xff]
          %v9129 = vld [vmem:[#allocation3 + $0xc8] sm:$0xff]
          %v9130 = vld [vmem:[#allocation3 + $0xd0] sm:$0xff]
          %v9131 = vld [vmem:[#allocation3 + $0xd8] sm:$0xff]
          %v9132 = vld [vmem:[#allocation3 + $0xe0] sm:$0xff]
          %v9133 = vld [vmem:[#allocation3 + $0xe8] sm:$0xff]
          %v9134 = vld [vmem:[#allocation3 + $0xf0] sm:$0xff]
          %v9135 = vld [vmem:[#allocation3 + $0xf8] sm:$0xff]
          %v9136 = vadd.f32 %v9104, 1e-16
          %v9137 = vadd.f32 %v9105, 1e-16
          %v9138 = vadd.f32 %v9106, 1e-16
          %v9139 = vadd.f32 %v9107, 1e-16
          %v9140 = vadd.f32 %v9108, 1e-16
          %v9141 = vadd.f32 %v9109, 1e-16
          %v9142 = vadd.f32 %v9110, 1e-16
          %v9143 = vadd.f32 %v9111, 1e-16
          %v9144 = vadd.f32 %v9112, 1e-16
          %v9145 = vadd.f32 %v9113, 1e-16
          %v9146 = vadd.f32 %v9114, 1e-16
          %v9147 = vadd.f32 %v9115, 1e-16
          %v9148 = vadd.f32 %v9116, 1e-16
          %v9149 = vadd.f32 %v9117, 1e-16
          %v9150 = vadd.f32 %v9118, 1e-16
          %v9151 = vadd.f32 %v9119, 1e-16
          %v9152 = vadd.f32 %v9120, 1e-16
          %v9153 = vadd.f32 %v9121, 1e-16
          %v9154 = vadd.f32 %v9122, 1e-16
          %v9155 = vadd.f32 %v9123, 1e-16
          %v9156 = vadd.f32 %v9124, 1e-16
          %v9157 = vadd.f32 %v9125, 1e-16
          %v9158 = vadd.f32 %v9126, 1e-16
          %v9159 = vadd.f32 %v9127, 1e-16
          %v9160 = vadd.f32 %v9128, 1e-16
          %v9161 = vadd.f32 %v9129, 1e-16
          %v9162 = vadd.f32 %v9130, 1e-16
          %v9163 = vadd.f32 %v9131, 1e-16
          %v9164 = vadd.f32 %v9132, 1e-16
          %v9165 = vadd.f32 %v9133, 1e-16
          %v9166 = vadd.f32 %v9134, 1e-16
          %v9167 = vadd.f32 %v9135, 1e-16
          %v9168 = vrcp.pop %v9136
          %v9169 = vrcp.pop %v9137
          %v9170 = vrcp.pop %v9138
          %v9171 = vrcp.pop %v9139
          %v9172 = vrcp.pop %v9140
          %v9173 = vrcp.pop %v9141
          %v9174 = vrcp.pop %v9142
          %v9175 = vrcp.pop %v9143
          %v9176 = vrcp.pop %v9144
          %v9177 = vrcp.pop %v9145
          %v9178 = vrcp.pop %v9146
          %v9179 = vrcp.pop %v9147
          %v9180 = vrcp.pop %v9148
          %v9181 = vrcp.pop %v9149
          %v9182 = vrcp.pop %v9150
          %v9183 = vrcp.pop %v9151
          %v9184 = vrcp.pop %v9152
          %v9185 = vrcp.pop %v9153
          %v9186 = vrcp.pop %v9154
          %v9187 = vrcp.pop %v9155
          %v9188 = vrcp.pop %v9156
          %v9189 = vrcp.pop %v9157
          %v9190 = vrcp.pop %v9158
          %v9191 = vrcp.pop %v9159
          %v9192 = vrcp.pop %v9160
          %v9193 = vrcp.pop %v9161
          %v9194 = vrcp.pop %v9162
          %v9195 = vrcp.pop %v9163
          %v9196 = vrcp.pop %v9164
          %v9197 = vrcp.pop %v9165
          %v9198 = vrcp.pop %v9166
          %v9199 = vrcp.pop %v9167
          %9201 = vset.pattern.permute.xlu0 0
          %9202 = vperm.xlu0 %9201, %v9168
          %v9203 = vpop.permute.xlu0 %9202
          %9206 = vset.pattern.permute.xlu0 0
          %9207 = vperm.xlu0 %9206, %v9169
          %v9208 = vpop.permute.xlu0 %9207
          %9211 = vset.pattern.permute.xlu0 0
          %9212 = vperm.xlu0 %9211, %v9170
          %v9213 = vpop.permute.xlu0 %9212
          %9216 = vset.pattern.permute.xlu0 0
          %9217 = vperm.xlu0 %9216, %v9171
          %v9218 = vpop.permute.xlu0 %9217
          %9221 = vset.pattern.permute.xlu0 0
          %9222 = vperm.xlu0 %9221, %v9172
          %v9223 = vpop.permute.xlu0 %9222
          %9226 = vset.pattern.permute.xlu0 0
          %9227 = vperm.xlu0 %9226, %v9173
          %v9228 = vpop.permute.xlu0 %9227
          %9231 = vset.pattern.permute.xlu0 0
          %9232 = vperm.xlu0 %9231, %v9174
          %v9233 = vpop.permute.xlu0 %9232
          %9236 = vset.pattern.permute.xlu0 0
          %9237 = vperm.xlu0 %9236, %v9175
          %v9238 = vpop.permute.xlu0 %9237
          %9241 = vset.pattern.permute.xlu0 0
          %9242 = vperm.xlu0 %9241, %v9176
          %v9243 = vpop.permute.xlu0 %9242
          %9246 = vset.pattern.permute.xlu0 0
          %9247 = vperm.xlu0 %9246, %v9177
          %v9248 = vpop.permute.xlu0 %9247
          %9251 = vset.pattern.permute.xlu0 0
          %9252 = vperm.xlu0 %9251, %v9178
          %v9253 = vpop.permute.xlu0 %9252
          %9256 = vset.pattern.permute.xlu0 0
          %9257 = vperm.xlu0 %9256, %v9179
          %v9258 = vpop.permute.xlu0 %9257
          %9261 = vset.pattern.permute.xlu0 0
          %9262 = vperm.xlu0 %9261, %v9180
          %v9263 = vpop.permute.xlu0 %9262
          %9266 = vset.pattern.permute.xlu0 0
          %9267 = vperm.xlu0 %9266, %v9181
          %v9268 = vpop.permute.xlu0 %9267
          %9271 = vset.pattern.permute.xlu0 0
          %9272 = vperm.xlu0 %9271, %v9182
          %v9273 = vpop.permute.xlu0 %9272
          %9276 = vset.pattern.permute.xlu0 0
          %9277 = vperm.xlu0 %9276, %v9183
          %v9278 = vpop.permute.xlu0 %9277
          %9281 = vset.pattern.permute.xlu0 0
          %9282 = vperm.xlu0 %9281, %v9184
          %v9283 = vpop.permute.xlu0 %9282
          %9286 = vset.pattern.permute.xlu0 0
          %9287 = vperm.xlu0 %9286, %v9185
          %v9288 = vpop.permute.xlu0 %9287
          %9291 = vset.pattern.permute.xlu0 0
          %9292 = vperm.xlu0 %9291, %v9186
          %v9293 = vpop.permute.xlu0 %9292
          %9296 = vset.pattern.permute.xlu0 0
          %9297 = vperm.xlu0 %9296, %v9187
          %v9298 = vpop.permute.xlu0 %9297
          %9301 = vset.pattern.permute.xlu0 0
          %9302 = vperm.xlu0 %9301, %v9188
          %v9303 = vpop.permute.xlu0 %9302
          %9306 = vset.pattern.permute.xlu0 0
          %9307 = vperm.xlu0 %9306, %v9189
          %v9308 = vpop.permute.xlu0 %9307
          %9311 = vset.pattern.permute.xlu0 0
          %9312 = vperm.xlu0 %9311, %v9190
          %v9313 = vpop.permute.xlu0 %9312
          %9316 = vset.pattern.permute.xlu0 0
          %9317 = vperm.xlu0 %9316, %v9191
          %v9318 = vpop.permute.xlu0 %9317
          %9321 = vset.pattern.permute.xlu0 0
          %9322 = vperm.xlu0 %9321, %v9192
          %v9323 = vpop.permute.xlu0 %9322
          %9326 = vset.pattern.permute.xlu0 0
          %9327 = vperm.xlu0 %9326, %v9193
          %v9328 = vpop.permute.xlu0 %9327
          %9331 = vset.pattern.permute.xlu0 0
          %9332 = vperm.xlu0 %9331, %v9194
          %v9333 = vpop.permute.xlu0 %9332
          %9336 = vset.pattern.permute.xlu0 0
          %9337 = vperm.xlu0 %9336, %v9195
          %v9338 = vpop.permute.xlu0 %9337
          %9341 = vset.pattern.permute.xlu0 0
          %9342 = vperm.xlu0 %9341, %v9196
          %v9343 = vpop.permute.xlu0 %9342
          %9346 = vset.pattern.permute.xlu0 0
          %9347 = vperm.xlu0 %9346, %v9197
          %v9348 = vpop.permute.xlu0 %9347
          %9351 = vset.pattern.permute.xlu0 0
          %9352 = vperm.xlu0 %9351, %v9198
          %v9353 = vpop.permute.xlu0 %9352
          %9356 = vset.pattern.permute.xlu0 0
          %9357 = vperm.xlu0 %9356, %v9199
          %v9358 = vpop.permute.xlu0 %9357
          %v9360 = vmul.f32 %v9203, %v8257
          %v9361 = vmul.f32 %v9208, %v8257
          %v9362 = vmul.f32 %v9213, %v8257
          %v9363 = vmul.f32 %v9218, %v8257
          %v9364 = vmul.f32 %v9223, %v8257
          %v9365 = vmul.f32 %v9228, %v8257
          %v9366 = vmul.f32 %v9233, %v8257
          %v9367 = vmul.f32 %v9238, %v8257
          %v9368 = vmul.f32 %v9243, %v8257
          %v9369 = vmul.f32 %v9248, %v8257
          %v9370 = vmul.f32 %v9253, %v8257
          %v9371 = vmul.f32 %v9258, %v8257
          %v9372 = vmul.f32 %v9263, %v8257
          %v9373 = vmul.f32 %v9268, %v8257
          %v9374 = vmul.f32 %v9273, %v8257
          %v9375 = vmul.f32 %v9278, %v8257
          %v9376 = vmul.f32 %v9283, %v8257
          %v9377 = vmul.f32 %v9288, %v8257
          %v9378 = vmul.f32 %v9293, %v8257
          %v9379 = vmul.f32 %v9298, %v8257
          %v9380 = vmul.f32 %v9303, %v8257
          %v9381 = vmul.f32 %v9308, %v8257
          %v9382 = vmul.f32 %v9313, %v8257
          %v9383 = vmul.f32 %v9318, %v8257
          %v9384 = vmul.f32 %v9323, %v8257
          %v9385 = vmul.f32 %v9328, %v8257
          %v9386 = vmul.f32 %v9333, %v8257
          %v9387 = vmul.f32 %v9338, %v8257
          %v9388 = vmul.f32 %v9343, %v8257
          %v9389 = vmul.f32 %v9348, %v8257
          %v9390 = vmul.f32 %v9353, %v8257
          %v9391 = vmul.f32 %v9358, %v8257
          %v9392 = vrot.slane %v9360, 4
          %v9393 = vadd.f32 %v9360, %v9392
          %v9394 = vrot.slane %v9393, 2
          %v9395 = vadd.f32 %v9393, %v9394
          %v9396 = vrot.slane %v9395, 1
          %v9397 = vadd.f32 %v9395, %v9396
          %v9398 = vrot.slane %v9361, 4
          %v9399 = vadd.f32 %v9361, %v9398
          %v9400 = vrot.slane %v9399, 2
          %v9401 = vadd.f32 %v9399, %v9400
          %v9402 = vrot.slane %v9401, 1
          %v9403 = vadd.f32 %v9401, %v9402
          %v9404 = vrot.slane %v9362, 4
          %v9405 = vadd.f32 %v9362, %v9404
          %v9406 = vrot.slane %v9405, 2
          %v9407 = vadd.f32 %v9405, %v9406
          %v9408 = vrot.slane %v9407, 1
          %v9409 = vadd.f32 %v9407, %v9408
          %v9410 = vrot.slane %v9363, 4
          %v9411 = vadd.f32 %v9363, %v9410
          %v9412 = vrot.slane %v9411, 2
          %v9413 = vadd.f32 %v9411, %v9412
          %v9414 = vrot.slane %v9413, 1
          %v9415 = vadd.f32 %v9413, %v9414
          %v9416 = vrot.slane %v9364, 4
          %v9417 = vadd.f32 %v9364, %v9416
          %v9418 = vrot.slane %v9417, 2
          %v9419 = vadd.f32 %v9417, %v9418
          %v9420 = vrot.slane %v9419, 1
          %v9421 = vadd.f32 %v9419, %v9420
          %v9422 = vrot.slane %v9365, 4
          %v9423 = vadd.f32 %v9365, %v9422
          %v9424 = vrot.slane %v9423, 2
          %v9425 = vadd.f32 %v9423, %v9424
          %v9426 = vrot.slane %v9425, 1
          %v9427 = vadd.f32 %v9425, %v9426
          %v9428 = vrot.slane %v9366, 4
          %v9429 = vadd.f32 %v9366, %v9428
          %v9430 = vrot.slane %v9429, 2
          %v9431 = vadd.f32 %v9429, %v9430
          %v9432 = vrot.slane %v9431, 1
          %v9433 = vadd.f32 %v9431, %v9432
          %v9434 = vrot.slane %v9367, 4
          %v9435 = vadd.f32 %v9367, %v9434
          %v9436 = vrot.slane %v9435, 2
          %v9437 = vadd.f32 %v9435, %v9436
          %v9438 = vrot.slane %v9437, 1
          %v9439 = vadd.f32 %v9437, %v9438
          %v9440 = vrot.slane %v9368, 4
          %v9441 = vadd.f32 %v9368, %v9440
          %v9442 = vrot.slane %v9441, 2
          %v9443 = vadd.f32 %v9441, %v9442
          %v9444 = vrot.slane %v9443, 1
          %v9445 = vadd.f32 %v9443, %v9444
          %v9446 = vrot.slane %v9369, 4
          %v9447 = vadd.f32 %v9369, %v9446
          %v9448 = vrot.slane %v9447, 2
          %v9449 = vadd.f32 %v9447, %v9448
          %v9450 = vrot.slane %v9449, 1
          %v9451 = vadd.f32 %v9449, %v9450
          %v9452 = vrot.slane %v9370, 4
          %v9453 = vadd.f32 %v9370, %v9452
          %v9454 = vrot.slane %v9453, 2
          %v9455 = vadd.f32 %v9453, %v9454
          %v9456 = vrot.slane %v9455, 1
          %v9457 = vadd.f32 %v9455, %v9456
          %v9458 = vrot.slane %v9371, 4
          %v9459 = vadd.f32 %v9371, %v9458
          %v9460 = vrot.slane %v9459, 2
          %v9461 = vadd.f32 %v9459, %v9460
          %v9462 = vrot.slane %v9461, 1
          %v9463 = vadd.f32 %v9461, %v9462
          %v9464 = vrot.slane %v9372, 4
          %v9465 = vadd.f32 %v9372, %v9464
          %v9466 = vrot.slane %v9465, 2
          %v9467 = vadd.f32 %v9465, %v9466
          %v9468 = vrot.slane %v9467, 1
          %v9469 = vadd.f32 %v9467, %v9468
          %v9470 = vrot.slane %v9373, 4
          %v9471 = vadd.f32 %v9373, %v9470
          %v9472 = vrot.slane %v9471, 2
          %v9473 = vadd.f32 %v9471, %v9472
          %v9474 = vrot.slane %v9473, 1
          %v9475 = vadd.f32 %v9473, %v9474
          %v9476 = vrot.slane %v9374, 4
          %v9477 = vadd.f32 %v9374, %v9476
          %v9478 = vrot.slane %v9477, 2
          %v9479 = vadd.f32 %v9477, %v9478
          %v9480 = vrot.slane %v9479, 1
          %v9481 = vadd.f32 %v9479, %v9480
          %v9482 = vrot.slane %v9375, 4
          %v9483 = vadd.f32 %v9375, %v9482
          %v9484 = vrot.slane %v9483, 2
          %v9485 = vadd.f32 %v9483, %v9484
          %v9486 = vrot.slane %v9485, 1
          %v9487 = vadd.f32 %v9485, %v9486
          %v9488 = vrot.slane %v9376, 4
          %v9489 = vadd.f32 %v9376, %v9488
          %v9490 = vrot.slane %v9489, 2
          %v9491 = vadd.f32 %v9489, %v9490
          %v9492 = vrot.slane %v9491, 1
          %v9493 = vadd.f32 %v9491, %v9492
          %v9494 = vrot.slane %v9377, 4
          %v9495 = vadd.f32 %v9377, %v9494
          %v9496 = vrot.slane %v9495, 2
          %v9497 = vadd.f32 %v9495, %v9496
          %v9498 = vrot.slane %v9497, 1
          %v9499 = vadd.f32 %v9497, %v9498
          %v9500 = vrot.slane %v9378, 4
          %v9501 = vadd.f32 %v9378, %v9500
          %v9502 = vrot.slane %v9501, 2
          %v9503 = vadd.f32 %v9501, %v9502
          %v9504 = vrot.slane %v9503, 1
          %v9505 = vadd.f32 %v9503, %v9504
          %v9506 = vrot.slane %v9379, 4
          %v9507 = vadd.f32 %v9379, %v9506
          %v9508 = vrot.slane %v9507, 2
          %v9509 = vadd.f32 %v9507, %v9508
          %v9510 = vrot.slane %v9509, 1
          %v9511 = vadd.f32 %v9509, %v9510
          %v9512 = vrot.slane %v9380, 4
          %v9513 = vadd.f32 %v9380, %v9512
          %v9514 = vrot.slane %v9513, 2
          %v9515 = vadd.f32 %v9513, %v9514
          %v9516 = vrot.slane %v9515, 1
          %v9517 = vadd.f32 %v9515, %v9516
          %v9518 = vrot.slane %v9381, 4
          %v9519 = vadd.f32 %v9381, %v9518
          %v9520 = vrot.slane %v9519, 2
          %v9521 = vadd.f32 %v9519, %v9520
          %v9522 = vrot.slane %v9521, 1
          %v9523 = vadd.f32 %v9521, %v9522
          %v9524 = vrot.slane %v9382, 4
          %v9525 = vadd.f32 %v9382, %v9524
          %v9526 = vrot.slane %v9525, 2
          %v9527 = vadd.f32 %v9525, %v9526
          %v9528 = vrot.slane %v9527, 1
          %v9529 = vadd.f32 %v9527, %v9528
          %v9530 = vrot.slane %v9383, 4
          %v9531 = vadd.f32 %v9383, %v9530
          %v9532 = vrot.slane %v9531, 2
          %v9533 = vadd.f32 %v9531, %v9532
          %v9534 = vrot.slane %v9533, 1
          %v9535 = vadd.f32 %v9533, %v9534
          %v9536 = vrot.slane %v9384, 4
          %v9537 = vadd.f32 %v9384, %v9536
          %v9538 = vrot.slane %v9537, 2
          %v9539 = vadd.f32 %v9537, %v9538
          %v9540 = vrot.slane %v9539, 1
          %v9541 = vadd.f32 %v9539, %v9540
          %v9542 = vrot.slane %v9385, 4
          %v9543 = vadd.f32 %v9385, %v9542
          %v9544 = vrot.slane %v9543, 2
          %v9545 = vadd.f32 %v9543, %v9544
          %v9546 = vrot.slane %v9545, 1
          %v9547 = vadd.f32 %v9545, %v9546
          %v9548 = vrot.slane %v9386, 4
          %v9549 = vadd.f32 %v9386, %v9548
          %v9550 = vrot.slane %v9549, 2
          %v9551 = vadd.f32 %v9549, %v9550
          %v9552 = vrot.slane %v9551, 1
          %v9553 = vadd.f32 %v9551, %v9552
          %v9554 = vrot.slane %v9387, 4
          %v9555 = vadd.f32 %v9387, %v9554
          %v9556 = vrot.slane %v9555, 2
          %v9557 = vadd.f32 %v9555, %v9556
          %v9558 = vrot.slane %v9557, 1
          %v9559 = vadd.f32 %v9557, %v9558
          %v9560 = vrot.slane %v9388, 4
          %v9561 = vadd.f32 %v9388, %v9560
          %v9562 = vrot.slane %v9561, 2
          %v9563 = vadd.f32 %v9561, %v9562
          %v9564 = vrot.slane %v9563, 1
          %v9565 = vadd.f32 %v9563, %v9564
          %v9566 = vrot.slane %v9389, 4
          %v9567 = vadd.f32 %v9389, %v9566
          %v9568 = vrot.slane %v9567, 2
          %v9569 = vadd.f32 %v9567, %v9568
          %v9570 = vrot.slane %v9569, 1
          %v9571 = vadd.f32 %v9569, %v9570
          %v9572 = vrot.slane %v9390, 4
          %v9573 = vadd.f32 %v9390, %v9572
          %v9574 = vrot.slane %v9573, 2
          %v9575 = vadd.f32 %v9573, %v9574
          %v9576 = vrot.slane %v9575, 1
          %v9577 = vadd.f32 %v9575, %v9576
          %v9578 = vrot.slane %v9391, 4
          %v9579 = vadd.f32 %v9391, %v9578
          %v9580 = vrot.slane %v9579, 2
          %v9581 = vadd.f32 %v9579, %v9580
          %v9582 = vrot.slane %v9581, 1
          %v9583 = vadd.f32 %v9581, %v9582
          %v9584 = vld [vmem:[#allocation4] sm:$0xff]
          %v9585 = vld [vmem:[#allocation4 + $0x8] sm:$0xff]
          %v9586 = vld [vmem:[#allocation4 + $0x10] sm:$0xff]
          %v9587 = vld [vmem:[#allocation4 + $0x18] sm:$0xff]
          %v9620 = vsel %vm9031, %v9403, %v9397
          %v9621 = vsel %vm9034, %v9409, %v9620
          %v9622 = vsel %vm9037, %v9415, %v9621
          %v9623 = vsel %vm9040, %v9421, %v9622
          %v9624 = vsel %vm9043, %v9427, %v9623
          %v9625 = vsel %vm9046, %v9433, %v9624
          %v9626 = vsel %vm9049, %v9439, %v9625
          %v9627 = vsel %vm9031, %v9451, %v9445
          %v9628 = vsel %vm9034, %v9457, %v9627
          %v9629 = vsel %vm9037, %v9463, %v9628
          %v9630 = vsel %vm9040, %v9469, %v9629
          %v9631 = vsel %vm9043, %v9475, %v9630
          %v9632 = vsel %vm9046, %v9481, %v9631
          %v9633 = vsel %vm9049, %v9487, %v9632
          %v9634 = vsel %vm9031, %v9499, %v9493
          %v9635 = vsel %vm9034, %v9505, %v9634
          %v9636 = vsel %vm9037, %v9511, %v9635
          %v9637 = vsel %vm9040, %v9517, %v9636
          %v9638 = vsel %vm9043, %v9523, %v9637
          %v9639 = vsel %vm9046, %v9529, %v9638
          %v9640 = vsel %vm9049, %v9535, %v9639
          %v9641 = vsel %vm9031, %v9547, %v9541
          %v9642 = vsel %vm9034, %v9553, %v9641
          %v9643 = vsel %vm9037, %v9559, %v9642
          %v9644 = vsel %vm9040, %v9565, %v9643
          %v9645 = vsel %vm9043, %v9571, %v9644
          %v9646 = vsel %vm9046, %v9577, %v9645
          %v9647 = vsel %vm9049, %v9583, %v9646
          %v9652 = vmul.f32 %v9584, %v9626
          %v9653 = vmul.f32 %v9585, %v9633
          %v9654 = vmul.f32 %v9586, %v9640
          %v9655 = vmul.f32 %v9587, %v9647
          %v9656 = vld [vmem:[%s6] sm:$0x1]
          %v9658 = vlaneseq
          %v9659 = vshrl.u32 %v9658, 7
          %v9660 = vsub.s32 0, %v9659
          %v9661 = vrot.slane %v9656, %v9660
          %v9663 = vadd.f32 %v9652, %v9661
          %v9664 = vadd.f32 %v9653, %v9661
          %v9665 = vadd.f32 %v9654, %v9661
          %v9666 = vadd.f32 %v9655, %v9661
          %v9667 = vld [vmem:[%s347] sm:$0xff]
          %v9668 = vld [vmem:[%s347 + $0x8] sm:$0xff]
          %v9669 = vld [vmem:[%s347 + $0x10] sm:$0xff]
          %v9670 = vld [vmem:[%s347 + $0x18] sm:$0xff]
          %v9671 = vmul.f32 %v9663, 0.5
          %v9672 = vmul.f32 %v9664, 0.5
          %v9673 = vmul.f32 %v9665, 0.5
          %v9674 = vmul.f32 %v9666, 0.5
          %v9675 = vmul.f32 %v9663, 0.044715
          %v9676 = vmul.f32 %v9664, 0.044715
          %v9677 = vmul.f32 %v9665, 0.044715
          %v9678 = vmul.f32 %v9666, 0.044715
          %v9679 = vmul.f32 %v9675, %v9663
          %v9680 = vmul.f32 %v9676, %v9664
          %v9681 = vmul.f32 %v9677, %v9665
          %v9682 = vmul.f32 %v9678, %v9666
          %v9683 = vmul.f32 %v9679, %v9663
          %v9684 = vmul.f32 %v9680, %v9664
          %v9685 = vmul.f32 %v9681, %v9665
          %v9686 = vmul.f32 %v9682, %v9666
          %v9687 = vadd.f32 %v9663, %v9683
          %v9688 = vadd.f32 %v9664, %v9684
          %v9689 = vadd.f32 %v9665, %v9685
          %v9690 = vadd.f32 %v9666, %v9686
          %v9691 = vmul.f32 %v9687, 0.7978846
          %v9692 = vmul.f32 %v9688, 0.7978846
          %v9693 = vmul.f32 %v9689, 0.7978846
          %v9694 = vmul.f32 %v9690, 0.7978846
          %v9695 = vtanh.pop %v9691
          %v9696 = vtanh.pop %v9692
          %v9697 = vtanh.pop %v9693
          %v9698 = vtanh.pop %v9694
          %v9699 = vadd.f32 %v9695, 1.0
          %v9700 = vadd.f32 %v9696, 1.0
          %v9701 = vadd.f32 %v9697, 1.0
          %v9702 = vadd.f32 %v9698, 1.0
          %v9703 = vmul.f32 %v9671, %v9699
          %v9704 = vmul.f32 %v9672, %v9700
          %v9705 = vmul.f32 %v9673, %v9701
          %v9706 = vmul.f32 %v9674, %v9702
          %v9707 = vadd.f32 %v9667, %v9703
          %v9708 = vadd.f32 %v9668, %v9704
          %v9709 = vadd.f32 %v9669, %v9705
          %v9710 = vadd.f32 %v9670, %v9706
          %9711 = vst [vmem:[%s401] sm:$0xff] %v9707
          %9712 = vst [vmem:[%s401 + $0x8] sm:$0xff] %v9708
          %9713 = vst [vmem:[%s401 + $0x10] sm:$0xff] %v9709
          %9714 = vst [vmem:[%s401 + $0x18] sm:$0xff] %v9710
        $region68: #{tpu_custom_call.1} parent=47 // pred_fallthru
          _
        %s9715 = sand.u32 %s216, 1
        %s9716 = scalar_lea.sflag [#allocation7], %s9715
        %s9717 = sand.u32 %s216, 1
        %s9718 = smul.addr %s9717, 32
        %s9719 = scalar_lea.vmem [#allocation11], %s9718
        // Predicated region
        $region69: #{tpu_custom_call.1} parent=47 // pred_check
          %p9720 = pneg %p226
        $region70: #{tpu_custom_call.1} parent=47 // pred_check_branch
          %9722 = sbr.rel (%p9720) target = $region72
        $region71: #{tpu_custom_call.1} parent=47 // pred_region
          %s9723 = smul.u32 4, %s31
          %s9725 = ssub.s32 512, 512
          %9726 = vsyncadd %s9716, %s9725
          %s9727 = smul.addr %s9723, 128
          %s9728 = scalar_lea.hbm %s7, %s9727
          %s9729 = sshll.u32 %s9719, 4
          %s9730 = int_to_ptr.vmem [resolvable:$true] %s9729
          %9735 = dma.vmem_to_hbm [thread:$0]  %s9730, 512, %s9728, %s9716, 128, 128, 8
        $region72: #{tpu_custom_call.1} parent=47 // pred_fallthru
          _
      $region48: #{tpu_custom_call.1} parent=5 // pred_fallthru
        _
      %p9736 = scmp.le.s32.totalorder 2, %s22
      // Predicated region
      $region73: #{tpu_custom_call.1} parent=5 // pred_check
        %p9737 = pneg %p9736
      $region74: #{tpu_custom_call.1} parent=5 // pred_check_branch
        %9739 = sbr.rel (%p9737) target = $region76
      $region75: #{tpu_custom_call.1} parent=5 // pred_region
        %s9740 = ssub.s32 %s22, 2
        // Predicated region
        $region77: #{tpu_custom_call.1} parent=75 // pred_check
          %p9741 = pneg %p232
        $region78: #{tpu_custom_call.1} parent=75 // pred_check_branch
          %9743 = sbr.rel (%p9741) target = $region80
        $region79: #{tpu_custom_call.1} parent=75 // pred_region
          %s9744 = sand.u32 %s217, 1
          %s9745 = scalar_lea.sflag [#allocation7], %s9744
          %s9746 = sand.u32 %s217, 1
          %s9747 = smul.addr %s9746, 32
          %s9748 = scalar_lea.vmem [#allocation11], %s9747
          %9749 = dma.done %s9745, 512
        $region80: #{tpu_custom_call.1} parent=75 // pred_fallthru
          _
      $region76: #{tpu_custom_call.1} parent=5 // pred_fallthru
        _
    $region6: #{tpu_custom_call.1} parent=1 // loop_footer
      %s26 = sadd.s32 1, %s22
    $region7: #{tpu_custom_call.1} parent=1 // loop_footer_branch
      %21 = sbr.rel target = $region3
    $region8: #{tpu_custom_call.1} parent=1 // loop_exit
      _
    %9750 = vsyncpa [#allocation6], 1
    %s9751 = scalar_lea.sflag [#allocation6], 1
    %9752 = vsyncpa %s9751, 1
    %9753 = vsyncpa [#allocation9], 1
    %s9754 = scalar_lea.sflag [#allocation9], 1
    %9755 = vsyncpa %s9754, 1
    %9756 = vsyncpa [#allocation7], 1
    %s9757 = scalar_lea.sflag [#allocation7], 1
    %9758 = vsyncpa %s9757, 1

</llo_original>
